<compile_context>
chip_gen: v7x
topology: tpu7x:2x2x1
jax: 0.10.0
libtpu: 0.0.40
codegen_flags: <defaults>
</compile_context>

<pallas_src>
import jax
import jax.numpy as jnp
import numpy as np
from jax.experimental import pallas as pl
from jax.experimental.pallas import tpu as pltpu


# ----------------------------------------------------------------------------
# Fused Pallas kernel: conv-as-matmul + ReLU + global-avg-pool + 5-layer MLP
# ----------------------------------------------------------------------------
def _fused_kernel(patch_ref, user_ref,
                  cw_ref, cb_ref,
                  w1u_ref, w1i_ref, b1_ref,
                  ws_ref, bs_ref,
                  o_ref):
    f32 = jnp.float32
    bf16 = jnp.bfloat16

    tn = user_ref.shape[0]
    hw = patch_ref.shape[0] // tn
    c1p = cw_ref.shape[1]

    # Conv 3x3 (im2col) as one flat 2-D matmul: (tn*hw, Kp) x (Kp, C1p), f32 acc
    conv = jnp.dot(patch_ref[...], cw_ref[...], preferred_element_type=f32)
    conv = jnp.maximum(conv + cb_ref[...], 0.0)            # bias + ReLU (f32 VPU)

    # Global average pool: f32 sum over the spatial axis, mean scale folded in.
    pooled = jnp.sum(conv.reshape(tn, hw, c1p), axis=1) * (1.0 / hw)   # (tn, C1p)

    # MLP layer 1: concat absorbed via split weight; backbone projection folded
    # into w1_img (exact, no activation in between).
    h = jnp.dot(user_ref[...], w1u_ref[...], preferred_element_type=f32)
    h = h + jnp.dot(pooled.astype(bf16), w1i_ref[...], preferred_element_type=f32)
    h = jnp.maximum(h + b1_ref[...], 0.0)

    # Layers 2-4: Linear (BN folded) + ReLU.  Dropout (eval mode) == identity.
    for li in range(3):
        h = jnp.maximum(
            jnp.dot(h.astype(bf16), ws_ref[li], preferred_element_type=f32)
            + bs_ref[li], 0.0)

    # Layer 5 (no activation), lane-dense 128-wide output block.
    o_ref[...] = (jnp.dot(h.astype(bf16), ws_ref[3], preferred_element_type=f32)
                  + bs_ref[3])


# ----------------------------------------------------------------------------
# Wrapper
# ----------------------------------------------------------------------------
def _ceil_to(x, m):
    return ((x + m - 1) // m) * m


def image_only_cnn_mlp_forward(user_embed, image, kparams, *,
                               output_dim, batch_tile=64):
    """user_embed: (N, 141) f32; image: (N, Cin, H, W) f32 -> (N, output_dim)."""
    n, cin, h, w = image.shape
    hw = h * w

    kpad, c1p = kparams["conv_w"].shape
    upad, hmax = kparams["w1_user"].shape

    # Batch tile: large M for the MXU, but keep >= 2 grid steps when the batch
    # permits so v7x's two TensorCores both get work under "parallel".
    tn = max(8, min(batch_tile, _ceil_to((n + 1) // 2, 8)))
    npad = _ceil_to(n, tn)

    # --- XLA glue: NCHW -> NHWC, pad, im2col, lane/batch padding, bf16 cast ---
    # TODO(synk): for production image sizes, move im2col into the kernel.
    x = jnp.transpose(image, (0, 2, 3, 1))
    xp = jnp.pad(x, ((0, 0), (1, 1), (1, 1), (0, 0)))
    cols = [xp[:, dh:dh + h, dw:dw + w, :] for dh in range(3) for dw in range(3)]
    patches = jnp.concatenate(cols, axis=-1).reshape(n, hw, 9 * cin)
    patches = jnp.pad(patches, ((0, npad - n), (0, 0), (0, kpad - 9 * cin)))
    patches = patches.reshape(npad * hw, kpad).astype(jnp.bfloat16)

    u = jnp.pad(user_embed,
                ((0, npad - n), (0, upad - user_embed.shape[1])))
    u = u.astype(jnp.bfloat16)

    def rows_spec(block):                                    # batch-tiled operands
        return pl.BlockSpec(block, lambda i: (i, 0))

    def resident2(shape):                                    # weights stay in VMEM
        return pl.BlockSpec(shape, lambda i: (0, 0))

    def resident3(shape):
        return pl.BlockSpec(shape, lambda i: (0, 0, 0))

    # Explicit scoped-VMEM budget: conv f32 intermediate + double-buffered I/O
    # + resident weights, with headroom.  Clamped to stay within v7x's 64 MiB.
    weight_bytes = sum(int(np.prod(kparams[k].shape)) * kparams[k].dtype.itemsize
                       for k in kparams)
    est = (2 * (tn * hw * kpad * 2)                          # patches (bf16) x2 buf
           + 2 * (tn * upad * 2 + tn * hmax * 4)             # user + output blocks
           + tn * hw * c1p * 4                               # conv intermediate f32
           + tn * hw * c1p * 2                               # reshape/temp slack
           + 2 * weight_bytes)
    vmem_limit = int(min(48 << 20, max(32 << 20, 2 * est)))

    flops = 2 * npad * (hw * kpad * c1p                      # conv matmul
                        + upad * hmax + c1p * hmax           # MLP layer 1
                        + 4 * hmax * hmax)                   # MLP layers 2-5
    bytes_accessed = (patches.size * 2 + u.size * 2
                      + npad * hmax * 4 + weight_bytes)

    out = pl.pallas_call(
        _fused_kernel,
        out_shape=jax.ShapeDtypeStruct((npad, hmax), jnp.float32),
        grid=(npad // tn,),
        in_specs=[
            rows_spec((tn * hw, kpad)),                      # patches
            rows_spec((tn, upad)),                           # user embeddings
            resident2(kparams["conv_w"].shape),
            resident2(kparams["conv_b"].shape),
            resident2(kparams["w1_user"].shape),
            resident2(kparams["w1_img"].shape),
            resident2(kparams["b1"].shape),
            resident3(kparams["w_stack"].shape),
            resident3(kparams["b_stack"].shape),
        ],
        out_specs=rows_spec((tn, hmax)),
        compiler_params=pltpu.CompilerParams(
            dimension_semantics=("parallel",),
            vmem_limit_bytes=vmem_limit),
        cost_estimate=pl.CostEstimate(flops=int(flops),
                                      transcendentals=0,
                                      bytes_accessed=int(bytes_accessed)),
    )(patches, u,
      kparams["conv_w"], kparams["conv_b"],
      kparams["w1_user"], kparams["w1_img"], kparams["b1"],
      kparams["w_stack"], kparams["b_stack"])

    return out[:n, :output_dim]


# ----------------------------------------------------------------------------
# Parameter construction (f32 "math" params) + kernel-side padded/bf16 params
# ----------------------------------------------------------------------------
def _uniform(key, shape, scale):
    return jax.random.uniform(key, shape, jnp.float32, -scale, scale)


def _pad2(a, rows, cols):
    r, c = a.shape
    return jnp.pad(a, ((0, rows - r), (0, cols - c)))


def fold_bn_into_linear(w, b, gamma, beta, mean, var, eps=1e-5):
    """y = BN(xW + b)  ==  x W' + b'   (exact in eval mode)."""
    s = gamma / jnp.sqrt(var + eps)
    return w * s[None, :], (b - mean) * s + beta


def build_params(key, cin, c1, img_embs_size, hidden_dim, output_dim):
    """Unpadded f32 parameters (reference math).  BN is folded into Linears."""
    keys = jax.random.split(key, 16)
    ki = iter(range(16))
    p = {}

    kconv = 9 * cin
    p["conv_w"] = _uniform(keys[next(ki)], (kconv, c1), 1.0 / np.sqrt(kconv))
    p["conv_b"] = _uniform(keys[next(ki)], (c1,), 1.0 / np.sqrt(kconv))
    p["proj_w"] = _uniform(keys[next(ki)], (c1, img_embs_size), 1.0 / np.sqrt(c1))
    p["proj_b"] = _uniform(keys[next(ki)], (img_embs_size,), 1.0 / np.sqrt(c1))

    input_dim = 141 + img_embs_size
    dims = [input_dim] + list(hidden_dim) + [output_dim]
    mlp = []
    for li in range(5):
        din, dout = dims[li], dims[li + 1]
        wm = _uniform(keys[next(ki)], (din, dout), 1.0 / np.sqrt(din))
        bm = _uniform(keys[next(ki)], (dout,), 1.0 / np.sqrt(din))
        if li < 4:  # Linear -> BatchNorm1d -> ReLU blocks
            ar = jnp.arange(dout, dtype=jnp.float32)
            gamma, beta = 1.0 + 0.01 * ar, 0.01 * ar
            mean, var = 0.02 * ar, 1.0 + 0.05 * ar
            wm, bm = fold_bn_into_linear(wm, bm, gamma, beta, mean, var)
        mlp.append((wm, bm))
    p["mlp"] = mlp
    return p


def prepare_kernel_params(p, user_dim=141):
    """Pad to lane-dense sizes, split W1 (concat absorption), fold the backbone
    projection into the image half of W1, stack layers 2..5, cast weights bf16."""
    bf16 = jnp.bfloat16
    k, c1 = p["conv_w"].shape
    kpad = _ceil_to(k, 8)
    c1p = _ceil_to(c1, 128)
    up = _ceil_to(user_dim, 8)

    mlp = p["mlp"]
    # One common lane-dense width for every MLP layer so layers 2..5 stack.
    hmax = max(_ceil_to(wm.shape[1], 128) for (wm, _) in mlp)

    kp = {
        "conv_w": _pad2(p["conv_w"], kpad, c1p).astype(bf16),
        "conv_b": _pad2(p["conv_b"].reshape(1, -1), 1, c1p),
    }

    # Layer 1: split the concat; fold the (activation-free) backbone projection
    # into the image half, in f32 BEFORE the bf16 cast (exact composition).
    w1, b1 = mlp[0]
    w1_user = w1[:user_dim]
    w1_img = w1[user_dim:]
    w1_img_eff = p["proj_w"] @ w1_img                       # (c1, h1)
    b1_eff = b1 + p["proj_b"] @ w1_img
    kp["w1_user"] = _pad2(w1_user, up, hmax).astype(bf16)
    kp["w1_img"] = _pad2(w1_img_eff, c1p, hmax).astype(bf16)
    kp["b1"] = _pad2(b1_eff.reshape(1, -1), 1, hmax)

    # Layers 2..5: pad to (hmax, hmax) / (1, hmax) and stack.
    kp["w_stack"] = jnp.stack(
        [_pad2(wm, hmax, hmax) for (wm, _) in mlp[1:]]).astype(bf16)
    kp["b_stack"] = jnp.stack(
        [_pad2(bm.reshape(1, -1), 1, hmax) for (_, bm) in mlp[1:]])
    return kp


# ----------------------------------------------------------------------------
# Pure-JAX f32 reference (same math, no Pallas, no padding / bf16 / folding)
# ----------------------------------------------------------------------------
def reference_forward(user_embed, image, params):
    n, cin, h, w = image.shape
    x = jnp.transpose(image, (0, 2, 3, 1))
    xp = jnp.pad(x, ((0, 0), (1, 1), (1, 1), (0, 0)))
    cols = [xp[:, dh:dh + h, dw:dw + w, :] for dh in range(3) for dw in range(3)]
    patches = jnp.concatenate(cols, axis=-1).reshape(n, h * w, 9 * cin)
    conv = jnp.maximum(jnp.einsum("nhk,kc->nhc", patches, params["conv_w"])
                       + params["conv_b"], 0.0)
    feat = jnp.mean(conv, axis=1) @ params["proj_w"] + params["proj_b"]
    hcur = jnp.concatenate([user_embed, feat], axis=1)
    for li, (wm, bm) in enumerate(params["mlp"]):
        hcur = hcur @ wm + bm
        if li < 4:
            hcur = jnp.maximum(hcur, 0.0)
    return hcur


# ----------------------------------------------------------------------------
if __name__ == "__main__":
    # N=64 with batch_tile=64 -> effective tile 32, grid of 2 "parallel" steps
    # (both v7x TensorCores get work); exercises batch tiling, resident weights,
    # stacked-layer indexing, and the lane-dense output path at runtime.
    N, CIN, H, W = 64, 3, 16, 16
    C1 = 8
    ARG = {"img_embs_size": 32, "hidden_dim": [64, 64, 32, 32],
           "output_dim": 8, "dropout": 0.2}

    key = jax.random.PRNGKey(0)
    k_img, k_usr, k_par = jax.random.split(key, 3)

    image = jax.random.normal(k_img, (N, CIN, H, W), jnp.float32)   # NCHW input
    user_embed = jax.random.normal(k_usr, (N, 141), jnp.float32)

    params = build_params(k_par, CIN, C1, ARG["img_embs_size"],
                          ARG["hidden_dim"], ARG["output_dim"])
    kparams = prepare_kernel_params(params)

    out = image_only_cnn_mlp_forward(user_embed, image, kparams,
                                     output_dim=ARG["output_dim"], batch_tile=64)
    out = jax.block_until_ready(out)

    ref = jax.block_until_ready(reference_forward(user_embed, image, params))
    assert out.shape == (N, ARG["output_dim"])
    # bf16 MXU operands with f32 accumulation -> loosened tolerance vs f32 ref.
    np.testing.assert_allclose(np.asarray(out), np.asarray(ref),
                               rtol=5e-2, atol=5e-2)

    print("KERNEL_OK")
</pallas_src>

<mosaic_0001>
module attributes {stable_mosaic.version = 11 : i64} {
  func.func @_fused_kernel(%arg0: i32, %arg1: memref<8192x32xbf16, #tpu.memory_space<vmem>>, %arg2: memref<32x144xbf16, #tpu.memory_space<vmem>>, %arg3: memref<32x128xbf16, #tpu.memory_space<vmem>>, %arg4: memref<1x128xf32, #tpu.memory_space<vmem>>, %arg5: memref<144x128xbf16, #tpu.memory_space<vmem>>, %arg6: memref<128x128xbf16, #tpu.memory_space<vmem>>, %arg7: memref<1x128xf32, #tpu.memory_space<vmem>>, %arg8: memref<4x128x128xbf16, #tpu.memory_space<vmem>>, %arg9: memref<4x1x128xf32, #tpu.memory_space<vmem>>, %arg10: memref<32x128xf32, #tpu.memory_space<vmem>>) attributes {dimension_semantics = [#tpu.dimension_semantics<parallel>], iteration_bounds = array<i64: 2>, scalar_prefetch = 0 : i64, scratch_operands = 0 : i64, tpu.core_type = #tpu.core_type<tc>, window_params = [{transform_indices = @transform_0, window_bounds = array<i64: 8192, 32>}, {transform_indices = @transform_1, window_bounds = array<i64: 32, 144>}, {pipeline_mode = #tpu.pipeline_mode<synchronous>, transform_indices = @transform_2, window_bounds = array<i64: 32, 128>}, {pipeline_mode = #tpu.pipeline_mode<synchronous>, transform_indices = @transform_3, window_bounds = array<i64: 1, 128>}, {pipeline_mode = #tpu.pipeline_mode<synchronous>, transform_indices = @transform_4, window_bounds = array<i64: 144, 128>}, {pipeline_mode = #tpu.pipeline_mode<synchronous>, transform_indices = @transform_5, window_bounds = array<i64: 128, 128>}, {pipeline_mode = #tpu.pipeline_mode<synchronous>, transform_indices = @transform_6, window_bounds = array<i64: 1, 128>}, {pipeline_mode = #tpu.pipeline_mode<synchronous>, transform_indices = @transform_7, window_bounds = array<i64: 4, 128, 128>}, {pipeline_mode = #tpu.pipeline_mode<synchronous>, transform_indices = @transform_8, window_bounds = array<i64: 4, 1, 128>}, {transform_indices = @transform_9, window_bounds = array<i64: 32, 128>}]} {
    %c0 = arith.constant 0 : index
    %c0_0 = arith.constant 0 : index
    %0 = vector.load %arg1[%c0, %c0_0] : memref<8192x32xbf16, #tpu.memory_space<vmem>>, vector<8192x32xbf16>
    %c0_1 = arith.constant 0 : index
    %c0_2 = arith.constant 0 : index
    %1 = vector.load %arg3[%c0_1, %c0_2] : memref<32x128xbf16, #tpu.memory_space<vmem>>, vector<32x128xbf16>
    %cst = arith.constant dense<0.000000e+00> : vector<8192x128xf32>
    %2 = tpu.matmul %0, %1, %cst {dimension_numbers = #tpu.dot_dimension_numbers<[1], [0], [0], [1], [0, 0, 1, 1], [], []>} : vector<8192x32xbf16>, vector<32x128xbf16>, vector<8192x128xf32> -> vector<8192x128xf32>
    %c0_3 = arith.constant 0 : index
    %c0_4 = arith.constant 0 : index
    %3 = vector.load %arg4[%c0_3, %c0_4] : memref<1x128xf32, #tpu.memory_space<vmem>>, vector<1x128xf32>
    %4 = vector.broadcast %3 : vector<1x128xf32> to vector<8192x128xf32>
    %5 = arith.addf %2, %4 : vector<8192x128xf32>
    %cst_5 = arith.constant 0.000000e+00 : f32
    %6 = vector.broadcast %cst_5 : f32 to vector<8192x128xf32>
    %7 = arith.maximumf %5, %6 : vector<8192x128xf32>
    %8 = vector.shape_cast %7 : vector<8192x128xf32> to vector<32x256x128xf32>
    %cst_6 = arith.constant dense<0.000000e+00> : vector<32x128xf32>
    %9 = vector.multi_reduction <add>, %8, %cst_6 [1] : vector<32x256x128xf32> to vector<32x128xf32>
    %cst_7 = arith.constant 3.906250e-03 : f32
    %10 = vector.broadcast %cst_7 : f32 to vector<32x128xf32>
    %11 = arith.mulf %9, %10 : vector<32x128xf32>
    %c0_8 = arith.constant 0 : index
    %c0_9 = arith.constant 0 : index
    %12 = vector.load %arg2[%c0_8, %c0_9] : memref<32x144xbf16, #tpu.memory_space<vmem>>, vector<32x144xbf16>
    %c0_10 = arith.constant 0 : index
    %c0_11 = arith.constant 0 : index
    %13 = vector.load %arg5[%c0_10, %c0_11] : memref<144x128xbf16, #tpu.memory_space<vmem>>, vector<144x128xbf16>
    %cst_12 = arith.constant dense<0.000000e+00> : vector<32x128xf32>
    %14 = tpu.matmul %12, %13, %cst_12 {dimension_numbers = #tpu.dot_dimension_numbers<[1], [0], [0], [1], [0, 0, 1, 1], [], []>} : vector<32x144xbf16>, vector<144x128xbf16>, vector<32x128xf32> -> vector<32x128xf32>
    %15 = arith.truncf %11 : vector<32x128xf32> to vector<32x128xbf16>
    %c0_13 = arith.constant 0 : index
    %c0_14 = arith.constant 0 : index
    %16 = vector.load %arg6[%c0_13, %c0_14] : memref<128x128xbf16, #tpu.memory_space<vmem>>, vector<128x128xbf16>
    %cst_15 = arith.constant dense<0.000000e+00> : vector<32x128xf32>
    %17 = tpu.matmul %15, %16, %cst_15 {dimension_numbers = #tpu.dot_dimension_numbers<[1], [0], [0], [1], [0, 0, 1, 1], [], []>} : vector<32x128xbf16>, vector<128x128xbf16>, vector<32x128xf32> -> vector<32x128xf32>
    %18 = arith.addf %14, %17 : vector<32x128xf32>
    %c0_16 = arith.constant 0 : index
    %c0_17 = arith.constant 0 : index
    %19 = vector.load %arg7[%c0_16, %c0_17] : memref<1x128xf32, #tpu.memory_space<vmem>>, vector<1x128xf32>
    %20 = vector.broadcast %19 : vector<1x128xf32> to vector<32x128xf32>
    %21 = arith.addf %18, %20 : vector<32x128xf32>
    %cst_18 = arith.constant 0.000000e+00 : f32
    %22 = vector.broadcast %cst_18 : f32 to vector<32x128xf32>
    %23 = arith.maximumf %21, %22 : vector<32x128xf32>
    %24 = arith.truncf %23 : vector<32x128xf32> to vector<32x128xbf16>
    %c0_19 = arith.constant 0 : index
    %c0_20 = arith.constant 0 : index
    %c0_21 = arith.constant 0 : index
    %25 = vector.load %arg8[%c0_19, %c0_20, %c0_21] : memref<4x128x128xbf16, #tpu.memory_space<vmem>>, vector<1x128x128xbf16>
    %26 = vector.shape_cast %25 : vector<1x128x128xbf16> to vector<128x128xbf16>
    %cst_22 = arith.constant dense<0.000000e+00> : vector<32x128xf32>
    %27 = tpu.matmul %24, %26, %cst_22 {dimension_numbers = #tpu.dot_dimension_numbers<[1], [0], [0], [1], [0, 0, 1, 1], [], []>} : vector<32x128xbf16>, vector<128x128xbf16>, vector<32x128xf32> -> vector<32x128xf32>
    %c0_23 = arith.constant 0 : index
    %c0_24 = arith.constant 0 : index
    %c0_25 = arith.constant 0 : index
    %28 = vector.load %arg9[%c0_23, %c0_24, %c0_25] : memref<4x1x128xf32, #tpu.memory_space<vmem>>, vector<1x1x128xf32>
    %29 = vector.shape_cast %28 : vector<1x1x128xf32> to vector<1x128xf32>
    %30 = vector.broadcast %29 : vector<1x128xf32> to vector<32x128xf32>
    %31 = arith.addf %27, %30 : vector<32x128xf32>
    %cst_26 = arith.constant 0.000000e+00 : f32
    %32 = vector.broadcast %cst_26 : f32 to vector<32x128xf32>
    %33 = arith.maximumf %31, %32 : vector<32x128xf32>
    %34 = arith.truncf %33 : vector<32x128xf32> to vector<32x128xbf16>
    %c1 = arith.constant 1 : index
    %c0_27 = arith.constant 0 : index
    %c0_28 = arith.constant 0 : index
    %35 = vector.load %arg8[%c1, %c0_27, %c0_28] : memref<4x128x128xbf16, #tpu.memory_space<vmem>>, vector<1x128x128xbf16>
    %36 = vector.shape_cast %35 : vector<1x128x128xbf16> to vector<128x128xbf16>
    %cst_29 = arith.constant dense<0.000000e+00> : vector<32x128xf32>
    %37 = tpu.matmul %34, %36, %cst_29 {dimension_numbers = #tpu.dot_dimension_numbers<[1], [0], [0], [1], [0, 0, 1, 1], [], []>} : vector<32x128xbf16>, vector<128x128xbf16>, vector<32x128xf32> -> vector<32x128xf32>
    %c1_30 = arith.constant 1 : index
    %c0_31 = arith.constant 0 : index
    %c0_32 = arith.constant 0 : index
    %38 = vector.load %arg9[%c1_30, %c0_31, %c0_32] : memref<4x1x128xf32, #tpu.memory_space<vmem>>, vector<1x1x128xf32>
    %39 = vector.shape_cast %38 : vector<1x1x128xf32> to vector<1x128xf32>
    %40 = vector.broadcast %39 : vector<1x128xf32> to vector<32x128xf32>
    %41 = arith.addf %37, %40 : vector<32x128xf32>
    %cst_33 = arith.constant 0.000000e+00 : f32
    %42 = vector.broadcast %cst_33 : f32 to vector<32x128xf32>
    %43 = arith.maximumf %41, %42 : vector<32x128xf32>
    %44 = arith.truncf %43 : vector<32x128xf32> to vector<32x128xbf16>
    %c2 = arith.constant 2 : index
    %c0_34 = arith.constant 0 : index
    %c0_35 = arith.constant 0 : index
    %45 = vector.load %arg8[%c2, %c0_34, %c0_35] : memref<4x128x128xbf16, #tpu.memory_space<vmem>>, vector<1x128x128xbf16>
    %46 = vector.shape_cast %45 : vector<1x128x128xbf16> to vector<128x128xbf16>
    %cst_36 = arith.constant dense<0.000000e+00> : vector<32x128xf32>
    %47 = tpu.matmul %44, %46, %cst_36 {dimension_numbers = #tpu.dot_dimension_numbers<[1], [0], [0], [1], [0, 0, 1, 1], [], []>} : vector<32x128xbf16>, vector<128x128xbf16>, vector<32x128xf32> -> vector<32x128xf32>
    %c2_37 = arith.constant 2 : index
    %c0_38 = arith.constant 0 : index
    %c0_39 = arith.constant 0 : index
    %48 = vector.load %arg9[%c2_37, %c0_38, %c0_39] : memref<4x1x128xf32, #tpu.memory_space<vmem>>, vector<1x1x128xf32>
    %49 = vector.shape_cast %48 : vector<1x1x128xf32> to vector<1x128xf32>
    %50 = vector.broadcast %49 : vector<1x128xf32> to vector<32x128xf32>
    %51 = arith.addf %47, %50 : vector<32x128xf32>
    %cst_40 = arith.constant 0.000000e+00 : f32
    %52 = vector.broadcast %cst_40 : f32 to vector<32x128xf32>
    %53 = arith.maximumf %51, %52 : vector<32x128xf32>
    %54 = arith.truncf %53 : vector<32x128xf32> to vector<32x128xbf16>
    %c3 = arith.constant 3 : index
    %c0_41 = arith.constant 0 : index
    %c0_42 = arith.constant 0 : index
    %55 = vector.load %arg8[%c3, %c0_41, %c0_42] : memref<4x128x128xbf16, #tpu.memory_space<vmem>>, vector<1x128x128xbf16>
    %56 = vector.shape_cast %55 : vector<1x128x128xbf16> to vector<128x128xbf16>
    %cst_43 = arith.constant dense<0.000000e+00> : vector<32x128xf32>
    %57 = tpu.matmul %54, %56, %cst_43 {dimension_numbers = #tpu.dot_dimension_numbers<[1], [0], [0], [1], [0, 0, 1, 1], [], []>} : vector<32x128xbf16>, vector<128x128xbf16>, vector<32x128xf32> -> vector<32x128xf32>
    %c3_44 = arith.constant 3 : index
    %c0_45 = arith.constant 0 : index
    %c0_46 = arith.constant 0 : index
    %58 = vector.load %arg9[%c3_44, %c0_45, %c0_46] : memref<4x1x128xf32, #tpu.memory_space<vmem>>, vector<1x1x128xf32>
    %59 = vector.shape_cast %58 : vector<1x1x128xf32> to vector<1x128xf32>
    %60 = vector.broadcast %59 : vector<1x128xf32> to vector<32x128xf32>
    %61 = arith.addf %57, %60 : vector<32x128xf32>
    %c0_47 = arith.constant 0 : index
    %c0_48 = arith.constant 0 : index
    %62 = vector.load %arg10[%c0_47, %c0_48] : memref<32x128xf32, #tpu.memory_space<vmem>>, vector<32x128xf32>
    tpu.vector_store %arg10[%c0_47, %c0_48], %61 {strides = array<i32>} : memref<32x128xf32, #tpu.memory_space<vmem>>, vector<32x128xf32>,
    return
  }
  func.func @transform_0(%arg0: i32) -> (i32, i32) {
    %c0_i32 = arith.constant 0 : i32
    %c0_i32_0 = arith.constant 0 : i32
    return %arg0, %c0_i32 : i32, i32
  }
  func.func @transform_1(%arg0: i32) -> (i32, i32) {
    %c0_i32 = arith.constant 0 : i32
    %c0_i32_0 = arith.constant 0 : i32
    return %arg0, %c0_i32 : i32, i32
  }
  func.func @transform_2(%arg0: i32) -> (i32, i32) {
    %c0_i32 = arith.constant 0 : i32
    %c0_i32_0 = arith.constant 0 : i32
    %c0_i32_1 = arith.constant 0 : i32
    return %c0_i32, %c0_i32_0 : i32, i32
  }
  func.func @transform_3(%arg0: i32) -> (i32, i32) {
    %c0_i32 = arith.constant 0 : i32
    %c0_i32_0 = arith.constant 0 : i32
    %c0_i32_1 = arith.constant 0 : i32
    return %c0_i32, %c0_i32_0 : i32, i32
  }
  func.func @transform_4(%arg0: i32) -> (i32, i32) {
    %c0_i32 = arith.constant 0 : i32
    %c0_i32_0 = arith.constant 0 : i32
    %c0_i32_1 = arith.constant 0 : i32
    return %c0_i32, %c0_i32_0 : i32, i32
  }
  func.func @transform_5(%arg0: i32) -> (i32, i32) {
    %c0_i32 = arith.constant 0 : i32
    %c0_i32_0 = arith.constant 0 : i32
    %c0_i32_1 = arith.constant 0 : i32
    return %c0_i32, %c0_i32_0 : i32, i32
  }
  func.func @transform_6(%arg0: i32) -> (i32, i32) {
    %c0_i32 = arith.constant 0 : i32
    %c0_i32_0 = arith.constant 0 : i32
    %c0_i32_1 = arith.constant 0 : i32
    return %c0_i32, %c0_i32_0 : i32, i32
  }
  func.func @transform_7(%arg0: i32) -> (i32, i32, i32) {
    %c0_i32 = arith.constant 0 : i32
    %c0_i32_0 = arith.constant 0 : i32
    %c0_i32_1 = arith.constant 0 : i32
    %c0_i32_2 = arith.constant 0 : i32
    return %c0_i32, %c0_i32_0, %c0_i32_1 : i32, i32, i32
  }
  func.func @transform_8(%arg0: i32) -> (i32, i32, i32) {
    %c0_i32 = arith.constant 0 : i32
    %c0_i32_0 = arith.constant 0 : i32
    %c0_i32_1 = arith.constant 0 : i32
    %c0_i32_2 = arith.constant 0 : i32
    return %c0_i32, %c0_i32_0, %c0_i32_1 : i32, i32, i32
  }
  func.func @transform_9(%arg0: i32) -> (i32, i32) {
    %c0_i32 = arith.constant 0 : i32
    %c0_i32_0 = arith.constant 0 : i32
    return %arg0, %c0_i32 : i32, i32
  }
}

</mosaic_0001>

<llo_original>
// kernel: tpu_custom_call.1
$region0: #{tpu_custom_call.1}
  #allocation0 [shape = 'u32[]', space=smem, size = 0x4, offset = 0x4, fixed_abs, tag = 'smem constant byte address 0x4 - core index']
  #allocation1 [shape = 'u32[144,128]{1,0:T(1,128)}', space=vmem, size = 0x12000, scoped, tag = 'internal scratch']
  %s0 = inlined_call_operand.vmem [shape: bf16[16384,32], index: 0, kind: input, shape index: {}]
  %s1 = inlined_call_operand.vmem [shape: bf16[64,144], index: 1, kind: input, shape index: {}]
  %s2 = inlined_call_operand.vmem [shape: bf16[32,128], index: 2, kind: input, shape index: {}]
  %s3 = inlined_call_operand.vmem [shape: f32[1,128], index: 3, kind: input, shape index: {}]
  %s4 = inlined_call_operand.vmem [shape: bf16[144,128], index: 4, kind: input, shape index: {}]
  %s5 = inlined_call_operand.vmem [shape: bf16[128,128], index: 5, kind: input, shape index: {}]
  %s6 = inlined_call_operand.vmem [shape: f32[1,128], index: 6, kind: input, shape index: {}]
  %s7 = inlined_call_operand.vmem [shape: bf16[4,128,128], index: 7, kind: input, shape index: {}]
  %s8 = inlined_call_operand.vmem [shape: f32[4,1,128], index: 8, kind: input, shape index: {}]
  %s9 = inlined_call_operand.hbm [shape: f32[64,128], index: 9, kind: output, shape index: {}]
  %s10 = sld [smem:[#allocation0]]
  $region69: #{tpu_custom_call.1} parent=0
    _
  %s12 = ssub.s32 1, %s10
  %s13 = scalar_select 0, %s12, %s10
  $region1: #{tpu_custom_call.1} parent=0
    #allocation2 [shape = 'u8[32768]{0}', space=vmem, size = 0x8000, scoped, tag = 'output window, operand 0']
    #allocation3 [shape = 's32[2]{0}', space=sflag, size = 0x8, scoped, tag = 'scoped memory for tpu_custom_call.1']
    %14 = vsyncpa [#allocation3], 0
    %s15 = scalar_lea.sflag [#allocation3], 1
    %16 = vsyncpa %s15, 0
    loop: start=0, step=1, limit=4
    $region2: #{tpu_custom_call.1} parent=1 // loop_pre_header
      _
    $region3: #{tpu_custom_call.1} parent=1 // loop_header
      %s18 = sphi 0, %s22
      %p19 = scmp.ge.s32.totalorder %s18, 4
      %s28 = sphi 0, %s30
      %s31 = sphi 0, %s28
      %s32 = sphi 0, %s31
      %s48 = sphi 0, %s32
      %s54 = sphi 0, %s56
      %s57 = sphi 0, %s54
      %s58 = sphi 0, %s57
      %s74 = sphi 0, %s58
      %s78 = sphi 0, %s78
      %s80 = sphi 0, %s78
      %s81 = sphi 0, %s80
      %s95 = sphi 0, %s81
      %s99 = sphi 0, %s99
      %s101 = sphi 0, %s99
      %s102 = sphi 0, %s101
      %s116 = sphi 0, %s102
      %s120 = sphi 0, %s120
      %s122 = sphi 0, %s120
      %s123 = sphi 0, %s122
      %s137 = sphi 0, %s123
      %s141 = sphi 0, %s141
      %s143 = sphi 0, %s141
      %s144 = sphi 0, %s143
      %s158 = sphi 0, %s144
      %s162 = sphi 0, %s162
      %s164 = sphi 0, %s162
      %s165 = sphi 0, %s164
      %s179 = sphi 0, %s165
      %s183 = sphi 0, %s183
      %s185 = sphi 0, %s183
      %s186 = sphi 0, %s185
      %s200 = sphi 0, %s186
      %s204 = sphi 0, %s204
      %s206 = sphi 0, %s204
      %s207 = sphi 0, %s206
      %s221 = sphi 0, %s207
      %s227 = sphi 0, %s229
      %s230 = sphi 0, %s227
      %s231 = sphi 0, %s230
      %s247 = sphi 0, %s231
    $region4: #{tpu_custom_call.1} parent=1 // loop_header_branch
      %21 = sbr.rel (%p19) target = $region8
    $region5: #{tpu_custom_call.1} parent=1 // loop_body
      %s23 = ssub.s32 %s18, 1
      %s24 = ssub.s32 %s18, 2
      %s25 = sadd.s32 %s18, 1
      %s26 = ssub.s32 %s18, %s25
      %p27 = scmp.eq.s32.totalorder %s26, 0
      %s29 = sadd.s32 %s28, 1
      %s30 = scalar_select %p27, %s28, %s29
      %p33 = pneg %p27
      %p34 = scmp.eq.s32.totalorder %s18, 1
      %p35 = por %p33, %p34
      %p36 = scmp.ne.s32.totalorder %s28, %s31
      %p37 = scmp.eq.s32.totalorder %s18, 0
      %p38 = por %p36, %p37
      %p39 = scmp.ne.s32.totalorder %s28, %s31
      %p40 = scmp.eq.s32.totalorder %s23, 1
      %p41 = por %p39, %p40
      %p42 = scmp.ne.s32.totalorder %s31, %s32
      %p43 = scmp.eq.s32.totalorder %s23, 0
      %p44 = por %p42, %p43
      %p45 = scmp.ne.s32.totalorder %s31, %s32
      %p46 = scmp.eq.s32.totalorder %s24, 1
      %p47 = por %p45, %p46
      %p49 = scmp.ne.s32.totalorder %s32, %s48
      %p50 = scmp.eq.s32.totalorder %s24, 0
      %p51 = por %p49, %p50
      %s52 = ssub.s32 %s18, %s25
      %p53 = scmp.eq.s32.totalorder %s52, 0
      %s55 = sadd.s32 %s54, 1
      %s56 = scalar_select %p53, %s54, %s55
      %p59 = pneg %p53
      %p60 = scmp.eq.s32.totalorder %s18, 1
      %p61 = por %p59, %p60
      %p62 = scmp.ne.s32.totalorder %s54, %s57
      %p63 = scmp.eq.s32.totalorder %s18, 0
      %p64 = por %p62, %p63
      %p65 = scmp.ne.s32.totalorder %s54, %s57
      %p66 = scmp.eq.s32.totalorder %s23, 1
      %p67 = por %p65, %p66
      %p68 = scmp.ne.s32.totalorder %s57, %s58
      %p69 = scmp.eq.s32.totalorder %s23, 0
      %p70 = por %p68, %p69
      %p71 = scmp.ne.s32.totalorder %s57, %s58
      %p72 = scmp.eq.s32.totalorder %s24, 1
      %p73 = por %p71, %p72
      %p75 = scmp.ne.s32.totalorder %s58, %s74
      %p76 = scmp.eq.s32.totalorder %s24, 0
      %p77 = por %p75, %p76
      %s79 = sadd.s32 %s78, 1
      %p82 = scmp.eq.s32.totalorder %s18, 1
      %p83 = scmp.ne.s32.totalorder %s78, %s80
      %p84 = scmp.eq.s32.totalorder %s18, 0
      %p85 = por %p83, %p84
      %p86 = scmp.ne.s32.totalorder %s78, %s80
      %p87 = scmp.eq.s32.totalorder %s23, 1
      %p88 = por %p86, %p87
      %p89 = scmp.ne.s32.totalorder %s80, %s81
      %p90 = scmp.eq.s32.totalorder %s23, 0
      %p91 = por %p89, %p90
      %p92 = scmp.ne.s32.totalorder %s80, %s81
      %p93 = scmp.eq.s32.totalorder %s24, 1
      %p94 = por %p92, %p93
      %p96 = scmp.ne.s32.totalorder %s81, %s95
      %p97 = scmp.eq.s32.totalorder %s24, 0
      %p98 = por %p96, %p97
      %s100 = sadd.s32 %s99, 1
      %p103 = scmp.eq.s32.totalorder %s18, 1
      %p104 = scmp.ne.s32.totalorder %s99, %s101
      %p105 = scmp.eq.s32.totalorder %s18, 0
      %p106 = por %p104, %p105
      %p107 = scmp.ne.s32.totalorder %s99, %s101
      %p108 = scmp.eq.s32.totalorder %s23, 1
      %p109 = por %p107, %p108
      %p110 = scmp.ne.s32.totalorder %s101, %s102
      %p111 = scmp.eq.s32.totalorder %s23, 0
      %p112 = por %p110, %p111
      %p113 = scmp.ne.s32.totalorder %s101, %s102
      %p114 = scmp.eq.s32.totalorder %s24, 1
      %p115 = por %p113, %p114
      %p117 = scmp.ne.s32.totalorder %s102, %s116
      %p118 = scmp.eq.s32.totalorder %s24, 0
      %p119 = por %p117, %p118
      %s121 = sadd.s32 %s120, 1
      %p124 = scmp.eq.s32.totalorder %s18, 1
      %p125 = scmp.ne.s32.totalorder %s120, %s122
      %p126 = scmp.eq.s32.totalorder %s18, 0
      %p127 = por %p125, %p126
      %p128 = scmp.ne.s32.totalorder %s120, %s122
      %p129 = scmp.eq.s32.totalorder %s23, 1
      %p130 = por %p128, %p129
      %p131 = scmp.ne.s32.totalorder %s122, %s123
      %p132 = scmp.eq.s32.totalorder %s23, 0
      %p133 = por %p131, %p132
      %p134 = scmp.ne.s32.totalorder %s122, %s123
      %p135 = scmp.eq.s32.totalorder %s24, 1
      %p136 = por %p134, %p135
      %p138 = scmp.ne.s32.totalorder %s123, %s137
      %p139 = scmp.eq.s32.totalorder %s24, 0
      %p140 = por %p138, %p139
      %s142 = sadd.s32 %s141, 1
      %p145 = scmp.eq.s32.totalorder %s18, 1
      %p146 = scmp.ne.s32.totalorder %s141, %s143
      %p147 = scmp.eq.s32.totalorder %s18, 0
      %p148 = por %p146, %p147
      %p149 = scmp.ne.s32.totalorder %s141, %s143
      %p150 = scmp.eq.s32.totalorder %s23, 1
      %p151 = por %p149, %p150
      %p152 = scmp.ne.s32.totalorder %s143, %s144
      %p153 = scmp.eq.s32.totalorder %s23, 0
      %p154 = por %p152, %p153
      %p155 = scmp.ne.s32.totalorder %s143, %s144
      %p156 = scmp.eq.s32.totalorder %s24, 1
      %p157 = por %p155, %p156
      %p159 = scmp.ne.s32.totalorder %s144, %s158
      %p160 = scmp.eq.s32.totalorder %s24, 0
      %p161 = por %p159, %p160
      %s163 = sadd.s32 %s162, 1
      %p166 = scmp.eq.s32.totalorder %s18, 1
      %p167 = scmp.ne.s32.totalorder %s162, %s164
      %p168 = scmp.eq.s32.totalorder %s18, 0
      %p169 = por %p167, %p168
      %p170 = scmp.ne.s32.totalorder %s162, %s164
      %p171 = scmp.eq.s32.totalorder %s23, 1
      %p172 = por %p170, %p171
      %p173 = scmp.ne.s32.totalorder %s164, %s165
      %p174 = scmp.eq.s32.totalorder %s23, 0
      %p175 = por %p173, %p174
      %p176 = scmp.ne.s32.totalorder %s164, %s165
      %p177 = scmp.eq.s32.totalorder %s24, 1
      %p178 = por %p176, %p177
      %p180 = scmp.ne.s32.totalorder %s165, %s179
      %p181 = scmp.eq.s32.totalorder %s24, 0
      %p182 = por %p180, %p181
      %s184 = sadd.s32 %s183, 1
      %p187 = scmp.eq.s32.totalorder %s18, 1
      %p188 = scmp.ne.s32.totalorder %s183, %s185
      %p189 = scmp.eq.s32.totalorder %s18, 0
      %p190 = por %p188, %p189
      %p191 = scmp.ne.s32.totalorder %s183, %s185
      %p192 = scmp.eq.s32.totalorder %s23, 1
      %p193 = por %p191, %p192
      %p194 = scmp.ne.s32.totalorder %s185, %s186
      %p195 = scmp.eq.s32.totalorder %s23, 0
      %p196 = por %p194, %p195
      %p197 = scmp.ne.s32.totalorder %s185, %s186
      %p198 = scmp.eq.s32.totalorder %s24, 1
      %p199 = por %p197, %p198
      %p201 = scmp.ne.s32.totalorder %s186, %s200
      %p202 = scmp.eq.s32.totalorder %s24, 0
      %p203 = por %p201, %p202
      %s205 = sadd.s32 %s204, 1
      %p208 = scmp.eq.s32.totalorder %s18, 1
      %p209 = scmp.ne.s32.totalorder %s204, %s206
      %p210 = scmp.eq.s32.totalorder %s18, 0
      %p211 = por %p209, %p210
      %p212 = scmp.ne.s32.totalorder %s204, %s206
      %p213 = scmp.eq.s32.totalorder %s23, 1
      %p214 = por %p212, %p213
      %p215 = scmp.ne.s32.totalorder %s206, %s207
      %p216 = scmp.eq.s32.totalorder %s23, 0
      %p217 = por %p215, %p216
      %p218 = scmp.ne.s32.totalorder %s206, %s207
      %p219 = scmp.eq.s32.totalorder %s24, 1
      %p220 = por %p218, %p219
      %p222 = scmp.ne.s32.totalorder %s207, %s221
      %p223 = scmp.eq.s32.totalorder %s24, 0
      %p224 = por %p222, %p223
      %s225 = ssub.s32 %s18, %s25
      %p226 = scmp.eq.s32.totalorder %s225, 0
      %s228 = sadd.s32 %s227, 1
      %s229 = scalar_select %p226, %s227, %s228
      %p232 = pneg %p226
      %p233 = scmp.eq.s32.totalorder %s18, 1
      %p234 = por %p232, %p233
      %p235 = scmp.ne.s32.totalorder %s227, %s230
      %p236 = scmp.eq.s32.totalorder %s18, 0
      %p237 = por %p235, %p236
      %p238 = scmp.ne.s32.totalorder %s227, %s230
      %p239 = scmp.eq.s32.totalorder %s23, 1
      %p240 = por %p238, %p239
      %p241 = scmp.ne.s32.totalorder %s230, %s231
      %p242 = scmp.eq.s32.totalorder %s23, 0
      %p243 = por %p241, %p242
      %p244 = scmp.ne.s32.totalorder %s230, %s231
      %p245 = scmp.eq.s32.totalorder %s24, 1
      %p246 = por %p244, %p245
      %p248 = scmp.ne.s32.totalorder %s231, %s247
      %p249 = scmp.eq.s32.totalorder %s24, 0
      %p250 = por %p248, %p249
      %p251 = scmp.le.s32.totalorder 1, %s18
      %p252 = scmp.lt.s32.totalorder %s18, 3
      %p253 = pnand %p251, %p252
      %p254 = pneg %p253
      // Predicated region
      $region9: #{tpu_custom_call.1} parent=5 // pred_check
        _
      $region10: #{tpu_custom_call.1} parent=5 // pred_check_branch
        %256 = sbr.rel (%p253) target = $region12
      $region11: #{tpu_custom_call.1} parent=5 // pred_region
        %s257 = ssub.s32 %s18, 1
        // Predicated region
        $region13: #{tpu_custom_call.1} parent=11 // pred_check
          %p258 = pneg %p91
        $region14: #{tpu_custom_call.1} parent=11 // pred_check_branch
          %260 = sbr.rel (%p258) target = $region16
        $region15: #{tpu_custom_call.1} parent=11 // pred_region
          _
        $region16: #{tpu_custom_call.1} parent=11 // pred_fallthru
          _
        // Predicated region
        $region17: #{tpu_custom_call.1} parent=11 // pred_check
          %p261 = pneg %p112
        $region18: #{tpu_custom_call.1} parent=11 // pred_check_branch
          %263 = sbr.rel (%p261) target = $region20
        $region19: #{tpu_custom_call.1} parent=11 // pred_region
          _
        $region20: #{tpu_custom_call.1} parent=11 // pred_fallthru
          _
        // Predicated region
        $region21: #{tpu_custom_call.1} parent=11 // pred_check
          %p264 = pneg %p133
        $region22: #{tpu_custom_call.1} parent=11 // pred_check_branch
          %266 = sbr.rel (%p264) target = $region24
        $region23: #{tpu_custom_call.1} parent=11 // pred_region
          _
        $region24: #{tpu_custom_call.1} parent=11 // pred_fallthru
          _
        // Predicated region
        $region25: #{tpu_custom_call.1} parent=11 // pred_check
          %p267 = pneg %p154
        $region26: #{tpu_custom_call.1} parent=11 // pred_check_branch
          %269 = sbr.rel (%p267) target = $region28
        $region27: #{tpu_custom_call.1} parent=11 // pred_region
          _
        $region28: #{tpu_custom_call.1} parent=11 // pred_fallthru
          _
        // Predicated region
        $region29: #{tpu_custom_call.1} parent=11 // pred_check
          %p270 = pneg %p175
        $region30: #{tpu_custom_call.1} parent=11 // pred_check_branch
          %272 = sbr.rel (%p270) target = $region32
        $region31: #{tpu_custom_call.1} parent=11 // pred_region
          _
        $region32: #{tpu_custom_call.1} parent=11 // pred_fallthru
          _
        // Predicated region
        $region33: #{tpu_custom_call.1} parent=11 // pred_check
          %p273 = pneg %p196
        $region34: #{tpu_custom_call.1} parent=11 // pred_check_branch
          %275 = sbr.rel (%p273) target = $region36
        $region35: #{tpu_custom_call.1} parent=11 // pred_region
          _
        $region36: #{tpu_custom_call.1} parent=11 // pred_fallthru
          _
        // Predicated region
        $region37: #{tpu_custom_call.1} parent=11 // pred_check
          %p276 = pneg %p217
        $region38: #{tpu_custom_call.1} parent=11 // pred_check_branch
          %278 = sbr.rel (%p276) target = $region40
        $region39: #{tpu_custom_call.1} parent=11 // pred_region
          _
        $region40: #{tpu_custom_call.1} parent=11 // pred_fallthru
          _
      $region12: #{tpu_custom_call.1} parent=5 // pred_fallthru
        _
      %p279 = scmp.lt.s32.totalorder %s18, 2
      // Predicated region
      $region41: #{tpu_custom_call.1} parent=5 // pred_check
        %p280 = pneg %p279
      $region42: #{tpu_custom_call.1} parent=5 // pred_check_branch
        %282 = sbr.rel (%p280) target = $region44
      $region43: #{tpu_custom_call.1} parent=5 // pred_region
        // Predicated region
        $region45: #{tpu_custom_call.1} parent=43 // pred_check
          %p283 = pneg %p38
        $region46: #{tpu_custom_call.1} parent=43 // pred_check_branch
          %285 = sbr.rel (%p283) target = $region48
        $region47: #{tpu_custom_call.1} parent=43 // pred_region
          %s286 = smul.u32 1024, %s18
          %p287 = scmp.lt.s32.totalorder %s286, 2047
          %s288 = scalar_select %p287, %s286, 2047
          %s289 = smul.addr %s288, 4
          %s290 = scalar_lea.vmem %s0, %s289
          %s291 = smul.u32 1024, %s18
        $region48: #{tpu_custom_call.1} parent=43 // pred_fallthru
          _
        // Predicated region
        $region49: #{tpu_custom_call.1} parent=43 // pred_check
          %p292 = pneg %p64
        $region50: #{tpu_custom_call.1} parent=43 // pred_check_branch
          %294 = sbr.rel (%p292) target = $region52
        $region51: #{tpu_custom_call.1} parent=43 // pred_region
          %s295 = smul.u32 4, %s18
          %p296 = scmp.lt.s32.totalorder %s295, 7
          %s297 = scalar_select %p296, %s295, 7
          %s298 = smul.addr %s297, 2
          %s299 = smul.addr %s298, 4
          %s300 = scalar_lea.vmem %s1, %s299
          %s301 = smul.u32 4, %s18
        $region52: #{tpu_custom_call.1} parent=43 // pred_fallthru
          _
      $region44: #{tpu_custom_call.1} parent=5 // pred_fallthru
        _
      %p302 = scmp.le.s32.totalorder 1, %s18
      %p303 = scmp.lt.s32.totalorder %s18, 3
      %p304 = pnand %p302, %p303
      %p305 = pneg %p304
      // Predicated region
      $region53: #{tpu_custom_call.1} parent=5 // pred_check
        _
      $region54: #{tpu_custom_call.1} parent=5 // pred_check_branch
        %307 = sbr.rel (%p304) target = $region56
      $region55: #{tpu_custom_call.1} parent=5 // pred_region
        %s308 = ssub.s32 %s18, 1
        %s309 = smul.u32 1024, %s23
        %p310 = scmp.lt.s32.totalorder %s309, 2047
        %s311 = scalar_select %p310, %s309, 2047
        %s312 = smul.addr %s311, 4
        %s313 = scalar_lea.vmem %s0, %s312
        %p314 = pneg %p44
        %p315 = pneg %p41
        %s316 = smul.u32 4, %s23
        %p317 = scmp.lt.s32.totalorder %s316, 7
        %s318 = scalar_select %p317, %s316, 7
        %s319 = smul.addr %s318, 2
        %s320 = smul.addr %s319, 4
        %s321 = scalar_lea.vmem %s1, %s320
        %p322 = pneg %p70
        %p323 = pneg %p67
        %p324 = pneg %p91
        %p325 = pneg %p88
        %p326 = pneg %p112
        %p327 = pneg %p109
        %p328 = pneg %p133
        %p329 = pneg %p130
        %p330 = pneg %p154
        %p331 = pneg %p151
        %p332 = pneg %p175
        %p333 = pneg %p172
        %p334 = pneg %p196
        %p335 = pneg %p193
        %p336 = pneg %p217
        %p337 = pneg %p214
        %p338 = pneg %p243
        %p339 = pneg %p240
        %s340 = sand.u32 %s230, 1
        %s341 = scalar_lea.sflag [#allocation3], %s340
        %s342 = sand.u32 %s230, 1
        %s343 = smul.addr %s342, 32
        %s344 = scalar_lea.vmem [#allocation2], %s343
        %s345 = smul.u32 1024, %s23
        %p346 = scmp.lt.s32.totalorder %s345, 2047
        %s347 = scalar_select %p346, %s345, 2047
        %s348 = smul.addr %s347, 4
        %s349 = scalar_lea.vmem %s0, %s348
        %s350 = smul.u32 1024, %s23
        %s351 = smul.u32 4, %s23
        %p352 = scmp.lt.s32.totalorder %s351, 7
        %s353 = scalar_select %p352, %s351, 7
        %s354 = smul.addr %s353, 2
        %s355 = smul.addr %s354, 4
        %s356 = scalar_lea.vmem %s1, %s355
        %s357 = smul.u32 4, %s23
        %s358 = smul.u32 4, %s23
        %v360 = vld [vmem:[%s349] sm:$0xf]
        %v361 = vld [vmem:[%s349 + $0x4] sm:$0xf]
        %v362 = vld [vmem:[%s349 + $0x8] sm:$0xf]
        %v363 = vld [vmem:[%s349 + $0xc] sm:$0xf]
        %v364 = vld [vmem:[%s349 + $0x10] sm:$0xf]
        %v365 = vld [vmem:[%s349 + $0x14] sm:$0xf]
        %v366 = vld [vmem:[%s349 + $0x18] sm:$0xf]
        %v367 = vld [vmem:[%s349 + $0x1c] sm:$0xf]
        %v368 = vld [vmem:[%s349 + $0x20] sm:$0xf]
        %v369 = vld [vmem:[%s349 + $0x24] sm:$0xf]
        %v370 = vld [vmem:[%s349 + $0x28] sm:$0xf]
        %v371 = vld [vmem:[%s349 + $0x2c] sm:$0xf]
        %v372 = vld [vmem:[%s349 + $0x30] sm:$0xf]
        %v373 = vld [vmem:[%s349 + $0x34] sm:$0xf]
        %v374 = vld [vmem:[%s349 + $0x38] sm:$0xf]
        %v375 = vld [vmem:[%s349 + $0x3c] sm:$0xf]
        %v376 = vld [vmem:[%s349 + $0x40] sm:$0xf]
        %v377 = vld [vmem:[%s349 + $0x44] sm:$0xf]
        %v378 = vld [vmem:[%s349 + $0x48] sm:$0xf]
        %v379 = vld [vmem:[%s349 + $0x4c] sm:$0xf]
        %v380 = vld [vmem:[%s349 + $0x50] sm:$0xf]
        %v381 = vld [vmem:[%s349 + $0x54] sm:$0xf]
        %v382 = vld [vmem:[%s349 + $0x58] sm:$0xf]
        %v383 = vld [vmem:[%s349 + $0x5c] sm:$0xf]
        %v384 = vld [vmem:[%s349 + $0x60] sm:$0xf]
        %v385 = vld [vmem:[%s349 + $0x64] sm:$0xf]
        %v386 = vld [vmem:[%s349 + $0x68] sm:$0xf]
        %v387 = vld [vmem:[%s349 + $0x6c] sm:$0xf]
        %v388 = vld [vmem:[%s349 + $0x70] sm:$0xf]
        %v389 = vld [vmem:[%s349 + $0x74] sm:$0xf]
        %v390 = vld [vmem:[%s349 + $0x78] sm:$0xf]
        %v391 = vld [vmem:[%s349 + $0x7c] sm:$0xf]
        %v392 = vld [vmem:[%s349 + $0x80] sm:$0xf]
        %v393 = vld [vmem:[%s349 + $0x84] sm:$0xf]
        %v394 = vld [vmem:[%s349 + $0x88] sm:$0xf]
        %v395 = vld [vmem:[%s349 + $0x8c] sm:$0xf]
        %v396 = vld [vmem:[%s349 + $0x90] sm:$0xf]
        %v397 = vld [vmem:[%s349 + $0x94] sm:$0xf]
        %v398 = vld [vmem:[%s349 + $0x98] sm:$0xf]
        %v399 = vld [vmem:[%s349 + $0x9c] sm:$0xf]
        %v400 = vld [vmem:[%s349 + $0xa0] sm:$0xf]
        %v401 = vld [vmem:[%s349 + $0xa4] sm:$0xf]
        %v402 = vld [vmem:[%s349 + $0xa8] sm:$0xf]
        %v403 = vld [vmem:[%s349 + $0xac] sm:$0xf]
        %v404 = vld [vmem:[%s349 + $0xb0] sm:$0xf]
        %v405 = vld [vmem:[%s349 + $0xb4] sm:$0xf]
        %v406 = vld [vmem:[%s349 + $0xb8] sm:$0xf]
        %v407 = vld [vmem:[%s349 + $0xbc] sm:$0xf]
        %v408 = vld [vmem:[%s349 + $0xc0] sm:$0xf]
        %v409 = vld [vmem:[%s349 + $0xc4] sm:$0xf]
        %v410 = vld [vmem:[%s349 + $0xc8] sm:$0xf]
        %v411 = vld [vmem:[%s349 + $0xcc] sm:$0xf]
        %v412 = vld [vmem:[%s349 + $0xd0] sm:$0xf]
        %v413 = vld [vmem:[%s349 + $0xd4] sm:$0xf]
        %v414 = vld [vmem:[%s349 + $0xd8] sm:$0xf]
        %v415 = vld [vmem:[%s349 + $0xdc] sm:$0xf]
        %v416 = vld [vmem:[%s349 + $0xe0] sm:$0xf]
        %v417 = vld [vmem:[%s349 + $0xe4] sm:$0xf]
        %v418 = vld [vmem:[%s349 + $0xe8] sm:$0xf]
        %v419 = vld [vmem:[%s349 + $0xec] sm:$0xf]
        %v420 = vld [vmem:[%s349 + $0xf0] sm:$0xf]
        %v421 = vld [vmem:[%s349 + $0xf4] sm:$0xf]
        %v422 = vld [vmem:[%s349 + $0xf8] sm:$0xf]
        %v423 = vld [vmem:[%s349 + $0xfc] sm:$0xf]
        %v424 = vld [vmem:[%s349 + $0x100] sm:$0xf]
        %v425 = vld [vmem:[%s349 + $0x104] sm:$0xf]
        %v426 = vld [vmem:[%s349 + $0x108] sm:$0xf]
        %v427 = vld [vmem:[%s349 + $0x10c] sm:$0xf]
        %v428 = vld [vmem:[%s349 + $0x110] sm:$0xf]
        %v429 = vld [vmem:[%s349 + $0x114] sm:$0xf]
        %v430 = vld [vmem:[%s349 + $0x118] sm:$0xf]
        %v431 = vld [vmem:[%s349 + $0x11c] sm:$0xf]
        %v432 = vld [vmem:[%s349 + $0x120] sm:$0xf]
        %v433 = vld [vmem:[%s349 + $0x124] sm:$0xf]
        %v434 = vld [vmem:[%s349 + $0x128] sm:$0xf]
        %v435 = vld [vmem:[%s349 + $0x12c] sm:$0xf]
        %v436 = vld [vmem:[%s349 + $0x130] sm:$0xf]
        %v437 = vld [vmem:[%s349 + $0x134] sm:$0xf]
        %v438 = vld [vmem:[%s349 + $0x138] sm:$0xf]
        %v439 = vld [vmem:[%s349 + $0x13c] sm:$0xf]
        %v440 = vld [vmem:[%s349 + $0x140] sm:$0xf]
        %v441 = vld [vmem:[%s349 + $0x144] sm:$0xf]
        %v442 = vld [vmem:[%s349 + $0x148] sm:$0xf]
        %v443 = vld [vmem:[%s349 + $0x14c] sm:$0xf]
        %v444 = vld [vmem:[%s349 + $0x150] sm:$0xf]
        %v445 = vld [vmem:[%s349 + $0x154] sm:$0xf]
        %v446 = vld [vmem:[%s349 + $0x158] sm:$0xf]
        %v447 = vld [vmem:[%s349 + $0x15c] sm:$0xf]
        %v448 = vld [vmem:[%s349 + $0x160] sm:$0xf]
        %v449 = vld [vmem:[%s349 + $0x164] sm:$0xf]
        %v450 = vld [vmem:[%s349 + $0x168] sm:$0xf]
        %v451 = vld [vmem:[%s349 + $0x16c] sm:$0xf]
        %v452 = vld [vmem:[%s349 + $0x170] sm:$0xf]
        %v453 = vld [vmem:[%s349 + $0x174] sm:$0xf]
        %v454 = vld [vmem:[%s349 + $0x178] sm:$0xf]
        %v455 = vld [vmem:[%s349 + $0x17c] sm:$0xf]
        %v456 = vld [vmem:[%s349 + $0x180] sm:$0xf]
        %v457 = vld [vmem:[%s349 + $0x184] sm:$0xf]
        %v458 = vld [vmem:[%s349 + $0x188] sm:$0xf]
        %v459 = vld [vmem:[%s349 + $0x18c] sm:$0xf]
        %v460 = vld [vmem:[%s349 + $0x190] sm:$0xf]
        %v461 = vld [vmem:[%s349 + $0x194] sm:$0xf]
        %v462 = vld [vmem:[%s349 + $0x198] sm:$0xf]
        %v463 = vld [vmem:[%s349 + $0x19c] sm:$0xf]
        %v464 = vld [vmem:[%s349 + $0x1a0] sm:$0xf]
        %v465 = vld [vmem:[%s349 + $0x1a4] sm:$0xf]
        %v466 = vld [vmem:[%s349 + $0x1a8] sm:$0xf]
        %v467 = vld [vmem:[%s349 + $0x1ac] sm:$0xf]
        %v468 = vld [vmem:[%s349 + $0x1b0] sm:$0xf]
        %v469 = vld [vmem:[%s349 + $0x1b4] sm:$0xf]
        %v470 = vld [vmem:[%s349 + $0x1b8] sm:$0xf]
        %v471 = vld [vmem:[%s349 + $0x1bc] sm:$0xf]
        %v472 = vld [vmem:[%s349 + $0x1c0] sm:$0xf]
        %v473 = vld [vmem:[%s349 + $0x1c4] sm:$0xf]
        %v474 = vld [vmem:[%s349 + $0x1c8] sm:$0xf]
        %v475 = vld [vmem:[%s349 + $0x1cc] sm:$0xf]
        %v476 = vld [vmem:[%s349 + $0x1d0] sm:$0xf]
        %v477 = vld [vmem:[%s349 + $0x1d4] sm:$0xf]
        %v478 = vld [vmem:[%s349 + $0x1d8] sm:$0xf]
        %v479 = vld [vmem:[%s349 + $0x1dc] sm:$0xf]
        %v480 = vld [vmem:[%s349 + $0x1e0] sm:$0xf]
        %v481 = vld [vmem:[%s349 + $0x1e4] sm:$0xf]
        %v482 = vld [vmem:[%s349 + $0x1e8] sm:$0xf]
        %v483 = vld [vmem:[%s349 + $0x1ec] sm:$0xf]
        %v484 = vld [vmem:[%s349 + $0x1f0] sm:$0xf]
        %v485 = vld [vmem:[%s349 + $0x1f4] sm:$0xf]
        %v486 = vld [vmem:[%s349 + $0x1f8] sm:$0xf]
        %v487 = vld [vmem:[%s349 + $0x1fc] sm:$0xf]
        %v488 = vld [vmem:[%s349 + $0x200] sm:$0xf]
        %v489 = vld [vmem:[%s349 + $0x204] sm:$0xf]
        %v490 = vld [vmem:[%s349 + $0x208] sm:$0xf]
        %v491 = vld [vmem:[%s349 + $0x20c] sm:$0xf]
        %v492 = vld [vmem:[%s349 + $0x210] sm:$0xf]
        %v493 = vld [vmem:[%s349 + $0x214] sm:$0xf]
        %v494 = vld [vmem:[%s349 + $0x218] sm:$0xf]
        %v495 = vld [vmem:[%s349 + $0x21c] sm:$0xf]
        %v496 = vld [vmem:[%s349 + $0x220] sm:$0xf]
        %v497 = vld [vmem:[%s349 + $0x224] sm:$0xf]
        %v498 = vld [vmem:[%s349 + $0x228] sm:$0xf]
        %v499 = vld [vmem:[%s349 + $0x22c] sm:$0xf]
        %v500 = vld [vmem:[%s349 + $0x230] sm:$0xf]
        %v501 = vld [vmem:[%s349 + $0x234] sm:$0xf]
        %v502 = vld [vmem:[%s349 + $0x238] sm:$0xf]
        %v503 = vld [vmem:[%s349 + $0x23c] sm:$0xf]
        %v504 = vld [vmem:[%s349 + $0x240] sm:$0xf]
        %v505 = vld [vmem:[%s349 + $0x244] sm:$0xf]
        %v506 = vld [vmem:[%s349 + $0x248] sm:$0xf]
        %v507 = vld [vmem:[%s349 + $0x24c] sm:$0xf]
        %v508 = vld [vmem:[%s349 + $0x250] sm:$0xf]
        %v509 = vld [vmem:[%s349 + $0x254] sm:$0xf]
        %v510 = vld [vmem:[%s349 + $0x258] sm:$0xf]
        %v511 = vld [vmem:[%s349 + $0x25c] sm:$0xf]
        %v512 = vld [vmem:[%s349 + $0x260] sm:$0xf]
        %v513 = vld [vmem:[%s349 + $0x264] sm:$0xf]
        %v514 = vld [vmem:[%s349 + $0x268] sm:$0xf]
        %v515 = vld [vmem:[%s349 + $0x26c] sm:$0xf]
        %v516 = vld [vmem:[%s349 + $0x270] sm:$0xf]
        %v517 = vld [vmem:[%s349 + $0x274] sm:$0xf]
        %v518 = vld [vmem:[%s349 + $0x278] sm:$0xf]
        %v519 = vld [vmem:[%s349 + $0x27c] sm:$0xf]
        %v520 = vld [vmem:[%s349 + $0x280] sm:$0xf]
        %v521 = vld [vmem:[%s349 + $0x284] sm:$0xf]
        %v522 = vld [vmem:[%s349 + $0x288] sm:$0xf]
        %v523 = vld [vmem:[%s349 + $0x28c] sm:$0xf]
        %v524 = vld [vmem:[%s349 + $0x290] sm:$0xf]
        %v525 = vld [vmem:[%s349 + $0x294] sm:$0xf]
        %v526 = vld [vmem:[%s349 + $0x298] sm:$0xf]
        %v527 = vld [vmem:[%s349 + $0x29c] sm:$0xf]
        %v528 = vld [vmem:[%s349 + $0x2a0] sm:$0xf]
        %v529 = vld [vmem:[%s349 + $0x2a4] sm:$0xf]
        %v530 = vld [vmem:[%s349 + $0x2a8] sm:$0xf]
        %v531 = vld [vmem:[%s349 + $0x2ac] sm:$0xf]
        %v532 = vld [vmem:[%s349 + $0x2b0] sm:$0xf]
        %v533 = vld [vmem:[%s349 + $0x2b4] sm:$0xf]
        %v534 = vld [vmem:[%s349 + $0x2b8] sm:$0xf]
        %v535 = vld [vmem:[%s349 + $0x2bc] sm:$0xf]
        %v536 = vld [vmem:[%s349 + $0x2c0] sm:$0xf]
        %v537 = vld [vmem:[%s349 + $0x2c4] sm:$0xf]
        %v538 = vld [vmem:[%s349 + $0x2c8] sm:$0xf]
        %v539 = vld [vmem:[%s349 + $0x2cc] sm:$0xf]
        %v540 = vld [vmem:[%s349 + $0x2d0] sm:$0xf]
        %v541 = vld [vmem:[%s349 + $0x2d4] sm:$0xf]
        %v542 = vld [vmem:[%s349 + $0x2d8] sm:$0xf]
        %v543 = vld [vmem:[%s349 + $0x2dc] sm:$0xf]
        %v544 = vld [vmem:[%s349 + $0x2e0] sm:$0xf]
        %v545 = vld [vmem:[%s349 + $0x2e4] sm:$0xf]
        %v546 = vld [vmem:[%s349 + $0x2e8] sm:$0xf]
        %v547 = vld [vmem:[%s349 + $0x2ec] sm:$0xf]
        %v548 = vld [vmem:[%s349 + $0x2f0] sm:$0xf]
        %v549 = vld [vmem:[%s349 + $0x2f4] sm:$0xf]
        %v550 = vld [vmem:[%s349 + $0x2f8] sm:$0xf]
        %v551 = vld [vmem:[%s349 + $0x2fc] sm:$0xf]
        %v552 = vld [vmem:[%s349 + $0x300] sm:$0xf]
        %v553 = vld [vmem:[%s349 + $0x304] sm:$0xf]
        %v554 = vld [vmem:[%s349 + $0x308] sm:$0xf]
        %v555 = vld [vmem:[%s349 + $0x30c] sm:$0xf]
        %v556 = vld [vmem:[%s349 + $0x310] sm:$0xf]
        %v557 = vld [vmem:[%s349 + $0x314] sm:$0xf]
        %v558 = vld [vmem:[%s349 + $0x318] sm:$0xf]
        %v559 = vld [vmem:[%s349 + $0x31c] sm:$0xf]
        %v560 = vld [vmem:[%s349 + $0x320] sm:$0xf]
        %v561 = vld [vmem:[%s349 + $0x324] sm:$0xf]
        %v562 = vld [vmem:[%s349 + $0x328] sm:$0xf]
        %v563 = vld [vmem:[%s349 + $0x32c] sm:$0xf]
        %v564 = vld [vmem:[%s349 + $0x330] sm:$0xf]
        %v565 = vld [vmem:[%s349 + $0x334] sm:$0xf]
        %v566 = vld [vmem:[%s349 + $0x338] sm:$0xf]
        %v567 = vld [vmem:[%s349 + $0x33c] sm:$0xf]
        %v568 = vld [vmem:[%s349 + $0x340] sm:$0xf]
        %v569 = vld [vmem:[%s349 + $0x344] sm:$0xf]
        %v570 = vld [vmem:[%s349 + $0x348] sm:$0xf]
        %v571 = vld [vmem:[%s349 + $0x34c] sm:$0xf]
        %v572 = vld [vmem:[%s349 + $0x350] sm:$0xf]
        %v573 = vld [vmem:[%s349 + $0x354] sm:$0xf]
        %v574 = vld [vmem:[%s349 + $0x358] sm:$0xf]
        %v575 = vld [vmem:[%s349 + $0x35c] sm:$0xf]
        %v576 = vld [vmem:[%s349 + $0x360] sm:$0xf]
        %v577 = vld [vmem:[%s349 + $0x364] sm:$0xf]
        %v578 = vld [vmem:[%s349 + $0x368] sm:$0xf]
        %v579 = vld [vmem:[%s349 + $0x36c] sm:$0xf]
        %v580 = vld [vmem:[%s349 + $0x370] sm:$0xf]
        %v581 = vld [vmem:[%s349 + $0x374] sm:$0xf]
        %v582 = vld [vmem:[%s349 + $0x378] sm:$0xf]
        %v583 = vld [vmem:[%s349 + $0x37c] sm:$0xf]
        %v584 = vld [vmem:[%s349 + $0x380] sm:$0xf]
        %v585 = vld [vmem:[%s349 + $0x384] sm:$0xf]
        %v586 = vld [vmem:[%s349 + $0x388] sm:$0xf]
        %v587 = vld [vmem:[%s349 + $0x38c] sm:$0xf]
        %v588 = vld [vmem:[%s349 + $0x390] sm:$0xf]
        %v589 = vld [vmem:[%s349 + $0x394] sm:$0xf]
        %v590 = vld [vmem:[%s349 + $0x398] sm:$0xf]
        %v591 = vld [vmem:[%s349 + $0x39c] sm:$0xf]
        %v592 = vld [vmem:[%s349 + $0x3a0] sm:$0xf]
        %v593 = vld [vmem:[%s349 + $0x3a4] sm:$0xf]
        %v594 = vld [vmem:[%s349 + $0x3a8] sm:$0xf]
        %v595 = vld [vmem:[%s349 + $0x3ac] sm:$0xf]
        %v596 = vld [vmem:[%s349 + $0x3b0] sm:$0xf]
        %v597 = vld [vmem:[%s349 + $0x3b4] sm:$0xf]
        %v598 = vld [vmem:[%s349 + $0x3b8] sm:$0xf]
        %v599 = vld [vmem:[%s349 + $0x3bc] sm:$0xf]
        %v600 = vld [vmem:[%s349 + $0x3c0] sm:$0xf]
        %v601 = vld [vmem:[%s349 + $0x3c4] sm:$0xf]
        %v602 = vld [vmem:[%s349 + $0x3c8] sm:$0xf]
        %v603 = vld [vmem:[%s349 + $0x3cc] sm:$0xf]
        %v604 = vld [vmem:[%s349 + $0x3d0] sm:$0xf]
        %v605 = vld [vmem:[%s349 + $0x3d4] sm:$0xf]
        %v606 = vld [vmem:[%s349 + $0x3d8] sm:$0xf]
        %v607 = vld [vmem:[%s349 + $0x3dc] sm:$0xf]
        %v608 = vld [vmem:[%s349 + $0x3e0] sm:$0xf]
        %v609 = vld [vmem:[%s349 + $0x3e4] sm:$0xf]
        %v610 = vld [vmem:[%s349 + $0x3e8] sm:$0xf]
        %v611 = vld [vmem:[%s349 + $0x3ec] sm:$0xf]
        %v612 = vld [vmem:[%s349 + $0x3f0] sm:$0xf]
        %v613 = vld [vmem:[%s349 + $0x3f4] sm:$0xf]
        %v614 = vld [vmem:[%s349 + $0x3f8] sm:$0xf]
        %v615 = vld [vmem:[%s349 + $0x3fc] sm:$0xf]
        %v616 = vld [vmem:[%s349 + $0x400] sm:$0xf]
        %v617 = vld [vmem:[%s349 + $0x404] sm:$0xf]
        %v618 = vld [vmem:[%s349 + $0x408] sm:$0xf]
        %v619 = vld [vmem:[%s349 + $0x40c] sm:$0xf]
        %v620 = vld [vmem:[%s349 + $0x410] sm:$0xf]
        %v621 = vld [vmem:[%s349 + $0x414] sm:$0xf]
        %v622 = vld [vmem:[%s349 + $0x418] sm:$0xf]
        %v623 = vld [vmem:[%s349 + $0x41c] sm:$0xf]
        %v624 = vld [vmem:[%s349 + $0x420] sm:$0xf]
        %v625 = vld [vmem:[%s349 + $0x424] sm:$0xf]
        %v626 = vld [vmem:[%s349 + $0x428] sm:$0xf]
        %v627 = vld [vmem:[%s349 + $0x42c] sm:$0xf]
        %v628 = vld [vmem:[%s349 + $0x430] sm:$0xf]
        %v629 = vld [vmem:[%s349 + $0x434] sm:$0xf]
        %v630 = vld [vmem:[%s349 + $0x438] sm:$0xf]
        %v631 = vld [vmem:[%s349 + $0x43c] sm:$0xf]
        %v632 = vld [vmem:[%s349 + $0x440] sm:$0xf]
        %v633 = vld [vmem:[%s349 + $0x444] sm:$0xf]
        %v634 = vld [vmem:[%s349 + $0x448] sm:$0xf]
        %v635 = vld [vmem:[%s349 + $0x44c] sm:$0xf]
        %v636 = vld [vmem:[%s349 + $0x450] sm:$0xf]
        %v637 = vld [vmem:[%s349 + $0x454] sm:$0xf]
        %v638 = vld [vmem:[%s349 + $0x458] sm:$0xf]
        %v639 = vld [vmem:[%s349 + $0x45c] sm:$0xf]
        %v640 = vld [vmem:[%s349 + $0x460] sm:$0xf]
        %v641 = vld [vmem:[%s349 + $0x464] sm:$0xf]
        %v642 = vld [vmem:[%s349 + $0x468] sm:$0xf]
        %v643 = vld [vmem:[%s349 + $0x46c] sm:$0xf]
        %v644 = vld [vmem:[%s349 + $0x470] sm:$0xf]
        %v645 = vld [vmem:[%s349 + $0x474] sm:$0xf]
        %v646 = vld [vmem:[%s349 + $0x478] sm:$0xf]
        %v647 = vld [vmem:[%s349 + $0x47c] sm:$0xf]
        %v648 = vld [vmem:[%s349 + $0x480] sm:$0xf]
        %v649 = vld [vmem:[%s349 + $0x484] sm:$0xf]
        %v650 = vld [vmem:[%s349 + $0x488] sm:$0xf]
        %v651 = vld [vmem:[%s349 + $0x48c] sm:$0xf]
        %v652 = vld [vmem:[%s349 + $0x490] sm:$0xf]
        %v653 = vld [vmem:[%s349 + $0x494] sm:$0xf]
        %v654 = vld [vmem:[%s349 + $0x498] sm:$0xf]
        %v655 = vld [vmem:[%s349 + $0x49c] sm:$0xf]
        %v656 = vld [vmem:[%s349 + $0x4a0] sm:$0xf]
        %v657 = vld [vmem:[%s349 + $0x4a4] sm:$0xf]
        %v658 = vld [vmem:[%s349 + $0x4a8] sm:$0xf]
        %v659 = vld [vmem:[%s349 + $0x4ac] sm:$0xf]
        %v660 = vld [vmem:[%s349 + $0x4b0] sm:$0xf]
        %v661 = vld [vmem:[%s349 + $0x4b4] sm:$0xf]
        %v662 = vld [vmem:[%s349 + $0x4b8] sm:$0xf]
        %v663 = vld [vmem:[%s349 + $0x4bc] sm:$0xf]
        %v664 = vld [vmem:[%s349 + $0x4c0] sm:$0xf]
        %v665 = vld [vmem:[%s349 + $0x4c4] sm:$0xf]
        %v666 = vld [vmem:[%s349 + $0x4c8] sm:$0xf]
        %v667 = vld [vmem:[%s349 + $0x4cc] sm:$0xf]
        %v668 = vld [vmem:[%s349 + $0x4d0] sm:$0xf]
        %v669 = vld [vmem:[%s349 + $0x4d4] sm:$0xf]
        %v670 = vld [vmem:[%s349 + $0x4d8] sm:$0xf]
        %v671 = vld [vmem:[%s349 + $0x4dc] sm:$0xf]
        %v672 = vld [vmem:[%s349 + $0x4e0] sm:$0xf]
        %v673 = vld [vmem:[%s349 + $0x4e4] sm:$0xf]
        %v674 = vld [vmem:[%s349 + $0x4e8] sm:$0xf]
        %v675 = vld [vmem:[%s349 + $0x4ec] sm:$0xf]
        %v676 = vld [vmem:[%s349 + $0x4f0] sm:$0xf]
        %v677 = vld [vmem:[%s349 + $0x4f4] sm:$0xf]
        %v678 = vld [vmem:[%s349 + $0x4f8] sm:$0xf]
        %v679 = vld [vmem:[%s349 + $0x4fc] sm:$0xf]
        %v680 = vld [vmem:[%s349 + $0x500] sm:$0xf]
        %v681 = vld [vmem:[%s349 + $0x504] sm:$0xf]
        %v682 = vld [vmem:[%s349 + $0x508] sm:$0xf]
        %v683 = vld [vmem:[%s349 + $0x50c] sm:$0xf]
        %v684 = vld [vmem:[%s349 + $0x510] sm:$0xf]
        %v685 = vld [vmem:[%s349 + $0x514] sm:$0xf]
        %v686 = vld [vmem:[%s349 + $0x518] sm:$0xf]
        %v687 = vld [vmem:[%s349 + $0x51c] sm:$0xf]
        %v688 = vld [vmem:[%s349 + $0x520] sm:$0xf]
        %v689 = vld [vmem:[%s349 + $0x524] sm:$0xf]
        %v690 = vld [vmem:[%s349 + $0x528] sm:$0xf]
        %v691 = vld [vmem:[%s349 + $0x52c] sm:$0xf]
        %v692 = vld [vmem:[%s349 + $0x530] sm:$0xf]
        %v693 = vld [vmem:[%s349 + $0x534] sm:$0xf]
        %v694 = vld [vmem:[%s349 + $0x538] sm:$0xf]
        %v695 = vld [vmem:[%s349 + $0x53c] sm:$0xf]
        %v696 = vld [vmem:[%s349 + $0x540] sm:$0xf]
        %v697 = vld [vmem:[%s349 + $0x544] sm:$0xf]
        %v698 = vld [vmem:[%s349 + $0x548] sm:$0xf]
        %v699 = vld [vmem:[%s349 + $0x54c] sm:$0xf]
        %v700 = vld [vmem:[%s349 + $0x550] sm:$0xf]
        %v701 = vld [vmem:[%s349 + $0x554] sm:$0xf]
        %v702 = vld [vmem:[%s349 + $0x558] sm:$0xf]
        %v703 = vld [vmem:[%s349 + $0x55c] sm:$0xf]
        %v704 = vld [vmem:[%s349 + $0x560] sm:$0xf]
        %v705 = vld [vmem:[%s349 + $0x564] sm:$0xf]
        %v706 = vld [vmem:[%s349 + $0x568] sm:$0xf]
        %v707 = vld [vmem:[%s349 + $0x56c] sm:$0xf]
        %v708 = vld [vmem:[%s349 + $0x570] sm:$0xf]
        %v709 = vld [vmem:[%s349 + $0x574] sm:$0xf]
        %v710 = vld [vmem:[%s349 + $0x578] sm:$0xf]
        %v711 = vld [vmem:[%s349 + $0x57c] sm:$0xf]
        %v712 = vld [vmem:[%s349 + $0x580] sm:$0xf]
        %v713 = vld [vmem:[%s349 + $0x584] sm:$0xf]
        %v714 = vld [vmem:[%s349 + $0x588] sm:$0xf]
        %v715 = vld [vmem:[%s349 + $0x58c] sm:$0xf]
        %v716 = vld [vmem:[%s349 + $0x590] sm:$0xf]
        %v717 = vld [vmem:[%s349 + $0x594] sm:$0xf]
        %v718 = vld [vmem:[%s349 + $0x598] sm:$0xf]
        %v719 = vld [vmem:[%s349 + $0x59c] sm:$0xf]
        %v720 = vld [vmem:[%s349 + $0x5a0] sm:$0xf]
        %v721 = vld [vmem:[%s349 + $0x5a4] sm:$0xf]
        %v722 = vld [vmem:[%s349 + $0x5a8] sm:$0xf]
        %v723 = vld [vmem:[%s349 + $0x5ac] sm:$0xf]
        %v724 = vld [vmem:[%s349 + $0x5b0] sm:$0xf]
        %v725 = vld [vmem:[%s349 + $0x5b4] sm:$0xf]
        %v726 = vld [vmem:[%s349 + $0x5b8] sm:$0xf]
        %v727 = vld [vmem:[%s349 + $0x5bc] sm:$0xf]
        %v728 = vld [vmem:[%s349 + $0x5c0] sm:$0xf]
        %v729 = vld [vmem:[%s349 + $0x5c4] sm:$0xf]
        %v730 = vld [vmem:[%s349 + $0x5c8] sm:$0xf]
        %v731 = vld [vmem:[%s349 + $0x5cc] sm:$0xf]
        %v732 = vld [vmem:[%s349 + $0x5d0] sm:$0xf]
        %v733 = vld [vmem:[%s349 + $0x5d4] sm:$0xf]
        %v734 = vld [vmem:[%s349 + $0x5d8] sm:$0xf]
        %v735 = vld [vmem:[%s349 + $0x5dc] sm:$0xf]
        %v736 = vld [vmem:[%s349 + $0x5e0] sm:$0xf]
        %v737 = vld [vmem:[%s349 + $0x5e4] sm:$0xf]
        %v738 = vld [vmem:[%s349 + $0x5e8] sm:$0xf]
        %v739 = vld [vmem:[%s349 + $0x5ec] sm:$0xf]
        %v740 = vld [vmem:[%s349 + $0x5f0] sm:$0xf]
        %v741 = vld [vmem:[%s349 + $0x5f4] sm:$0xf]
        %v742 = vld [vmem:[%s349 + $0x5f8] sm:$0xf]
        %v743 = vld [vmem:[%s349 + $0x5fc] sm:$0xf]
        %v744 = vld [vmem:[%s349 + $0x600] sm:$0xf]
        %v745 = vld [vmem:[%s349 + $0x604] sm:$0xf]
        %v746 = vld [vmem:[%s349 + $0x608] sm:$0xf]
        %v747 = vld [vmem:[%s349 + $0x60c] sm:$0xf]
        %v748 = vld [vmem:[%s349 + $0x610] sm:$0xf]
        %v749 = vld [vmem:[%s349 + $0x614] sm:$0xf]
        %v750 = vld [vmem:[%s349 + $0x618] sm:$0xf]
        %v751 = vld [vmem:[%s349 + $0x61c] sm:$0xf]
        %v752 = vld [vmem:[%s349 + $0x620] sm:$0xf]
        %v753 = vld [vmem:[%s349 + $0x624] sm:$0xf]
        %v754 = vld [vmem:[%s349 + $0x628] sm:$0xf]
        %v755 = vld [vmem:[%s349 + $0x62c] sm:$0xf]
        %v756 = vld [vmem:[%s349 + $0x630] sm:$0xf]
        %v757 = vld [vmem:[%s349 + $0x634] sm:$0xf]
        %v758 = vld [vmem:[%s349 + $0x638] sm:$0xf]
        %v759 = vld [vmem:[%s349 + $0x63c] sm:$0xf]
        %v760 = vld [vmem:[%s349 + $0x640] sm:$0xf]
        %v761 = vld [vmem:[%s349 + $0x644] sm:$0xf]
        %v762 = vld [vmem:[%s349 + $0x648] sm:$0xf]
        %v763 = vld [vmem:[%s349 + $0x64c] sm:$0xf]
        %v764 = vld [vmem:[%s349 + $0x650] sm:$0xf]
        %v765 = vld [vmem:[%s349 + $0x654] sm:$0xf]
        %v766 = vld [vmem:[%s349 + $0x658] sm:$0xf]
        %v767 = vld [vmem:[%s349 + $0x65c] sm:$0xf]
        %v768 = vld [vmem:[%s349 + $0x660] sm:$0xf]
        %v769 = vld [vmem:[%s349 + $0x664] sm:$0xf]
        %v770 = vld [vmem:[%s349 + $0x668] sm:$0xf]
        %v771 = vld [vmem:[%s349 + $0x66c] sm:$0xf]
        %v772 = vld [vmem:[%s349 + $0x670] sm:$0xf]
        %v773 = vld [vmem:[%s349 + $0x674] sm:$0xf]
        %v774 = vld [vmem:[%s349 + $0x678] sm:$0xf]
        %v775 = vld [vmem:[%s349 + $0x67c] sm:$0xf]
        %v776 = vld [vmem:[%s349 + $0x680] sm:$0xf]
        %v777 = vld [vmem:[%s349 + $0x684] sm:$0xf]
        %v778 = vld [vmem:[%s349 + $0x688] sm:$0xf]
        %v779 = vld [vmem:[%s349 + $0x68c] sm:$0xf]
        %v780 = vld [vmem:[%s349 + $0x690] sm:$0xf]
        %v781 = vld [vmem:[%s349 + $0x694] sm:$0xf]
        %v782 = vld [vmem:[%s349 + $0x698] sm:$0xf]
        %v783 = vld [vmem:[%s349 + $0x69c] sm:$0xf]
        %v784 = vld [vmem:[%s349 + $0x6a0] sm:$0xf]
        %v785 = vld [vmem:[%s349 + $0x6a4] sm:$0xf]
        %v786 = vld [vmem:[%s349 + $0x6a8] sm:$0xf]
        %v787 = vld [vmem:[%s349 + $0x6ac] sm:$0xf]
        %v788 = vld [vmem:[%s349 + $0x6b0] sm:$0xf]
        %v789 = vld [vmem:[%s349 + $0x6b4] sm:$0xf]
        %v790 = vld [vmem:[%s349 + $0x6b8] sm:$0xf]
        %v791 = vld [vmem:[%s349 + $0x6bc] sm:$0xf]
        %v792 = vld [vmem:[%s349 + $0x6c0] sm:$0xf]
        %v793 = vld [vmem:[%s349 + $0x6c4] sm:$0xf]
        %v794 = vld [vmem:[%s349 + $0x6c8] sm:$0xf]
        %v795 = vld [vmem:[%s349 + $0x6cc] sm:$0xf]
        %v796 = vld [vmem:[%s349 + $0x6d0] sm:$0xf]
        %v797 = vld [vmem:[%s349 + $0x6d4] sm:$0xf]
        %v798 = vld [vmem:[%s349 + $0x6d8] sm:$0xf]
        %v799 = vld [vmem:[%s349 + $0x6dc] sm:$0xf]
        %v800 = vld [vmem:[%s349 + $0x6e0] sm:$0xf]
        %v801 = vld [vmem:[%s349 + $0x6e4] sm:$0xf]
        %v802 = vld [vmem:[%s349 + $0x6e8] sm:$0xf]
        %v803 = vld [vmem:[%s349 + $0x6ec] sm:$0xf]
        %v804 = vld [vmem:[%s349 + $0x6f0] sm:$0xf]
        %v805 = vld [vmem:[%s349 + $0x6f4] sm:$0xf]
        %v806 = vld [vmem:[%s349 + $0x6f8] sm:$0xf]
        %v807 = vld [vmem:[%s349 + $0x6fc] sm:$0xf]
        %v808 = vld [vmem:[%s349 + $0x700] sm:$0xf]
        %v809 = vld [vmem:[%s349 + $0x704] sm:$0xf]
        %v810 = vld [vmem:[%s349 + $0x708] sm:$0xf]
        %v811 = vld [vmem:[%s349 + $0x70c] sm:$0xf]
        %v812 = vld [vmem:[%s349 + $0x710] sm:$0xf]
        %v813 = vld [vmem:[%s349 + $0x714] sm:$0xf]
        %v814 = vld [vmem:[%s349 + $0x718] sm:$0xf]
        %v815 = vld [vmem:[%s349 + $0x71c] sm:$0xf]
        %v816 = vld [vmem:[%s349 + $0x720] sm:$0xf]
        %v817 = vld [vmem:[%s349 + $0x724] sm:$0xf]
        %v818 = vld [vmem:[%s349 + $0x728] sm:$0xf]
        %v819 = vld [vmem:[%s349 + $0x72c] sm:$0xf]
        %v820 = vld [vmem:[%s349 + $0x730] sm:$0xf]
        %v821 = vld [vmem:[%s349 + $0x734] sm:$0xf]
        %v822 = vld [vmem:[%s349 + $0x738] sm:$0xf]
        %v823 = vld [vmem:[%s349 + $0x73c] sm:$0xf]
        %v824 = vld [vmem:[%s349 + $0x740] sm:$0xf]
        %v825 = vld [vmem:[%s349 + $0x744] sm:$0xf]
        %v826 = vld [vmem:[%s349 + $0x748] sm:$0xf]
        %v827 = vld [vmem:[%s349 + $0x74c] sm:$0xf]
        %v828 = vld [vmem:[%s349 + $0x750] sm:$0xf]
        %v829 = vld [vmem:[%s349 + $0x754] sm:$0xf]
        %v830 = vld [vmem:[%s349 + $0x758] sm:$0xf]
        %v831 = vld [vmem:[%s349 + $0x75c] sm:$0xf]
        %v832 = vld [vmem:[%s349 + $0x760] sm:$0xf]
        %v833 = vld [vmem:[%s349 + $0x764] sm:$0xf]
        %v834 = vld [vmem:[%s349 + $0x768] sm:$0xf]
        %v835 = vld [vmem:[%s349 + $0x76c] sm:$0xf]
        %v836 = vld [vmem:[%s349 + $0x770] sm:$0xf]
        %v837 = vld [vmem:[%s349 + $0x774] sm:$0xf]
        %v838 = vld [vmem:[%s349 + $0x778] sm:$0xf]
        %v839 = vld [vmem:[%s349 + $0x77c] sm:$0xf]
        %v840 = vld [vmem:[%s349 + $0x780] sm:$0xf]
        %v841 = vld [vmem:[%s349 + $0x784] sm:$0xf]
        %v842 = vld [vmem:[%s349 + $0x788] sm:$0xf]
        %v843 = vld [vmem:[%s349 + $0x78c] sm:$0xf]
        %v844 = vld [vmem:[%s349 + $0x790] sm:$0xf]
        %v845 = vld [vmem:[%s349 + $0x794] sm:$0xf]
        %v846 = vld [vmem:[%s349 + $0x798] sm:$0xf]
        %v847 = vld [vmem:[%s349 + $0x79c] sm:$0xf]
        %v848 = vld [vmem:[%s349 + $0x7a0] sm:$0xf]
        %v849 = vld [vmem:[%s349 + $0x7a4] sm:$0xf]
        %v850 = vld [vmem:[%s349 + $0x7a8] sm:$0xf]
        %v851 = vld [vmem:[%s349 + $0x7ac] sm:$0xf]
        %v852 = vld [vmem:[%s349 + $0x7b0] sm:$0xf]
        %v853 = vld [vmem:[%s349 + $0x7b4] sm:$0xf]
        %v854 = vld [vmem:[%s349 + $0x7b8] sm:$0xf]
        %v855 = vld [vmem:[%s349 + $0x7bc] sm:$0xf]
        %v856 = vld [vmem:[%s349 + $0x7c0] sm:$0xf]
        %v857 = vld [vmem:[%s349 + $0x7c4] sm:$0xf]
        %v858 = vld [vmem:[%s349 + $0x7c8] sm:$0xf]
        %v859 = vld [vmem:[%s349 + $0x7cc] sm:$0xf]
        %v860 = vld [vmem:[%s349 + $0x7d0] sm:$0xf]
        %v861 = vld [vmem:[%s349 + $0x7d4] sm:$0xf]
        %v862 = vld [vmem:[%s349 + $0x7d8] sm:$0xf]
        %v863 = vld [vmem:[%s349 + $0x7dc] sm:$0xf]
        %v864 = vld [vmem:[%s349 + $0x7e0] sm:$0xf]
        %v865 = vld [vmem:[%s349 + $0x7e4] sm:$0xf]
        %v866 = vld [vmem:[%s349 + $0x7e8] sm:$0xf]
        %v867 = vld [vmem:[%s349 + $0x7ec] sm:$0xf]
        %v868 = vld [vmem:[%s349 + $0x7f0] sm:$0xf]
        %v869 = vld [vmem:[%s349 + $0x7f4] sm:$0xf]
        %v870 = vld [vmem:[%s349 + $0x7f8] sm:$0xf]
        %v871 = vld [vmem:[%s349 + $0x7fc] sm:$0xf]
        %v872 = vld [vmem:[%s349 + $0x800] sm:$0xf]
        %v873 = vld [vmem:[%s349 + $0x804] sm:$0xf]
        %v874 = vld [vmem:[%s349 + $0x808] sm:$0xf]
        %v875 = vld [vmem:[%s349 + $0x80c] sm:$0xf]
        %v876 = vld [vmem:[%s349 + $0x810] sm:$0xf]
        %v877 = vld [vmem:[%s349 + $0x814] sm:$0xf]
        %v878 = vld [vmem:[%s349 + $0x818] sm:$0xf]
        %v879 = vld [vmem:[%s349 + $0x81c] sm:$0xf]
        %v880 = vld [vmem:[%s349 + $0x820] sm:$0xf]
        %v881 = vld [vmem:[%s349 + $0x824] sm:$0xf]
        %v882 = vld [vmem:[%s349 + $0x828] sm:$0xf]
        %v883 = vld [vmem:[%s349 + $0x82c] sm:$0xf]
        %v884 = vld [vmem:[%s349 + $0x830] sm:$0xf]
        %v885 = vld [vmem:[%s349 + $0x834] sm:$0xf]
        %v886 = vld [vmem:[%s349 + $0x838] sm:$0xf]
        %v887 = vld [vmem:[%s349 + $0x83c] sm:$0xf]
        %v888 = vld [vmem:[%s349 + $0x840] sm:$0xf]
        %v889 = vld [vmem:[%s349 + $0x844] sm:$0xf]
        %v890 = vld [vmem:[%s349 + $0x848] sm:$0xf]
        %v891 = vld [vmem:[%s349 + $0x84c] sm:$0xf]
        %v892 = vld [vmem:[%s349 + $0x850] sm:$0xf]
        %v893 = vld [vmem:[%s349 + $0x854] sm:$0xf]
        %v894 = vld [vmem:[%s349 + $0x858] sm:$0xf]
        %v895 = vld [vmem:[%s349 + $0x85c] sm:$0xf]
        %v896 = vld [vmem:[%s349 + $0x860] sm:$0xf]
        %v897 = vld [vmem:[%s349 + $0x864] sm:$0xf]
        %v898 = vld [vmem:[%s349 + $0x868] sm:$0xf]
        %v899 = vld [vmem:[%s349 + $0x86c] sm:$0xf]
        %v900 = vld [vmem:[%s349 + $0x870] sm:$0xf]
        %v901 = vld [vmem:[%s349 + $0x874] sm:$0xf]
        %v902 = vld [vmem:[%s349 + $0x878] sm:$0xf]
        %v903 = vld [vmem:[%s349 + $0x87c] sm:$0xf]
        %v904 = vld [vmem:[%s349 + $0x880] sm:$0xf]
        %v905 = vld [vmem:[%s349 + $0x884] sm:$0xf]
        %v906 = vld [vmem:[%s349 + $0x888] sm:$0xf]
        %v907 = vld [vmem:[%s349 + $0x88c] sm:$0xf]
        %v908 = vld [vmem:[%s349 + $0x890] sm:$0xf]
        %v909 = vld [vmem:[%s349 + $0x894] sm:$0xf]
        %v910 = vld [vmem:[%s349 + $0x898] sm:$0xf]
        %v911 = vld [vmem:[%s349 + $0x89c] sm:$0xf]
        %v912 = vld [vmem:[%s349 + $0x8a0] sm:$0xf]
        %v913 = vld [vmem:[%s349 + $0x8a4] sm:$0xf]
        %v914 = vld [vmem:[%s349 + $0x8a8] sm:$0xf]
        %v915 = vld [vmem:[%s349 + $0x8ac] sm:$0xf]
        %v916 = vld [vmem:[%s349 + $0x8b0] sm:$0xf]
        %v917 = vld [vmem:[%s349 + $0x8b4] sm:$0xf]
        %v918 = vld [vmem:[%s349 + $0x8b8] sm:$0xf]
        %v919 = vld [vmem:[%s349 + $0x8bc] sm:$0xf]
        %v920 = vld [vmem:[%s349 + $0x8c0] sm:$0xf]
        %v921 = vld [vmem:[%s349 + $0x8c4] sm:$0xf]
        %v922 = vld [vmem:[%s349 + $0x8c8] sm:$0xf]
        %v923 = vld [vmem:[%s349 + $0x8cc] sm:$0xf]
        %v924 = vld [vmem:[%s349 + $0x8d0] sm:$0xf]
        %v925 = vld [vmem:[%s349 + $0x8d4] sm:$0xf]
        %v926 = vld [vmem:[%s349 + $0x8d8] sm:$0xf]
        %v927 = vld [vmem:[%s349 + $0x8dc] sm:$0xf]
        %v928 = vld [vmem:[%s349 + $0x8e0] sm:$0xf]
        %v929 = vld [vmem:[%s349 + $0x8e4] sm:$0xf]
        %v930 = vld [vmem:[%s349 + $0x8e8] sm:$0xf]
        %v931 = vld [vmem:[%s349 + $0x8ec] sm:$0xf]
        %v932 = vld [vmem:[%s349 + $0x8f0] sm:$0xf]
        %v933 = vld [vmem:[%s349 + $0x8f4] sm:$0xf]
        %v934 = vld [vmem:[%s349 + $0x8f8] sm:$0xf]
        %v935 = vld [vmem:[%s349 + $0x8fc] sm:$0xf]
        %v936 = vld [vmem:[%s349 + $0x900] sm:$0xf]
        %v937 = vld [vmem:[%s349 + $0x904] sm:$0xf]
        %v938 = vld [vmem:[%s349 + $0x908] sm:$0xf]
        %v939 = vld [vmem:[%s349 + $0x90c] sm:$0xf]
        %v940 = vld [vmem:[%s349 + $0x910] sm:$0xf]
        %v941 = vld [vmem:[%s349 + $0x914] sm:$0xf]
        %v942 = vld [vmem:[%s349 + $0x918] sm:$0xf]
        %v943 = vld [vmem:[%s349 + $0x91c] sm:$0xf]
        %v944 = vld [vmem:[%s349 + $0x920] sm:$0xf]
        %v945 = vld [vmem:[%s349 + $0x924] sm:$0xf]
        %v946 = vld [vmem:[%s349 + $0x928] sm:$0xf]
        %v947 = vld [vmem:[%s349 + $0x92c] sm:$0xf]
        %v948 = vld [vmem:[%s349 + $0x930] sm:$0xf]
        %v949 = vld [vmem:[%s349 + $0x934] sm:$0xf]
        %v950 = vld [vmem:[%s349 + $0x938] sm:$0xf]
        %v951 = vld [vmem:[%s349 + $0x93c] sm:$0xf]
        %v952 = vld [vmem:[%s349 + $0x940] sm:$0xf]
        %v953 = vld [vmem:[%s349 + $0x944] sm:$0xf]
        %v954 = vld [vmem:[%s349 + $0x948] sm:$0xf]
        %v955 = vld [vmem:[%s349 + $0x94c] sm:$0xf]
        %v956 = vld [vmem:[%s349 + $0x950] sm:$0xf]
        %v957 = vld [vmem:[%s349 + $0x954] sm:$0xf]
        %v958 = vld [vmem:[%s349 + $0x958] sm:$0xf]
        %v959 = vld [vmem:[%s349 + $0x95c] sm:$0xf]
        %v960 = vld [vmem:[%s349 + $0x960] sm:$0xf]
        %v961 = vld [vmem:[%s349 + $0x964] sm:$0xf]
        %v962 = vld [vmem:[%s349 + $0x968] sm:$0xf]
        %v963 = vld [vmem:[%s349 + $0x96c] sm:$0xf]
        %v964 = vld [vmem:[%s349 + $0x970] sm:$0xf]
        %v965 = vld [vmem:[%s349 + $0x974] sm:$0xf]
        %v966 = vld [vmem:[%s349 + $0x978] sm:$0xf]
        %v967 = vld [vmem:[%s349 + $0x97c] sm:$0xf]
        %v968 = vld [vmem:[%s349 + $0x980] sm:$0xf]
        %v969 = vld [vmem:[%s349 + $0x984] sm:$0xf]
        %v970 = vld [vmem:[%s349 + $0x988] sm:$0xf]
        %v971 = vld [vmem:[%s349 + $0x98c] sm:$0xf]
        %v972 = vld [vmem:[%s349 + $0x990] sm:$0xf]
        %v973 = vld [vmem:[%s349 + $0x994] sm:$0xf]
        %v974 = vld [vmem:[%s349 + $0x998] sm:$0xf]
        %v975 = vld [vmem:[%s349 + $0x99c] sm:$0xf]
        %v976 = vld [vmem:[%s349 + $0x9a0] sm:$0xf]
        %v977 = vld [vmem:[%s349 + $0x9a4] sm:$0xf]
        %v978 = vld [vmem:[%s349 + $0x9a8] sm:$0xf]
        %v979 = vld [vmem:[%s349 + $0x9ac] sm:$0xf]
        %v980 = vld [vmem:[%s349 + $0x9b0] sm:$0xf]
        %v981 = vld [vmem:[%s349 + $0x9b4] sm:$0xf]
        %v982 = vld [vmem:[%s349 + $0x9b8] sm:$0xf]
        %v983 = vld [vmem:[%s349 + $0x9bc] sm:$0xf]
        %v984 = vld [vmem:[%s349 + $0x9c0] sm:$0xf]
        %v985 = vld [vmem:[%s349 + $0x9c4] sm:$0xf]
        %v986 = vld [vmem:[%s349 + $0x9c8] sm:$0xf]
        %v987 = vld [vmem:[%s349 + $0x9cc] sm:$0xf]
        %v988 = vld [vmem:[%s349 + $0x9d0] sm:$0xf]
        %v989 = vld [vmem:[%s349 + $0x9d4] sm:$0xf]
        %v990 = vld [vmem:[%s349 + $0x9d8] sm:$0xf]
        %v991 = vld [vmem:[%s349 + $0x9dc] sm:$0xf]
        %v992 = vld [vmem:[%s349 + $0x9e0] sm:$0xf]
        %v993 = vld [vmem:[%s349 + $0x9e4] sm:$0xf]
        %v994 = vld [vmem:[%s349 + $0x9e8] sm:$0xf]
        %v995 = vld [vmem:[%s349 + $0x9ec] sm:$0xf]
        %v996 = vld [vmem:[%s349 + $0x9f0] sm:$0xf]
        %v997 = vld [vmem:[%s349 + $0x9f4] sm:$0xf]
        %v998 = vld [vmem:[%s349 + $0x9f8] sm:$0xf]
        %v999 = vld [vmem:[%s349 + $0x9fc] sm:$0xf]
        %v1000 = vld [vmem:[%s349 + $0xa00] sm:$0xf]
        %v1001 = vld [vmem:[%s349 + $0xa04] sm:$0xf]
        %v1002 = vld [vmem:[%s349 + $0xa08] sm:$0xf]
        %v1003 = vld [vmem:[%s349 + $0xa0c] sm:$0xf]
        %v1004 = vld [vmem:[%s349 + $0xa10] sm:$0xf]
        %v1005 = vld [vmem:[%s349 + $0xa14] sm:$0xf]
        %v1006 = vld [vmem:[%s349 + $0xa18] sm:$0xf]
        %v1007 = vld [vmem:[%s349 + $0xa1c] sm:$0xf]
        %v1008 = vld [vmem:[%s349 + $0xa20] sm:$0xf]
        %v1009 = vld [vmem:[%s349 + $0xa24] sm:$0xf]
        %v1010 = vld [vmem:[%s349 + $0xa28] sm:$0xf]
        %v1011 = vld [vmem:[%s349 + $0xa2c] sm:$0xf]
        %v1012 = vld [vmem:[%s349 + $0xa30] sm:$0xf]
        %v1013 = vld [vmem:[%s349 + $0xa34] sm:$0xf]
        %v1014 = vld [vmem:[%s349 + $0xa38] sm:$0xf]
        %v1015 = vld [vmem:[%s349 + $0xa3c] sm:$0xf]
        %v1016 = vld [vmem:[%s349 + $0xa40] sm:$0xf]
        %v1017 = vld [vmem:[%s349 + $0xa44] sm:$0xf]
        %v1018 = vld [vmem:[%s349 + $0xa48] sm:$0xf]
        %v1019 = vld [vmem:[%s349 + $0xa4c] sm:$0xf]
        %v1020 = vld [vmem:[%s349 + $0xa50] sm:$0xf]
        %v1021 = vld [vmem:[%s349 + $0xa54] sm:$0xf]
        %v1022 = vld [vmem:[%s349 + $0xa58] sm:$0xf]
        %v1023 = vld [vmem:[%s349 + $0xa5c] sm:$0xf]
        %v1024 = vld [vmem:[%s349 + $0xa60] sm:$0xf]
        %v1025 = vld [vmem:[%s349 + $0xa64] sm:$0xf]
        %v1026 = vld [vmem:[%s349 + $0xa68] sm:$0xf]
        %v1027 = vld [vmem:[%s349 + $0xa6c] sm:$0xf]
        %v1028 = vld [vmem:[%s349 + $0xa70] sm:$0xf]
        %v1029 = vld [vmem:[%s349 + $0xa74] sm:$0xf]
        %v1030 = vld [vmem:[%s349 + $0xa78] sm:$0xf]
        %v1031 = vld [vmem:[%s349 + $0xa7c] sm:$0xf]
        %v1032 = vld [vmem:[%s349 + $0xa80] sm:$0xf]
        %v1033 = vld [vmem:[%s349 + $0xa84] sm:$0xf]
        %v1034 = vld [vmem:[%s349 + $0xa88] sm:$0xf]
        %v1035 = vld [vmem:[%s349 + $0xa8c] sm:$0xf]
        %v1036 = vld [vmem:[%s349 + $0xa90] sm:$0xf]
        %v1037 = vld [vmem:[%s349 + $0xa94] sm:$0xf]
        %v1038 = vld [vmem:[%s349 + $0xa98] sm:$0xf]
        %v1039 = vld [vmem:[%s349 + $0xa9c] sm:$0xf]
        %v1040 = vld [vmem:[%s349 + $0xaa0] sm:$0xf]
        %v1041 = vld [vmem:[%s349 + $0xaa4] sm:$0xf]
        %v1042 = vld [vmem:[%s349 + $0xaa8] sm:$0xf]
        %v1043 = vld [vmem:[%s349 + $0xaac] sm:$0xf]
        %v1044 = vld [vmem:[%s349 + $0xab0] sm:$0xf]
        %v1045 = vld [vmem:[%s349 + $0xab4] sm:$0xf]
        %v1046 = vld [vmem:[%s349 + $0xab8] sm:$0xf]
        %v1047 = vld [vmem:[%s349 + $0xabc] sm:$0xf]
        %v1048 = vld [vmem:[%s349 + $0xac0] sm:$0xf]
        %v1049 = vld [vmem:[%s349 + $0xac4] sm:$0xf]
        %v1050 = vld [vmem:[%s349 + $0xac8] sm:$0xf]
        %v1051 = vld [vmem:[%s349 + $0xacc] sm:$0xf]
        %v1052 = vld [vmem:[%s349 + $0xad0] sm:$0xf]
        %v1053 = vld [vmem:[%s349 + $0xad4] sm:$0xf]
        %v1054 = vld [vmem:[%s349 + $0xad8] sm:$0xf]
        %v1055 = vld [vmem:[%s349 + $0xadc] sm:$0xf]
        %v1056 = vld [vmem:[%s349 + $0xae0] sm:$0xf]
        %v1057 = vld [vmem:[%s349 + $0xae4] sm:$0xf]
        %v1058 = vld [vmem:[%s349 + $0xae8] sm:$0xf]
        %v1059 = vld [vmem:[%s349 + $0xaec] sm:$0xf]
        %v1060 = vld [vmem:[%s349 + $0xaf0] sm:$0xf]
        %v1061 = vld [vmem:[%s349 + $0xaf4] sm:$0xf]
        %v1062 = vld [vmem:[%s349 + $0xaf8] sm:$0xf]
        %v1063 = vld [vmem:[%s349 + $0xafc] sm:$0xf]
        %v1064 = vld [vmem:[%s349 + $0xb00] sm:$0xf]
        %v1065 = vld [vmem:[%s349 + $0xb04] sm:$0xf]
        %v1066 = vld [vmem:[%s349 + $0xb08] sm:$0xf]
        %v1067 = vld [vmem:[%s349 + $0xb0c] sm:$0xf]
        %v1068 = vld [vmem:[%s349 + $0xb10] sm:$0xf]
        %v1069 = vld [vmem:[%s349 + $0xb14] sm:$0xf]
        %v1070 = vld [vmem:[%s349 + $0xb18] sm:$0xf]
        %v1071 = vld [vmem:[%s349 + $0xb1c] sm:$0xf]
        %v1072 = vld [vmem:[%s349 + $0xb20] sm:$0xf]
        %v1073 = vld [vmem:[%s349 + $0xb24] sm:$0xf]
        %v1074 = vld [vmem:[%s349 + $0xb28] sm:$0xf]
        %v1075 = vld [vmem:[%s349 + $0xb2c] sm:$0xf]
        %v1076 = vld [vmem:[%s349 + $0xb30] sm:$0xf]
        %v1077 = vld [vmem:[%s349 + $0xb34] sm:$0xf]
        %v1078 = vld [vmem:[%s349 + $0xb38] sm:$0xf]
        %v1079 = vld [vmem:[%s349 + $0xb3c] sm:$0xf]
        %v1080 = vld [vmem:[%s349 + $0xb40] sm:$0xf]
        %v1081 = vld [vmem:[%s349 + $0xb44] sm:$0xf]
        %v1082 = vld [vmem:[%s349 + $0xb48] sm:$0xf]
        %v1083 = vld [vmem:[%s349 + $0xb4c] sm:$0xf]
        %v1084 = vld [vmem:[%s349 + $0xb50] sm:$0xf]
        %v1085 = vld [vmem:[%s349 + $0xb54] sm:$0xf]
        %v1086 = vld [vmem:[%s349 + $0xb58] sm:$0xf]
        %v1087 = vld [vmem:[%s349 + $0xb5c] sm:$0xf]
        %v1088 = vld [vmem:[%s349 + $0xb60] sm:$0xf]
        %v1089 = vld [vmem:[%s349 + $0xb64] sm:$0xf]
        %v1090 = vld [vmem:[%s349 + $0xb68] sm:$0xf]
        %v1091 = vld [vmem:[%s349 + $0xb6c] sm:$0xf]
        %v1092 = vld [vmem:[%s349 + $0xb70] sm:$0xf]
        %v1093 = vld [vmem:[%s349 + $0xb74] sm:$0xf]
        %v1094 = vld [vmem:[%s349 + $0xb78] sm:$0xf]
        %v1095 = vld [vmem:[%s349 + $0xb7c] sm:$0xf]
        %v1096 = vld [vmem:[%s349 + $0xb80] sm:$0xf]
        %v1097 = vld [vmem:[%s349 + $0xb84] sm:$0xf]
        %v1098 = vld [vmem:[%s349 + $0xb88] sm:$0xf]
        %v1099 = vld [vmem:[%s349 + $0xb8c] sm:$0xf]
        %v1100 = vld [vmem:[%s349 + $0xb90] sm:$0xf]
        %v1101 = vld [vmem:[%s349 + $0xb94] sm:$0xf]
        %v1102 = vld [vmem:[%s349 + $0xb98] sm:$0xf]
        %v1103 = vld [vmem:[%s349 + $0xb9c] sm:$0xf]
        %v1104 = vld [vmem:[%s349 + $0xba0] sm:$0xf]
        %v1105 = vld [vmem:[%s349 + $0xba4] sm:$0xf]
        %v1106 = vld [vmem:[%s349 + $0xba8] sm:$0xf]
        %v1107 = vld [vmem:[%s349 + $0xbac] sm:$0xf]
        %v1108 = vld [vmem:[%s349 + $0xbb0] sm:$0xf]
        %v1109 = vld [vmem:[%s349 + $0xbb4] sm:$0xf]
        %v1110 = vld [vmem:[%s349 + $0xbb8] sm:$0xf]
        %v1111 = vld [vmem:[%s349 + $0xbbc] sm:$0xf]
        %v1112 = vld [vmem:[%s349 + $0xbc0] sm:$0xf]
        %v1113 = vld [vmem:[%s349 + $0xbc4] sm:$0xf]
        %v1114 = vld [vmem:[%s349 + $0xbc8] sm:$0xf]
        %v1115 = vld [vmem:[%s349 + $0xbcc] sm:$0xf]
        %v1116 = vld [vmem:[%s349 + $0xbd0] sm:$0xf]
        %v1117 = vld [vmem:[%s349 + $0xbd4] sm:$0xf]
        %v1118 = vld [vmem:[%s349 + $0xbd8] sm:$0xf]
        %v1119 = vld [vmem:[%s349 + $0xbdc] sm:$0xf]
        %v1120 = vld [vmem:[%s349 + $0xbe0] sm:$0xf]
        %v1121 = vld [vmem:[%s349 + $0xbe4] sm:$0xf]
        %v1122 = vld [vmem:[%s349 + $0xbe8] sm:$0xf]
        %v1123 = vld [vmem:[%s349 + $0xbec] sm:$0xf]
        %v1124 = vld [vmem:[%s349 + $0xbf0] sm:$0xf]
        %v1125 = vld [vmem:[%s349 + $0xbf4] sm:$0xf]
        %v1126 = vld [vmem:[%s349 + $0xbf8] sm:$0xf]
        %v1127 = vld [vmem:[%s349 + $0xbfc] sm:$0xf]
        %v1128 = vld [vmem:[%s349 + $0xc00] sm:$0xf]
        %v1129 = vld [vmem:[%s349 + $0xc04] sm:$0xf]
        %v1130 = vld [vmem:[%s349 + $0xc08] sm:$0xf]
        %v1131 = vld [vmem:[%s349 + $0xc0c] sm:$0xf]
        %v1132 = vld [vmem:[%s349 + $0xc10] sm:$0xf]
        %v1133 = vld [vmem:[%s349 + $0xc14] sm:$0xf]
        %v1134 = vld [vmem:[%s349 + $0xc18] sm:$0xf]
        %v1135 = vld [vmem:[%s349 + $0xc1c] sm:$0xf]
        %v1136 = vld [vmem:[%s349 + $0xc20] sm:$0xf]
        %v1137 = vld [vmem:[%s349 + $0xc24] sm:$0xf]
        %v1138 = vld [vmem:[%s349 + $0xc28] sm:$0xf]
        %v1139 = vld [vmem:[%s349 + $0xc2c] sm:$0xf]
        %v1140 = vld [vmem:[%s349 + $0xc30] sm:$0xf]
        %v1141 = vld [vmem:[%s349 + $0xc34] sm:$0xf]
        %v1142 = vld [vmem:[%s349 + $0xc38] sm:$0xf]
        %v1143 = vld [vmem:[%s349 + $0xc3c] sm:$0xf]
        %v1144 = vld [vmem:[%s349 + $0xc40] sm:$0xf]
        %v1145 = vld [vmem:[%s349 + $0xc44] sm:$0xf]
        %v1146 = vld [vmem:[%s349 + $0xc48] sm:$0xf]
        %v1147 = vld [vmem:[%s349 + $0xc4c] sm:$0xf]
        %v1148 = vld [vmem:[%s349 + $0xc50] sm:$0xf]
        %v1149 = vld [vmem:[%s349 + $0xc54] sm:$0xf]
        %v1150 = vld [vmem:[%s349 + $0xc58] sm:$0xf]
        %v1151 = vld [vmem:[%s349 + $0xc5c] sm:$0xf]
        %v1152 = vld [vmem:[%s349 + $0xc60] sm:$0xf]
        %v1153 = vld [vmem:[%s349 + $0xc64] sm:$0xf]
        %v1154 = vld [vmem:[%s349 + $0xc68] sm:$0xf]
        %v1155 = vld [vmem:[%s349 + $0xc6c] sm:$0xf]
        %v1156 = vld [vmem:[%s349 + $0xc70] sm:$0xf]
        %v1157 = vld [vmem:[%s349 + $0xc74] sm:$0xf]
        %v1158 = vld [vmem:[%s349 + $0xc78] sm:$0xf]
        %v1159 = vld [vmem:[%s349 + $0xc7c] sm:$0xf]
        %v1160 = vld [vmem:[%s349 + $0xc80] sm:$0xf]
        %v1161 = vld [vmem:[%s349 + $0xc84] sm:$0xf]
        %v1162 = vld [vmem:[%s349 + $0xc88] sm:$0xf]
        %v1163 = vld [vmem:[%s349 + $0xc8c] sm:$0xf]
        %v1164 = vld [vmem:[%s349 + $0xc90] sm:$0xf]
        %v1165 = vld [vmem:[%s349 + $0xc94] sm:$0xf]
        %v1166 = vld [vmem:[%s349 + $0xc98] sm:$0xf]
        %v1167 = vld [vmem:[%s349 + $0xc9c] sm:$0xf]
        %v1168 = vld [vmem:[%s349 + $0xca0] sm:$0xf]
        %v1169 = vld [vmem:[%s349 + $0xca4] sm:$0xf]
        %v1170 = vld [vmem:[%s349 + $0xca8] sm:$0xf]
        %v1171 = vld [vmem:[%s349 + $0xcac] sm:$0xf]
        %v1172 = vld [vmem:[%s349 + $0xcb0] sm:$0xf]
        %v1173 = vld [vmem:[%s349 + $0xcb4] sm:$0xf]
        %v1174 = vld [vmem:[%s349 + $0xcb8] sm:$0xf]
        %v1175 = vld [vmem:[%s349 + $0xcbc] sm:$0xf]
        %v1176 = vld [vmem:[%s349 + $0xcc0] sm:$0xf]
        %v1177 = vld [vmem:[%s349 + $0xcc4] sm:$0xf]
        %v1178 = vld [vmem:[%s349 + $0xcc8] sm:$0xf]
        %v1179 = vld [vmem:[%s349 + $0xccc] sm:$0xf]
        %v1180 = vld [vmem:[%s349 + $0xcd0] sm:$0xf]
        %v1181 = vld [vmem:[%s349 + $0xcd4] sm:$0xf]
        %v1182 = vld [vmem:[%s349 + $0xcd8] sm:$0xf]
        %v1183 = vld [vmem:[%s349 + $0xcdc] sm:$0xf]
        %v1184 = vld [vmem:[%s349 + $0xce0] sm:$0xf]
        %v1185 = vld [vmem:[%s349 + $0xce4] sm:$0xf]
        %v1186 = vld [vmem:[%s349 + $0xce8] sm:$0xf]
        %v1187 = vld [vmem:[%s349 + $0xcec] sm:$0xf]
        %v1188 = vld [vmem:[%s349 + $0xcf0] sm:$0xf]
        %v1189 = vld [vmem:[%s349 + $0xcf4] sm:$0xf]
        %v1190 = vld [vmem:[%s349 + $0xcf8] sm:$0xf]
        %v1191 = vld [vmem:[%s349 + $0xcfc] sm:$0xf]
        %v1192 = vld [vmem:[%s349 + $0xd00] sm:$0xf]
        %v1193 = vld [vmem:[%s349 + $0xd04] sm:$0xf]
        %v1194 = vld [vmem:[%s349 + $0xd08] sm:$0xf]
        %v1195 = vld [vmem:[%s349 + $0xd0c] sm:$0xf]
        %v1196 = vld [vmem:[%s349 + $0xd10] sm:$0xf]
        %v1197 = vld [vmem:[%s349 + $0xd14] sm:$0xf]
        %v1198 = vld [vmem:[%s349 + $0xd18] sm:$0xf]
        %v1199 = vld [vmem:[%s349 + $0xd1c] sm:$0xf]
        %v1200 = vld [vmem:[%s349 + $0xd20] sm:$0xf]
        %v1201 = vld [vmem:[%s349 + $0xd24] sm:$0xf]
        %v1202 = vld [vmem:[%s349 + $0xd28] sm:$0xf]
        %v1203 = vld [vmem:[%s349 + $0xd2c] sm:$0xf]
        %v1204 = vld [vmem:[%s349 + $0xd30] sm:$0xf]
        %v1205 = vld [vmem:[%s349 + $0xd34] sm:$0xf]
        %v1206 = vld [vmem:[%s349 + $0xd38] sm:$0xf]
        %v1207 = vld [vmem:[%s349 + $0xd3c] sm:$0xf]
        %v1208 = vld [vmem:[%s349 + $0xd40] sm:$0xf]
        %v1209 = vld [vmem:[%s349 + $0xd44] sm:$0xf]
        %v1210 = vld [vmem:[%s349 + $0xd48] sm:$0xf]
        %v1211 = vld [vmem:[%s349 + $0xd4c] sm:$0xf]
        %v1212 = vld [vmem:[%s349 + $0xd50] sm:$0xf]
        %v1213 = vld [vmem:[%s349 + $0xd54] sm:$0xf]
        %v1214 = vld [vmem:[%s349 + $0xd58] sm:$0xf]
        %v1215 = vld [vmem:[%s349 + $0xd5c] sm:$0xf]
        %v1216 = vld [vmem:[%s349 + $0xd60] sm:$0xf]
        %v1217 = vld [vmem:[%s349 + $0xd64] sm:$0xf]
        %v1218 = vld [vmem:[%s349 + $0xd68] sm:$0xf]
        %v1219 = vld [vmem:[%s349 + $0xd6c] sm:$0xf]
        %v1220 = vld [vmem:[%s349 + $0xd70] sm:$0xf]
        %v1221 = vld [vmem:[%s349 + $0xd74] sm:$0xf]
        %v1222 = vld [vmem:[%s349 + $0xd78] sm:$0xf]
        %v1223 = vld [vmem:[%s349 + $0xd7c] sm:$0xf]
        %v1224 = vld [vmem:[%s349 + $0xd80] sm:$0xf]
        %v1225 = vld [vmem:[%s349 + $0xd84] sm:$0xf]
        %v1226 = vld [vmem:[%s349 + $0xd88] sm:$0xf]
        %v1227 = vld [vmem:[%s349 + $0xd8c] sm:$0xf]
        %v1228 = vld [vmem:[%s349 + $0xd90] sm:$0xf]
        %v1229 = vld [vmem:[%s349 + $0xd94] sm:$0xf]
        %v1230 = vld [vmem:[%s349 + $0xd98] sm:$0xf]
        %v1231 = vld [vmem:[%s349 + $0xd9c] sm:$0xf]
        %v1232 = vld [vmem:[%s349 + $0xda0] sm:$0xf]
        %v1233 = vld [vmem:[%s349 + $0xda4] sm:$0xf]
        %v1234 = vld [vmem:[%s349 + $0xda8] sm:$0xf]
        %v1235 = vld [vmem:[%s349 + $0xdac] sm:$0xf]
        %v1236 = vld [vmem:[%s349 + $0xdb0] sm:$0xf]
        %v1237 = vld [vmem:[%s349 + $0xdb4] sm:$0xf]
        %v1238 = vld [vmem:[%s349 + $0xdb8] sm:$0xf]
        %v1239 = vld [vmem:[%s349 + $0xdbc] sm:$0xf]
        %v1240 = vld [vmem:[%s349 + $0xdc0] sm:$0xf]
        %v1241 = vld [vmem:[%s349 + $0xdc4] sm:$0xf]
        %v1242 = vld [vmem:[%s349 + $0xdc8] sm:$0xf]
        %v1243 = vld [vmem:[%s349 + $0xdcc] sm:$0xf]
        %v1244 = vld [vmem:[%s349 + $0xdd0] sm:$0xf]
        %v1245 = vld [vmem:[%s349 + $0xdd4] sm:$0xf]
        %v1246 = vld [vmem:[%s349 + $0xdd8] sm:$0xf]
        %v1247 = vld [vmem:[%s349 + $0xddc] sm:$0xf]
        %v1248 = vld [vmem:[%s349 + $0xde0] sm:$0xf]
        %v1249 = vld [vmem:[%s349 + $0xde4] sm:$0xf]
        %v1250 = vld [vmem:[%s349 + $0xde8] sm:$0xf]
        %v1251 = vld [vmem:[%s349 + $0xdec] sm:$0xf]
        %v1252 = vld [vmem:[%s349 + $0xdf0] sm:$0xf]
        %v1253 = vld [vmem:[%s349 + $0xdf4] sm:$0xf]
        %v1254 = vld [vmem:[%s349 + $0xdf8] sm:$0xf]
        %v1255 = vld [vmem:[%s349 + $0xdfc] sm:$0xf]
        %v1256 = vld [vmem:[%s349 + $0xe00] sm:$0xf]
        %v1257 = vld [vmem:[%s349 + $0xe04] sm:$0xf]
        %v1258 = vld [vmem:[%s349 + $0xe08] sm:$0xf]
        %v1259 = vld [vmem:[%s349 + $0xe0c] sm:$0xf]
        %v1260 = vld [vmem:[%s349 + $0xe10] sm:$0xf]
        %v1261 = vld [vmem:[%s349 + $0xe14] sm:$0xf]
        %v1262 = vld [vmem:[%s349 + $0xe18] sm:$0xf]
        %v1263 = vld [vmem:[%s349 + $0xe1c] sm:$0xf]
        %v1264 = vld [vmem:[%s349 + $0xe20] sm:$0xf]
        %v1265 = vld [vmem:[%s349 + $0xe24] sm:$0xf]
        %v1266 = vld [vmem:[%s349 + $0xe28] sm:$0xf]
        %v1267 = vld [vmem:[%s349 + $0xe2c] sm:$0xf]
        %v1268 = vld [vmem:[%s349 + $0xe30] sm:$0xf]
        %v1269 = vld [vmem:[%s349 + $0xe34] sm:$0xf]
        %v1270 = vld [vmem:[%s349 + $0xe38] sm:$0xf]
        %v1271 = vld [vmem:[%s349 + $0xe3c] sm:$0xf]
        %v1272 = vld [vmem:[%s349 + $0xe40] sm:$0xf]
        %v1273 = vld [vmem:[%s349 + $0xe44] sm:$0xf]
        %v1274 = vld [vmem:[%s349 + $0xe48] sm:$0xf]
        %v1275 = vld [vmem:[%s349 + $0xe4c] sm:$0xf]
        %v1276 = vld [vmem:[%s349 + $0xe50] sm:$0xf]
        %v1277 = vld [vmem:[%s349 + $0xe54] sm:$0xf]
        %v1278 = vld [vmem:[%s349 + $0xe58] sm:$0xf]
        %v1279 = vld [vmem:[%s349 + $0xe5c] sm:$0xf]
        %v1280 = vld [vmem:[%s349 + $0xe60] sm:$0xf]
        %v1281 = vld [vmem:[%s349 + $0xe64] sm:$0xf]
        %v1282 = vld [vmem:[%s349 + $0xe68] sm:$0xf]
        %v1283 = vld [vmem:[%s349 + $0xe6c] sm:$0xf]
        %v1284 = vld [vmem:[%s349 + $0xe70] sm:$0xf]
        %v1285 = vld [vmem:[%s349 + $0xe74] sm:$0xf]
        %v1286 = vld [vmem:[%s349 + $0xe78] sm:$0xf]
        %v1287 = vld [vmem:[%s349 + $0xe7c] sm:$0xf]
        %v1288 = vld [vmem:[%s349 + $0xe80] sm:$0xf]
        %v1289 = vld [vmem:[%s349 + $0xe84] sm:$0xf]
        %v1290 = vld [vmem:[%s349 + $0xe88] sm:$0xf]
        %v1291 = vld [vmem:[%s349 + $0xe8c] sm:$0xf]
        %v1292 = vld [vmem:[%s349 + $0xe90] sm:$0xf]
        %v1293 = vld [vmem:[%s349 + $0xe94] sm:$0xf]
        %v1294 = vld [vmem:[%s349 + $0xe98] sm:$0xf]
        %v1295 = vld [vmem:[%s349 + $0xe9c] sm:$0xf]
        %v1296 = vld [vmem:[%s349 + $0xea0] sm:$0xf]
        %v1297 = vld [vmem:[%s349 + $0xea4] sm:$0xf]
        %v1298 = vld [vmem:[%s349 + $0xea8] sm:$0xf]
        %v1299 = vld [vmem:[%s349 + $0xeac] sm:$0xf]
        %v1300 = vld [vmem:[%s349 + $0xeb0] sm:$0xf]
        %v1301 = vld [vmem:[%s349 + $0xeb4] sm:$0xf]
        %v1302 = vld [vmem:[%s349 + $0xeb8] sm:$0xf]
        %v1303 = vld [vmem:[%s349 + $0xebc] sm:$0xf]
        %v1304 = vld [vmem:[%s349 + $0xec0] sm:$0xf]
        %v1305 = vld [vmem:[%s349 + $0xec4] sm:$0xf]
        %v1306 = vld [vmem:[%s349 + $0xec8] sm:$0xf]
        %v1307 = vld [vmem:[%s349 + $0xecc] sm:$0xf]
        %v1308 = vld [vmem:[%s349 + $0xed0] sm:$0xf]
        %v1309 = vld [vmem:[%s349 + $0xed4] sm:$0xf]
        %v1310 = vld [vmem:[%s349 + $0xed8] sm:$0xf]
        %v1311 = vld [vmem:[%s349 + $0xedc] sm:$0xf]
        %v1312 = vld [vmem:[%s349 + $0xee0] sm:$0xf]
        %v1313 = vld [vmem:[%s349 + $0xee4] sm:$0xf]
        %v1314 = vld [vmem:[%s349 + $0xee8] sm:$0xf]
        %v1315 = vld [vmem:[%s349 + $0xeec] sm:$0xf]
        %v1316 = vld [vmem:[%s349 + $0xef0] sm:$0xf]
        %v1317 = vld [vmem:[%s349 + $0xef4] sm:$0xf]
        %v1318 = vld [vmem:[%s349 + $0xef8] sm:$0xf]
        %v1319 = vld [vmem:[%s349 + $0xefc] sm:$0xf]
        %v1320 = vld [vmem:[%s349 + $0xf00] sm:$0xf]
        %v1321 = vld [vmem:[%s349 + $0xf04] sm:$0xf]
        %v1322 = vld [vmem:[%s349 + $0xf08] sm:$0xf]
        %v1323 = vld [vmem:[%s349 + $0xf0c] sm:$0xf]
        %v1324 = vld [vmem:[%s349 + $0xf10] sm:$0xf]
        %v1325 = vld [vmem:[%s349 + $0xf14] sm:$0xf]
        %v1326 = vld [vmem:[%s349 + $0xf18] sm:$0xf]
        %v1327 = vld [vmem:[%s349 + $0xf1c] sm:$0xf]
        %v1328 = vld [vmem:[%s349 + $0xf20] sm:$0xf]
        %v1329 = vld [vmem:[%s349 + $0xf24] sm:$0xf]
        %v1330 = vld [vmem:[%s349 + $0xf28] sm:$0xf]
        %v1331 = vld [vmem:[%s349 + $0xf2c] sm:$0xf]
        %v1332 = vld [vmem:[%s349 + $0xf30] sm:$0xf]
        %v1333 = vld [vmem:[%s349 + $0xf34] sm:$0xf]
        %v1334 = vld [vmem:[%s349 + $0xf38] sm:$0xf]
        %v1335 = vld [vmem:[%s349 + $0xf3c] sm:$0xf]
        %v1336 = vld [vmem:[%s349 + $0xf40] sm:$0xf]
        %v1337 = vld [vmem:[%s349 + $0xf44] sm:$0xf]
        %v1338 = vld [vmem:[%s349 + $0xf48] sm:$0xf]
        %v1339 = vld [vmem:[%s349 + $0xf4c] sm:$0xf]
        %v1340 = vld [vmem:[%s349 + $0xf50] sm:$0xf]
        %v1341 = vld [vmem:[%s349 + $0xf54] sm:$0xf]
        %v1342 = vld [vmem:[%s349 + $0xf58] sm:$0xf]
        %v1343 = vld [vmem:[%s349 + $0xf5c] sm:$0xf]
        %v1344 = vld [vmem:[%s349 + $0xf60] sm:$0xf]
        %v1345 = vld [vmem:[%s349 + $0xf64] sm:$0xf]
        %v1346 = vld [vmem:[%s349 + $0xf68] sm:$0xf]
        %v1347 = vld [vmem:[%s349 + $0xf6c] sm:$0xf]
        %v1348 = vld [vmem:[%s349 + $0xf70] sm:$0xf]
        %v1349 = vld [vmem:[%s349 + $0xf74] sm:$0xf]
        %v1350 = vld [vmem:[%s349 + $0xf78] sm:$0xf]
        %v1351 = vld [vmem:[%s349 + $0xf7c] sm:$0xf]
        %v1352 = vld [vmem:[%s349 + $0xf80] sm:$0xf]
        %v1353 = vld [vmem:[%s349 + $0xf84] sm:$0xf]
        %v1354 = vld [vmem:[%s349 + $0xf88] sm:$0xf]
        %v1355 = vld [vmem:[%s349 + $0xf8c] sm:$0xf]
        %v1356 = vld [vmem:[%s349 + $0xf90] sm:$0xf]
        %v1357 = vld [vmem:[%s349 + $0xf94] sm:$0xf]
        %v1358 = vld [vmem:[%s349 + $0xf98] sm:$0xf]
        %v1359 = vld [vmem:[%s349 + $0xf9c] sm:$0xf]
        %v1360 = vld [vmem:[%s349 + $0xfa0] sm:$0xf]
        %v1361 = vld [vmem:[%s349 + $0xfa4] sm:$0xf]
        %v1362 = vld [vmem:[%s349 + $0xfa8] sm:$0xf]
        %v1363 = vld [vmem:[%s349 + $0xfac] sm:$0xf]
        %v1364 = vld [vmem:[%s349 + $0xfb0] sm:$0xf]
        %v1365 = vld [vmem:[%s349 + $0xfb4] sm:$0xf]
        %v1366 = vld [vmem:[%s349 + $0xfb8] sm:$0xf]
        %v1367 = vld [vmem:[%s349 + $0xfbc] sm:$0xf]
        %v1368 = vld [vmem:[%s349 + $0xfc0] sm:$0xf]
        %v1369 = vld [vmem:[%s349 + $0xfc4] sm:$0xf]
        %v1370 = vld [vmem:[%s349 + $0xfc8] sm:$0xf]
        %v1371 = vld [vmem:[%s349 + $0xfcc] sm:$0xf]
        %v1372 = vld [vmem:[%s349 + $0xfd0] sm:$0xf]
        %v1373 = vld [vmem:[%s349 + $0xfd4] sm:$0xf]
        %v1374 = vld [vmem:[%s349 + $0xfd8] sm:$0xf]
        %v1375 = vld [vmem:[%s349 + $0xfdc] sm:$0xf]
        %v1376 = vld [vmem:[%s349 + $0xfe0] sm:$0xf]
        %v1377 = vld [vmem:[%s349 + $0xfe4] sm:$0xf]
        %v1378 = vld [vmem:[%s349 + $0xfe8] sm:$0xf]
        %v1379 = vld [vmem:[%s349 + $0xfec] sm:$0xf]
        %v1380 = vld [vmem:[%s349 + $0xff0] sm:$0xf]
        %v1381 = vld [vmem:[%s349 + $0xff4] sm:$0xf]
        %v1382 = vld [vmem:[%s349 + $0xff8] sm:$0xf]
        %v1383 = vld [vmem:[%s349 + $0xffc] sm:$0xf]
        %v1384 = vld [vmem:[%s2] sm:$0xf]
        %v1385 = vld [vmem:[%s2 + $0x4] sm:$0xf]
        %v1386 = vld [vmem:[%s2 + $0x8] sm:$0xf]
        %v1387 = vld [vmem:[%s2 + $0xc] sm:$0xf]
        %v1388 = vld [vmem:[%s3] sm:$0x1]
        %v1390 = vlaneseq
        %v1391 = vshrl.u32 %v1390, 7
        %v1392 = vsub.s32 0, %v1391
        %v1393 = vrot.slane %v1388, %v1392
        %v2419 = vunpack.c.l.b16 %v360
        %v2420 = vunpack.c.l.b16 %v361
        %v2421 = vunpack.c.l.b16 %v362
        %v2422 = vunpack.c.l.b16 %v363
        %v2423 = vunpack.c.l.b16 %v364
        %v2424 = vunpack.c.l.b16 %v365
        %v2425 = vunpack.c.l.b16 %v366
        %v2426 = vunpack.c.l.b16 %v367
        %v2427 = vunpack.c.l.b16 %v368
        %v2428 = vunpack.c.l.b16 %v369
        %v2429 = vunpack.c.l.b16 %v370
        %v2430 = vunpack.c.l.b16 %v371
        %v2431 = vunpack.c.l.b16 %v372
        %v2432 = vunpack.c.l.b16 %v373
        %v2433 = vunpack.c.l.b16 %v374
        %v2434 = vunpack.c.l.b16 %v375
        %v2435 = vunpack.c.l.b16 %v376
        %v2436 = vunpack.c.l.b16 %v377
        %v2437 = vunpack.c.l.b16 %v378
        %v2438 = vunpack.c.l.b16 %v379
        %v2439 = vunpack.c.l.b16 %v380
        %v2440 = vunpack.c.l.b16 %v381
        %v2441 = vunpack.c.l.b16 %v382
        %v2442 = vunpack.c.l.b16 %v383
        %v2443 = vunpack.c.l.b16 %v384
        %v2444 = vunpack.c.l.b16 %v385
        %v2445 = vunpack.c.l.b16 %v386
        %v2446 = vunpack.c.l.b16 %v387
        %v2447 = vunpack.c.l.b16 %v388
        %v2448 = vunpack.c.l.b16 %v389
        %v2449 = vunpack.c.l.b16 %v390
        %v2450 = vunpack.c.l.b16 %v391
        %v2451 = vunpack.c.l.b16 %v392
        %v2452 = vunpack.c.l.b16 %v393
        %v2453 = vunpack.c.l.b16 %v394
        %v2454 = vunpack.c.l.b16 %v395
        %v2455 = vunpack.c.l.b16 %v396
        %v2456 = vunpack.c.l.b16 %v397
        %v2457 = vunpack.c.l.b16 %v398
        %v2458 = vunpack.c.l.b16 %v399
        %v2459 = vunpack.c.l.b16 %v400
        %v2460 = vunpack.c.l.b16 %v401
        %v2461 = vunpack.c.l.b16 %v402
        %v2462 = vunpack.c.l.b16 %v403
        %v2463 = vunpack.c.l.b16 %v404
        %v2464 = vunpack.c.l.b16 %v405
        %v2465 = vunpack.c.l.b16 %v406
        %v2466 = vunpack.c.l.b16 %v407
        %v2467 = vunpack.c.l.b16 %v408
        %v2468 = vunpack.c.l.b16 %v409
        %v2469 = vunpack.c.l.b16 %v410
        %v2470 = vunpack.c.l.b16 %v411
        %v2471 = vunpack.c.l.b16 %v412
        %v2472 = vunpack.c.l.b16 %v413
        %v2473 = vunpack.c.l.b16 %v414
        %v2474 = vunpack.c.l.b16 %v415
        %v2475 = vunpack.c.l.b16 %v416
        %v2476 = vunpack.c.l.b16 %v417
        %v2477 = vunpack.c.l.b16 %v418
        %v2478 = vunpack.c.l.b16 %v419
        %v2479 = vunpack.c.l.b16 %v420
        %v2480 = vunpack.c.l.b16 %v421
        %v2481 = vunpack.c.l.b16 %v422
        %v2482 = vunpack.c.l.b16 %v423
        %v2483 = vunpack.c.l.b16 %v424
        %v2484 = vunpack.c.l.b16 %v425
        %v2485 = vunpack.c.l.b16 %v426
        %v2486 = vunpack.c.l.b16 %v427
        %v2487 = vunpack.c.l.b16 %v428
        %v2488 = vunpack.c.l.b16 %v429
        %v2489 = vunpack.c.l.b16 %v430
        %v2490 = vunpack.c.l.b16 %v431
        %v2491 = vunpack.c.l.b16 %v432
        %v2492 = vunpack.c.l.b16 %v433
        %v2493 = vunpack.c.l.b16 %v434
        %v2494 = vunpack.c.l.b16 %v435
        %v2495 = vunpack.c.l.b16 %v436
        %v2496 = vunpack.c.l.b16 %v437
        %v2497 = vunpack.c.l.b16 %v438
        %v2498 = vunpack.c.l.b16 %v439
        %v2499 = vunpack.c.l.b16 %v440
        %v2500 = vunpack.c.l.b16 %v441
        %v2501 = vunpack.c.l.b16 %v442
        %v2502 = vunpack.c.l.b16 %v443
        %v2503 = vunpack.c.l.b16 %v444
        %v2504 = vunpack.c.l.b16 %v445
        %v2505 = vunpack.c.l.b16 %v446
        %v2506 = vunpack.c.l.b16 %v447
        %v2507 = vunpack.c.l.b16 %v448
        %v2508 = vunpack.c.l.b16 %v449
        %v2509 = vunpack.c.l.b16 %v450
        %v2510 = vunpack.c.l.b16 %v451
        %v2511 = vunpack.c.l.b16 %v452
        %v2512 = vunpack.c.l.b16 %v453
        %v2513 = vunpack.c.l.b16 %v454
        %v2514 = vunpack.c.l.b16 %v455
        %v2515 = vunpack.c.l.b16 %v456
        %v2516 = vunpack.c.l.b16 %v457
        %v2517 = vunpack.c.l.b16 %v458
        %v2518 = vunpack.c.l.b16 %v459
        %v2519 = vunpack.c.l.b16 %v460
        %v2520 = vunpack.c.l.b16 %v461
        %v2521 = vunpack.c.l.b16 %v462
        %v2522 = vunpack.c.l.b16 %v463
        %v2523 = vunpack.c.l.b16 %v464
        %v2524 = vunpack.c.l.b16 %v465
        %v2525 = vunpack.c.l.b16 %v466
        %v2526 = vunpack.c.l.b16 %v467
        %v2527 = vunpack.c.l.b16 %v468
        %v2528 = vunpack.c.l.b16 %v469
        %v2529 = vunpack.c.l.b16 %v470
        %v2530 = vunpack.c.l.b16 %v471
        %v2531 = vunpack.c.l.b16 %v472
        %v2532 = vunpack.c.l.b16 %v473
        %v2533 = vunpack.c.l.b16 %v474
        %v2534 = vunpack.c.l.b16 %v475
        %v2535 = vunpack.c.l.b16 %v476
        %v2536 = vunpack.c.l.b16 %v477
        %v2537 = vunpack.c.l.b16 %v478
        %v2538 = vunpack.c.l.b16 %v479
        %v2539 = vunpack.c.l.b16 %v480
        %v2540 = vunpack.c.l.b16 %v481
        %v2541 = vunpack.c.l.b16 %v482
        %v2542 = vunpack.c.l.b16 %v483
        %v2543 = vunpack.c.l.b16 %v484
        %v2544 = vunpack.c.l.b16 %v485
        %v2545 = vunpack.c.l.b16 %v486
        %v2546 = vunpack.c.l.b16 %v487
        %v2547 = vunpack.c.l.b16 %v488
        %v2548 = vunpack.c.l.b16 %v489
        %v2549 = vunpack.c.l.b16 %v490
        %v2550 = vunpack.c.l.b16 %v491
        %v2551 = vunpack.c.l.b16 %v492
        %v2552 = vunpack.c.l.b16 %v493
        %v2553 = vunpack.c.l.b16 %v494
        %v2554 = vunpack.c.l.b16 %v495
        %v2555 = vunpack.c.l.b16 %v496
        %v2556 = vunpack.c.l.b16 %v497
        %v2557 = vunpack.c.l.b16 %v498
        %v2558 = vunpack.c.l.b16 %v499
        %v2559 = vunpack.c.l.b16 %v500
        %v2560 = vunpack.c.l.b16 %v501
        %v2561 = vunpack.c.l.b16 %v502
        %v2562 = vunpack.c.l.b16 %v503
        %v2563 = vunpack.c.l.b16 %v504
        %v2564 = vunpack.c.l.b16 %v505
        %v2565 = vunpack.c.l.b16 %v506
        %v2566 = vunpack.c.l.b16 %v507
        %v2567 = vunpack.c.l.b16 %v508
        %v2568 = vunpack.c.l.b16 %v509
        %v2569 = vunpack.c.l.b16 %v510
        %v2570 = vunpack.c.l.b16 %v511
        %v2571 = vunpack.c.l.b16 %v512
        %v2572 = vunpack.c.l.b16 %v513
        %v2573 = vunpack.c.l.b16 %v514
        %v2574 = vunpack.c.l.b16 %v515
        %v2575 = vunpack.c.l.b16 %v516
        %v2576 = vunpack.c.l.b16 %v517
        %v2577 = vunpack.c.l.b16 %v518
        %v2578 = vunpack.c.l.b16 %v519
        %v2579 = vunpack.c.l.b16 %v520
        %v2580 = vunpack.c.l.b16 %v521
        %v2581 = vunpack.c.l.b16 %v522
        %v2582 = vunpack.c.l.b16 %v523
        %v2583 = vunpack.c.l.b16 %v524
        %v2584 = vunpack.c.l.b16 %v525
        %v2585 = vunpack.c.l.b16 %v526
        %v2586 = vunpack.c.l.b16 %v527
        %v2587 = vunpack.c.l.b16 %v528
        %v2588 = vunpack.c.l.b16 %v529
        %v2589 = vunpack.c.l.b16 %v530
        %v2590 = vunpack.c.l.b16 %v531
        %v2591 = vunpack.c.l.b16 %v532
        %v2592 = vunpack.c.l.b16 %v533
        %v2593 = vunpack.c.l.b16 %v534
        %v2594 = vunpack.c.l.b16 %v535
        %v2595 = vunpack.c.l.b16 %v536
        %v2596 = vunpack.c.l.b16 %v537
        %v2597 = vunpack.c.l.b16 %v538
        %v2598 = vunpack.c.l.b16 %v539
        %v2599 = vunpack.c.l.b16 %v540
        %v2600 = vunpack.c.l.b16 %v541
        %v2601 = vunpack.c.l.b16 %v542
        %v2602 = vunpack.c.l.b16 %v543
        %v2603 = vunpack.c.l.b16 %v544
        %v2604 = vunpack.c.l.b16 %v545
        %v2605 = vunpack.c.l.b16 %v546
        %v2606 = vunpack.c.l.b16 %v547
        %v2607 = vunpack.c.l.b16 %v548
        %v2608 = vunpack.c.l.b16 %v549
        %v2609 = vunpack.c.l.b16 %v550
        %v2610 = vunpack.c.l.b16 %v551
        %v2611 = vunpack.c.l.b16 %v552
        %v2612 = vunpack.c.l.b16 %v553
        %v2613 = vunpack.c.l.b16 %v554
        %v2614 = vunpack.c.l.b16 %v555
        %v2615 = vunpack.c.l.b16 %v556
        %v2616 = vunpack.c.l.b16 %v557
        %v2617 = vunpack.c.l.b16 %v558
        %v2618 = vunpack.c.l.b16 %v559
        %v2619 = vunpack.c.l.b16 %v560
        %v2620 = vunpack.c.l.b16 %v561
        %v2621 = vunpack.c.l.b16 %v562
        %v2622 = vunpack.c.l.b16 %v563
        %v2623 = vunpack.c.l.b16 %v564
        %v2624 = vunpack.c.l.b16 %v565
        %v2625 = vunpack.c.l.b16 %v566
        %v2626 = vunpack.c.l.b16 %v567
        %v2627 = vunpack.c.l.b16 %v568
        %v2628 = vunpack.c.l.b16 %v569
        %v2629 = vunpack.c.l.b16 %v570
        %v2630 = vunpack.c.l.b16 %v571
        %v2631 = vunpack.c.l.b16 %v572
        %v2632 = vunpack.c.l.b16 %v573
        %v2633 = vunpack.c.l.b16 %v574
        %v2634 = vunpack.c.l.b16 %v575
        %v2635 = vunpack.c.l.b16 %v576
        %v2636 = vunpack.c.l.b16 %v577
        %v2637 = vunpack.c.l.b16 %v578
        %v2638 = vunpack.c.l.b16 %v579
        %v2639 = vunpack.c.l.b16 %v580
        %v2640 = vunpack.c.l.b16 %v581
        %v2641 = vunpack.c.l.b16 %v582
        %v2642 = vunpack.c.l.b16 %v583
        %v2643 = vunpack.c.l.b16 %v584
        %v2644 = vunpack.c.l.b16 %v585
        %v2645 = vunpack.c.l.b16 %v586
        %v2646 = vunpack.c.l.b16 %v587
        %v2647 = vunpack.c.l.b16 %v588
        %v2648 = vunpack.c.l.b16 %v589
        %v2649 = vunpack.c.l.b16 %v590
        %v2650 = vunpack.c.l.b16 %v591
        %v2651 = vunpack.c.l.b16 %v592
        %v2652 = vunpack.c.l.b16 %v593
        %v2653 = vunpack.c.l.b16 %v594
        %v2654 = vunpack.c.l.b16 %v595
        %v2655 = vunpack.c.l.b16 %v596
        %v2656 = vunpack.c.l.b16 %v597
        %v2657 = vunpack.c.l.b16 %v598
        %v2658 = vunpack.c.l.b16 %v599
        %v2659 = vunpack.c.l.b16 %v600
        %v2660 = vunpack.c.l.b16 %v601
        %v2661 = vunpack.c.l.b16 %v602
        %v2662 = vunpack.c.l.b16 %v603
        %v2663 = vunpack.c.l.b16 %v604
        %v2664 = vunpack.c.l.b16 %v605
        %v2665 = vunpack.c.l.b16 %v606
        %v2666 = vunpack.c.l.b16 %v607
        %v2667 = vunpack.c.l.b16 %v608
        %v2668 = vunpack.c.l.b16 %v609
        %v2669 = vunpack.c.l.b16 %v610
        %v2670 = vunpack.c.l.b16 %v611
        %v2671 = vunpack.c.l.b16 %v612
        %v2672 = vunpack.c.l.b16 %v613
        %v2673 = vunpack.c.l.b16 %v614
        %v2674 = vunpack.c.l.b16 %v615
        %v2675 = vunpack.c.l.b16 %v616
        %v2676 = vunpack.c.l.b16 %v617
        %v2677 = vunpack.c.l.b16 %v618
        %v2678 = vunpack.c.l.b16 %v619
        %v2679 = vunpack.c.l.b16 %v620
        %v2680 = vunpack.c.l.b16 %v621
        %v2681 = vunpack.c.l.b16 %v622
        %v2682 = vunpack.c.l.b16 %v623
        %v2683 = vunpack.c.l.b16 %v624
        %v2684 = vunpack.c.l.b16 %v625
        %v2685 = vunpack.c.l.b16 %v626
        %v2686 = vunpack.c.l.b16 %v627
        %v2687 = vunpack.c.l.b16 %v628
        %v2688 = vunpack.c.l.b16 %v629
        %v2689 = vunpack.c.l.b16 %v630
        %v2690 = vunpack.c.l.b16 %v631
        %v2691 = vunpack.c.l.b16 %v632
        %v2692 = vunpack.c.l.b16 %v633
        %v2693 = vunpack.c.l.b16 %v634
        %v2694 = vunpack.c.l.b16 %v635
        %v2695 = vunpack.c.l.b16 %v636
        %v2696 = vunpack.c.l.b16 %v637
        %v2697 = vunpack.c.l.b16 %v638
        %v2698 = vunpack.c.l.b16 %v639
        %v2699 = vunpack.c.l.b16 %v640
        %v2700 = vunpack.c.l.b16 %v641
        %v2701 = vunpack.c.l.b16 %v642
        %v2702 = vunpack.c.l.b16 %v643
        %v2703 = vunpack.c.l.b16 %v644
        %v2704 = vunpack.c.l.b16 %v645
        %v2705 = vunpack.c.l.b16 %v646
        %v2706 = vunpack.c.l.b16 %v647
        %v2707 = vunpack.c.l.b16 %v648
        %v2708 = vunpack.c.l.b16 %v649
        %v2709 = vunpack.c.l.b16 %v650
        %v2710 = vunpack.c.l.b16 %v651
        %v2711 = vunpack.c.l.b16 %v652
        %v2712 = vunpack.c.l.b16 %v653
        %v2713 = vunpack.c.l.b16 %v654
        %v2714 = vunpack.c.l.b16 %v655
        %v2715 = vunpack.c.l.b16 %v656
        %v2716 = vunpack.c.l.b16 %v657
        %v2717 = vunpack.c.l.b16 %v658
        %v2718 = vunpack.c.l.b16 %v659
        %v2719 = vunpack.c.l.b16 %v660
        %v2720 = vunpack.c.l.b16 %v661
        %v2721 = vunpack.c.l.b16 %v662
        %v2722 = vunpack.c.l.b16 %v663
        %v2723 = vunpack.c.l.b16 %v664
        %v2724 = vunpack.c.l.b16 %v665
        %v2725 = vunpack.c.l.b16 %v666
        %v2726 = vunpack.c.l.b16 %v667
        %v2727 = vunpack.c.l.b16 %v668
        %v2728 = vunpack.c.l.b16 %v669
        %v2729 = vunpack.c.l.b16 %v670
        %v2730 = vunpack.c.l.b16 %v671
        %v2731 = vunpack.c.l.b16 %v672
        %v2732 = vunpack.c.l.b16 %v673
        %v2733 = vunpack.c.l.b16 %v674
        %v2734 = vunpack.c.l.b16 %v675
        %v2735 = vunpack.c.l.b16 %v676
        %v2736 = vunpack.c.l.b16 %v677
        %v2737 = vunpack.c.l.b16 %v678
        %v2738 = vunpack.c.l.b16 %v679
        %v2739 = vunpack.c.l.b16 %v680
        %v2740 = vunpack.c.l.b16 %v681
        %v2741 = vunpack.c.l.b16 %v682
        %v2742 = vunpack.c.l.b16 %v683
        %v2743 = vunpack.c.l.b16 %v684
        %v2744 = vunpack.c.l.b16 %v685
        %v2745 = vunpack.c.l.b16 %v686
        %v2746 = vunpack.c.l.b16 %v687
        %v2747 = vunpack.c.l.b16 %v688
        %v2748 = vunpack.c.l.b16 %v689
        %v2749 = vunpack.c.l.b16 %v690
        %v2750 = vunpack.c.l.b16 %v691
        %v2751 = vunpack.c.l.b16 %v692
        %v2752 = vunpack.c.l.b16 %v693
        %v2753 = vunpack.c.l.b16 %v694
        %v2754 = vunpack.c.l.b16 %v695
        %v2755 = vunpack.c.l.b16 %v696
        %v2756 = vunpack.c.l.b16 %v697
        %v2757 = vunpack.c.l.b16 %v698
        %v2758 = vunpack.c.l.b16 %v699
        %v2759 = vunpack.c.l.b16 %v700
        %v2760 = vunpack.c.l.b16 %v701
        %v2761 = vunpack.c.l.b16 %v702
        %v2762 = vunpack.c.l.b16 %v703
        %v2763 = vunpack.c.l.b16 %v704
        %v2764 = vunpack.c.l.b16 %v705
        %v2765 = vunpack.c.l.b16 %v706
        %v2766 = vunpack.c.l.b16 %v707
        %v2767 = vunpack.c.l.b16 %v708
        %v2768 = vunpack.c.l.b16 %v709
        %v2769 = vunpack.c.l.b16 %v710
        %v2770 = vunpack.c.l.b16 %v711
        %v2771 = vunpack.c.l.b16 %v712
        %v2772 = vunpack.c.l.b16 %v713
        %v2773 = vunpack.c.l.b16 %v714
        %v2774 = vunpack.c.l.b16 %v715
        %v2775 = vunpack.c.l.b16 %v716
        %v2776 = vunpack.c.l.b16 %v717
        %v2777 = vunpack.c.l.b16 %v718
        %v2778 = vunpack.c.l.b16 %v719
        %v2779 = vunpack.c.l.b16 %v720
        %v2780 = vunpack.c.l.b16 %v721
        %v2781 = vunpack.c.l.b16 %v722
        %v2782 = vunpack.c.l.b16 %v723
        %v2783 = vunpack.c.l.b16 %v724
        %v2784 = vunpack.c.l.b16 %v725
        %v2785 = vunpack.c.l.b16 %v726
        %v2786 = vunpack.c.l.b16 %v727
        %v2787 = vunpack.c.l.b16 %v728
        %v2788 = vunpack.c.l.b16 %v729
        %v2789 = vunpack.c.l.b16 %v730
        %v2790 = vunpack.c.l.b16 %v731
        %v2791 = vunpack.c.l.b16 %v732
        %v2792 = vunpack.c.l.b16 %v733
        %v2793 = vunpack.c.l.b16 %v734
        %v2794 = vunpack.c.l.b16 %v735
        %v2795 = vunpack.c.l.b16 %v736
        %v2796 = vunpack.c.l.b16 %v737
        %v2797 = vunpack.c.l.b16 %v738
        %v2798 = vunpack.c.l.b16 %v739
        %v2799 = vunpack.c.l.b16 %v740
        %v2800 = vunpack.c.l.b16 %v741
        %v2801 = vunpack.c.l.b16 %v742
        %v2802 = vunpack.c.l.b16 %v743
        %v2803 = vunpack.c.l.b16 %v744
        %v2804 = vunpack.c.l.b16 %v745
        %v2805 = vunpack.c.l.b16 %v746
        %v2806 = vunpack.c.l.b16 %v747
        %v2807 = vunpack.c.l.b16 %v748
        %v2808 = vunpack.c.l.b16 %v749
        %v2809 = vunpack.c.l.b16 %v750
        %v2810 = vunpack.c.l.b16 %v751
        %v2811 = vunpack.c.l.b16 %v752
        %v2812 = vunpack.c.l.b16 %v753
        %v2813 = vunpack.c.l.b16 %v754
        %v2814 = vunpack.c.l.b16 %v755
        %v2815 = vunpack.c.l.b16 %v756
        %v2816 = vunpack.c.l.b16 %v757
        %v2817 = vunpack.c.l.b16 %v758
        %v2818 = vunpack.c.l.b16 %v759
        %v2819 = vunpack.c.l.b16 %v760
        %v2820 = vunpack.c.l.b16 %v761
        %v2821 = vunpack.c.l.b16 %v762
        %v2822 = vunpack.c.l.b16 %v763
        %v2823 = vunpack.c.l.b16 %v764
        %v2824 = vunpack.c.l.b16 %v765
        %v2825 = vunpack.c.l.b16 %v766
        %v2826 = vunpack.c.l.b16 %v767
        %v2827 = vunpack.c.l.b16 %v768
        %v2828 = vunpack.c.l.b16 %v769
        %v2829 = vunpack.c.l.b16 %v770
        %v2830 = vunpack.c.l.b16 %v771
        %v2831 = vunpack.c.l.b16 %v772
        %v2832 = vunpack.c.l.b16 %v773
        %v2833 = vunpack.c.l.b16 %v774
        %v2834 = vunpack.c.l.b16 %v775
        %v2835 = vunpack.c.l.b16 %v776
        %v2836 = vunpack.c.l.b16 %v777
        %v2837 = vunpack.c.l.b16 %v778
        %v2838 = vunpack.c.l.b16 %v779
        %v2839 = vunpack.c.l.b16 %v780
        %v2840 = vunpack.c.l.b16 %v781
        %v2841 = vunpack.c.l.b16 %v782
        %v2842 = vunpack.c.l.b16 %v783
        %v2843 = vunpack.c.l.b16 %v784
        %v2844 = vunpack.c.l.b16 %v785
        %v2845 = vunpack.c.l.b16 %v786
        %v2846 = vunpack.c.l.b16 %v787
        %v2847 = vunpack.c.l.b16 %v788
        %v2848 = vunpack.c.l.b16 %v789
        %v2849 = vunpack.c.l.b16 %v790
        %v2850 = vunpack.c.l.b16 %v791
        %v2851 = vunpack.c.l.b16 %v792
        %v2852 = vunpack.c.l.b16 %v793
        %v2853 = vunpack.c.l.b16 %v794
        %v2854 = vunpack.c.l.b16 %v795
        %v2855 = vunpack.c.l.b16 %v796
        %v2856 = vunpack.c.l.b16 %v797
        %v2857 = vunpack.c.l.b16 %v798
        %v2858 = vunpack.c.l.b16 %v799
        %v2859 = vunpack.c.l.b16 %v800
        %v2860 = vunpack.c.l.b16 %v801
        %v2861 = vunpack.c.l.b16 %v802
        %v2862 = vunpack.c.l.b16 %v803
        %v2863 = vunpack.c.l.b16 %v804
        %v2864 = vunpack.c.l.b16 %v805
        %v2865 = vunpack.c.l.b16 %v806
        %v2866 = vunpack.c.l.b16 %v807
        %v2867 = vunpack.c.l.b16 %v808
        %v2868 = vunpack.c.l.b16 %v809
        %v2869 = vunpack.c.l.b16 %v810
        %v2870 = vunpack.c.l.b16 %v811
        %v2871 = vunpack.c.l.b16 %v812
        %v2872 = vunpack.c.l.b16 %v813
        %v2873 = vunpack.c.l.b16 %v814
        %v2874 = vunpack.c.l.b16 %v815
        %v2875 = vunpack.c.l.b16 %v816
        %v2876 = vunpack.c.l.b16 %v817
        %v2877 = vunpack.c.l.b16 %v818
        %v2878 = vunpack.c.l.b16 %v819
        %v2879 = vunpack.c.l.b16 %v820
        %v2880 = vunpack.c.l.b16 %v821
        %v2881 = vunpack.c.l.b16 %v822
        %v2882 = vunpack.c.l.b16 %v823
        %v2883 = vunpack.c.l.b16 %v824
        %v2884 = vunpack.c.l.b16 %v825
        %v2885 = vunpack.c.l.b16 %v826
        %v2886 = vunpack.c.l.b16 %v827
        %v2887 = vunpack.c.l.b16 %v828
        %v2888 = vunpack.c.l.b16 %v829
        %v2889 = vunpack.c.l.b16 %v830
        %v2890 = vunpack.c.l.b16 %v831
        %v2891 = vunpack.c.l.b16 %v832
        %v2892 = vunpack.c.l.b16 %v833
        %v2893 = vunpack.c.l.b16 %v834
        %v2894 = vunpack.c.l.b16 %v835
        %v2895 = vunpack.c.l.b16 %v836
        %v2896 = vunpack.c.l.b16 %v837
        %v2897 = vunpack.c.l.b16 %v838
        %v2898 = vunpack.c.l.b16 %v839
        %v2899 = vunpack.c.l.b16 %v840
        %v2900 = vunpack.c.l.b16 %v841
        %v2901 = vunpack.c.l.b16 %v842
        %v2902 = vunpack.c.l.b16 %v843
        %v2903 = vunpack.c.l.b16 %v844
        %v2904 = vunpack.c.l.b16 %v845
        %v2905 = vunpack.c.l.b16 %v846
        %v2906 = vunpack.c.l.b16 %v847
        %v2907 = vunpack.c.l.b16 %v848
        %v2908 = vunpack.c.l.b16 %v849
        %v2909 = vunpack.c.l.b16 %v850
        %v2910 = vunpack.c.l.b16 %v851
        %v2911 = vunpack.c.l.b16 %v852
        %v2912 = vunpack.c.l.b16 %v853
        %v2913 = vunpack.c.l.b16 %v854
        %v2914 = vunpack.c.l.b16 %v855
        %v2915 = vunpack.c.l.b16 %v856
        %v2916 = vunpack.c.l.b16 %v857
        %v2917 = vunpack.c.l.b16 %v858
        %v2918 = vunpack.c.l.b16 %v859
        %v2919 = vunpack.c.l.b16 %v860
        %v2920 = vunpack.c.l.b16 %v861
        %v2921 = vunpack.c.l.b16 %v862
        %v2922 = vunpack.c.l.b16 %v863
        %v2923 = vunpack.c.l.b16 %v864
        %v2924 = vunpack.c.l.b16 %v865
        %v2925 = vunpack.c.l.b16 %v866
        %v2926 = vunpack.c.l.b16 %v867
        %v2927 = vunpack.c.l.b16 %v868
        %v2928 = vunpack.c.l.b16 %v869
        %v2929 = vunpack.c.l.b16 %v870
        %v2930 = vunpack.c.l.b16 %v871
        %v2931 = vunpack.c.l.b16 %v872
        %v2932 = vunpack.c.l.b16 %v873
        %v2933 = vunpack.c.l.b16 %v874
        %v2934 = vunpack.c.l.b16 %v875
        %v2935 = vunpack.c.l.b16 %v876
        %v2936 = vunpack.c.l.b16 %v877
        %v2937 = vunpack.c.l.b16 %v878
        %v2938 = vunpack.c.l.b16 %v879
        %v2939 = vunpack.c.l.b16 %v880
        %v2940 = vunpack.c.l.b16 %v881
        %v2941 = vunpack.c.l.b16 %v882
        %v2942 = vunpack.c.l.b16 %v883
        %v2943 = vunpack.c.l.b16 %v884
        %v2944 = vunpack.c.l.b16 %v885
        %v2945 = vunpack.c.l.b16 %v886
        %v2946 = vunpack.c.l.b16 %v887
        %v2947 = vunpack.c.l.b16 %v888
        %v2948 = vunpack.c.l.b16 %v889
        %v2949 = vunpack.c.l.b16 %v890
        %v2950 = vunpack.c.l.b16 %v891
        %v2951 = vunpack.c.l.b16 %v892
        %v2952 = vunpack.c.l.b16 %v893
        %v2953 = vunpack.c.l.b16 %v894
        %v2954 = vunpack.c.l.b16 %v895
        %v2955 = vunpack.c.l.b16 %v896
        %v2956 = vunpack.c.l.b16 %v897
        %v2957 = vunpack.c.l.b16 %v898
        %v2958 = vunpack.c.l.b16 %v899
        %v2959 = vunpack.c.l.b16 %v900
        %v2960 = vunpack.c.l.b16 %v901
        %v2961 = vunpack.c.l.b16 %v902
        %v2962 = vunpack.c.l.b16 %v903
        %v2963 = vunpack.c.l.b16 %v904
        %v2964 = vunpack.c.l.b16 %v905
        %v2965 = vunpack.c.l.b16 %v906
        %v2966 = vunpack.c.l.b16 %v907
        %v2967 = vunpack.c.l.b16 %v908
        %v2968 = vunpack.c.l.b16 %v909
        %v2969 = vunpack.c.l.b16 %v910
        %v2970 = vunpack.c.l.b16 %v911
        %v2971 = vunpack.c.l.b16 %v912
        %v2972 = vunpack.c.l.b16 %v913
        %v2973 = vunpack.c.l.b16 %v914
        %v2974 = vunpack.c.l.b16 %v915
        %v2975 = vunpack.c.l.b16 %v916
        %v2976 = vunpack.c.l.b16 %v917
        %v2977 = vunpack.c.l.b16 %v918
        %v2978 = vunpack.c.l.b16 %v919
        %v2979 = vunpack.c.l.b16 %v920
        %v2980 = vunpack.c.l.b16 %v921
        %v2981 = vunpack.c.l.b16 %v922
        %v2982 = vunpack.c.l.b16 %v923
        %v2983 = vunpack.c.l.b16 %v924
        %v2984 = vunpack.c.l.b16 %v925
        %v2985 = vunpack.c.l.b16 %v926
        %v2986 = vunpack.c.l.b16 %v927
        %v2987 = vunpack.c.l.b16 %v928
        %v2988 = vunpack.c.l.b16 %v929
        %v2989 = vunpack.c.l.b16 %v930
        %v2990 = vunpack.c.l.b16 %v931
        %v2991 = vunpack.c.l.b16 %v932
        %v2992 = vunpack.c.l.b16 %v933
        %v2993 = vunpack.c.l.b16 %v934
        %v2994 = vunpack.c.l.b16 %v935
        %v2995 = vunpack.c.l.b16 %v936
        %v2996 = vunpack.c.l.b16 %v937
        %v2997 = vunpack.c.l.b16 %v938
        %v2998 = vunpack.c.l.b16 %v939
        %v2999 = vunpack.c.l.b16 %v940
        %v3000 = vunpack.c.l.b16 %v941
        %v3001 = vunpack.c.l.b16 %v942
        %v3002 = vunpack.c.l.b16 %v943
        %v3003 = vunpack.c.l.b16 %v944
        %v3004 = vunpack.c.l.b16 %v945
        %v3005 = vunpack.c.l.b16 %v946
        %v3006 = vunpack.c.l.b16 %v947
        %v3007 = vunpack.c.l.b16 %v948
        %v3008 = vunpack.c.l.b16 %v949
        %v3009 = vunpack.c.l.b16 %v950
        %v3010 = vunpack.c.l.b16 %v951
        %v3011 = vunpack.c.l.b16 %v952
        %v3012 = vunpack.c.l.b16 %v953
        %v3013 = vunpack.c.l.b16 %v954
        %v3014 = vunpack.c.l.b16 %v955
        %v3015 = vunpack.c.l.b16 %v956
        %v3016 = vunpack.c.l.b16 %v957
        %v3017 = vunpack.c.l.b16 %v958
        %v3018 = vunpack.c.l.b16 %v959
        %v3019 = vunpack.c.l.b16 %v960
        %v3020 = vunpack.c.l.b16 %v961
        %v3021 = vunpack.c.l.b16 %v962
        %v3022 = vunpack.c.l.b16 %v963
        %v3023 = vunpack.c.l.b16 %v964
        %v3024 = vunpack.c.l.b16 %v965
        %v3025 = vunpack.c.l.b16 %v966
        %v3026 = vunpack.c.l.b16 %v967
        %v3027 = vunpack.c.l.b16 %v968
        %v3028 = vunpack.c.l.b16 %v969
        %v3029 = vunpack.c.l.b16 %v970
        %v3030 = vunpack.c.l.b16 %v971
        %v3031 = vunpack.c.l.b16 %v972
        %v3032 = vunpack.c.l.b16 %v973
        %v3033 = vunpack.c.l.b16 %v974
        %v3034 = vunpack.c.l.b16 %v975
        %v3035 = vunpack.c.l.b16 %v976
        %v3036 = vunpack.c.l.b16 %v977
        %v3037 = vunpack.c.l.b16 %v978
        %v3038 = vunpack.c.l.b16 %v979
        %v3039 = vunpack.c.l.b16 %v980
        %v3040 = vunpack.c.l.b16 %v981
        %v3041 = vunpack.c.l.b16 %v982
        %v3042 = vunpack.c.l.b16 %v983
        %v3043 = vunpack.c.l.b16 %v984
        %v3044 = vunpack.c.l.b16 %v985
        %v3045 = vunpack.c.l.b16 %v986
        %v3046 = vunpack.c.l.b16 %v987
        %v3047 = vunpack.c.l.b16 %v988
        %v3048 = vunpack.c.l.b16 %v989
        %v3049 = vunpack.c.l.b16 %v990
        %v3050 = vunpack.c.l.b16 %v991
        %v3051 = vunpack.c.l.b16 %v992
        %v3052 = vunpack.c.l.b16 %v993
        %v3053 = vunpack.c.l.b16 %v994
        %v3054 = vunpack.c.l.b16 %v995
        %v3055 = vunpack.c.l.b16 %v996
        %v3056 = vunpack.c.l.b16 %v997
        %v3057 = vunpack.c.l.b16 %v998
        %v3058 = vunpack.c.l.b16 %v999
        %v3059 = vunpack.c.l.b16 %v1000
        %v3060 = vunpack.c.l.b16 %v1001
        %v3061 = vunpack.c.l.b16 %v1002
        %v3062 = vunpack.c.l.b16 %v1003
        %v3063 = vunpack.c.l.b16 %v1004
        %v3064 = vunpack.c.l.b16 %v1005
        %v3065 = vunpack.c.l.b16 %v1006
        %v3066 = vunpack.c.l.b16 %v1007
        %v3067 = vunpack.c.l.b16 %v1008
        %v3068 = vunpack.c.l.b16 %v1009
        %v3069 = vunpack.c.l.b16 %v1010
        %v3070 = vunpack.c.l.b16 %v1011
        %v3071 = vunpack.c.l.b16 %v1012
        %v3072 = vunpack.c.l.b16 %v1013
        %v3073 = vunpack.c.l.b16 %v1014
        %v3074 = vunpack.c.l.b16 %v1015
        %v3075 = vunpack.c.l.b16 %v1016
        %v3076 = vunpack.c.l.b16 %v1017
        %v3077 = vunpack.c.l.b16 %v1018
        %v3078 = vunpack.c.l.b16 %v1019
        %v3079 = vunpack.c.l.b16 %v1020
        %v3080 = vunpack.c.l.b16 %v1021
        %v3081 = vunpack.c.l.b16 %v1022
        %v3082 = vunpack.c.l.b16 %v1023
        %v3083 = vunpack.c.l.b16 %v1024
        %v3084 = vunpack.c.l.b16 %v1025
        %v3085 = vunpack.c.l.b16 %v1026
        %v3086 = vunpack.c.l.b16 %v1027
        %v3087 = vunpack.c.l.b16 %v1028
        %v3088 = vunpack.c.l.b16 %v1029
        %v3089 = vunpack.c.l.b16 %v1030
        %v3090 = vunpack.c.l.b16 %v1031
        %v3091 = vunpack.c.l.b16 %v1032
        %v3092 = vunpack.c.l.b16 %v1033
        %v3093 = vunpack.c.l.b16 %v1034
        %v3094 = vunpack.c.l.b16 %v1035
        %v3095 = vunpack.c.l.b16 %v1036
        %v3096 = vunpack.c.l.b16 %v1037
        %v3097 = vunpack.c.l.b16 %v1038
        %v3098 = vunpack.c.l.b16 %v1039
        %v3099 = vunpack.c.l.b16 %v1040
        %v3100 = vunpack.c.l.b16 %v1041
        %v3101 = vunpack.c.l.b16 %v1042
        %v3102 = vunpack.c.l.b16 %v1043
        %v3103 = vunpack.c.l.b16 %v1044
        %v3104 = vunpack.c.l.b16 %v1045
        %v3105 = vunpack.c.l.b16 %v1046
        %v3106 = vunpack.c.l.b16 %v1047
        %v3107 = vunpack.c.l.b16 %v1048
        %v3108 = vunpack.c.l.b16 %v1049
        %v3109 = vunpack.c.l.b16 %v1050
        %v3110 = vunpack.c.l.b16 %v1051
        %v3111 = vunpack.c.l.b16 %v1052
        %v3112 = vunpack.c.l.b16 %v1053
        %v3113 = vunpack.c.l.b16 %v1054
        %v3114 = vunpack.c.l.b16 %v1055
        %v3115 = vunpack.c.l.b16 %v1056
        %v3116 = vunpack.c.l.b16 %v1057
        %v3117 = vunpack.c.l.b16 %v1058
        %v3118 = vunpack.c.l.b16 %v1059
        %v3119 = vunpack.c.l.b16 %v1060
        %v3120 = vunpack.c.l.b16 %v1061
        %v3121 = vunpack.c.l.b16 %v1062
        %v3122 = vunpack.c.l.b16 %v1063
        %v3123 = vunpack.c.l.b16 %v1064
        %v3124 = vunpack.c.l.b16 %v1065
        %v3125 = vunpack.c.l.b16 %v1066
        %v3126 = vunpack.c.l.b16 %v1067
        %v3127 = vunpack.c.l.b16 %v1068
        %v3128 = vunpack.c.l.b16 %v1069
        %v3129 = vunpack.c.l.b16 %v1070
        %v3130 = vunpack.c.l.b16 %v1071
        %v3131 = vunpack.c.l.b16 %v1072
        %v3132 = vunpack.c.l.b16 %v1073
        %v3133 = vunpack.c.l.b16 %v1074
        %v3134 = vunpack.c.l.b16 %v1075
        %v3135 = vunpack.c.l.b16 %v1076
        %v3136 = vunpack.c.l.b16 %v1077
        %v3137 = vunpack.c.l.b16 %v1078
        %v3138 = vunpack.c.l.b16 %v1079
        %v3139 = vunpack.c.l.b16 %v1080
        %v3140 = vunpack.c.l.b16 %v1081
        %v3141 = vunpack.c.l.b16 %v1082
        %v3142 = vunpack.c.l.b16 %v1083
        %v3143 = vunpack.c.l.b16 %v1084
        %v3144 = vunpack.c.l.b16 %v1085
        %v3145 = vunpack.c.l.b16 %v1086
        %v3146 = vunpack.c.l.b16 %v1087
        %v3147 = vunpack.c.l.b16 %v1088
        %v3148 = vunpack.c.l.b16 %v1089
        %v3149 = vunpack.c.l.b16 %v1090
        %v3150 = vunpack.c.l.b16 %v1091
        %v3151 = vunpack.c.l.b16 %v1092
        %v3152 = vunpack.c.l.b16 %v1093
        %v3153 = vunpack.c.l.b16 %v1094
        %v3154 = vunpack.c.l.b16 %v1095
        %v3155 = vunpack.c.l.b16 %v1096
        %v3156 = vunpack.c.l.b16 %v1097
        %v3157 = vunpack.c.l.b16 %v1098
        %v3158 = vunpack.c.l.b16 %v1099
        %v3159 = vunpack.c.l.b16 %v1100
        %v3160 = vunpack.c.l.b16 %v1101
        %v3161 = vunpack.c.l.b16 %v1102
        %v3162 = vunpack.c.l.b16 %v1103
        %v3163 = vunpack.c.l.b16 %v1104
        %v3164 = vunpack.c.l.b16 %v1105
        %v3165 = vunpack.c.l.b16 %v1106
        %v3166 = vunpack.c.l.b16 %v1107
        %v3167 = vunpack.c.l.b16 %v1108
        %v3168 = vunpack.c.l.b16 %v1109
        %v3169 = vunpack.c.l.b16 %v1110
        %v3170 = vunpack.c.l.b16 %v1111
        %v3171 = vunpack.c.l.b16 %v1112
        %v3172 = vunpack.c.l.b16 %v1113
        %v3173 = vunpack.c.l.b16 %v1114
        %v3174 = vunpack.c.l.b16 %v1115
        %v3175 = vunpack.c.l.b16 %v1116
        %v3176 = vunpack.c.l.b16 %v1117
        %v3177 = vunpack.c.l.b16 %v1118
        %v3178 = vunpack.c.l.b16 %v1119
        %v3179 = vunpack.c.l.b16 %v1120
        %v3180 = vunpack.c.l.b16 %v1121
        %v3181 = vunpack.c.l.b16 %v1122
        %v3182 = vunpack.c.l.b16 %v1123
        %v3183 = vunpack.c.l.b16 %v1124
        %v3184 = vunpack.c.l.b16 %v1125
        %v3185 = vunpack.c.l.b16 %v1126
        %v3186 = vunpack.c.l.b16 %v1127
        %v3187 = vunpack.c.l.b16 %v1128
        %v3188 = vunpack.c.l.b16 %v1129
        %v3189 = vunpack.c.l.b16 %v1130
        %v3190 = vunpack.c.l.b16 %v1131
        %v3191 = vunpack.c.l.b16 %v1132
        %v3192 = vunpack.c.l.b16 %v1133
        %v3193 = vunpack.c.l.b16 %v1134
        %v3194 = vunpack.c.l.b16 %v1135
        %v3195 = vunpack.c.l.b16 %v1136
        %v3196 = vunpack.c.l.b16 %v1137
        %v3197 = vunpack.c.l.b16 %v1138
        %v3198 = vunpack.c.l.b16 %v1139
        %v3199 = vunpack.c.l.b16 %v1140
        %v3200 = vunpack.c.l.b16 %v1141
        %v3201 = vunpack.c.l.b16 %v1142
        %v3202 = vunpack.c.l.b16 %v1143
        %v3203 = vunpack.c.l.b16 %v1144
        %v3204 = vunpack.c.l.b16 %v1145
        %v3205 = vunpack.c.l.b16 %v1146
        %v3206 = vunpack.c.l.b16 %v1147
        %v3207 = vunpack.c.l.b16 %v1148
        %v3208 = vunpack.c.l.b16 %v1149
        %v3209 = vunpack.c.l.b16 %v1150
        %v3210 = vunpack.c.l.b16 %v1151
        %v3211 = vunpack.c.l.b16 %v1152
        %v3212 = vunpack.c.l.b16 %v1153
        %v3213 = vunpack.c.l.b16 %v1154
        %v3214 = vunpack.c.l.b16 %v1155
        %v3215 = vunpack.c.l.b16 %v1156
        %v3216 = vunpack.c.l.b16 %v1157
        %v3217 = vunpack.c.l.b16 %v1158
        %v3218 = vunpack.c.l.b16 %v1159
        %v3219 = vunpack.c.l.b16 %v1160
        %v3220 = vunpack.c.l.b16 %v1161
        %v3221 = vunpack.c.l.b16 %v1162
        %v3222 = vunpack.c.l.b16 %v1163
        %v3223 = vunpack.c.l.b16 %v1164
        %v3224 = vunpack.c.l.b16 %v1165
        %v3225 = vunpack.c.l.b16 %v1166
        %v3226 = vunpack.c.l.b16 %v1167
        %v3227 = vunpack.c.l.b16 %v1168
        %v3228 = vunpack.c.l.b16 %v1169
        %v3229 = vunpack.c.l.b16 %v1170
        %v3230 = vunpack.c.l.b16 %v1171
        %v3231 = vunpack.c.l.b16 %v1172
        %v3232 = vunpack.c.l.b16 %v1173
        %v3233 = vunpack.c.l.b16 %v1174
        %v3234 = vunpack.c.l.b16 %v1175
        %v3235 = vunpack.c.l.b16 %v1176
        %v3236 = vunpack.c.l.b16 %v1177
        %v3237 = vunpack.c.l.b16 %v1178
        %v3238 = vunpack.c.l.b16 %v1179
        %v3239 = vunpack.c.l.b16 %v1180
        %v3240 = vunpack.c.l.b16 %v1181
        %v3241 = vunpack.c.l.b16 %v1182
        %v3242 = vunpack.c.l.b16 %v1183
        %v3243 = vunpack.c.l.b16 %v1184
        %v3244 = vunpack.c.l.b16 %v1185
        %v3245 = vunpack.c.l.b16 %v1186
        %v3246 = vunpack.c.l.b16 %v1187
        %v3247 = vunpack.c.l.b16 %v1188
        %v3248 = vunpack.c.l.b16 %v1189
        %v3249 = vunpack.c.l.b16 %v1190
        %v3250 = vunpack.c.l.b16 %v1191
        %v3251 = vunpack.c.l.b16 %v1192
        %v3252 = vunpack.c.l.b16 %v1193
        %v3253 = vunpack.c.l.b16 %v1194
        %v3254 = vunpack.c.l.b16 %v1195
        %v3255 = vunpack.c.l.b16 %v1196
        %v3256 = vunpack.c.l.b16 %v1197
        %v3257 = vunpack.c.l.b16 %v1198
        %v3258 = vunpack.c.l.b16 %v1199
        %v3259 = vunpack.c.l.b16 %v1200
        %v3260 = vunpack.c.l.b16 %v1201
        %v3261 = vunpack.c.l.b16 %v1202
        %v3262 = vunpack.c.l.b16 %v1203
        %v3263 = vunpack.c.l.b16 %v1204
        %v3264 = vunpack.c.l.b16 %v1205
        %v3265 = vunpack.c.l.b16 %v1206
        %v3266 = vunpack.c.l.b16 %v1207
        %v3267 = vunpack.c.l.b16 %v1208
        %v3268 = vunpack.c.l.b16 %v1209
        %v3269 = vunpack.c.l.b16 %v1210
        %v3270 = vunpack.c.l.b16 %v1211
        %v3271 = vunpack.c.l.b16 %v1212
        %v3272 = vunpack.c.l.b16 %v1213
        %v3273 = vunpack.c.l.b16 %v1214
        %v3274 = vunpack.c.l.b16 %v1215
        %v3275 = vunpack.c.l.b16 %v1216
        %v3276 = vunpack.c.l.b16 %v1217
        %v3277 = vunpack.c.l.b16 %v1218
        %v3278 = vunpack.c.l.b16 %v1219
        %v3279 = vunpack.c.l.b16 %v1220
        %v3280 = vunpack.c.l.b16 %v1221
        %v3281 = vunpack.c.l.b16 %v1222
        %v3282 = vunpack.c.l.b16 %v1223
        %v3283 = vunpack.c.l.b16 %v1224
        %v3284 = vunpack.c.l.b16 %v1225
        %v3285 = vunpack.c.l.b16 %v1226
        %v3286 = vunpack.c.l.b16 %v1227
        %v3287 = vunpack.c.l.b16 %v1228
        %v3288 = vunpack.c.l.b16 %v1229
        %v3289 = vunpack.c.l.b16 %v1230
        %v3290 = vunpack.c.l.b16 %v1231
        %v3291 = vunpack.c.l.b16 %v1232
        %v3292 = vunpack.c.l.b16 %v1233
        %v3293 = vunpack.c.l.b16 %v1234
        %v3294 = vunpack.c.l.b16 %v1235
        %v3295 = vunpack.c.l.b16 %v1236
        %v3296 = vunpack.c.l.b16 %v1237
        %v3297 = vunpack.c.l.b16 %v1238
        %v3298 = vunpack.c.l.b16 %v1239
        %v3299 = vunpack.c.l.b16 %v1240
        %v3300 = vunpack.c.l.b16 %v1241
        %v3301 = vunpack.c.l.b16 %v1242
        %v3302 = vunpack.c.l.b16 %v1243
        %v3303 = vunpack.c.l.b16 %v1244
        %v3304 = vunpack.c.l.b16 %v1245
        %v3305 = vunpack.c.l.b16 %v1246
        %v3306 = vunpack.c.l.b16 %v1247
        %v3307 = vunpack.c.l.b16 %v1248
        %v3308 = vunpack.c.l.b16 %v1249
        %v3309 = vunpack.c.l.b16 %v1250
        %v3310 = vunpack.c.l.b16 %v1251
        %v3311 = vunpack.c.l.b16 %v1252
        %v3312 = vunpack.c.l.b16 %v1253
        %v3313 = vunpack.c.l.b16 %v1254
        %v3314 = vunpack.c.l.b16 %v1255
        %v3315 = vunpack.c.l.b16 %v1256
        %v3316 = vunpack.c.l.b16 %v1257
        %v3317 = vunpack.c.l.b16 %v1258
        %v3318 = vunpack.c.l.b16 %v1259
        %v3319 = vunpack.c.l.b16 %v1260
        %v3320 = vunpack.c.l.b16 %v1261
        %v3321 = vunpack.c.l.b16 %v1262
        %v3322 = vunpack.c.l.b16 %v1263
        %v3323 = vunpack.c.l.b16 %v1264
        %v3324 = vunpack.c.l.b16 %v1265
        %v3325 = vunpack.c.l.b16 %v1266
        %v3326 = vunpack.c.l.b16 %v1267
        %v3327 = vunpack.c.l.b16 %v1268
        %v3328 = vunpack.c.l.b16 %v1269
        %v3329 = vunpack.c.l.b16 %v1270
        %v3330 = vunpack.c.l.b16 %v1271
        %v3331 = vunpack.c.l.b16 %v1272
        %v3332 = vunpack.c.l.b16 %v1273
        %v3333 = vunpack.c.l.b16 %v1274
        %v3334 = vunpack.c.l.b16 %v1275
        %v3335 = vunpack.c.l.b16 %v1276
        %v3336 = vunpack.c.l.b16 %v1277
        %v3337 = vunpack.c.l.b16 %v1278
        %v3338 = vunpack.c.l.b16 %v1279
        %v3339 = vunpack.c.l.b16 %v1280
        %v3340 = vunpack.c.l.b16 %v1281
        %v3341 = vunpack.c.l.b16 %v1282
        %v3342 = vunpack.c.l.b16 %v1283
        %v3343 = vunpack.c.l.b16 %v1284
        %v3344 = vunpack.c.l.b16 %v1285
        %v3345 = vunpack.c.l.b16 %v1286
        %v3346 = vunpack.c.l.b16 %v1287
        %v3347 = vunpack.c.l.b16 %v1288
        %v3348 = vunpack.c.l.b16 %v1289
        %v3349 = vunpack.c.l.b16 %v1290
        %v3350 = vunpack.c.l.b16 %v1291
        %v3351 = vunpack.c.l.b16 %v1292
        %v3352 = vunpack.c.l.b16 %v1293
        %v3353 = vunpack.c.l.b16 %v1294
        %v3354 = vunpack.c.l.b16 %v1295
        %v3355 = vunpack.c.l.b16 %v1296
        %v3356 = vunpack.c.l.b16 %v1297
        %v3357 = vunpack.c.l.b16 %v1298
        %v3358 = vunpack.c.l.b16 %v1299
        %v3359 = vunpack.c.l.b16 %v1300
        %v3360 = vunpack.c.l.b16 %v1301
        %v3361 = vunpack.c.l.b16 %v1302
        %v3362 = vunpack.c.l.b16 %v1303
        %v3363 = vunpack.c.l.b16 %v1304
        %v3364 = vunpack.c.l.b16 %v1305
        %v3365 = vunpack.c.l.b16 %v1306
        %v3366 = vunpack.c.l.b16 %v1307
        %v3367 = vunpack.c.l.b16 %v1308
        %v3368 = vunpack.c.l.b16 %v1309
        %v3369 = vunpack.c.l.b16 %v1310
        %v3370 = vunpack.c.l.b16 %v1311
        %v3371 = vunpack.c.l.b16 %v1312
        %v3372 = vunpack.c.l.b16 %v1313
        %v3373 = vunpack.c.l.b16 %v1314
        %v3374 = vunpack.c.l.b16 %v1315
        %v3375 = vunpack.c.l.b16 %v1316
        %v3376 = vunpack.c.l.b16 %v1317
        %v3377 = vunpack.c.l.b16 %v1318
        %v3378 = vunpack.c.l.b16 %v1319
        %v3379 = vunpack.c.l.b16 %v1320
        %v3380 = vunpack.c.l.b16 %v1321
        %v3381 = vunpack.c.l.b16 %v1322
        %v3382 = vunpack.c.l.b16 %v1323
        %v3383 = vunpack.c.l.b16 %v1324
        %v3384 = vunpack.c.l.b16 %v1325
        %v3385 = vunpack.c.l.b16 %v1326
        %v3386 = vunpack.c.l.b16 %v1327
        %v3387 = vunpack.c.l.b16 %v1328
        %v3388 = vunpack.c.l.b16 %v1329
        %v3389 = vunpack.c.l.b16 %v1330
        %v3390 = vunpack.c.l.b16 %v1331
        %v3391 = vunpack.c.l.b16 %v1332
        %v3392 = vunpack.c.l.b16 %v1333
        %v3393 = vunpack.c.l.b16 %v1334
        %v3394 = vunpack.c.l.b16 %v1335
        %v3395 = vunpack.c.l.b16 %v1336
        %v3396 = vunpack.c.l.b16 %v1337
        %v3397 = vunpack.c.l.b16 %v1338
        %v3398 = vunpack.c.l.b16 %v1339
        %v3399 = vunpack.c.l.b16 %v1340
        %v3400 = vunpack.c.l.b16 %v1341
        %v3401 = vunpack.c.l.b16 %v1342
        %v3402 = vunpack.c.l.b16 %v1343
        %v3403 = vunpack.c.l.b16 %v1344
        %v3404 = vunpack.c.l.b16 %v1345
        %v3405 = vunpack.c.l.b16 %v1346
        %v3406 = vunpack.c.l.b16 %v1347
        %v3407 = vunpack.c.l.b16 %v1348
        %v3408 = vunpack.c.l.b16 %v1349
        %v3409 = vunpack.c.l.b16 %v1350
        %v3410 = vunpack.c.l.b16 %v1351
        %v3411 = vunpack.c.l.b16 %v1352
        %v3412 = vunpack.c.l.b16 %v1353
        %v3413 = vunpack.c.l.b16 %v1354
        %v3414 = vunpack.c.l.b16 %v1355
        %v3415 = vunpack.c.l.b16 %v1356
        %v3416 = vunpack.c.l.b16 %v1357
        %v3417 = vunpack.c.l.b16 %v1358
        %v3418 = vunpack.c.l.b16 %v1359
        %v3419 = vunpack.c.l.b16 %v1360
        %v3420 = vunpack.c.l.b16 %v1361
        %v3421 = vunpack.c.l.b16 %v1362
        %v3422 = vunpack.c.l.b16 %v1363
        %v3423 = vunpack.c.l.b16 %v1364
        %v3424 = vunpack.c.l.b16 %v1365
        %v3425 = vunpack.c.l.b16 %v1366
        %v3426 = vunpack.c.l.b16 %v1367
        %v3427 = vunpack.c.l.b16 %v1368
        %v3428 = vunpack.c.l.b16 %v1369
        %v3429 = vunpack.c.l.b16 %v1370
        %v3430 = vunpack.c.l.b16 %v1371
        %v3431 = vunpack.c.l.b16 %v1372
        %v3432 = vunpack.c.l.b16 %v1373
        %v3433 = vunpack.c.l.b16 %v1374
        %v3434 = vunpack.c.l.b16 %v1375
        %v3435 = vunpack.c.l.b16 %v1376
        %v3436 = vunpack.c.l.b16 %v1377
        %v3437 = vunpack.c.l.b16 %v1378
        %v3438 = vunpack.c.l.b16 %v1379
        %v3439 = vunpack.c.l.b16 %v1380
        %v3440 = vunpack.c.l.b16 %v1381
        %v3441 = vunpack.c.l.b16 %v1382
        %v3442 = vunpack.c.l.b16 %v1383
        %v3443 = vpack.c.b16 %v2420, %v2419
        %v3444 = vpack.c.b16 %v2422, %v2421
        %v3445 = vpack.c.b16 %v2424, %v2423
        %v3446 = vpack.c.b16 %v2426, %v2425
        %v3447 = vpack.c.b16 %v2428, %v2427
        %v3448 = vpack.c.b16 %v2430, %v2429
        %v3449 = vpack.c.b16 %v2432, %v2431
        %v3450 = vpack.c.b16 %v2434, %v2433
        %v3451 = vpack.c.b16 %v2436, %v2435
        %v3452 = vpack.c.b16 %v2438, %v2437
        %v3453 = vpack.c.b16 %v2440, %v2439
        %v3454 = vpack.c.b16 %v2442, %v2441
        %v3455 = vpack.c.b16 %v2444, %v2443
        %v3456 = vpack.c.b16 %v2446, %v2445
        %v3457 = vpack.c.b16 %v2448, %v2447
        %v3458 = vpack.c.b16 %v2450, %v2449
        %v3459 = vpack.c.b16 %v2452, %v2451
        %v3460 = vpack.c.b16 %v2454, %v2453
        %v3461 = vpack.c.b16 %v2456, %v2455
        %v3462 = vpack.c.b16 %v2458, %v2457
        %v3463 = vpack.c.b16 %v2460, %v2459
        %v3464 = vpack.c.b16 %v2462, %v2461
        %v3465 = vpack.c.b16 %v2464, %v2463
        %v3466 = vpack.c.b16 %v2466, %v2465
        %v3467 = vpack.c.b16 %v2468, %v2467
        %v3468 = vpack.c.b16 %v2470, %v2469
        %v3469 = vpack.c.b16 %v2472, %v2471
        %v3470 = vpack.c.b16 %v2474, %v2473
        %v3471 = vpack.c.b16 %v2476, %v2475
        %v3472 = vpack.c.b16 %v2478, %v2477
        %v3473 = vpack.c.b16 %v2480, %v2479
        %v3474 = vpack.c.b16 %v2482, %v2481
        %v3475 = vpack.c.b16 %v2484, %v2483
        %v3476 = vpack.c.b16 %v2486, %v2485
        %v3477 = vpack.c.b16 %v2488, %v2487
        %v3478 = vpack.c.b16 %v2490, %v2489
        %v3479 = vpack.c.b16 %v2492, %v2491
        %v3480 = vpack.c.b16 %v2494, %v2493
        %v3481 = vpack.c.b16 %v2496, %v2495
        %v3482 = vpack.c.b16 %v2498, %v2497
        %v3483 = vpack.c.b16 %v2500, %v2499
        %v3484 = vpack.c.b16 %v2502, %v2501
        %v3485 = vpack.c.b16 %v2504, %v2503
        %v3486 = vpack.c.b16 %v2506, %v2505
        %v3487 = vpack.c.b16 %v2508, %v2507
        %v3488 = vpack.c.b16 %v2510, %v2509
        %v3489 = vpack.c.b16 %v2512, %v2511
        %v3490 = vpack.c.b16 %v2514, %v2513
        %v3491 = vpack.c.b16 %v2516, %v2515
        %v3492 = vpack.c.b16 %v2518, %v2517
        %v3493 = vpack.c.b16 %v2520, %v2519
        %v3494 = vpack.c.b16 %v2522, %v2521
        %v3495 = vpack.c.b16 %v2524, %v2523
        %v3496 = vpack.c.b16 %v2526, %v2525
        %v3497 = vpack.c.b16 %v2528, %v2527
        %v3498 = vpack.c.b16 %v2530, %v2529
        %v3499 = vpack.c.b16 %v2532, %v2531
        %v3500 = vpack.c.b16 %v2534, %v2533
        %v3501 = vpack.c.b16 %v2536, %v2535
        %v3502 = vpack.c.b16 %v2538, %v2537
        %v3503 = vpack.c.b16 %v2540, %v2539
        %v3504 = vpack.c.b16 %v2542, %v2541
        %v3505 = vpack.c.b16 %v2544, %v2543
        %v3506 = vpack.c.b16 %v2546, %v2545
        %v3507 = vpack.c.b16 %v2548, %v2547
        %v3508 = vpack.c.b16 %v2550, %v2549
        %v3509 = vpack.c.b16 %v2552, %v2551
        %v3510 = vpack.c.b16 %v2554, %v2553
        %v3511 = vpack.c.b16 %v2556, %v2555
        %v3512 = vpack.c.b16 %v2558, %v2557
        %v3513 = vpack.c.b16 %v2560, %v2559
        %v3514 = vpack.c.b16 %v2562, %v2561
        %v3515 = vpack.c.b16 %v2564, %v2563
        %v3516 = vpack.c.b16 %v2566, %v2565
        %v3517 = vpack.c.b16 %v2568, %v2567
        %v3518 = vpack.c.b16 %v2570, %v2569
        %v3519 = vpack.c.b16 %v2572, %v2571
        %v3520 = vpack.c.b16 %v2574, %v2573
        %v3521 = vpack.c.b16 %v2576, %v2575
        %v3522 = vpack.c.b16 %v2578, %v2577
        %v3523 = vpack.c.b16 %v2580, %v2579
        %v3524 = vpack.c.b16 %v2582, %v2581
        %v3525 = vpack.c.b16 %v2584, %v2583
        %v3526 = vpack.c.b16 %v2586, %v2585
        %v3527 = vpack.c.b16 %v2588, %v2587
        %v3528 = vpack.c.b16 %v2590, %v2589
        %v3529 = vpack.c.b16 %v2592, %v2591
        %v3530 = vpack.c.b16 %v2594, %v2593
        %v3531 = vpack.c.b16 %v2596, %v2595
        %v3532 = vpack.c.b16 %v2598, %v2597
        %v3533 = vpack.c.b16 %v2600, %v2599
        %v3534 = vpack.c.b16 %v2602, %v2601
        %v3535 = vpack.c.b16 %v2604, %v2603
        %v3536 = vpack.c.b16 %v2606, %v2605
        %v3537 = vpack.c.b16 %v2608, %v2607
        %v3538 = vpack.c.b16 %v2610, %v2609
        %v3539 = vpack.c.b16 %v2612, %v2611
        %v3540 = vpack.c.b16 %v2614, %v2613
        %v3541 = vpack.c.b16 %v2616, %v2615
        %v3542 = vpack.c.b16 %v2618, %v2617
        %v3543 = vpack.c.b16 %v2620, %v2619
        %v3544 = vpack.c.b16 %v2622, %v2621
        %v3545 = vpack.c.b16 %v2624, %v2623
        %v3546 = vpack.c.b16 %v2626, %v2625
        %v3547 = vpack.c.b16 %v2628, %v2627
        %v3548 = vpack.c.b16 %v2630, %v2629
        %v3549 = vpack.c.b16 %v2632, %v2631
        %v3550 = vpack.c.b16 %v2634, %v2633
        %v3551 = vpack.c.b16 %v2636, %v2635
        %v3552 = vpack.c.b16 %v2638, %v2637
        %v3553 = vpack.c.b16 %v2640, %v2639
        %v3554 = vpack.c.b16 %v2642, %v2641
        %v3555 = vpack.c.b16 %v2644, %v2643
        %v3556 = vpack.c.b16 %v2646, %v2645
        %v3557 = vpack.c.b16 %v2648, %v2647
        %v3558 = vpack.c.b16 %v2650, %v2649
        %v3559 = vpack.c.b16 %v2652, %v2651
        %v3560 = vpack.c.b16 %v2654, %v2653
        %v3561 = vpack.c.b16 %v2656, %v2655
        %v3562 = vpack.c.b16 %v2658, %v2657
        %v3563 = vpack.c.b16 %v2660, %v2659
        %v3564 = vpack.c.b16 %v2662, %v2661
        %v3565 = vpack.c.b16 %v2664, %v2663
        %v3566 = vpack.c.b16 %v2666, %v2665
        %v3567 = vpack.c.b16 %v2668, %v2667
        %v3568 = vpack.c.b16 %v2670, %v2669
        %v3569 = vpack.c.b16 %v2672, %v2671
        %v3570 = vpack.c.b16 %v2674, %v2673
        %v3571 = vpack.c.b16 %v2676, %v2675
        %v3572 = vpack.c.b16 %v2678, %v2677
        %v3573 = vpack.c.b16 %v2680, %v2679
        %v3574 = vpack.c.b16 %v2682, %v2681
        %v3575 = vpack.c.b16 %v2684, %v2683
        %v3576 = vpack.c.b16 %v2686, %v2685
        %v3577 = vpack.c.b16 %v2688, %v2687
        %v3578 = vpack.c.b16 %v2690, %v2689
        %v3579 = vpack.c.b16 %v2692, %v2691
        %v3580 = vpack.c.b16 %v2694, %v2693
        %v3581 = vpack.c.b16 %v2696, %v2695
        %v3582 = vpack.c.b16 %v2698, %v2697
        %v3583 = vpack.c.b16 %v2700, %v2699
        %v3584 = vpack.c.b16 %v2702, %v2701
        %v3585 = vpack.c.b16 %v2704, %v2703
        %v3586 = vpack.c.b16 %v2706, %v2705
        %v3587 = vpack.c.b16 %v2708, %v2707
        %v3588 = vpack.c.b16 %v2710, %v2709
        %v3589 = vpack.c.b16 %v2712, %v2711
        %v3590 = vpack.c.b16 %v2714, %v2713
        %v3591 = vpack.c.b16 %v2716, %v2715
        %v3592 = vpack.c.b16 %v2718, %v2717
        %v3593 = vpack.c.b16 %v2720, %v2719
        %v3594 = vpack.c.b16 %v2722, %v2721
        %v3595 = vpack.c.b16 %v2724, %v2723
        %v3596 = vpack.c.b16 %v2726, %v2725
        %v3597 = vpack.c.b16 %v2728, %v2727
        %v3598 = vpack.c.b16 %v2730, %v2729
        %v3599 = vpack.c.b16 %v2732, %v2731
        %v3600 = vpack.c.b16 %v2734, %v2733
        %v3601 = vpack.c.b16 %v2736, %v2735
        %v3602 = vpack.c.b16 %v2738, %v2737
        %v3603 = vpack.c.b16 %v2740, %v2739
        %v3604 = vpack.c.b16 %v2742, %v2741
        %v3605 = vpack.c.b16 %v2744, %v2743
        %v3606 = vpack.c.b16 %v2746, %v2745
        %v3607 = vpack.c.b16 %v2748, %v2747
        %v3608 = vpack.c.b16 %v2750, %v2749
        %v3609 = vpack.c.b16 %v2752, %v2751
        %v3610 = vpack.c.b16 %v2754, %v2753
        %v3611 = vpack.c.b16 %v2756, %v2755
        %v3612 = vpack.c.b16 %v2758, %v2757
        %v3613 = vpack.c.b16 %v2760, %v2759
        %v3614 = vpack.c.b16 %v2762, %v2761
        %v3615 = vpack.c.b16 %v2764, %v2763
        %v3616 = vpack.c.b16 %v2766, %v2765
        %v3617 = vpack.c.b16 %v2768, %v2767
        %v3618 = vpack.c.b16 %v2770, %v2769
        %v3619 = vpack.c.b16 %v2772, %v2771
        %v3620 = vpack.c.b16 %v2774, %v2773
        %v3621 = vpack.c.b16 %v2776, %v2775
        %v3622 = vpack.c.b16 %v2778, %v2777
        %v3623 = vpack.c.b16 %v2780, %v2779
        %v3624 = vpack.c.b16 %v2782, %v2781
        %v3625 = vpack.c.b16 %v2784, %v2783
        %v3626 = vpack.c.b16 %v2786, %v2785
        %v3627 = vpack.c.b16 %v2788, %v2787
        %v3628 = vpack.c.b16 %v2790, %v2789
        %v3629 = vpack.c.b16 %v2792, %v2791
        %v3630 = vpack.c.b16 %v2794, %v2793
        %v3631 = vpack.c.b16 %v2796, %v2795
        %v3632 = vpack.c.b16 %v2798, %v2797
        %v3633 = vpack.c.b16 %v2800, %v2799
        %v3634 = vpack.c.b16 %v2802, %v2801
        %v3635 = vpack.c.b16 %v2804, %v2803
        %v3636 = vpack.c.b16 %v2806, %v2805
        %v3637 = vpack.c.b16 %v2808, %v2807
        %v3638 = vpack.c.b16 %v2810, %v2809
        %v3639 = vpack.c.b16 %v2812, %v2811
        %v3640 = vpack.c.b16 %v2814, %v2813
        %v3641 = vpack.c.b16 %v2816, %v2815
        %v3642 = vpack.c.b16 %v2818, %v2817
        %v3643 = vpack.c.b16 %v2820, %v2819
        %v3644 = vpack.c.b16 %v2822, %v2821
        %v3645 = vpack.c.b16 %v2824, %v2823
        %v3646 = vpack.c.b16 %v2826, %v2825
        %v3647 = vpack.c.b16 %v2828, %v2827
        %v3648 = vpack.c.b16 %v2830, %v2829
        %v3649 = vpack.c.b16 %v2832, %v2831
        %v3650 = vpack.c.b16 %v2834, %v2833
        %v3651 = vpack.c.b16 %v2836, %v2835
        %v3652 = vpack.c.b16 %v2838, %v2837
        %v3653 = vpack.c.b16 %v2840, %v2839
        %v3654 = vpack.c.b16 %v2842, %v2841
        %v3655 = vpack.c.b16 %v2844, %v2843
        %v3656 = vpack.c.b16 %v2846, %v2845
        %v3657 = vpack.c.b16 %v2848, %v2847
        %v3658 = vpack.c.b16 %v2850, %v2849
        %v3659 = vpack.c.b16 %v2852, %v2851
        %v3660 = vpack.c.b16 %v2854, %v2853
        %v3661 = vpack.c.b16 %v2856, %v2855
        %v3662 = vpack.c.b16 %v2858, %v2857
        %v3663 = vpack.c.b16 %v2860, %v2859
        %v3664 = vpack.c.b16 %v2862, %v2861
        %v3665 = vpack.c.b16 %v2864, %v2863
        %v3666 = vpack.c.b16 %v2866, %v2865
        %v3667 = vpack.c.b16 %v2868, %v2867
        %v3668 = vpack.c.b16 %v2870, %v2869
        %v3669 = vpack.c.b16 %v2872, %v2871
        %v3670 = vpack.c.b16 %v2874, %v2873
        %v3671 = vpack.c.b16 %v2876, %v2875
        %v3672 = vpack.c.b16 %v2878, %v2877
        %v3673 = vpack.c.b16 %v2880, %v2879
        %v3674 = vpack.c.b16 %v2882, %v2881
        %v3675 = vpack.c.b16 %v2884, %v2883
        %v3676 = vpack.c.b16 %v2886, %v2885
        %v3677 = vpack.c.b16 %v2888, %v2887
        %v3678 = vpack.c.b16 %v2890, %v2889
        %v3679 = vpack.c.b16 %v2892, %v2891
        %v3680 = vpack.c.b16 %v2894, %v2893
        %v3681 = vpack.c.b16 %v2896, %v2895
        %v3682 = vpack.c.b16 %v2898, %v2897
        %v3683 = vpack.c.b16 %v2900, %v2899
        %v3684 = vpack.c.b16 %v2902, %v2901
        %v3685 = vpack.c.b16 %v2904, %v2903
        %v3686 = vpack.c.b16 %v2906, %v2905
        %v3687 = vpack.c.b16 %v2908, %v2907
        %v3688 = vpack.c.b16 %v2910, %v2909
        %v3689 = vpack.c.b16 %v2912, %v2911
        %v3690 = vpack.c.b16 %v2914, %v2913
        %v3691 = vpack.c.b16 %v2916, %v2915
        %v3692 = vpack.c.b16 %v2918, %v2917
        %v3693 = vpack.c.b16 %v2920, %v2919
        %v3694 = vpack.c.b16 %v2922, %v2921
        %v3695 = vpack.c.b16 %v2924, %v2923
        %v3696 = vpack.c.b16 %v2926, %v2925
        %v3697 = vpack.c.b16 %v2928, %v2927
        %v3698 = vpack.c.b16 %v2930, %v2929
        %v3699 = vpack.c.b16 %v2932, %v2931
        %v3700 = vpack.c.b16 %v2934, %v2933
        %v3701 = vpack.c.b16 %v2936, %v2935
        %v3702 = vpack.c.b16 %v2938, %v2937
        %v3703 = vpack.c.b16 %v2940, %v2939
        %v3704 = vpack.c.b16 %v2942, %v2941
        %v3705 = vpack.c.b16 %v2944, %v2943
        %v3706 = vpack.c.b16 %v2946, %v2945
        %v3707 = vpack.c.b16 %v2948, %v2947
        %v3708 = vpack.c.b16 %v2950, %v2949
        %v3709 = vpack.c.b16 %v2952, %v2951
        %v3710 = vpack.c.b16 %v2954, %v2953
        %v3711 = vpack.c.b16 %v2956, %v2955
        %v3712 = vpack.c.b16 %v2958, %v2957
        %v3713 = vpack.c.b16 %v2960, %v2959
        %v3714 = vpack.c.b16 %v2962, %v2961
        %v3715 = vpack.c.b16 %v2964, %v2963
        %v3716 = vpack.c.b16 %v2966, %v2965
        %v3717 = vpack.c.b16 %v2968, %v2967
        %v3718 = vpack.c.b16 %v2970, %v2969
        %v3719 = vpack.c.b16 %v2972, %v2971
        %v3720 = vpack.c.b16 %v2974, %v2973
        %v3721 = vpack.c.b16 %v2976, %v2975
        %v3722 = vpack.c.b16 %v2978, %v2977
        %v3723 = vpack.c.b16 %v2980, %v2979
        %v3724 = vpack.c.b16 %v2982, %v2981
        %v3725 = vpack.c.b16 %v2984, %v2983
        %v3726 = vpack.c.b16 %v2986, %v2985
        %v3727 = vpack.c.b16 %v2988, %v2987
        %v3728 = vpack.c.b16 %v2990, %v2989
        %v3729 = vpack.c.b16 %v2992, %v2991
        %v3730 = vpack.c.b16 %v2994, %v2993
        %v3731 = vpack.c.b16 %v2996, %v2995
        %v3732 = vpack.c.b16 %v2998, %v2997
        %v3733 = vpack.c.b16 %v3000, %v2999
        %v3734 = vpack.c.b16 %v3002, %v3001
        %v3735 = vpack.c.b16 %v3004, %v3003
        %v3736 = vpack.c.b16 %v3006, %v3005
        %v3737 = vpack.c.b16 %v3008, %v3007
        %v3738 = vpack.c.b16 %v3010, %v3009
        %v3739 = vpack.c.b16 %v3012, %v3011
        %v3740 = vpack.c.b16 %v3014, %v3013
        %v3741 = vpack.c.b16 %v3016, %v3015
        %v3742 = vpack.c.b16 %v3018, %v3017
        %v3743 = vpack.c.b16 %v3020, %v3019
        %v3744 = vpack.c.b16 %v3022, %v3021
        %v3745 = vpack.c.b16 %v3024, %v3023
        %v3746 = vpack.c.b16 %v3026, %v3025
        %v3747 = vpack.c.b16 %v3028, %v3027
        %v3748 = vpack.c.b16 %v3030, %v3029
        %v3749 = vpack.c.b16 %v3032, %v3031
        %v3750 = vpack.c.b16 %v3034, %v3033
        %v3751 = vpack.c.b16 %v3036, %v3035
        %v3752 = vpack.c.b16 %v3038, %v3037
        %v3753 = vpack.c.b16 %v3040, %v3039
        %v3754 = vpack.c.b16 %v3042, %v3041
        %v3755 = vpack.c.b16 %v3044, %v3043
        %v3756 = vpack.c.b16 %v3046, %v3045
        %v3757 = vpack.c.b16 %v3048, %v3047
        %v3758 = vpack.c.b16 %v3050, %v3049
        %v3759 = vpack.c.b16 %v3052, %v3051
        %v3760 = vpack.c.b16 %v3054, %v3053
        %v3761 = vpack.c.b16 %v3056, %v3055
        %v3762 = vpack.c.b16 %v3058, %v3057
        %v3763 = vpack.c.b16 %v3060, %v3059
        %v3764 = vpack.c.b16 %v3062, %v3061
        %v3765 = vpack.c.b16 %v3064, %v3063
        %v3766 = vpack.c.b16 %v3066, %v3065
        %v3767 = vpack.c.b16 %v3068, %v3067
        %v3768 = vpack.c.b16 %v3070, %v3069
        %v3769 = vpack.c.b16 %v3072, %v3071
        %v3770 = vpack.c.b16 %v3074, %v3073
        %v3771 = vpack.c.b16 %v3076, %v3075
        %v3772 = vpack.c.b16 %v3078, %v3077
        %v3773 = vpack.c.b16 %v3080, %v3079
        %v3774 = vpack.c.b16 %v3082, %v3081
        %v3775 = vpack.c.b16 %v3084, %v3083
        %v3776 = vpack.c.b16 %v3086, %v3085
        %v3777 = vpack.c.b16 %v3088, %v3087
        %v3778 = vpack.c.b16 %v3090, %v3089
        %v3779 = vpack.c.b16 %v3092, %v3091
        %v3780 = vpack.c.b16 %v3094, %v3093
        %v3781 = vpack.c.b16 %v3096, %v3095
        %v3782 = vpack.c.b16 %v3098, %v3097
        %v3783 = vpack.c.b16 %v3100, %v3099
        %v3784 = vpack.c.b16 %v3102, %v3101
        %v3785 = vpack.c.b16 %v3104, %v3103
        %v3786 = vpack.c.b16 %v3106, %v3105
        %v3787 = vpack.c.b16 %v3108, %v3107
        %v3788 = vpack.c.b16 %v3110, %v3109
        %v3789 = vpack.c.b16 %v3112, %v3111
        %v3790 = vpack.c.b16 %v3114, %v3113
        %v3791 = vpack.c.b16 %v3116, %v3115
        %v3792 = vpack.c.b16 %v3118, %v3117
        %v3793 = vpack.c.b16 %v3120, %v3119
        %v3794 = vpack.c.b16 %v3122, %v3121
        %v3795 = vpack.c.b16 %v3124, %v3123
        %v3796 = vpack.c.b16 %v3126, %v3125
        %v3797 = vpack.c.b16 %v3128, %v3127
        %v3798 = vpack.c.b16 %v3130, %v3129
        %v3799 = vpack.c.b16 %v3132, %v3131
        %v3800 = vpack.c.b16 %v3134, %v3133
        %v3801 = vpack.c.b16 %v3136, %v3135
        %v3802 = vpack.c.b16 %v3138, %v3137
        %v3803 = vpack.c.b16 %v3140, %v3139
        %v3804 = vpack.c.b16 %v3142, %v3141
        %v3805 = vpack.c.b16 %v3144, %v3143
        %v3806 = vpack.c.b16 %v3146, %v3145
        %v3807 = vpack.c.b16 %v3148, %v3147
        %v3808 = vpack.c.b16 %v3150, %v3149
        %v3809 = vpack.c.b16 %v3152, %v3151
        %v3810 = vpack.c.b16 %v3154, %v3153
        %v3811 = vpack.c.b16 %v3156, %v3155
        %v3812 = vpack.c.b16 %v3158, %v3157
        %v3813 = vpack.c.b16 %v3160, %v3159
        %v3814 = vpack.c.b16 %v3162, %v3161
        %v3815 = vpack.c.b16 %v3164, %v3163
        %v3816 = vpack.c.b16 %v3166, %v3165
        %v3817 = vpack.c.b16 %v3168, %v3167
        %v3818 = vpack.c.b16 %v3170, %v3169
        %v3819 = vpack.c.b16 %v3172, %v3171
        %v3820 = vpack.c.b16 %v3174, %v3173
        %v3821 = vpack.c.b16 %v3176, %v3175
        %v3822 = vpack.c.b16 %v3178, %v3177
        %v3823 = vpack.c.b16 %v3180, %v3179
        %v3824 = vpack.c.b16 %v3182, %v3181
        %v3825 = vpack.c.b16 %v3184, %v3183
        %v3826 = vpack.c.b16 %v3186, %v3185
        %v3827 = vpack.c.b16 %v3188, %v3187
        %v3828 = vpack.c.b16 %v3190, %v3189
        %v3829 = vpack.c.b16 %v3192, %v3191
        %v3830 = vpack.c.b16 %v3194, %v3193
        %v3831 = vpack.c.b16 %v3196, %v3195
        %v3832 = vpack.c.b16 %v3198, %v3197
        %v3833 = vpack.c.b16 %v3200, %v3199
        %v3834 = vpack.c.b16 %v3202, %v3201
        %v3835 = vpack.c.b16 %v3204, %v3203
        %v3836 = vpack.c.b16 %v3206, %v3205
        %v3837 = vpack.c.b16 %v3208, %v3207
        %v3838 = vpack.c.b16 %v3210, %v3209
        %v3839 = vpack.c.b16 %v3212, %v3211
        %v3840 = vpack.c.b16 %v3214, %v3213
        %v3841 = vpack.c.b16 %v3216, %v3215
        %v3842 = vpack.c.b16 %v3218, %v3217
        %v3843 = vpack.c.b16 %v3220, %v3219
        %v3844 = vpack.c.b16 %v3222, %v3221
        %v3845 = vpack.c.b16 %v3224, %v3223
        %v3846 = vpack.c.b16 %v3226, %v3225
        %v3847 = vpack.c.b16 %v3228, %v3227
        %v3848 = vpack.c.b16 %v3230, %v3229
        %v3849 = vpack.c.b16 %v3232, %v3231
        %v3850 = vpack.c.b16 %v3234, %v3233
        %v3851 = vpack.c.b16 %v3236, %v3235
        %v3852 = vpack.c.b16 %v3238, %v3237
        %v3853 = vpack.c.b16 %v3240, %v3239
        %v3854 = vpack.c.b16 %v3242, %v3241
        %v3855 = vpack.c.b16 %v3244, %v3243
        %v3856 = vpack.c.b16 %v3246, %v3245
        %v3857 = vpack.c.b16 %v3248, %v3247
        %v3858 = vpack.c.b16 %v3250, %v3249
        %v3859 = vpack.c.b16 %v3252, %v3251
        %v3860 = vpack.c.b16 %v3254, %v3253
        %v3861 = vpack.c.b16 %v3256, %v3255
        %v3862 = vpack.c.b16 %v3258, %v3257
        %v3863 = vpack.c.b16 %v3260, %v3259
        %v3864 = vpack.c.b16 %v3262, %v3261
        %v3865 = vpack.c.b16 %v3264, %v3263
        %v3866 = vpack.c.b16 %v3266, %v3265
        %v3867 = vpack.c.b16 %v3268, %v3267
        %v3868 = vpack.c.b16 %v3270, %v3269
        %v3869 = vpack.c.b16 %v3272, %v3271
        %v3870 = vpack.c.b16 %v3274, %v3273
        %v3871 = vpack.c.b16 %v3276, %v3275
        %v3872 = vpack.c.b16 %v3278, %v3277
        %v3873 = vpack.c.b16 %v3280, %v3279
        %v3874 = vpack.c.b16 %v3282, %v3281
        %v3875 = vpack.c.b16 %v3284, %v3283
        %v3876 = vpack.c.b16 %v3286, %v3285
        %v3877 = vpack.c.b16 %v3288, %v3287
        %v3878 = vpack.c.b16 %v3290, %v3289
        %v3879 = vpack.c.b16 %v3292, %v3291
        %v3880 = vpack.c.b16 %v3294, %v3293
        %v3881 = vpack.c.b16 %v3296, %v3295
        %v3882 = vpack.c.b16 %v3298, %v3297
        %v3883 = vpack.c.b16 %v3300, %v3299
        %v3884 = vpack.c.b16 %v3302, %v3301
        %v3885 = vpack.c.b16 %v3304, %v3303
        %v3886 = vpack.c.b16 %v3306, %v3305
        %v3887 = vpack.c.b16 %v3308, %v3307
        %v3888 = vpack.c.b16 %v3310, %v3309
        %v3889 = vpack.c.b16 %v3312, %v3311
        %v3890 = vpack.c.b16 %v3314, %v3313
        %v3891 = vpack.c.b16 %v3316, %v3315
        %v3892 = vpack.c.b16 %v3318, %v3317
        %v3893 = vpack.c.b16 %v3320, %v3319
        %v3894 = vpack.c.b16 %v3322, %v3321
        %v3895 = vpack.c.b16 %v3324, %v3323
        %v3896 = vpack.c.b16 %v3326, %v3325
        %v3897 = vpack.c.b16 %v3328, %v3327
        %v3898 = vpack.c.b16 %v3330, %v3329
        %v3899 = vpack.c.b16 %v3332, %v3331
        %v3900 = vpack.c.b16 %v3334, %v3333
        %v3901 = vpack.c.b16 %v3336, %v3335
        %v3902 = vpack.c.b16 %v3338, %v3337
        %v3903 = vpack.c.b16 %v3340, %v3339
        %v3904 = vpack.c.b16 %v3342, %v3341
        %v3905 = vpack.c.b16 %v3344, %v3343
        %v3906 = vpack.c.b16 %v3346, %v3345
        %v3907 = vpack.c.b16 %v3348, %v3347
        %v3908 = vpack.c.b16 %v3350, %v3349
        %v3909 = vpack.c.b16 %v3352, %v3351
        %v3910 = vpack.c.b16 %v3354, %v3353
        %v3911 = vpack.c.b16 %v3356, %v3355
        %v3912 = vpack.c.b16 %v3358, %v3357
        %v3913 = vpack.c.b16 %v3360, %v3359
        %v3914 = vpack.c.b16 %v3362, %v3361
        %v3915 = vpack.c.b16 %v3364, %v3363
        %v3916 = vpack.c.b16 %v3366, %v3365
        %v3917 = vpack.c.b16 %v3368, %v3367
        %v3918 = vpack.c.b16 %v3370, %v3369
        %v3919 = vpack.c.b16 %v3372, %v3371
        %v3920 = vpack.c.b16 %v3374, %v3373
        %v3921 = vpack.c.b16 %v3376, %v3375
        %v3922 = vpack.c.b16 %v3378, %v3377
        %v3923 = vpack.c.b16 %v3380, %v3379
        %v3924 = vpack.c.b16 %v3382, %v3381
        %v3925 = vpack.c.b16 %v3384, %v3383
        %v3926 = vpack.c.b16 %v3386, %v3385
        %v3927 = vpack.c.b16 %v3388, %v3387
        %v3928 = vpack.c.b16 %v3390, %v3389
        %v3929 = vpack.c.b16 %v3392, %v3391
        %v3930 = vpack.c.b16 %v3394, %v3393
        %v3931 = vpack.c.b16 %v3396, %v3395
        %v3932 = vpack.c.b16 %v3398, %v3397
        %v3933 = vpack.c.b16 %v3400, %v3399
        %v3934 = vpack.c.b16 %v3402, %v3401
        %v3935 = vpack.c.b16 %v3404, %v3403
        %v3936 = vpack.c.b16 %v3406, %v3405
        %v3937 = vpack.c.b16 %v3408, %v3407
        %v3938 = vpack.c.b16 %v3410, %v3409
        %v3939 = vpack.c.b16 %v3412, %v3411
        %v3940 = vpack.c.b16 %v3414, %v3413
        %v3941 = vpack.c.b16 %v3416, %v3415
        %v3942 = vpack.c.b16 %v3418, %v3417
        %v3943 = vpack.c.b16 %v3420, %v3419
        %v3944 = vpack.c.b16 %v3422, %v3421
        %v3945 = vpack.c.b16 %v3424, %v3423
        %v3946 = vpack.c.b16 %v3426, %v3425
        %v3947 = vpack.c.b16 %v3428, %v3427
        %v3948 = vpack.c.b16 %v3430, %v3429
        %v3949 = vpack.c.b16 %v3432, %v3431
        %v3950 = vpack.c.b16 %v3434, %v3433
        %v3951 = vpack.c.b16 %v3436, %v3435
        %v3952 = vpack.c.b16 %v3438, %v3437
        %v3953 = vpack.c.b16 %v3440, %v3439
        %v3954 = vpack.c.b16 %v3442, %v3441
        %v3959 = vunpack.c.l.b16 %v1384
        %v3960 = vunpack.c.l.b16 %v1385
        %v3961 = vunpack.c.l.b16 %v1386
        %v3962 = vunpack.c.l.b16 %v1387
        %v3963 = vpack.c.b16 %v3960, %v3959
        %v3964 = vpack.c.b16 %v3962, %v3961
        %vm3967 = vcmask 261120
        %v3969 = vsel %vm3967, %v3443, 0
        %v3972 = vsel %vm3967, %v3444, 0
        %v3975 = vsel %vm3967, %v3445, 0
        %v3978 = vsel %vm3967, %v3446, 0
        %v3981 = vsel %vm3967, %v3447, 0
        %v3984 = vsel %vm3967, %v3448, 0
        %v3987 = vsel %vm3967, %v3449, 0
        %v3990 = vsel %vm3967, %v3450, 0
        %v3993 = vsel %vm3967, %v3451, 0
        %v3996 = vsel %vm3967, %v3452, 0
        %v3999 = vsel %vm3967, %v3453, 0
        %v4002 = vsel %vm3967, %v3454, 0
        %v4005 = vsel %vm3967, %v3455, 0
        %v4008 = vsel %vm3967, %v3456, 0
        %v4011 = vsel %vm3967, %v3457, 0
        %v4014 = vsel %vm3967, %v3458, 0
        %v4017 = vsel %vm3967, %v3459, 0
        %v4020 = vsel %vm3967, %v3460, 0
        %v4023 = vsel %vm3967, %v3461, 0
        %v4026 = vsel %vm3967, %v3462, 0
        %v4029 = vsel %vm3967, %v3463, 0
        %v4032 = vsel %vm3967, %v3464, 0
        %v4035 = vsel %vm3967, %v3465, 0
        %v4038 = vsel %vm3967, %v3466, 0
        %v4041 = vsel %vm3967, %v3467, 0
        %v4044 = vsel %vm3967, %v3468, 0
        %v4047 = vsel %vm3967, %v3469, 0
        %v4050 = vsel %vm3967, %v3470, 0
        %v4053 = vsel %vm3967, %v3471, 0
        %v4056 = vsel %vm3967, %v3472, 0
        %v4059 = vsel %vm3967, %v3473, 0
        %v4062 = vsel %vm3967, %v3474, 0
        %v4065 = vsel %vm3967, %v3475, 0
        %v4068 = vsel %vm3967, %v3476, 0
        %v4071 = vsel %vm3967, %v3477, 0
        %v4074 = vsel %vm3967, %v3478, 0
        %v4077 = vsel %vm3967, %v3479, 0
        %v4080 = vsel %vm3967, %v3480, 0
        %v4083 = vsel %vm3967, %v3481, 0
        %v4086 = vsel %vm3967, %v3482, 0
        %v4089 = vsel %vm3967, %v3483, 0
        %v4092 = vsel %vm3967, %v3484, 0
        %v4095 = vsel %vm3967, %v3485, 0
        %v4098 = vsel %vm3967, %v3486, 0
        %v4101 = vsel %vm3967, %v3487, 0
        %v4104 = vsel %vm3967, %v3488, 0
        %v4107 = vsel %vm3967, %v3489, 0
        %v4110 = vsel %vm3967, %v3490, 0
        %v4113 = vsel %vm3967, %v3491, 0
        %v4116 = vsel %vm3967, %v3492, 0
        %v4119 = vsel %vm3967, %v3493, 0
        %v4122 = vsel %vm3967, %v3494, 0
        %v4125 = vsel %vm3967, %v3495, 0
        %v4128 = vsel %vm3967, %v3496, 0
        %v4131 = vsel %vm3967, %v3497, 0
        %v4134 = vsel %vm3967, %v3498, 0
        %v4137 = vsel %vm3967, %v3499, 0
        %v4140 = vsel %vm3967, %v3500, 0
        %v4143 = vsel %vm3967, %v3501, 0
        %v4146 = vsel %vm3967, %v3502, 0
        %v4149 = vsel %vm3967, %v3503, 0
        %v4152 = vsel %vm3967, %v3504, 0
        %v4155 = vsel %vm3967, %v3505, 0
        %v4158 = vsel %vm3967, %v3506, 0
        %v4161 = vsel %vm3967, %v3507, 0
        %v4164 = vsel %vm3967, %v3508, 0
        %v4167 = vsel %vm3967, %v3509, 0
        %v4170 = vsel %vm3967, %v3510, 0
        %v4173 = vsel %vm3967, %v3511, 0
        %v4176 = vsel %vm3967, %v3512, 0
        %v4179 = vsel %vm3967, %v3513, 0
        %v4182 = vsel %vm3967, %v3514, 0
        %v4185 = vsel %vm3967, %v3515, 0
        %v4188 = vsel %vm3967, %v3516, 0
        %v4191 = vsel %vm3967, %v3517, 0
        %v4194 = vsel %vm3967, %v3518, 0
        %v4197 = vsel %vm3967, %v3519, 0
        %v4200 = vsel %vm3967, %v3520, 0
        %v4203 = vsel %vm3967, %v3521, 0
        %v4206 = vsel %vm3967, %v3522, 0
        %v4209 = vsel %vm3967, %v3523, 0
        %v4212 = vsel %vm3967, %v3524, 0
        %v4215 = vsel %vm3967, %v3525, 0
        %v4218 = vsel %vm3967, %v3526, 0
        %v4221 = vsel %vm3967, %v3527, 0
        %v4224 = vsel %vm3967, %v3528, 0
        %v4227 = vsel %vm3967, %v3529, 0
        %v4230 = vsel %vm3967, %v3530, 0
        %v4233 = vsel %vm3967, %v3531, 0
        %v4236 = vsel %vm3967, %v3532, 0
        %v4239 = vsel %vm3967, %v3533, 0
        %v4242 = vsel %vm3967, %v3534, 0
        %v4245 = vsel %vm3967, %v3535, 0
        %v4248 = vsel %vm3967, %v3536, 0
        %v4251 = vsel %vm3967, %v3537, 0
        %v4254 = vsel %vm3967, %v3538, 0
        %v4257 = vsel %vm3967, %v3539, 0
        %v4260 = vsel %vm3967, %v3540, 0
        %v4263 = vsel %vm3967, %v3541, 0
        %v4266 = vsel %vm3967, %v3542, 0
        %v4269 = vsel %vm3967, %v3543, 0
        %v4272 = vsel %vm3967, %v3544, 0
        %v4275 = vsel %vm3967, %v3545, 0
        %v4278 = vsel %vm3967, %v3546, 0
        %v4281 = vsel %vm3967, %v3547, 0
        %v4284 = vsel %vm3967, %v3548, 0
        %v4287 = vsel %vm3967, %v3549, 0
        %v4290 = vsel %vm3967, %v3550, 0
        %v4293 = vsel %vm3967, %v3551, 0
        %v4296 = vsel %vm3967, %v3552, 0
        %v4299 = vsel %vm3967, %v3553, 0
        %v4302 = vsel %vm3967, %v3554, 0
        %v4305 = vsel %vm3967, %v3555, 0
        %v4308 = vsel %vm3967, %v3556, 0
        %v4311 = vsel %vm3967, %v3557, 0
        %v4314 = vsel %vm3967, %v3558, 0
        %v4317 = vsel %vm3967, %v3559, 0
        %v4320 = vsel %vm3967, %v3560, 0
        %v4323 = vsel %vm3967, %v3561, 0
        %v4326 = vsel %vm3967, %v3562, 0
        %v4329 = vsel %vm3967, %v3563, 0
        %v4332 = vsel %vm3967, %v3564, 0
        %v4335 = vsel %vm3967, %v3565, 0
        %v4338 = vsel %vm3967, %v3566, 0
        %v4341 = vsel %vm3967, %v3567, 0
        %v4344 = vsel %vm3967, %v3568, 0
        %v4347 = vsel %vm3967, %v3569, 0
        %v4350 = vsel %vm3967, %v3570, 0
        %v4353 = vsel %vm3967, %v3571, 0
        %v4356 = vsel %vm3967, %v3572, 0
        %v4359 = vsel %vm3967, %v3573, 0
        %v4362 = vsel %vm3967, %v3574, 0
        %v4365 = vsel %vm3967, %v3575, 0
        %v4368 = vsel %vm3967, %v3576, 0
        %v4371 = vsel %vm3967, %v3577, 0
        %v4374 = vsel %vm3967, %v3578, 0
        %v4377 = vsel %vm3967, %v3579, 0
        %v4380 = vsel %vm3967, %v3580, 0
        %v4383 = vsel %vm3967, %v3581, 0
        %v4386 = vsel %vm3967, %v3582, 0
        %v4389 = vsel %vm3967, %v3583, 0
        %v4392 = vsel %vm3967, %v3584, 0
        %v4395 = vsel %vm3967, %v3585, 0
        %v4398 = vsel %vm3967, %v3586, 0
        %v4401 = vsel %vm3967, %v3587, 0
        %v4404 = vsel %vm3967, %v3588, 0
        %v4407 = vsel %vm3967, %v3589, 0
        %v4410 = vsel %vm3967, %v3590, 0
        %v4413 = vsel %vm3967, %v3591, 0
        %v4416 = vsel %vm3967, %v3592, 0
        %v4419 = vsel %vm3967, %v3593, 0
        %v4422 = vsel %vm3967, %v3594, 0
        %v4425 = vsel %vm3967, %v3595, 0
        %v4428 = vsel %vm3967, %v3596, 0
        %v4431 = vsel %vm3967, %v3597, 0
        %v4434 = vsel %vm3967, %v3598, 0
        %v4437 = vsel %vm3967, %v3599, 0
        %v4440 = vsel %vm3967, %v3600, 0
        %v4443 = vsel %vm3967, %v3601, 0
        %v4446 = vsel %vm3967, %v3602, 0
        %v4449 = vsel %vm3967, %v3603, 0
        %v4452 = vsel %vm3967, %v3604, 0
        %v4455 = vsel %vm3967, %v3605, 0
        %v4458 = vsel %vm3967, %v3606, 0
        %v4461 = vsel %vm3967, %v3607, 0
        %v4464 = vsel %vm3967, %v3608, 0
        %v4467 = vsel %vm3967, %v3609, 0
        %v4470 = vsel %vm3967, %v3610, 0
        %v4473 = vsel %vm3967, %v3611, 0
        %v4476 = vsel %vm3967, %v3612, 0
        %v4479 = vsel %vm3967, %v3613, 0
        %v4482 = vsel %vm3967, %v3614, 0
        %v4485 = vsel %vm3967, %v3615, 0
        %v4488 = vsel %vm3967, %v3616, 0
        %v4491 = vsel %vm3967, %v3617, 0
        %v4494 = vsel %vm3967, %v3618, 0
        %v4497 = vsel %vm3967, %v3619, 0
        %v4500 = vsel %vm3967, %v3620, 0
        %v4503 = vsel %vm3967, %v3621, 0
        %v4506 = vsel %vm3967, %v3622, 0
        %v4509 = vsel %vm3967, %v3623, 0
        %v4512 = vsel %vm3967, %v3624, 0
        %v4515 = vsel %vm3967, %v3625, 0
        %v4518 = vsel %vm3967, %v3626, 0
        %v4521 = vsel %vm3967, %v3627, 0
        %v4524 = vsel %vm3967, %v3628, 0
        %v4527 = vsel %vm3967, %v3629, 0
        %v4530 = vsel %vm3967, %v3630, 0
        %v4533 = vsel %vm3967, %v3631, 0
        %v4536 = vsel %vm3967, %v3632, 0
        %v4539 = vsel %vm3967, %v3633, 0
        %v4542 = vsel %vm3967, %v3634, 0
        %v4545 = vsel %vm3967, %v3635, 0
        %v4548 = vsel %vm3967, %v3636, 0
        %v4551 = vsel %vm3967, %v3637, 0
        %v4554 = vsel %vm3967, %v3638, 0
        %v4557 = vsel %vm3967, %v3639, 0
        %v4560 = vsel %vm3967, %v3640, 0
        %v4563 = vsel %vm3967, %v3641, 0
        %v4566 = vsel %vm3967, %v3642, 0
        %v4569 = vsel %vm3967, %v3643, 0
        %v4572 = vsel %vm3967, %v3644, 0
        %v4575 = vsel %vm3967, %v3645, 0
        %v4578 = vsel %vm3967, %v3646, 0
        %v4581 = vsel %vm3967, %v3647, 0
        %v4584 = vsel %vm3967, %v3648, 0
        %v4587 = vsel %vm3967, %v3649, 0
        %v4590 = vsel %vm3967, %v3650, 0
        %v4593 = vsel %vm3967, %v3651, 0
        %v4596 = vsel %vm3967, %v3652, 0
        %v4599 = vsel %vm3967, %v3653, 0
        %v4602 = vsel %vm3967, %v3654, 0
        %v4605 = vsel %vm3967, %v3655, 0
        %v4608 = vsel %vm3967, %v3656, 0
        %v4611 = vsel %vm3967, %v3657, 0
        %v4614 = vsel %vm3967, %v3658, 0
        %v4617 = vsel %vm3967, %v3659, 0
        %v4620 = vsel %vm3967, %v3660, 0
        %v4623 = vsel %vm3967, %v3661, 0
        %v4626 = vsel %vm3967, %v3662, 0
        %v4629 = vsel %vm3967, %v3663, 0
        %v4632 = vsel %vm3967, %v3664, 0
        %v4635 = vsel %vm3967, %v3665, 0
        %v4638 = vsel %vm3967, %v3666, 0
        %v4641 = vsel %vm3967, %v3667, 0
        %v4644 = vsel %vm3967, %v3668, 0
        %v4647 = vsel %vm3967, %v3669, 0
        %v4650 = vsel %vm3967, %v3670, 0
        %v4653 = vsel %vm3967, %v3671, 0
        %v4656 = vsel %vm3967, %v3672, 0
        %v4659 = vsel %vm3967, %v3673, 0
        %v4662 = vsel %vm3967, %v3674, 0
        %v4665 = vsel %vm3967, %v3675, 0
        %v4668 = vsel %vm3967, %v3676, 0
        %v4671 = vsel %vm3967, %v3677, 0
        %v4674 = vsel %vm3967, %v3678, 0
        %v4677 = vsel %vm3967, %v3679, 0
        %v4680 = vsel %vm3967, %v3680, 0
        %v4683 = vsel %vm3967, %v3681, 0
        %v4686 = vsel %vm3967, %v3682, 0
        %v4689 = vsel %vm3967, %v3683, 0
        %v4692 = vsel %vm3967, %v3684, 0
        %v4695 = vsel %vm3967, %v3685, 0
        %v4698 = vsel %vm3967, %v3686, 0
        %v4701 = vsel %vm3967, %v3687, 0
        %v4704 = vsel %vm3967, %v3688, 0
        %v4707 = vsel %vm3967, %v3689, 0
        %v4710 = vsel %vm3967, %v3690, 0
        %v4713 = vsel %vm3967, %v3691, 0
        %v4716 = vsel %vm3967, %v3692, 0
        %v4719 = vsel %vm3967, %v3693, 0
        %v4722 = vsel %vm3967, %v3694, 0
        %v4725 = vsel %vm3967, %v3695, 0
        %v4728 = vsel %vm3967, %v3696, 0
        %v4731 = vsel %vm3967, %v3697, 0
        %v4734 = vsel %vm3967, %v3698, 0
        %v4737 = vsel %vm3967, %v3699, 0
        %v4740 = vsel %vm3967, %v3700, 0
        %v4743 = vsel %vm3967, %v3701, 0
        %v4746 = vsel %vm3967, %v3702, 0
        %v4749 = vsel %vm3967, %v3703, 0
        %v4752 = vsel %vm3967, %v3704, 0
        %v4755 = vsel %vm3967, %v3705, 0
        %v4758 = vsel %vm3967, %v3706, 0
        %v4761 = vsel %vm3967, %v3707, 0
        %v4764 = vsel %vm3967, %v3708, 0
        %v4767 = vsel %vm3967, %v3709, 0
        %v4770 = vsel %vm3967, %v3710, 0
        %v4773 = vsel %vm3967, %v3711, 0
        %v4776 = vsel %vm3967, %v3712, 0
        %v4779 = vsel %vm3967, %v3713, 0
        %v4782 = vsel %vm3967, %v3714, 0
        %v4785 = vsel %vm3967, %v3715, 0
        %v4788 = vsel %vm3967, %v3716, 0
        %v4791 = vsel %vm3967, %v3717, 0
        %v4794 = vsel %vm3967, %v3718, 0
        %v4797 = vsel %vm3967, %v3719, 0
        %v4800 = vsel %vm3967, %v3720, 0
        %v4803 = vsel %vm3967, %v3721, 0
        %v4806 = vsel %vm3967, %v3722, 0
        %v4809 = vsel %vm3967, %v3723, 0
        %v4812 = vsel %vm3967, %v3724, 0
        %v4815 = vsel %vm3967, %v3725, 0
        %v4818 = vsel %vm3967, %v3726, 0
        %v4821 = vsel %vm3967, %v3727, 0
        %v4824 = vsel %vm3967, %v3728, 0
        %v4827 = vsel %vm3967, %v3729, 0
        %v4830 = vsel %vm3967, %v3730, 0
        %v4833 = vsel %vm3967, %v3731, 0
        %v4836 = vsel %vm3967, %v3732, 0
        %v4839 = vsel %vm3967, %v3733, 0
        %v4842 = vsel %vm3967, %v3734, 0
        %v4845 = vsel %vm3967, %v3735, 0
        %v4848 = vsel %vm3967, %v3736, 0
        %v4851 = vsel %vm3967, %v3737, 0
        %v4854 = vsel %vm3967, %v3738, 0
        %v4857 = vsel %vm3967, %v3739, 0
        %v4860 = vsel %vm3967, %v3740, 0
        %v4863 = vsel %vm3967, %v3741, 0
        %v4866 = vsel %vm3967, %v3742, 0
        %v4869 = vsel %vm3967, %v3743, 0
        %v4872 = vsel %vm3967, %v3744, 0
        %v4875 = vsel %vm3967, %v3745, 0
        %v4878 = vsel %vm3967, %v3746, 0
        %v4881 = vsel %vm3967, %v3747, 0
        %v4884 = vsel %vm3967, %v3748, 0
        %v4887 = vsel %vm3967, %v3749, 0
        %v4890 = vsel %vm3967, %v3750, 0
        %v4893 = vsel %vm3967, %v3751, 0
        %v4896 = vsel %vm3967, %v3752, 0
        %v4899 = vsel %vm3967, %v3753, 0
        %v4902 = vsel %vm3967, %v3754, 0
        %v4905 = vsel %vm3967, %v3755, 0
        %v4908 = vsel %vm3967, %v3756, 0
        %v4911 = vsel %vm3967, %v3757, 0
        %v4914 = vsel %vm3967, %v3758, 0
        %v4917 = vsel %vm3967, %v3759, 0
        %v4920 = vsel %vm3967, %v3760, 0
        %v4923 = vsel %vm3967, %v3761, 0
        %v4926 = vsel %vm3967, %v3762, 0
        %v4929 = vsel %vm3967, %v3763, 0
        %v4932 = vsel %vm3967, %v3764, 0
        %v4935 = vsel %vm3967, %v3765, 0
        %v4938 = vsel %vm3967, %v3766, 0
        %v4941 = vsel %vm3967, %v3767, 0
        %v4944 = vsel %vm3967, %v3768, 0
        %v4947 = vsel %vm3967, %v3769, 0
        %v4950 = vsel %vm3967, %v3770, 0
        %v4953 = vsel %vm3967, %v3771, 0
        %v4956 = vsel %vm3967, %v3772, 0
        %v4959 = vsel %vm3967, %v3773, 0
        %v4962 = vsel %vm3967, %v3774, 0
        %v4965 = vsel %vm3967, %v3775, 0
        %v4968 = vsel %vm3967, %v3776, 0
        %v4971 = vsel %vm3967, %v3777, 0
        %v4974 = vsel %vm3967, %v3778, 0
        %v4977 = vsel %vm3967, %v3779, 0
        %v4980 = vsel %vm3967, %v3780, 0
        %v4983 = vsel %vm3967, %v3781, 0
        %v4986 = vsel %vm3967, %v3782, 0
        %v4989 = vsel %vm3967, %v3783, 0
        %v4992 = vsel %vm3967, %v3784, 0
        %v4995 = vsel %vm3967, %v3785, 0
        %v4998 = vsel %vm3967, %v3786, 0
        %v5001 = vsel %vm3967, %v3787, 0
        %v5004 = vsel %vm3967, %v3788, 0
        %v5007 = vsel %vm3967, %v3789, 0
        %v5010 = vsel %vm3967, %v3790, 0
        %v5013 = vsel %vm3967, %v3791, 0
        %v5016 = vsel %vm3967, %v3792, 0
        %v5019 = vsel %vm3967, %v3793, 0
        %v5022 = vsel %vm3967, %v3794, 0
        %v5025 = vsel %vm3967, %v3795, 0
        %v5028 = vsel %vm3967, %v3796, 0
        %v5031 = vsel %vm3967, %v3797, 0
        %v5034 = vsel %vm3967, %v3798, 0
        %v5037 = vsel %vm3967, %v3799, 0
        %v5040 = vsel %vm3967, %v3800, 0
        %v5043 = vsel %vm3967, %v3801, 0
        %v5046 = vsel %vm3967, %v3802, 0
        %v5049 = vsel %vm3967, %v3803, 0
        %v5052 = vsel %vm3967, %v3804, 0
        %v5055 = vsel %vm3967, %v3805, 0
        %v5058 = vsel %vm3967, %v3806, 0
        %v5061 = vsel %vm3967, %v3807, 0
        %v5064 = vsel %vm3967, %v3808, 0
        %v5067 = vsel %vm3967, %v3809, 0
        %v5070 = vsel %vm3967, %v3810, 0
        %v5073 = vsel %vm3967, %v3811, 0
        %v5076 = vsel %vm3967, %v3812, 0
        %v5079 = vsel %vm3967, %v3813, 0
        %v5082 = vsel %vm3967, %v3814, 0
        %v5085 = vsel %vm3967, %v3815, 0
        %v5088 = vsel %vm3967, %v3816, 0
        %v5091 = vsel %vm3967, %v3817, 0
        %v5094 = vsel %vm3967, %v3818, 0
        %v5097 = vsel %vm3967, %v3819, 0
        %v5100 = vsel %vm3967, %v3820, 0
        %v5103 = vsel %vm3967, %v3821, 0
        %v5106 = vsel %vm3967, %v3822, 0
        %v5109 = vsel %vm3967, %v3823, 0
        %v5112 = vsel %vm3967, %v3824, 0
        %v5115 = vsel %vm3967, %v3825, 0
        %v5118 = vsel %vm3967, %v3826, 0
        %v5121 = vsel %vm3967, %v3827, 0
        %v5124 = vsel %vm3967, %v3828, 0
        %v5127 = vsel %vm3967, %v3829, 0
        %v5130 = vsel %vm3967, %v3830, 0
        %v5133 = vsel %vm3967, %v3831, 0
        %v5136 = vsel %vm3967, %v3832, 0
        %v5139 = vsel %vm3967, %v3833, 0
        %v5142 = vsel %vm3967, %v3834, 0
        %v5145 = vsel %vm3967, %v3835, 0
        %v5148 = vsel %vm3967, %v3836, 0
        %v5151 = vsel %vm3967, %v3837, 0
        %v5154 = vsel %vm3967, %v3838, 0
        %v5157 = vsel %vm3967, %v3839, 0
        %v5160 = vsel %vm3967, %v3840, 0
        %v5163 = vsel %vm3967, %v3841, 0
        %v5166 = vsel %vm3967, %v3842, 0
        %v5169 = vsel %vm3967, %v3843, 0
        %v5172 = vsel %vm3967, %v3844, 0
        %v5175 = vsel %vm3967, %v3845, 0
        %v5178 = vsel %vm3967, %v3846, 0
        %v5181 = vsel %vm3967, %v3847, 0
        %v5184 = vsel %vm3967, %v3848, 0
        %v5187 = vsel %vm3967, %v3849, 0
        %v5190 = vsel %vm3967, %v3850, 0
        %v5193 = vsel %vm3967, %v3851, 0
        %v5196 = vsel %vm3967, %v3852, 0
        %v5199 = vsel %vm3967, %v3853, 0
        %v5202 = vsel %vm3967, %v3854, 0
        %v5205 = vsel %vm3967, %v3855, 0
        %v5208 = vsel %vm3967, %v3856, 0
        %v5211 = vsel %vm3967, %v3857, 0
        %v5214 = vsel %vm3967, %v3858, 0
        %v5217 = vsel %vm3967, %v3859, 0
        %v5220 = vsel %vm3967, %v3860, 0
        %v5223 = vsel %vm3967, %v3861, 0
        %v5226 = vsel %vm3967, %v3862, 0
        %v5229 = vsel %vm3967, %v3863, 0
        %v5232 = vsel %vm3967, %v3864, 0
        %v5235 = vsel %vm3967, %v3865, 0
        %v5238 = vsel %vm3967, %v3866, 0
        %v5241 = vsel %vm3967, %v3867, 0
        %v5244 = vsel %vm3967, %v3868, 0
        %v5247 = vsel %vm3967, %v3869, 0
        %v5250 = vsel %vm3967, %v3870, 0
        %v5253 = vsel %vm3967, %v3871, 0
        %v5256 = vsel %vm3967, %v3872, 0
        %v5259 = vsel %vm3967, %v3873, 0
        %v5262 = vsel %vm3967, %v3874, 0
        %v5265 = vsel %vm3967, %v3875, 0
        %v5268 = vsel %vm3967, %v3876, 0
        %v5271 = vsel %vm3967, %v3877, 0
        %v5274 = vsel %vm3967, %v3878, 0
        %v5277 = vsel %vm3967, %v3879, 0
        %v5280 = vsel %vm3967, %v3880, 0
        %v5283 = vsel %vm3967, %v3881, 0
        %v5286 = vsel %vm3967, %v3882, 0
        %v5289 = vsel %vm3967, %v3883, 0
        %v5292 = vsel %vm3967, %v3884, 0
        %v5295 = vsel %vm3967, %v3885, 0
        %v5298 = vsel %vm3967, %v3886, 0
        %v5301 = vsel %vm3967, %v3887, 0
        %v5304 = vsel %vm3967, %v3888, 0
        %v5307 = vsel %vm3967, %v3889, 0
        %v5310 = vsel %vm3967, %v3890, 0
        %v5313 = vsel %vm3967, %v3891, 0
        %v5316 = vsel %vm3967, %v3892, 0
        %v5319 = vsel %vm3967, %v3893, 0
        %v5322 = vsel %vm3967, %v3894, 0
        %v5325 = vsel %vm3967, %v3895, 0
        %v5328 = vsel %vm3967, %v3896, 0
        %v5331 = vsel %vm3967, %v3897, 0
        %v5334 = vsel %vm3967, %v3898, 0
        %v5337 = vsel %vm3967, %v3899, 0
        %v5340 = vsel %vm3967, %v3900, 0
        %v5343 = vsel %vm3967, %v3901, 0
        %v5346 = vsel %vm3967, %v3902, 0
        %v5349 = vsel %vm3967, %v3903, 0
        %v5352 = vsel %vm3967, %v3904, 0
        %v5355 = vsel %vm3967, %v3905, 0
        %v5358 = vsel %vm3967, %v3906, 0
        %v5361 = vsel %vm3967, %v3907, 0
        %v5364 = vsel %vm3967, %v3908, 0
        %v5367 = vsel %vm3967, %v3909, 0
        %v5370 = vsel %vm3967, %v3910, 0
        %v5373 = vsel %vm3967, %v3911, 0
        %v5376 = vsel %vm3967, %v3912, 0
        %v5379 = vsel %vm3967, %v3913, 0
        %v5382 = vsel %vm3967, %v3914, 0
        %v5385 = vsel %vm3967, %v3915, 0
        %v5388 = vsel %vm3967, %v3916, 0
        %v5391 = vsel %vm3967, %v3917, 0
        %v5394 = vsel %vm3967, %v3918, 0
        %v5397 = vsel %vm3967, %v3919, 0
        %v5400 = vsel %vm3967, %v3920, 0
        %v5403 = vsel %vm3967, %v3921, 0
        %v5406 = vsel %vm3967, %v3922, 0
        %v5409 = vsel %vm3967, %v3923, 0
        %v5412 = vsel %vm3967, %v3924, 0
        %v5415 = vsel %vm3967, %v3925, 0
        %v5418 = vsel %vm3967, %v3926, 0
        %v5421 = vsel %vm3967, %v3927, 0
        %v5424 = vsel %vm3967, %v3928, 0
        %v5427 = vsel %vm3967, %v3929, 0
        %v5430 = vsel %vm3967, %v3930, 0
        %v5433 = vsel %vm3967, %v3931, 0
        %v5436 = vsel %vm3967, %v3932, 0
        %v5439 = vsel %vm3967, %v3933, 0
        %v5442 = vsel %vm3967, %v3934, 0
        %v5445 = vsel %vm3967, %v3935, 0
        %v5448 = vsel %vm3967, %v3936, 0
        %v5451 = vsel %vm3967, %v3937, 0
        %v5454 = vsel %vm3967, %v3938, 0
        %v5457 = vsel %vm3967, %v3939, 0
        %v5460 = vsel %vm3967, %v3940, 0
        %v5463 = vsel %vm3967, %v3941, 0
        %v5466 = vsel %vm3967, %v3942, 0
        %v5469 = vsel %vm3967, %v3943, 0
        %v5472 = vsel %vm3967, %v3944, 0
        %v5475 = vsel %vm3967, %v3945, 0
        %v5478 = vsel %vm3967, %v3946, 0
        %v5481 = vsel %vm3967, %v3947, 0
        %v5484 = vsel %vm3967, %v3948, 0
        %v5487 = vsel %vm3967, %v3949, 0
        %v5490 = vsel %vm3967, %v3950, 0
        %v5493 = vsel %vm3967, %v3951, 0
        %v5496 = vsel %vm3967, %v3952, 0
        %v5499 = vsel %vm3967, %v3953, 0
        %v5502 = vsel %vm3967, %v3954, 0
        %5504 = vmatprep.subr.bf16.mxu0 0
        %5505 = vmatpush1.bf16.msra.mxu0 %v3963
        %5506 = vmatprep.subr.bf16.mxu0 0
        %5507 = vmatpush1.bf16.msra.mxu0 %v3964
        %5508 = vmatprep.subr.bf16.mxu0 0
        %5509 = vmatpush1.bf16.msra.mxu0 0
        %5510 = vmatprep.subr.bf16.mxu0 0
        %5511 = vmatpush1.bf16.msra.mxu0 0
        %5512 = vmatprep.subr.bf16.mxu0 0
        %5513 = vmatpush1.bf16.msra.mxu0 0
        %5514 = vmatprep.subr.bf16.mxu0 0
        %5515 = vmatpush1.bf16.msra.mxu0 0
        %5516 = vmatprep.subr.bf16.mxu0 0
        %5517 = vmatpush1.bf16.msra.mxu0 0
        %5518 = vmatprep.subr.bf16.mxu0 0
        %5519 = vmatpush1.bf16.msra.mxu0 0
        %5520 = vmatprep.subr.bf16.mxu0 0
        %5521 = vmatpush1.bf16.msra.mxu0 0
        %5522 = vmatprep.subr.bf16.mxu0 0
        %5523 = vmatpush1.bf16.msra.mxu0 0
        %5524 = vmatprep.subr.bf16.mxu0 0
        %5525 = vmatpush1.bf16.msra.mxu0 0
        %5526 = vmatprep.subr.bf16.mxu0 0
        %5527 = vmatpush1.bf16.msra.mxu0 0
        %5528 = vmatprep.subr.bf16.mxu0 0
        %5529 = vmatpush1.bf16.msra.mxu0 0
        %5530 = vmatprep.subr.bf16.mxu0 0
        %5531 = vmatpush1.bf16.msra.mxu0 0
        %5532 = vmatprep.subr.bf16.mxu0 0
        %5533 = vmatpush1.bf16.msra.mxu0 0
        %5534 = vmatprep.subr.bf16.mxu0 0
        %5535 = vmatpush1.bf16.msra.mxu0 0
        %5536 = vmatprep.mubr.bf16.mxu0 0
        %5537 = vmatmul.mubr.bf16.gmra.mrb[0].mxu0 %v3969
        %v5538 = vpop.f32.mrb[0].mxu0
        %v5539 = vadd.f32 %v1393, %v5538
        %v5540 = vpop.f32.mrb[0].mxu0
        %v5541 = vpop.f32.mrb[0].mxu0
        %v5542 = vadd.f32 %v1393, %v5541
        %v5543 = vpop.f32.mrb[0].mxu0
        %5544 = vmatprep.mubr.bf16.mxu0 0
        %5545 = vmatmul.mubr.bf16.gmra.mrb[0].mxu0 %v3972
        %v5546 = vpop.f32.mrb[0].mxu0
        %v5547 = vadd.f32 %v1393, %v5546
        %v5548 = vpop.f32.mrb[0].mxu0
        %v5549 = vpop.f32.mrb[0].mxu0
        %v5550 = vadd.f32 %v1393, %v5549
        %v5551 = vpop.f32.mrb[0].mxu0
        %5552 = vmatprep.mubr.bf16.mxu0 0
        %5553 = vmatmul.mubr.bf16.gmra.mrb[0].mxu0 %v3975
        %v5554 = vpop.f32.mrb[0].mxu0
        %v5555 = vadd.f32 %v1393, %v5554
        %v5556 = vpop.f32.mrb[0].mxu0
        %v5557 = vpop.f32.mrb[0].mxu0
        %v5558 = vadd.f32 %v1393, %v5557
        %v5559 = vpop.f32.mrb[0].mxu0
        %5560 = vmatprep.mubr.bf16.mxu0 0
        %5561 = vmatmul.mubr.bf16.gmra.mrb[0].mxu0 %v3978
        %v5562 = vpop.f32.mrb[0].mxu0
        %v5563 = vadd.f32 %v1393, %v5562
        %v5564 = vpop.f32.mrb[0].mxu0
        %v5565 = vpop.f32.mrb[0].mxu0
        %v5566 = vadd.f32 %v1393, %v5565
        %v5567 = vpop.f32.mrb[0].mxu0
        %5568 = vmatprep.mubr.bf16.mxu0 0
        %5569 = vmatmul.mubr.bf16.gmra.mrb[0].mxu0 %v3981
        %v5570 = vpop.f32.mrb[0].mxu0
        %v5571 = vadd.f32 %v1393, %v5570
        %v5572 = vpop.f32.mrb[0].mxu0
        %v5573 = vpop.f32.mrb[0].mxu0
        %v5574 = vadd.f32 %v1393, %v5573
        %v5575 = vpop.f32.mrb[0].mxu0
        %5576 = vmatprep.mubr.bf16.mxu0 0
        %5577 = vmatmul.mubr.bf16.gmra.mrb[0].mxu0 %v3984
        %v5578 = vpop.f32.mrb[0].mxu0
        %v5579 = vadd.f32 %v1393, %v5578
        %v5580 = vpop.f32.mrb[0].mxu0
        %v5581 = vpop.f32.mrb[0].mxu0
        %v5582 = vadd.f32 %v1393, %v5581
        %v5583 = vpop.f32.mrb[0].mxu0
        %5584 = vmatprep.mubr.bf16.mxu0 0
        %5585 = vmatmul.mubr.bf16.gmra.mrb[0].mxu0 %v3987
        %v5586 = vpop.f32.mrb[0].mxu0
        %v5587 = vadd.f32 %v1393, %v5586
        %v5588 = vpop.f32.mrb[0].mxu0
        %v5589 = vpop.f32.mrb[0].mxu0
        %v5590 = vadd.f32 %v1393, %v5589
        %v5591 = vpop.f32.mrb[0].mxu0
        %5592 = vmatprep.mubr.bf16.mxu0 0
        %5593 = vmatmul.mubr.bf16.gmra.mrb[0].mxu0 %v3990
        %v5594 = vpop.f32.mrb[0].mxu0
        %v5595 = vadd.f32 %v1393, %v5594
        %v5596 = vpop.f32.mrb[0].mxu0
        %v5597 = vpop.f32.mrb[0].mxu0
        %v5598 = vadd.f32 %v1393, %v5597
        %v5599 = vpop.f32.mrb[0].mxu0
        %5600 = vmatprep.mubr.bf16.mxu0 0
        %5601 = vmatmul.mubr.bf16.gmra.mrb[0].mxu0 %v3993
        %v5602 = vpop.f32.mrb[0].mxu0
        %v5603 = vadd.f32 %v1393, %v5602
        %v5604 = vpop.f32.mrb[0].mxu0
        %v5605 = vpop.f32.mrb[0].mxu0
        %v5606 = vadd.f32 %v1393, %v5605
        %v5607 = vpop.f32.mrb[0].mxu0
        %5608 = vmatprep.mubr.bf16.mxu0 0
        %5609 = vmatmul.mubr.bf16.gmra.mrb[0].mxu0 %v3996
        %v5610 = vpop.f32.mrb[0].mxu0
        %v5611 = vadd.f32 %v1393, %v5610
        %v5612 = vpop.f32.mrb[0].mxu0
        %v5613 = vpop.f32.mrb[0].mxu0
        %v5614 = vadd.f32 %v1393, %v5613
        %v5615 = vpop.f32.mrb[0].mxu0
        %5616 = vmatprep.mubr.bf16.mxu0 0
        %5617 = vmatmul.mubr.bf16.gmra.mrb[0].mxu0 %v3999
        %v5618 = vpop.f32.mrb[0].mxu0
        %v5619 = vadd.f32 %v1393, %v5618
        %v5620 = vpop.f32.mrb[0].mxu0
        %v5621 = vpop.f32.mrb[0].mxu0
        %v5622 = vadd.f32 %v1393, %v5621
        %v5623 = vpop.f32.mrb[0].mxu0
        %5624 = vmatprep.mubr.bf16.mxu0 0
        %5625 = vmatmul.mubr.bf16.gmra.mrb[0].mxu0 %v4002
        %v5626 = vpop.f32.mrb[0].mxu0
        %v5627 = vadd.f32 %v1393, %v5626
        %v5628 = vpop.f32.mrb[0].mxu0
        %v5629 = vpop.f32.mrb[0].mxu0
        %v5630 = vadd.f32 %v1393, %v5629
        %v5631 = vpop.f32.mrb[0].mxu0
        %5632 = vmatprep.mubr.bf16.mxu0 0
        %5633 = vmatmul.mubr.bf16.gmra.mrb[0].mxu0 %v4005
        %v5634 = vpop.f32.mrb[0].mxu0
        %v5635 = vadd.f32 %v1393, %v5634
        %v5636 = vpop.f32.mrb[0].mxu0
        %v5637 = vpop.f32.mrb[0].mxu0
        %v5638 = vadd.f32 %v1393, %v5637
        %v5639 = vpop.f32.mrb[0].mxu0
        %5640 = vmatprep.mubr.bf16.mxu0 0
        %5641 = vmatmul.mubr.bf16.gmra.mrb[0].mxu0 %v4008
        %v5642 = vpop.f32.mrb[0].mxu0
        %v5643 = vadd.f32 %v1393, %v5642
        %v5644 = vpop.f32.mrb[0].mxu0
        %v5645 = vpop.f32.mrb[0].mxu0
        %v5646 = vadd.f32 %v1393, %v5645
        %v5647 = vpop.f32.mrb[0].mxu0
        %5648 = vmatprep.mubr.bf16.mxu0 0
        %5649 = vmatmul.mubr.bf16.gmra.mrb[0].mxu0 %v4011
        %v5650 = vpop.f32.mrb[0].mxu0
        %v5651 = vadd.f32 %v1393, %v5650
        %v5652 = vpop.f32.mrb[0].mxu0
        %v5653 = vpop.f32.mrb[0].mxu0
        %v5654 = vadd.f32 %v1393, %v5653
        %v5655 = vpop.f32.mrb[0].mxu0
        %5656 = vmatprep.mubr.bf16.mxu0 0
        %5657 = vmatmul.mubr.bf16.gmra.mrb[0].mxu0 %v4014
        %v5658 = vpop.f32.mrb[0].mxu0
        %v5659 = vadd.f32 %v1393, %v5658
        %v5660 = vpop.f32.mrb[0].mxu0
        %v5661 = vpop.f32.mrb[0].mxu0
        %v5662 = vadd.f32 %v1393, %v5661
        %v5663 = vpop.f32.mrb[0].mxu0
        %5664 = vmatprep.mubr.bf16.mxu0 0
        %5665 = vmatmul.mubr.bf16.gmra.mrb[0].mxu0 %v4017
        %v5666 = vpop.f32.mrb[0].mxu0
        %v5667 = vadd.f32 %v1393, %v5666
        %v5668 = vpop.f32.mrb[0].mxu0
        %v5669 = vpop.f32.mrb[0].mxu0
        %v5670 = vadd.f32 %v1393, %v5669
        %v5671 = vpop.f32.mrb[0].mxu0
        %5672 = vmatprep.mubr.bf16.mxu0 0
        %5673 = vmatmul.mubr.bf16.gmra.mrb[0].mxu0 %v4020
        %v5674 = vpop.f32.mrb[0].mxu0
        %v5675 = vadd.f32 %v1393, %v5674
        %v5676 = vpop.f32.mrb[0].mxu0
        %v5677 = vpop.f32.mrb[0].mxu0
        %v5678 = vadd.f32 %v1393, %v5677
        %v5679 = vpop.f32.mrb[0].mxu0
        %5680 = vmatprep.mubr.bf16.mxu0 0
        %5681 = vmatmul.mubr.bf16.gmra.mrb[0].mxu0 %v4023
        %v5682 = vpop.f32.mrb[0].mxu0
        %v5683 = vadd.f32 %v1393, %v5682
        %v5684 = vpop.f32.mrb[0].mxu0
        %v5685 = vpop.f32.mrb[0].mxu0
        %v5686 = vadd.f32 %v1393, %v5685
        %v5687 = vpop.f32.mrb[0].mxu0
        %5688 = vmatprep.mubr.bf16.mxu0 0
        %5689 = vmatmul.mubr.bf16.gmra.mrb[0].mxu0 %v4026
        %v5690 = vpop.f32.mrb[0].mxu0
        %v5691 = vadd.f32 %v1393, %v5690
        %v5692 = vpop.f32.mrb[0].mxu0
        %v5693 = vpop.f32.mrb[0].mxu0
        %v5694 = vadd.f32 %v1393, %v5693
        %v5695 = vpop.f32.mrb[0].mxu0
        %5696 = vmatprep.mubr.bf16.mxu0 0
        %5697 = vmatmul.mubr.bf16.gmra.mrb[0].mxu0 %v4029
        %v5698 = vpop.f32.mrb[0].mxu0
        %v5699 = vadd.f32 %v1393, %v5698
        %v5700 = vpop.f32.mrb[0].mxu0
        %v5701 = vpop.f32.mrb[0].mxu0
        %v5702 = vadd.f32 %v1393, %v5701
        %v5703 = vpop.f32.mrb[0].mxu0
        %5704 = vmatprep.mubr.bf16.mxu0 0
        %5705 = vmatmul.mubr.bf16.gmra.mrb[0].mxu0 %v4032
        %v5706 = vpop.f32.mrb[0].mxu0
        %v5707 = vadd.f32 %v1393, %v5706
        %v5708 = vpop.f32.mrb[0].mxu0
        %v5709 = vpop.f32.mrb[0].mxu0
        %v5710 = vadd.f32 %v1393, %v5709
        %v5711 = vpop.f32.mrb[0].mxu0
        %5712 = vmatprep.mubr.bf16.mxu0 0
        %5713 = vmatmul.mubr.bf16.gmra.mrb[0].mxu0 %v4035
        %v5714 = vpop.f32.mrb[0].mxu0
        %v5715 = vadd.f32 %v1393, %v5714
        %v5716 = vpop.f32.mrb[0].mxu0
        %v5717 = vpop.f32.mrb[0].mxu0
        %v5718 = vadd.f32 %v1393, %v5717
        %v5719 = vpop.f32.mrb[0].mxu0
        %5720 = vmatprep.mubr.bf16.mxu0 0
        %5721 = vmatmul.mubr.bf16.gmra.mrb[0].mxu0 %v4038
        %v5722 = vpop.f32.mrb[0].mxu0
        %v5723 = vadd.f32 %v1393, %v5722
        %v5724 = vpop.f32.mrb[0].mxu0
        %v5725 = vpop.f32.mrb[0].mxu0
        %v5726 = vadd.f32 %v1393, %v5725
        %v5727 = vpop.f32.mrb[0].mxu0
        %5728 = vmatprep.mubr.bf16.mxu0 0
        %5729 = vmatmul.mubr.bf16.gmra.mrb[0].mxu0 %v4041
        %v5730 = vpop.f32.mrb[0].mxu0
        %v5731 = vadd.f32 %v1393, %v5730
        %v5732 = vpop.f32.mrb[0].mxu0
        %v5733 = vpop.f32.mrb[0].mxu0
        %v5734 = vadd.f32 %v1393, %v5733
        %v5735 = vpop.f32.mrb[0].mxu0
        %5736 = vmatprep.mubr.bf16.mxu0 0
        %5737 = vmatmul.mubr.bf16.gmra.mrb[0].mxu0 %v4044
        %v5738 = vpop.f32.mrb[0].mxu0
        %v5739 = vadd.f32 %v1393, %v5738
        %v5740 = vpop.f32.mrb[0].mxu0
        %v5741 = vpop.f32.mrb[0].mxu0
        %v5742 = vadd.f32 %v1393, %v5741
        %v5743 = vpop.f32.mrb[0].mxu0
        %5744 = vmatprep.mubr.bf16.mxu0 0
        %5745 = vmatmul.mubr.bf16.gmra.mrb[0].mxu0 %v4047
        %v5746 = vpop.f32.mrb[0].mxu0
        %v5747 = vadd.f32 %v1393, %v5746
        %v5748 = vpop.f32.mrb[0].mxu0
        %v5749 = vpop.f32.mrb[0].mxu0
        %v5750 = vadd.f32 %v1393, %v5749
        %v5751 = vpop.f32.mrb[0].mxu0
        %5752 = vmatprep.mubr.bf16.mxu0 0
        %5753 = vmatmul.mubr.bf16.gmra.mrb[0].mxu0 %v4050
        %v5754 = vpop.f32.mrb[0].mxu0
        %v5755 = vadd.f32 %v1393, %v5754
        %v5756 = vpop.f32.mrb[0].mxu0
        %v5757 = vpop.f32.mrb[0].mxu0
        %v5758 = vadd.f32 %v1393, %v5757
        %v5759 = vpop.f32.mrb[0].mxu0
        %5760 = vmatprep.mubr.bf16.mxu0 0
        %5761 = vmatmul.mubr.bf16.gmra.mrb[0].mxu0 %v4053
        %v5762 = vpop.f32.mrb[0].mxu0
        %v5763 = vadd.f32 %v1393, %v5762
        %v5764 = vpop.f32.mrb[0].mxu0
        %v5765 = vpop.f32.mrb[0].mxu0
        %v5766 = vadd.f32 %v1393, %v5765
        %v5767 = vpop.f32.mrb[0].mxu0
        %5768 = vmatprep.mubr.bf16.mxu0 0
        %5769 = vmatmul.mubr.bf16.gmra.mrb[0].mxu0 %v4056
        %v5770 = vpop.f32.mrb[0].mxu0
        %v5771 = vadd.f32 %v1393, %v5770
        %v5772 = vpop.f32.mrb[0].mxu0
        %v5773 = vpop.f32.mrb[0].mxu0
        %v5774 = vadd.f32 %v1393, %v5773
        %v5775 = vpop.f32.mrb[0].mxu0
        %5776 = vmatprep.mubr.bf16.mxu0 0
        %5777 = vmatmul.mubr.bf16.gmra.mrb[0].mxu0 %v4059
        %v5778 = vpop.f32.mrb[0].mxu0
        %v5779 = vadd.f32 %v1393, %v5778
        %v5780 = vpop.f32.mrb[0].mxu0
        %v5781 = vpop.f32.mrb[0].mxu0
        %v5782 = vadd.f32 %v1393, %v5781
        %v5783 = vpop.f32.mrb[0].mxu0
        %5784 = vmatprep.mubr.bf16.mxu0 0
        %5785 = vmatmul.mubr.bf16.gmra.mrb[0].mxu0 %v4062
        %v5786 = vpop.f32.mrb[0].mxu0
        %v5787 = vadd.f32 %v1393, %v5786
        %v5788 = vpop.f32.mrb[0].mxu0
        %v5789 = vpop.f32.mrb[0].mxu0
        %v5790 = vadd.f32 %v1393, %v5789
        %v5791 = vpop.f32.mrb[0].mxu0
        %5792 = vmatprep.mubr.bf16.mxu0 0
        %5793 = vmatmul.mubr.bf16.gmra.mrb[0].mxu0 %v4065
        %v5794 = vpop.f32.mrb[0].mxu0
        %v5795 = vadd.f32 %v1393, %v5794
        %v5796 = vpop.f32.mrb[0].mxu0
        %v5797 = vpop.f32.mrb[0].mxu0
        %v5798 = vadd.f32 %v1393, %v5797
        %v5799 = vpop.f32.mrb[0].mxu0
        %5800 = vmatprep.mubr.bf16.mxu0 0
        %5801 = vmatmul.mubr.bf16.gmra.mrb[0].mxu0 %v4068
        %v5802 = vpop.f32.mrb[0].mxu0
        %v5803 = vadd.f32 %v1393, %v5802
        %v5804 = vpop.f32.mrb[0].mxu0
        %v5805 = vpop.f32.mrb[0].mxu0
        %v5806 = vadd.f32 %v1393, %v5805
        %v5807 = vpop.f32.mrb[0].mxu0
        %5808 = vmatprep.mubr.bf16.mxu0 0
        %5809 = vmatmul.mubr.bf16.gmra.mrb[0].mxu0 %v4071
        %v5810 = vpop.f32.mrb[0].mxu0
        %v5811 = vadd.f32 %v1393, %v5810
        %v5812 = vpop.f32.mrb[0].mxu0
        %v5813 = vpop.f32.mrb[0].mxu0
        %v5814 = vadd.f32 %v1393, %v5813
        %v5815 = vpop.f32.mrb[0].mxu0
        %5816 = vmatprep.mubr.bf16.mxu0 0
        %5817 = vmatmul.mubr.bf16.gmra.mrb[0].mxu0 %v4074
        %v5818 = vpop.f32.mrb[0].mxu0
        %v5819 = vadd.f32 %v1393, %v5818
        %v5820 = vpop.f32.mrb[0].mxu0
        %v5821 = vpop.f32.mrb[0].mxu0
        %v5822 = vadd.f32 %v1393, %v5821
        %v5823 = vpop.f32.mrb[0].mxu0
        %5824 = vmatprep.mubr.bf16.mxu0 0
        %5825 = vmatmul.mubr.bf16.gmra.mrb[0].mxu0 %v4077
        %v5826 = vpop.f32.mrb[0].mxu0
        %v5827 = vadd.f32 %v1393, %v5826
        %v5828 = vpop.f32.mrb[0].mxu0
        %v5829 = vpop.f32.mrb[0].mxu0
        %v5830 = vadd.f32 %v1393, %v5829
        %v5831 = vpop.f32.mrb[0].mxu0
        %5832 = vmatprep.mubr.bf16.mxu0 0
        %5833 = vmatmul.mubr.bf16.gmra.mrb[0].mxu0 %v4080
        %v5834 = vpop.f32.mrb[0].mxu0
        %v5835 = vadd.f32 %v1393, %v5834
        %v5836 = vpop.f32.mrb[0].mxu0
        %v5837 = vpop.f32.mrb[0].mxu0
        %v5838 = vadd.f32 %v1393, %v5837
        %v5839 = vpop.f32.mrb[0].mxu0
        %5840 = vmatprep.mubr.bf16.mxu0 0
        %5841 = vmatmul.mubr.bf16.gmra.mrb[0].mxu0 %v4083
        %v5842 = vpop.f32.mrb[0].mxu0
        %v5843 = vadd.f32 %v1393, %v5842
        %v5844 = vpop.f32.mrb[0].mxu0
        %v5845 = vpop.f32.mrb[0].mxu0
        %v5846 = vadd.f32 %v1393, %v5845
        %v5847 = vpop.f32.mrb[0].mxu0
        %5848 = vmatprep.mubr.bf16.mxu0 0
        %5849 = vmatmul.mubr.bf16.gmra.mrb[0].mxu0 %v4086
        %v5850 = vpop.f32.mrb[0].mxu0
        %v5851 = vadd.f32 %v1393, %v5850
        %v5852 = vpop.f32.mrb[0].mxu0
        %v5853 = vpop.f32.mrb[0].mxu0
        %v5854 = vadd.f32 %v1393, %v5853
        %v5855 = vpop.f32.mrb[0].mxu0
        %5856 = vmatprep.mubr.bf16.mxu0 0
        %5857 = vmatmul.mubr.bf16.gmra.mrb[0].mxu0 %v4089
        %v5858 = vpop.f32.mrb[0].mxu0
        %v5859 = vadd.f32 %v1393, %v5858
        %v5860 = vpop.f32.mrb[0].mxu0
        %v5861 = vpop.f32.mrb[0].mxu0
        %v5862 = vadd.f32 %v1393, %v5861
        %v5863 = vpop.f32.mrb[0].mxu0
        %5864 = vmatprep.mubr.bf16.mxu0 0
        %5865 = vmatmul.mubr.bf16.gmra.mrb[0].mxu0 %v4092
        %v5866 = vpop.f32.mrb[0].mxu0
        %v5867 = vadd.f32 %v1393, %v5866
        %v5868 = vpop.f32.mrb[0].mxu0
        %v5869 = vpop.f32.mrb[0].mxu0
        %v5870 = vadd.f32 %v1393, %v5869
        %v5871 = vpop.f32.mrb[0].mxu0
        %5872 = vmatprep.mubr.bf16.mxu0 0
        %5873 = vmatmul.mubr.bf16.gmra.mrb[0].mxu0 %v4095
        %v5874 = vpop.f32.mrb[0].mxu0
        %v5875 = vadd.f32 %v1393, %v5874
        %v5876 = vpop.f32.mrb[0].mxu0
        %v5877 = vpop.f32.mrb[0].mxu0
        %v5878 = vadd.f32 %v1393, %v5877
        %v5879 = vpop.f32.mrb[0].mxu0
        %5880 = vmatprep.mubr.bf16.mxu0 0
        %5881 = vmatmul.mubr.bf16.gmra.mrb[0].mxu0 %v4098
        %v5882 = vpop.f32.mrb[0].mxu0
        %v5883 = vadd.f32 %v1393, %v5882
        %v5884 = vpop.f32.mrb[0].mxu0
        %v5885 = vpop.f32.mrb[0].mxu0
        %v5886 = vadd.f32 %v1393, %v5885
        %v5887 = vpop.f32.mrb[0].mxu0
        %5888 = vmatprep.mubr.bf16.mxu0 0
        %5889 = vmatmul.mubr.bf16.gmra.mrb[0].mxu0 %v4101
        %v5890 = vpop.f32.mrb[0].mxu0
        %v5891 = vadd.f32 %v1393, %v5890
        %v5892 = vpop.f32.mrb[0].mxu0
        %v5893 = vpop.f32.mrb[0].mxu0
        %v5894 = vadd.f32 %v1393, %v5893
        %v5895 = vpop.f32.mrb[0].mxu0
        %5896 = vmatprep.mubr.bf16.mxu0 0
        %5897 = vmatmul.mubr.bf16.gmra.mrb[0].mxu0 %v4104
        %v5898 = vpop.f32.mrb[0].mxu0
        %v5899 = vadd.f32 %v1393, %v5898
        %v5900 = vpop.f32.mrb[0].mxu0
        %v5901 = vpop.f32.mrb[0].mxu0
        %v5902 = vadd.f32 %v1393, %v5901
        %v5903 = vpop.f32.mrb[0].mxu0
        %5904 = vmatprep.mubr.bf16.mxu0 0
        %5905 = vmatmul.mubr.bf16.gmra.mrb[0].mxu0 %v4107
        %v5906 = vpop.f32.mrb[0].mxu0
        %v5907 = vadd.f32 %v1393, %v5906
        %v5908 = vpop.f32.mrb[0].mxu0
        %v5909 = vpop.f32.mrb[0].mxu0
        %v5910 = vadd.f32 %v1393, %v5909
        %v5911 = vpop.f32.mrb[0].mxu0
        %5912 = vmatprep.mubr.bf16.mxu0 0
        %5913 = vmatmul.mubr.bf16.gmra.mrb[0].mxu0 %v4110
        %v5914 = vpop.f32.mrb[0].mxu0
        %v5915 = vadd.f32 %v1393, %v5914
        %v5916 = vpop.f32.mrb[0].mxu0
        %v5917 = vpop.f32.mrb[0].mxu0
        %v5918 = vadd.f32 %v1393, %v5917
        %v5919 = vpop.f32.mrb[0].mxu0
        %5920 = vmatprep.mubr.bf16.mxu0 0
        %5921 = vmatmul.mubr.bf16.gmra.mrb[0].mxu0 %v4113
        %v5922 = vpop.f32.mrb[0].mxu0
        %v5923 = vadd.f32 %v1393, %v5922
        %v5924 = vpop.f32.mrb[0].mxu0
        %v5925 = vpop.f32.mrb[0].mxu0
        %v5926 = vadd.f32 %v1393, %v5925
        %v5927 = vpop.f32.mrb[0].mxu0
        %5928 = vmatprep.mubr.bf16.mxu0 0
        %5929 = vmatmul.mubr.bf16.gmra.mrb[0].mxu0 %v4116
        %v5930 = vpop.f32.mrb[0].mxu0
        %v5931 = vadd.f32 %v1393, %v5930
        %v5932 = vpop.f32.mrb[0].mxu0
        %v5933 = vpop.f32.mrb[0].mxu0
        %v5934 = vadd.f32 %v1393, %v5933
        %v5935 = vpop.f32.mrb[0].mxu0
        %5936 = vmatprep.mubr.bf16.mxu0 0
        %5937 = vmatmul.mubr.bf16.gmra.mrb[0].mxu0 %v4119
        %v5938 = vpop.f32.mrb[0].mxu0
        %v5939 = vadd.f32 %v1393, %v5938
        %v5940 = vpop.f32.mrb[0].mxu0
        %v5941 = vpop.f32.mrb[0].mxu0
        %v5942 = vadd.f32 %v1393, %v5941
        %v5943 = vpop.f32.mrb[0].mxu0
        %5944 = vmatprep.mubr.bf16.mxu0 0
        %5945 = vmatmul.mubr.bf16.gmra.mrb[0].mxu0 %v4122
        %v5946 = vpop.f32.mrb[0].mxu0
        %v5947 = vadd.f32 %v1393, %v5946
        %v5948 = vpop.f32.mrb[0].mxu0
        %v5949 = vpop.f32.mrb[0].mxu0
        %v5950 = vadd.f32 %v1393, %v5949
        %v5951 = vpop.f32.mrb[0].mxu0
        %5952 = vmatprep.mubr.bf16.mxu0 0
        %5953 = vmatmul.mubr.bf16.gmra.mrb[0].mxu0 %v4125
        %v5954 = vpop.f32.mrb[0].mxu0
        %v5955 = vadd.f32 %v1393, %v5954
        %v5956 = vpop.f32.mrb[0].mxu0
        %v5957 = vpop.f32.mrb[0].mxu0
        %v5958 = vadd.f32 %v1393, %v5957
        %v5959 = vpop.f32.mrb[0].mxu0
        %5960 = vmatprep.mubr.bf16.mxu0 0
        %5961 = vmatmul.mubr.bf16.gmra.mrb[0].mxu0 %v4128
        %v5962 = vpop.f32.mrb[0].mxu0
        %v5963 = vadd.f32 %v1393, %v5962
        %v5964 = vpop.f32.mrb[0].mxu0
        %v5965 = vpop.f32.mrb[0].mxu0
        %v5966 = vadd.f32 %v1393, %v5965
        %v5967 = vpop.f32.mrb[0].mxu0
        %5968 = vmatprep.mubr.bf16.mxu0 0
        %5969 = vmatmul.mubr.bf16.gmra.mrb[0].mxu0 %v4131
        %v5970 = vpop.f32.mrb[0].mxu0
        %v5971 = vadd.f32 %v1393, %v5970
        %v5972 = vpop.f32.mrb[0].mxu0
        %v5973 = vpop.f32.mrb[0].mxu0
        %v5974 = vadd.f32 %v1393, %v5973
        %v5975 = vpop.f32.mrb[0].mxu0
        %5976 = vmatprep.mubr.bf16.mxu0 0
        %5977 = vmatmul.mubr.bf16.gmra.mrb[0].mxu0 %v4134
        %v5978 = vpop.f32.mrb[0].mxu0
        %v5979 = vadd.f32 %v1393, %v5978
        %v5980 = vpop.f32.mrb[0].mxu0
        %v5981 = vpop.f32.mrb[0].mxu0
        %v5982 = vadd.f32 %v1393, %v5981
        %v5983 = vpop.f32.mrb[0].mxu0
        %5984 = vmatprep.mubr.bf16.mxu0 0
        %5985 = vmatmul.mubr.bf16.gmra.mrb[0].mxu0 %v4137
        %v5986 = vpop.f32.mrb[0].mxu0
        %v5987 = vadd.f32 %v1393, %v5986
        %v5988 = vpop.f32.mrb[0].mxu0
        %v5989 = vpop.f32.mrb[0].mxu0
        %v5990 = vadd.f32 %v1393, %v5989
        %v5991 = vpop.f32.mrb[0].mxu0
        %5992 = vmatprep.mubr.bf16.mxu0 0
        %5993 = vmatmul.mubr.bf16.gmra.mrb[0].mxu0 %v4140
        %v5994 = vpop.f32.mrb[0].mxu0
        %v5995 = vadd.f32 %v1393, %v5994
        %v5996 = vpop.f32.mrb[0].mxu0
        %v5997 = vpop.f32.mrb[0].mxu0
        %v5998 = vadd.f32 %v1393, %v5997
        %v5999 = vpop.f32.mrb[0].mxu0
        %6000 = vmatprep.mubr.bf16.mxu0 0
        %6001 = vmatmul.mubr.bf16.gmra.mrb[0].mxu0 %v4143
        %v6002 = vpop.f32.mrb[0].mxu0
        %v6003 = vadd.f32 %v1393, %v6002
        %v6004 = vpop.f32.mrb[0].mxu0
        %v6005 = vpop.f32.mrb[0].mxu0
        %v6006 = vadd.f32 %v1393, %v6005
        %v6007 = vpop.f32.mrb[0].mxu0
        %6008 = vmatprep.mubr.bf16.mxu0 0
        %6009 = vmatmul.mubr.bf16.gmra.mrb[0].mxu0 %v4146
        %v6010 = vpop.f32.mrb[0].mxu0
        %v6011 = vadd.f32 %v1393, %v6010
        %v6012 = vpop.f32.mrb[0].mxu0
        %v6013 = vpop.f32.mrb[0].mxu0
        %v6014 = vadd.f32 %v1393, %v6013
        %v6015 = vpop.f32.mrb[0].mxu0
        %6016 = vmatprep.mubr.bf16.mxu0 0
        %6017 = vmatmul.mubr.bf16.gmra.mrb[0].mxu0 %v4149
        %v6018 = vpop.f32.mrb[0].mxu0
        %v6019 = vadd.f32 %v1393, %v6018
        %v6020 = vpop.f32.mrb[0].mxu0
        %v6021 = vpop.f32.mrb[0].mxu0
        %v6022 = vadd.f32 %v1393, %v6021
        %v6023 = vpop.f32.mrb[0].mxu0
        %6024 = vmatprep.mubr.bf16.mxu0 0
        %6025 = vmatmul.mubr.bf16.gmra.mrb[0].mxu0 %v4152
        %v6026 = vpop.f32.mrb[0].mxu0
        %v6027 = vadd.f32 %v1393, %v6026
        %v6028 = vpop.f32.mrb[0].mxu0
        %v6029 = vpop.f32.mrb[0].mxu0
        %v6030 = vadd.f32 %v1393, %v6029
        %v6031 = vpop.f32.mrb[0].mxu0
        %6032 = vmatprep.mubr.bf16.mxu0 0
        %6033 = vmatmul.mubr.bf16.gmra.mrb[0].mxu0 %v4155
        %v6034 = vpop.f32.mrb[0].mxu0
        %v6035 = vadd.f32 %v1393, %v6034
        %v6036 = vpop.f32.mrb[0].mxu0
        %v6037 = vpop.f32.mrb[0].mxu0
        %v6038 = vadd.f32 %v1393, %v6037
        %v6039 = vpop.f32.mrb[0].mxu0
        %6040 = vmatprep.mubr.bf16.mxu0 0
        %6041 = vmatmul.mubr.bf16.gmra.mrb[0].mxu0 %v4158
        %v6042 = vpop.f32.mrb[0].mxu0
        %v6043 = vadd.f32 %v1393, %v6042
        %v6044 = vpop.f32.mrb[0].mxu0
        %v6045 = vpop.f32.mrb[0].mxu0
        %v6046 = vadd.f32 %v1393, %v6045
        %v6047 = vpop.f32.mrb[0].mxu0
        %6048 = vmatprep.mubr.bf16.mxu0 0
        %6049 = vmatmul.mubr.bf16.gmra.mrb[0].mxu0 %v4161
        %v6050 = vpop.f32.mrb[0].mxu0
        %v6051 = vadd.f32 %v1393, %v6050
        %v6052 = vpop.f32.mrb[0].mxu0
        %v6053 = vpop.f32.mrb[0].mxu0
        %v6054 = vadd.f32 %v1393, %v6053
        %v6055 = vpop.f32.mrb[0].mxu0
        %6056 = vmatprep.mubr.bf16.mxu0 0
        %6057 = vmatmul.mubr.bf16.gmra.mrb[0].mxu0 %v4164
        %v6058 = vpop.f32.mrb[0].mxu0
        %v6059 = vadd.f32 %v1393, %v6058
        %v6060 = vpop.f32.mrb[0].mxu0
        %v6061 = vpop.f32.mrb[0].mxu0
        %v6062 = vadd.f32 %v1393, %v6061
        %v6063 = vpop.f32.mrb[0].mxu0
        %6064 = vmatprep.mubr.bf16.mxu0 0
        %6065 = vmatmul.mubr.bf16.gmra.mrb[0].mxu0 %v4167
        %v6066 = vpop.f32.mrb[0].mxu0
        %v6067 = vadd.f32 %v1393, %v6066
        %v6068 = vpop.f32.mrb[0].mxu0
        %v6069 = vpop.f32.mrb[0].mxu0
        %v6070 = vadd.f32 %v1393, %v6069
        %v6071 = vpop.f32.mrb[0].mxu0
        %6072 = vmatprep.mubr.bf16.mxu0 0
        %6073 = vmatmul.mubr.bf16.gmra.mrb[0].mxu0 %v4170
        %v6074 = vpop.f32.mrb[0].mxu0
        %v6075 = vadd.f32 %v1393, %v6074
        %v6076 = vpop.f32.mrb[0].mxu0
        %v6077 = vpop.f32.mrb[0].mxu0
        %v6078 = vadd.f32 %v1393, %v6077
        %v6079 = vpop.f32.mrb[0].mxu0
        %6080 = vmatprep.mubr.bf16.mxu0 0
        %6081 = vmatmul.mubr.bf16.gmra.mrb[0].mxu0 %v4173
        %v6082 = vpop.f32.mrb[0].mxu0
        %v6083 = vadd.f32 %v1393, %v6082
        %v6084 = vpop.f32.mrb[0].mxu0
        %v6085 = vpop.f32.mrb[0].mxu0
        %v6086 = vadd.f32 %v1393, %v6085
        %v6087 = vpop.f32.mrb[0].mxu0
        %6088 = vmatprep.mubr.bf16.mxu0 0
        %6089 = vmatmul.mubr.bf16.gmra.mrb[0].mxu0 %v4176
        %v6090 = vpop.f32.mrb[0].mxu0
        %v6091 = vadd.f32 %v1393, %v6090
        %v6092 = vpop.f32.mrb[0].mxu0
        %v6093 = vpop.f32.mrb[0].mxu0
        %v6094 = vadd.f32 %v1393, %v6093
        %v6095 = vpop.f32.mrb[0].mxu0
        %6096 = vmatprep.mubr.bf16.mxu0 0
        %6097 = vmatmul.mubr.bf16.gmra.mrb[0].mxu0 %v4179
        %v6098 = vpop.f32.mrb[0].mxu0
        %v6099 = vadd.f32 %v1393, %v6098
        %v6100 = vpop.f32.mrb[0].mxu0
        %v6101 = vpop.f32.mrb[0].mxu0
        %v6102 = vadd.f32 %v1393, %v6101
        %v6103 = vpop.f32.mrb[0].mxu0
        %6104 = vmatprep.mubr.bf16.mxu0 0
        %6105 = vmatmul.mubr.bf16.gmra.mrb[0].mxu0 %v4182
        %v6106 = vpop.f32.mrb[0].mxu0
        %v6107 = vadd.f32 %v1393, %v6106
        %v6108 = vpop.f32.mrb[0].mxu0
        %v6109 = vpop.f32.mrb[0].mxu0
        %v6110 = vadd.f32 %v1393, %v6109
        %v6111 = vpop.f32.mrb[0].mxu0
        %6112 = vmatprep.mubr.bf16.mxu0 0
        %6113 = vmatmul.mubr.bf16.gmra.mrb[0].mxu0 %v4185
        %v6114 = vpop.f32.mrb[0].mxu0
        %v6115 = vadd.f32 %v1393, %v6114
        %v6116 = vpop.f32.mrb[0].mxu0
        %v6117 = vpop.f32.mrb[0].mxu0
        %v6118 = vadd.f32 %v1393, %v6117
        %v6119 = vpop.f32.mrb[0].mxu0
        %6120 = vmatprep.mubr.bf16.mxu0 0
        %6121 = vmatmul.mubr.bf16.gmra.mrb[0].mxu0 %v4188
        %v6122 = vpop.f32.mrb[0].mxu0
        %v6123 = vadd.f32 %v1393, %v6122
        %v6124 = vpop.f32.mrb[0].mxu0
        %v6125 = vpop.f32.mrb[0].mxu0
        %v6126 = vadd.f32 %v1393, %v6125
        %v6127 = vpop.f32.mrb[0].mxu0
        %6128 = vmatprep.mubr.bf16.mxu0 0
        %6129 = vmatmul.mubr.bf16.gmra.mrb[0].mxu0 %v4191
        %v6130 = vpop.f32.mrb[0].mxu0
        %v6131 = vadd.f32 %v1393, %v6130
        %v6132 = vpop.f32.mrb[0].mxu0
        %v6133 = vpop.f32.mrb[0].mxu0
        %v6134 = vadd.f32 %v1393, %v6133
        %v6135 = vpop.f32.mrb[0].mxu0
        %6136 = vmatprep.mubr.bf16.mxu0 0
        %6137 = vmatmul.mubr.bf16.gmra.mrb[0].mxu0 %v4194
        %v6138 = vpop.f32.mrb[0].mxu0
        %v6139 = vadd.f32 %v1393, %v6138
        %v6140 = vpop.f32.mrb[0].mxu0
        %v6141 = vpop.f32.mrb[0].mxu0
        %v6142 = vadd.f32 %v1393, %v6141
        %v6143 = vpop.f32.mrb[0].mxu0
        %6144 = vmatprep.mubr.bf16.mxu0 0
        %6145 = vmatmul.mubr.bf16.gmra.mrb[0].mxu0 %v4197
        %v6146 = vpop.f32.mrb[0].mxu0
        %v6147 = vadd.f32 %v1393, %v6146
        %v6148 = vpop.f32.mrb[0].mxu0
        %v6149 = vpop.f32.mrb[0].mxu0
        %v6150 = vadd.f32 %v1393, %v6149
        %v6151 = vpop.f32.mrb[0].mxu0
        %6152 = vmatprep.mubr.bf16.mxu0 0
        %6153 = vmatmul.mubr.bf16.gmra.mrb[0].mxu0 %v4200
        %v6154 = vpop.f32.mrb[0].mxu0
        %v6155 = vadd.f32 %v1393, %v6154
        %v6156 = vpop.f32.mrb[0].mxu0
        %v6157 = vpop.f32.mrb[0].mxu0
        %v6158 = vadd.f32 %v1393, %v6157
        %v6159 = vpop.f32.mrb[0].mxu0
        %6160 = vmatprep.mubr.bf16.mxu0 0
        %6161 = vmatmul.mubr.bf16.gmra.mrb[0].mxu0 %v4203
        %v6162 = vpop.f32.mrb[0].mxu0
        %v6163 = vadd.f32 %v1393, %v6162
        %v6164 = vpop.f32.mrb[0].mxu0
        %v6165 = vpop.f32.mrb[0].mxu0
        %v6166 = vadd.f32 %v1393, %v6165
        %v6167 = vpop.f32.mrb[0].mxu0
        %6168 = vmatprep.mubr.bf16.mxu0 0
        %6169 = vmatmul.mubr.bf16.gmra.mrb[0].mxu0 %v4206
        %v6170 = vpop.f32.mrb[0].mxu0
        %v6171 = vadd.f32 %v1393, %v6170
        %v6172 = vpop.f32.mrb[0].mxu0
        %v6173 = vpop.f32.mrb[0].mxu0
        %v6174 = vadd.f32 %v1393, %v6173
        %v6175 = vpop.f32.mrb[0].mxu0
        %6176 = vmatprep.mubr.bf16.mxu0 0
        %6177 = vmatmul.mubr.bf16.gmra.mrb[0].mxu0 %v4209
        %v6178 = vpop.f32.mrb[0].mxu0
        %v6179 = vadd.f32 %v1393, %v6178
        %v6180 = vpop.f32.mrb[0].mxu0
        %v6181 = vpop.f32.mrb[0].mxu0
        %v6182 = vadd.f32 %v1393, %v6181
        %v6183 = vpop.f32.mrb[0].mxu0
        %6184 = vmatprep.mubr.bf16.mxu0 0
        %6185 = vmatmul.mubr.bf16.gmra.mrb[0].mxu0 %v4212
        %v6186 = vpop.f32.mrb[0].mxu0
        %v6187 = vadd.f32 %v1393, %v6186
        %v6188 = vpop.f32.mrb[0].mxu0
        %v6189 = vpop.f32.mrb[0].mxu0
        %v6190 = vadd.f32 %v1393, %v6189
        %v6191 = vpop.f32.mrb[0].mxu0
        %6192 = vmatprep.mubr.bf16.mxu0 0
        %6193 = vmatmul.mubr.bf16.gmra.mrb[0].mxu0 %v4215
        %v6194 = vpop.f32.mrb[0].mxu0
        %v6195 = vadd.f32 %v1393, %v6194
        %v6196 = vpop.f32.mrb[0].mxu0
        %v6197 = vpop.f32.mrb[0].mxu0
        %v6198 = vadd.f32 %v1393, %v6197
        %v6199 = vpop.f32.mrb[0].mxu0
        %6200 = vmatprep.mubr.bf16.mxu0 0
        %6201 = vmatmul.mubr.bf16.gmra.mrb[0].mxu0 %v4218
        %v6202 = vpop.f32.mrb[0].mxu0
        %v6203 = vadd.f32 %v1393, %v6202
        %v6204 = vpop.f32.mrb[0].mxu0
        %v6205 = vpop.f32.mrb[0].mxu0
        %v6206 = vadd.f32 %v1393, %v6205
        %v6207 = vpop.f32.mrb[0].mxu0
        %6208 = vmatprep.mubr.bf16.mxu0 0
        %6209 = vmatmul.mubr.bf16.gmra.mrb[0].mxu0 %v4221
        %v6210 = vpop.f32.mrb[0].mxu0
        %v6211 = vadd.f32 %v1393, %v6210
        %v6212 = vpop.f32.mrb[0].mxu0
        %v6213 = vpop.f32.mrb[0].mxu0
        %v6214 = vadd.f32 %v1393, %v6213
        %v6215 = vpop.f32.mrb[0].mxu0
        %6216 = vmatprep.mubr.bf16.mxu0 0
        %6217 = vmatmul.mubr.bf16.gmra.mrb[0].mxu0 %v4224
        %v6218 = vpop.f32.mrb[0].mxu0
        %v6219 = vadd.f32 %v1393, %v6218
        %v6220 = vpop.f32.mrb[0].mxu0
        %v6221 = vpop.f32.mrb[0].mxu0
        %v6222 = vadd.f32 %v1393, %v6221
        %v6223 = vpop.f32.mrb[0].mxu0
        %6224 = vmatprep.mubr.bf16.mxu0 0
        %6225 = vmatmul.mubr.bf16.gmra.mrb[0].mxu0 %v4227
        %v6226 = vpop.f32.mrb[0].mxu0
        %v6227 = vadd.f32 %v1393, %v6226
        %v6228 = vpop.f32.mrb[0].mxu0
        %v6229 = vpop.f32.mrb[0].mxu0
        %v6230 = vadd.f32 %v1393, %v6229
        %v6231 = vpop.f32.mrb[0].mxu0
        %6232 = vmatprep.mubr.bf16.mxu0 0
        %6233 = vmatmul.mubr.bf16.gmra.mrb[0].mxu0 %v4230
        %v6234 = vpop.f32.mrb[0].mxu0
        %v6235 = vadd.f32 %v1393, %v6234
        %v6236 = vpop.f32.mrb[0].mxu0
        %v6237 = vpop.f32.mrb[0].mxu0
        %v6238 = vadd.f32 %v1393, %v6237
        %v6239 = vpop.f32.mrb[0].mxu0
        %6240 = vmatprep.mubr.bf16.mxu0 0
        %6241 = vmatmul.mubr.bf16.gmra.mrb[0].mxu0 %v4233
        %v6242 = vpop.f32.mrb[0].mxu0
        %v6243 = vadd.f32 %v1393, %v6242
        %v6244 = vpop.f32.mrb[0].mxu0
        %v6245 = vpop.f32.mrb[0].mxu0
        %v6246 = vadd.f32 %v1393, %v6245
        %v6247 = vpop.f32.mrb[0].mxu0
        %6248 = vmatprep.mubr.bf16.mxu0 0
        %6249 = vmatmul.mubr.bf16.gmra.mrb[0].mxu0 %v4236
        %v6250 = vpop.f32.mrb[0].mxu0
        %v6251 = vadd.f32 %v1393, %v6250
        %v6252 = vpop.f32.mrb[0].mxu0
        %v6253 = vpop.f32.mrb[0].mxu0
        %v6254 = vadd.f32 %v1393, %v6253
        %v6255 = vpop.f32.mrb[0].mxu0
        %6256 = vmatprep.mubr.bf16.mxu0 0
        %6257 = vmatmul.mubr.bf16.gmra.mrb[0].mxu0 %v4239
        %v6258 = vpop.f32.mrb[0].mxu0
        %v6259 = vadd.f32 %v1393, %v6258
        %v6260 = vpop.f32.mrb[0].mxu0
        %v6261 = vpop.f32.mrb[0].mxu0
        %v6262 = vadd.f32 %v1393, %v6261
        %v6263 = vpop.f32.mrb[0].mxu0
        %6264 = vmatprep.mubr.bf16.mxu0 0
        %6265 = vmatmul.mubr.bf16.gmra.mrb[0].mxu0 %v4242
        %v6266 = vpop.f32.mrb[0].mxu0
        %v6267 = vadd.f32 %v1393, %v6266
        %v6268 = vpop.f32.mrb[0].mxu0
        %v6269 = vpop.f32.mrb[0].mxu0
        %v6270 = vadd.f32 %v1393, %v6269
        %v6271 = vpop.f32.mrb[0].mxu0
        %6272 = vmatprep.mubr.bf16.mxu0 0
        %6273 = vmatmul.mubr.bf16.gmra.mrb[0].mxu0 %v4245
        %v6274 = vpop.f32.mrb[0].mxu0
        %v6275 = vadd.f32 %v1393, %v6274
        %v6276 = vpop.f32.mrb[0].mxu0
        %v6277 = vpop.f32.mrb[0].mxu0
        %v6278 = vadd.f32 %v1393, %v6277
        %v6279 = vpop.f32.mrb[0].mxu0
        %6280 = vmatprep.mubr.bf16.mxu0 0
        %6281 = vmatmul.mubr.bf16.gmra.mrb[0].mxu0 %v4248
        %v6282 = vpop.f32.mrb[0].mxu0
        %v6283 = vadd.f32 %v1393, %v6282
        %v6284 = vpop.f32.mrb[0].mxu0
        %v6285 = vpop.f32.mrb[0].mxu0
        %v6286 = vadd.f32 %v1393, %v6285
        %v6287 = vpop.f32.mrb[0].mxu0
        %6288 = vmatprep.mubr.bf16.mxu0 0
        %6289 = vmatmul.mubr.bf16.gmra.mrb[0].mxu0 %v4251
        %v6290 = vpop.f32.mrb[0].mxu0
        %v6291 = vadd.f32 %v1393, %v6290
        %v6292 = vpop.f32.mrb[0].mxu0
        %v6293 = vpop.f32.mrb[0].mxu0
        %v6294 = vadd.f32 %v1393, %v6293
        %v6295 = vpop.f32.mrb[0].mxu0
        %6296 = vmatprep.mubr.bf16.mxu0 0
        %6297 = vmatmul.mubr.bf16.gmra.mrb[0].mxu0 %v4254
        %v6298 = vpop.f32.mrb[0].mxu0
        %v6299 = vadd.f32 %v1393, %v6298
        %v6300 = vpop.f32.mrb[0].mxu0
        %v6301 = vpop.f32.mrb[0].mxu0
        %v6302 = vadd.f32 %v1393, %v6301
        %v6303 = vpop.f32.mrb[0].mxu0
        %6304 = vmatprep.mubr.bf16.mxu0 0
        %6305 = vmatmul.mubr.bf16.gmra.mrb[0].mxu0 %v4257
        %v6306 = vpop.f32.mrb[0].mxu0
        %v6307 = vadd.f32 %v1393, %v6306
        %v6308 = vpop.f32.mrb[0].mxu0
        %v6309 = vpop.f32.mrb[0].mxu0
        %v6310 = vadd.f32 %v1393, %v6309
        %v6311 = vpop.f32.mrb[0].mxu0
        %6312 = vmatprep.mubr.bf16.mxu0 0
        %6313 = vmatmul.mubr.bf16.gmra.mrb[0].mxu0 %v4260
        %v6314 = vpop.f32.mrb[0].mxu0
        %v6315 = vadd.f32 %v1393, %v6314
        %v6316 = vpop.f32.mrb[0].mxu0
        %v6317 = vpop.f32.mrb[0].mxu0
        %v6318 = vadd.f32 %v1393, %v6317
        %v6319 = vpop.f32.mrb[0].mxu0
        %6320 = vmatprep.mubr.bf16.mxu0 0
        %6321 = vmatmul.mubr.bf16.gmra.mrb[0].mxu0 %v4263
        %v6322 = vpop.f32.mrb[0].mxu0
        %v6323 = vadd.f32 %v1393, %v6322
        %v6324 = vpop.f32.mrb[0].mxu0
        %v6325 = vpop.f32.mrb[0].mxu0
        %v6326 = vadd.f32 %v1393, %v6325
        %v6327 = vpop.f32.mrb[0].mxu0
        %6328 = vmatprep.mubr.bf16.mxu0 0
        %6329 = vmatmul.mubr.bf16.gmra.mrb[0].mxu0 %v4266
        %v6330 = vpop.f32.mrb[0].mxu0
        %v6331 = vadd.f32 %v1393, %v6330
        %v6332 = vpop.f32.mrb[0].mxu0
        %v6333 = vpop.f32.mrb[0].mxu0
        %v6334 = vadd.f32 %v1393, %v6333
        %v6335 = vpop.f32.mrb[0].mxu0
        %6336 = vmatprep.mubr.bf16.mxu0 0
        %6337 = vmatmul.mubr.bf16.gmra.mrb[0].mxu0 %v4269
        %v6338 = vpop.f32.mrb[0].mxu0
        %v6339 = vadd.f32 %v1393, %v6338
        %v6340 = vpop.f32.mrb[0].mxu0
        %v6341 = vpop.f32.mrb[0].mxu0
        %v6342 = vadd.f32 %v1393, %v6341
        %v6343 = vpop.f32.mrb[0].mxu0
        %6344 = vmatprep.mubr.bf16.mxu0 0
        %6345 = vmatmul.mubr.bf16.gmra.mrb[0].mxu0 %v4272
        %v6346 = vpop.f32.mrb[0].mxu0
        %v6347 = vadd.f32 %v1393, %v6346
        %v6348 = vpop.f32.mrb[0].mxu0
        %v6349 = vpop.f32.mrb[0].mxu0
        %v6350 = vadd.f32 %v1393, %v6349
        %v6351 = vpop.f32.mrb[0].mxu0
        %6352 = vmatprep.mubr.bf16.mxu0 0
        %6353 = vmatmul.mubr.bf16.gmra.mrb[0].mxu0 %v4275
        %v6354 = vpop.f32.mrb[0].mxu0
        %v6355 = vadd.f32 %v1393, %v6354
        %v6356 = vpop.f32.mrb[0].mxu0
        %v6357 = vpop.f32.mrb[0].mxu0
        %v6358 = vadd.f32 %v1393, %v6357
        %v6359 = vpop.f32.mrb[0].mxu0
        %6360 = vmatprep.mubr.bf16.mxu0 0
        %6361 = vmatmul.mubr.bf16.gmra.mrb[0].mxu0 %v4278
        %v6362 = vpop.f32.mrb[0].mxu0
        %v6363 = vadd.f32 %v1393, %v6362
        %v6364 = vpop.f32.mrb[0].mxu0
        %v6365 = vpop.f32.mrb[0].mxu0
        %v6366 = vadd.f32 %v1393, %v6365
        %v6367 = vpop.f32.mrb[0].mxu0
        %6368 = vmatprep.mubr.bf16.mxu0 0
        %6369 = vmatmul.mubr.bf16.gmra.mrb[0].mxu0 %v4281
        %v6370 = vpop.f32.mrb[0].mxu0
        %v6371 = vadd.f32 %v1393, %v6370
        %v6372 = vpop.f32.mrb[0].mxu0
        %v6373 = vpop.f32.mrb[0].mxu0
        %v6374 = vadd.f32 %v1393, %v6373
        %v6375 = vpop.f32.mrb[0].mxu0
        %6376 = vmatprep.mubr.bf16.mxu0 0
        %6377 = vmatmul.mubr.bf16.gmra.mrb[0].mxu0 %v4284
        %v6378 = vpop.f32.mrb[0].mxu0
        %v6379 = vadd.f32 %v1393, %v6378
        %v6380 = vpop.f32.mrb[0].mxu0
        %v6381 = vpop.f32.mrb[0].mxu0
        %v6382 = vadd.f32 %v1393, %v6381
        %v6383 = vpop.f32.mrb[0].mxu0
        %6384 = vmatprep.mubr.bf16.mxu0 0
        %6385 = vmatmul.mubr.bf16.gmra.mrb[0].mxu0 %v4287
        %v6386 = vpop.f32.mrb[0].mxu0
        %v6387 = vadd.f32 %v1393, %v6386
        %v6388 = vpop.f32.mrb[0].mxu0
        %v6389 = vpop.f32.mrb[0].mxu0
        %v6390 = vadd.f32 %v1393, %v6389
        %v6391 = vpop.f32.mrb[0].mxu0
        %6392 = vmatprep.mubr.bf16.mxu0 0
        %6393 = vmatmul.mubr.bf16.gmra.mrb[0].mxu0 %v4290
        %v6394 = vpop.f32.mrb[0].mxu0
        %v6395 = vadd.f32 %v1393, %v6394
        %v6396 = vpop.f32.mrb[0].mxu0
        %v6397 = vpop.f32.mrb[0].mxu0
        %v6398 = vadd.f32 %v1393, %v6397
        %v6399 = vpop.f32.mrb[0].mxu0
        %6400 = vmatprep.mubr.bf16.mxu0 0
        %6401 = vmatmul.mubr.bf16.gmra.mrb[0].mxu0 %v4293
        %v6402 = vpop.f32.mrb[0].mxu0
        %v6403 = vadd.f32 %v1393, %v6402
        %v6404 = vpop.f32.mrb[0].mxu0
        %v6405 = vpop.f32.mrb[0].mxu0
        %v6406 = vadd.f32 %v1393, %v6405
        %v6407 = vpop.f32.mrb[0].mxu0
        %6408 = vmatprep.mubr.bf16.mxu0 0
        %6409 = vmatmul.mubr.bf16.gmra.mrb[0].mxu0 %v4296
        %v6410 = vpop.f32.mrb[0].mxu0
        %v6411 = vadd.f32 %v1393, %v6410
        %v6412 = vpop.f32.mrb[0].mxu0
        %v6413 = vpop.f32.mrb[0].mxu0
        %v6414 = vadd.f32 %v1393, %v6413
        %v6415 = vpop.f32.mrb[0].mxu0
        %6416 = vmatprep.mubr.bf16.mxu0 0
        %6417 = vmatmul.mubr.bf16.gmra.mrb[0].mxu0 %v4299
        %v6418 = vpop.f32.mrb[0].mxu0
        %v6419 = vadd.f32 %v1393, %v6418
        %v6420 = vpop.f32.mrb[0].mxu0
        %v6421 = vpop.f32.mrb[0].mxu0
        %v6422 = vadd.f32 %v1393, %v6421
        %v6423 = vpop.f32.mrb[0].mxu0
        %6424 = vmatprep.mubr.bf16.mxu0 0
        %6425 = vmatmul.mubr.bf16.gmra.mrb[0].mxu0 %v4302
        %v6426 = vpop.f32.mrb[0].mxu0
        %v6427 = vadd.f32 %v1393, %v6426
        %v6428 = vpop.f32.mrb[0].mxu0
        %v6429 = vpop.f32.mrb[0].mxu0
        %v6430 = vadd.f32 %v1393, %v6429
        %v6431 = vpop.f32.mrb[0].mxu0
        %6432 = vmatprep.mubr.bf16.mxu0 0
        %6433 = vmatmul.mubr.bf16.gmra.mrb[0].mxu0 %v4305
        %v6434 = vpop.f32.mrb[0].mxu0
        %v6435 = vadd.f32 %v1393, %v6434
        %v6436 = vpop.f32.mrb[0].mxu0
        %v6437 = vpop.f32.mrb[0].mxu0
        %v6438 = vadd.f32 %v1393, %v6437
        %v6439 = vpop.f32.mrb[0].mxu0
        %6440 = vmatprep.mubr.bf16.mxu0 0
        %6441 = vmatmul.mubr.bf16.gmra.mrb[0].mxu0 %v4308
        %v6442 = vpop.f32.mrb[0].mxu0
        %v6443 = vadd.f32 %v1393, %v6442
        %v6444 = vpop.f32.mrb[0].mxu0
        %v6445 = vpop.f32.mrb[0].mxu0
        %v6446 = vadd.f32 %v1393, %v6445
        %v6447 = vpop.f32.mrb[0].mxu0
        %6448 = vmatprep.mubr.bf16.mxu0 0
        %6449 = vmatmul.mubr.bf16.gmra.mrb[0].mxu0 %v4311
        %v6450 = vpop.f32.mrb[0].mxu0
        %v6451 = vadd.f32 %v1393, %v6450
        %v6452 = vpop.f32.mrb[0].mxu0
        %v6453 = vpop.f32.mrb[0].mxu0
        %v6454 = vadd.f32 %v1393, %v6453
        %v6455 = vpop.f32.mrb[0].mxu0
        %6456 = vmatprep.mubr.bf16.mxu0 0
        %6457 = vmatmul.mubr.bf16.gmra.mrb[0].mxu0 %v4314
        %v6458 = vpop.f32.mrb[0].mxu0
        %v6459 = vadd.f32 %v1393, %v6458
        %v6460 = vpop.f32.mrb[0].mxu0
        %v6461 = vpop.f32.mrb[0].mxu0
        %v6462 = vadd.f32 %v1393, %v6461
        %v6463 = vpop.f32.mrb[0].mxu0
        %6464 = vmatprep.mubr.bf16.mxu0 0
        %6465 = vmatmul.mubr.bf16.gmra.mrb[0].mxu0 %v4317
        %v6466 = vpop.f32.mrb[0].mxu0
        %v6467 = vadd.f32 %v1393, %v6466
        %v6468 = vpop.f32.mrb[0].mxu0
        %v6469 = vpop.f32.mrb[0].mxu0
        %v6470 = vadd.f32 %v1393, %v6469
        %v6471 = vpop.f32.mrb[0].mxu0
        %6472 = vmatprep.mubr.bf16.mxu0 0
        %6473 = vmatmul.mubr.bf16.gmra.mrb[0].mxu0 %v4320
        %v6474 = vpop.f32.mrb[0].mxu0
        %v6475 = vadd.f32 %v1393, %v6474
        %v6476 = vpop.f32.mrb[0].mxu0
        %v6477 = vpop.f32.mrb[0].mxu0
        %v6478 = vadd.f32 %v1393, %v6477
        %v6479 = vpop.f32.mrb[0].mxu0
        %6480 = vmatprep.mubr.bf16.mxu0 0
        %6481 = vmatmul.mubr.bf16.gmra.mrb[0].mxu0 %v4323
        %v6482 = vpop.f32.mrb[0].mxu0
        %v6483 = vadd.f32 %v1393, %v6482
        %v6484 = vpop.f32.mrb[0].mxu0
        %v6485 = vpop.f32.mrb[0].mxu0
        %v6486 = vadd.f32 %v1393, %v6485
        %v6487 = vpop.f32.mrb[0].mxu0
        %6488 = vmatprep.mubr.bf16.mxu0 0
        %6489 = vmatmul.mubr.bf16.gmra.mrb[0].mxu0 %v4326
        %v6490 = vpop.f32.mrb[0].mxu0
        %v6491 = vadd.f32 %v1393, %v6490
        %v6492 = vpop.f32.mrb[0].mxu0
        %v6493 = vpop.f32.mrb[0].mxu0
        %v6494 = vadd.f32 %v1393, %v6493
        %v6495 = vpop.f32.mrb[0].mxu0
        %6496 = vmatprep.mubr.bf16.mxu0 0
        %6497 = vmatmul.mubr.bf16.gmra.mrb[0].mxu0 %v4329
        %v6498 = vpop.f32.mrb[0].mxu0
        %v6499 = vadd.f32 %v1393, %v6498
        %v6500 = vpop.f32.mrb[0].mxu0
        %v6501 = vpop.f32.mrb[0].mxu0
        %v6502 = vadd.f32 %v1393, %v6501
        %v6503 = vpop.f32.mrb[0].mxu0
        %6504 = vmatprep.mubr.bf16.mxu0 0
        %6505 = vmatmul.mubr.bf16.gmra.mrb[0].mxu0 %v4332
        %v6506 = vpop.f32.mrb[0].mxu0
        %v6507 = vadd.f32 %v1393, %v6506
        %v6508 = vpop.f32.mrb[0].mxu0
        %v6509 = vpop.f32.mrb[0].mxu0
        %v6510 = vadd.f32 %v1393, %v6509
        %v6511 = vpop.f32.mrb[0].mxu0
        %6512 = vmatprep.mubr.bf16.mxu0 0
        %6513 = vmatmul.mubr.bf16.gmra.mrb[0].mxu0 %v4335
        %v6514 = vpop.f32.mrb[0].mxu0
        %v6515 = vadd.f32 %v1393, %v6514
        %v6516 = vpop.f32.mrb[0].mxu0
        %v6517 = vpop.f32.mrb[0].mxu0
        %v6518 = vadd.f32 %v1393, %v6517
        %v6519 = vpop.f32.mrb[0].mxu0
        %6520 = vmatprep.mubr.bf16.mxu0 0
        %6521 = vmatmul.mubr.bf16.gmra.mrb[0].mxu0 %v4338
        %v6522 = vpop.f32.mrb[0].mxu0
        %v6523 = vadd.f32 %v1393, %v6522
        %v6524 = vpop.f32.mrb[0].mxu0
        %v6525 = vpop.f32.mrb[0].mxu0
        %v6526 = vadd.f32 %v1393, %v6525
        %v6527 = vpop.f32.mrb[0].mxu0
        %6528 = vmatprep.mubr.bf16.mxu0 0
        %6529 = vmatmul.mubr.bf16.gmra.mrb[0].mxu0 %v4341
        %v6530 = vpop.f32.mrb[0].mxu0
        %v6531 = vadd.f32 %v1393, %v6530
        %v6532 = vpop.f32.mrb[0].mxu0
        %v6533 = vpop.f32.mrb[0].mxu0
        %v6534 = vadd.f32 %v1393, %v6533
        %v6535 = vpop.f32.mrb[0].mxu0
        %6536 = vmatprep.mubr.bf16.mxu0 0
        %6537 = vmatmul.mubr.bf16.gmra.mrb[0].mxu0 %v4344
        %v6538 = vpop.f32.mrb[0].mxu0
        %v6539 = vadd.f32 %v1393, %v6538
        %v6540 = vpop.f32.mrb[0].mxu0
        %v6541 = vpop.f32.mrb[0].mxu0
        %v6542 = vadd.f32 %v1393, %v6541
        %v6543 = vpop.f32.mrb[0].mxu0
        %6544 = vmatprep.mubr.bf16.mxu0 0
        %6545 = vmatmul.mubr.bf16.gmra.mrb[0].mxu0 %v4347
        %v6546 = vpop.f32.mrb[0].mxu0
        %v6547 = vadd.f32 %v1393, %v6546
        %v6548 = vpop.f32.mrb[0].mxu0
        %v6549 = vpop.f32.mrb[0].mxu0
        %v6550 = vadd.f32 %v1393, %v6549
        %v6551 = vpop.f32.mrb[0].mxu0
        %6552 = vmatprep.mubr.bf16.mxu0 0
        %6553 = vmatmul.mubr.bf16.gmra.mrb[0].mxu0 %v4350
        %v6554 = vpop.f32.mrb[0].mxu0
        %v6555 = vadd.f32 %v1393, %v6554
        %v6556 = vpop.f32.mrb[0].mxu0
        %v6557 = vpop.f32.mrb[0].mxu0
        %v6558 = vadd.f32 %v1393, %v6557
        %v6559 = vpop.f32.mrb[0].mxu0
        %6560 = vmatprep.mubr.bf16.mxu0 0
        %6561 = vmatmul.mubr.bf16.gmra.mrb[0].mxu0 %v4353
        %v6562 = vpop.f32.mrb[0].mxu0
        %v6563 = vadd.f32 %v1393, %v6562
        %v6564 = vpop.f32.mrb[0].mxu0
        %v6565 = vpop.f32.mrb[0].mxu0
        %v6566 = vadd.f32 %v1393, %v6565
        %v6567 = vpop.f32.mrb[0].mxu0
        %6568 = vmatprep.mubr.bf16.mxu0 0
        %6569 = vmatmul.mubr.bf16.gmra.mrb[0].mxu0 %v4356
        %v6570 = vpop.f32.mrb[0].mxu0
        %v6571 = vadd.f32 %v1393, %v6570
        %v6572 = vpop.f32.mrb[0].mxu0
        %v6573 = vpop.f32.mrb[0].mxu0
        %v6574 = vadd.f32 %v1393, %v6573
        %v6575 = vpop.f32.mrb[0].mxu0
        %6576 = vmatprep.mubr.bf16.mxu0 0
        %6577 = vmatmul.mubr.bf16.gmra.mrb[0].mxu0 %v4359
        %v6578 = vpop.f32.mrb[0].mxu0
        %v6579 = vadd.f32 %v1393, %v6578
        %v6580 = vpop.f32.mrb[0].mxu0
        %v6581 = vpop.f32.mrb[0].mxu0
        %v6582 = vadd.f32 %v1393, %v6581
        %v6583 = vpop.f32.mrb[0].mxu0
        %6584 = vmatprep.mubr.bf16.mxu0 0
        %6585 = vmatmul.mubr.bf16.gmra.mrb[0].mxu0 %v4362
        %v6586 = vpop.f32.mrb[0].mxu0
        %v6587 = vadd.f32 %v1393, %v6586
        %v6588 = vpop.f32.mrb[0].mxu0
        %v6589 = vpop.f32.mrb[0].mxu0
        %v6590 = vadd.f32 %v1393, %v6589
        %v6591 = vpop.f32.mrb[0].mxu0
        %6592 = vmatprep.mubr.bf16.mxu0 0
        %6593 = vmatmul.mubr.bf16.gmra.mrb[0].mxu0 %v4365
        %v6594 = vpop.f32.mrb[0].mxu0
        %v6595 = vadd.f32 %v1393, %v6594
        %v6596 = vpop.f32.mrb[0].mxu0
        %v6597 = vpop.f32.mrb[0].mxu0
        %v6598 = vadd.f32 %v1393, %v6597
        %v6599 = vpop.f32.mrb[0].mxu0
        %6600 = vmatprep.mubr.bf16.mxu0 0
        %6601 = vmatmul.mubr.bf16.gmra.mrb[0].mxu0 %v4368
        %v6602 = vpop.f32.mrb[0].mxu0
        %v6603 = vadd.f32 %v1393, %v6602
        %v6604 = vpop.f32.mrb[0].mxu0
        %v6605 = vpop.f32.mrb[0].mxu0
        %v6606 = vadd.f32 %v1393, %v6605
        %v6607 = vpop.f32.mrb[0].mxu0
        %6608 = vmatprep.mubr.bf16.mxu0 0
        %6609 = vmatmul.mubr.bf16.gmra.mrb[0].mxu0 %v4371
        %v6610 = vpop.f32.mrb[0].mxu0
        %v6611 = vadd.f32 %v1393, %v6610
        %v6612 = vpop.f32.mrb[0].mxu0
        %v6613 = vpop.f32.mrb[0].mxu0
        %v6614 = vadd.f32 %v1393, %v6613
        %v6615 = vpop.f32.mrb[0].mxu0
        %6616 = vmatprep.mubr.bf16.mxu0 0
        %6617 = vmatmul.mubr.bf16.gmra.mrb[0].mxu0 %v4374
        %v6618 = vpop.f32.mrb[0].mxu0
        %v6619 = vadd.f32 %v1393, %v6618
        %v6620 = vpop.f32.mrb[0].mxu0
        %v6621 = vpop.f32.mrb[0].mxu0
        %v6622 = vadd.f32 %v1393, %v6621
        %v6623 = vpop.f32.mrb[0].mxu0
        %6624 = vmatprep.mubr.bf16.mxu0 0
        %6625 = vmatmul.mubr.bf16.gmra.mrb[0].mxu0 %v4377
        %v6626 = vpop.f32.mrb[0].mxu0
        %v6627 = vadd.f32 %v1393, %v6626
        %v6628 = vpop.f32.mrb[0].mxu0
        %v6629 = vpop.f32.mrb[0].mxu0
        %v6630 = vadd.f32 %v1393, %v6629
        %v6631 = vpop.f32.mrb[0].mxu0
        %6632 = vmatprep.mubr.bf16.mxu0 0
        %6633 = vmatmul.mubr.bf16.gmra.mrb[0].mxu0 %v4380
        %v6634 = vpop.f32.mrb[0].mxu0
        %v6635 = vadd.f32 %v1393, %v6634
        %v6636 = vpop.f32.mrb[0].mxu0
        %v6637 = vpop.f32.mrb[0].mxu0
        %v6638 = vadd.f32 %v1393, %v6637
        %v6639 = vpop.f32.mrb[0].mxu0
        %6640 = vmatprep.mubr.bf16.mxu0 0
        %6641 = vmatmul.mubr.bf16.gmra.mrb[0].mxu0 %v4383
        %v6642 = vpop.f32.mrb[0].mxu0
        %v6643 = vadd.f32 %v1393, %v6642
        %v6644 = vpop.f32.mrb[0].mxu0
        %v6645 = vpop.f32.mrb[0].mxu0
        %v6646 = vadd.f32 %v1393, %v6645
        %v6647 = vpop.f32.mrb[0].mxu0
        %6648 = vmatprep.mubr.bf16.mxu0 0
        %6649 = vmatmul.mubr.bf16.gmra.mrb[0].mxu0 %v4386
        %v6650 = vpop.f32.mrb[0].mxu0
        %v6651 = vadd.f32 %v1393, %v6650
        %v6652 = vpop.f32.mrb[0].mxu0
        %v6653 = vpop.f32.mrb[0].mxu0
        %v6654 = vadd.f32 %v1393, %v6653
        %v6655 = vpop.f32.mrb[0].mxu0
        %6656 = vmatprep.mubr.bf16.mxu0 0
        %6657 = vmatmul.mubr.bf16.gmra.mrb[0].mxu0 %v4389
        %v6658 = vpop.f32.mrb[0].mxu0
        %v6659 = vadd.f32 %v1393, %v6658
        %v6660 = vpop.f32.mrb[0].mxu0
        %v6661 = vpop.f32.mrb[0].mxu0
        %v6662 = vadd.f32 %v1393, %v6661
        %v6663 = vpop.f32.mrb[0].mxu0
        %6664 = vmatprep.mubr.bf16.mxu0 0
        %6665 = vmatmul.mubr.bf16.gmra.mrb[0].mxu0 %v4392
        %v6666 = vpop.f32.mrb[0].mxu0
        %v6667 = vadd.f32 %v1393, %v6666
        %v6668 = vpop.f32.mrb[0].mxu0
        %v6669 = vpop.f32.mrb[0].mxu0
        %v6670 = vadd.f32 %v1393, %v6669
        %v6671 = vpop.f32.mrb[0].mxu0
        %6672 = vmatprep.mubr.bf16.mxu0 0
        %6673 = vmatmul.mubr.bf16.gmra.mrb[0].mxu0 %v4395
        %v6674 = vpop.f32.mrb[0].mxu0
        %v6675 = vadd.f32 %v1393, %v6674
        %v6676 = vpop.f32.mrb[0].mxu0
        %v6677 = vpop.f32.mrb[0].mxu0
        %v6678 = vadd.f32 %v1393, %v6677
        %v6679 = vpop.f32.mrb[0].mxu0
        %6680 = vmatprep.mubr.bf16.mxu0 0
        %6681 = vmatmul.mubr.bf16.gmra.mrb[0].mxu0 %v4398
        %v6682 = vpop.f32.mrb[0].mxu0
        %v6683 = vadd.f32 %v1393, %v6682
        %v6684 = vpop.f32.mrb[0].mxu0
        %v6685 = vpop.f32.mrb[0].mxu0
        %v6686 = vadd.f32 %v1393, %v6685
        %v6687 = vpop.f32.mrb[0].mxu0
        %6688 = vmatprep.mubr.bf16.mxu0 0
        %6689 = vmatmul.mubr.bf16.gmra.mrb[0].mxu0 %v4401
        %v6690 = vpop.f32.mrb[0].mxu0
        %v6691 = vadd.f32 %v1393, %v6690
        %v6692 = vpop.f32.mrb[0].mxu0
        %v6693 = vpop.f32.mrb[0].mxu0
        %v6694 = vadd.f32 %v1393, %v6693
        %v6695 = vpop.f32.mrb[0].mxu0
        %6696 = vmatprep.mubr.bf16.mxu0 0
        %6697 = vmatmul.mubr.bf16.gmra.mrb[0].mxu0 %v4404
        %v6698 = vpop.f32.mrb[0].mxu0
        %v6699 = vadd.f32 %v1393, %v6698
        %v6700 = vpop.f32.mrb[0].mxu0
        %v6701 = vpop.f32.mrb[0].mxu0
        %v6702 = vadd.f32 %v1393, %v6701
        %v6703 = vpop.f32.mrb[0].mxu0
        %6704 = vmatprep.mubr.bf16.mxu0 0
        %6705 = vmatmul.mubr.bf16.gmra.mrb[0].mxu0 %v4407
        %v6706 = vpop.f32.mrb[0].mxu0
        %v6707 = vadd.f32 %v1393, %v6706
        %v6708 = vpop.f32.mrb[0].mxu0
        %v6709 = vpop.f32.mrb[0].mxu0
        %v6710 = vadd.f32 %v1393, %v6709
        %v6711 = vpop.f32.mrb[0].mxu0
        %6712 = vmatprep.mubr.bf16.mxu0 0
        %6713 = vmatmul.mubr.bf16.gmra.mrb[0].mxu0 %v4410
        %v6714 = vpop.f32.mrb[0].mxu0
        %v6715 = vadd.f32 %v1393, %v6714
        %v6716 = vpop.f32.mrb[0].mxu0
        %v6717 = vpop.f32.mrb[0].mxu0
        %v6718 = vadd.f32 %v1393, %v6717
        %v6719 = vpop.f32.mrb[0].mxu0
        %6720 = vmatprep.mubr.bf16.mxu0 0
        %6721 = vmatmul.mubr.bf16.gmra.mrb[0].mxu0 %v4413
        %v6722 = vpop.f32.mrb[0].mxu0
        %v6723 = vadd.f32 %v1393, %v6722
        %v6724 = vpop.f32.mrb[0].mxu0
        %v6725 = vpop.f32.mrb[0].mxu0
        %v6726 = vadd.f32 %v1393, %v6725
        %v6727 = vpop.f32.mrb[0].mxu0
        %6728 = vmatprep.mubr.bf16.mxu0 0
        %6729 = vmatmul.mubr.bf16.gmra.mrb[0].mxu0 %v4416
        %v6730 = vpop.f32.mrb[0].mxu0
        %v6731 = vadd.f32 %v1393, %v6730
        %v6732 = vpop.f32.mrb[0].mxu0
        %v6733 = vpop.f32.mrb[0].mxu0
        %v6734 = vadd.f32 %v1393, %v6733
        %v6735 = vpop.f32.mrb[0].mxu0
        %6736 = vmatprep.mubr.bf16.mxu0 0
        %6737 = vmatmul.mubr.bf16.gmra.mrb[0].mxu0 %v4419
        %v6738 = vpop.f32.mrb[0].mxu0
        %v6739 = vadd.f32 %v1393, %v6738
        %v6740 = vpop.f32.mrb[0].mxu0
        %v6741 = vpop.f32.mrb[0].mxu0
        %v6742 = vadd.f32 %v1393, %v6741
        %v6743 = vpop.f32.mrb[0].mxu0
        %6744 = vmatprep.mubr.bf16.mxu0 0
        %6745 = vmatmul.mubr.bf16.gmra.mrb[0].mxu0 %v4422
        %v6746 = vpop.f32.mrb[0].mxu0
        %v6747 = vadd.f32 %v1393, %v6746
        %v6748 = vpop.f32.mrb[0].mxu0
        %v6749 = vpop.f32.mrb[0].mxu0
        %v6750 = vadd.f32 %v1393, %v6749
        %v6751 = vpop.f32.mrb[0].mxu0
        %6752 = vmatprep.mubr.bf16.mxu0 0
        %6753 = vmatmul.mubr.bf16.gmra.mrb[0].mxu0 %v4425
        %v6754 = vpop.f32.mrb[0].mxu0
        %v6755 = vadd.f32 %v1393, %v6754
        %v6756 = vpop.f32.mrb[0].mxu0
        %v6757 = vpop.f32.mrb[0].mxu0
        %v6758 = vadd.f32 %v1393, %v6757
        %v6759 = vpop.f32.mrb[0].mxu0
        %6760 = vmatprep.mubr.bf16.mxu0 0
        %6761 = vmatmul.mubr.bf16.gmra.mrb[0].mxu0 %v4428
        %v6762 = vpop.f32.mrb[0].mxu0
        %v6763 = vadd.f32 %v1393, %v6762
        %v6764 = vpop.f32.mrb[0].mxu0
        %v6765 = vpop.f32.mrb[0].mxu0
        %v6766 = vadd.f32 %v1393, %v6765
        %v6767 = vpop.f32.mrb[0].mxu0
        %6768 = vmatprep.mubr.bf16.mxu0 0
        %6769 = vmatmul.mubr.bf16.gmra.mrb[0].mxu0 %v4431
        %v6770 = vpop.f32.mrb[0].mxu0
        %v6771 = vadd.f32 %v1393, %v6770
        %v6772 = vpop.f32.mrb[0].mxu0
        %v6773 = vpop.f32.mrb[0].mxu0
        %v6774 = vadd.f32 %v1393, %v6773
        %v6775 = vpop.f32.mrb[0].mxu0
        %6776 = vmatprep.mubr.bf16.mxu0 0
        %6777 = vmatmul.mubr.bf16.gmra.mrb[0].mxu0 %v4434
        %v6778 = vpop.f32.mrb[0].mxu0
        %v6779 = vadd.f32 %v1393, %v6778
        %v6780 = vpop.f32.mrb[0].mxu0
        %v6781 = vpop.f32.mrb[0].mxu0
        %v6782 = vadd.f32 %v1393, %v6781
        %v6783 = vpop.f32.mrb[0].mxu0
        %6784 = vmatprep.mubr.bf16.mxu0 0
        %6785 = vmatmul.mubr.bf16.gmra.mrb[0].mxu0 %v4437
        %v6786 = vpop.f32.mrb[0].mxu0
        %v6787 = vadd.f32 %v1393, %v6786
        %v6788 = vpop.f32.mrb[0].mxu0
        %v6789 = vpop.f32.mrb[0].mxu0
        %v6790 = vadd.f32 %v1393, %v6789
        %v6791 = vpop.f32.mrb[0].mxu0
        %6792 = vmatprep.mubr.bf16.mxu0 0
        %6793 = vmatmul.mubr.bf16.gmra.mrb[0].mxu0 %v4440
        %v6794 = vpop.f32.mrb[0].mxu0
        %v6795 = vadd.f32 %v1393, %v6794
        %v6796 = vpop.f32.mrb[0].mxu0
        %v6797 = vpop.f32.mrb[0].mxu0
        %v6798 = vadd.f32 %v1393, %v6797
        %v6799 = vpop.f32.mrb[0].mxu0
        %6800 = vmatprep.mubr.bf16.mxu0 0
        %6801 = vmatmul.mubr.bf16.gmra.mrb[0].mxu0 %v4443
        %v6802 = vpop.f32.mrb[0].mxu0
        %v6803 = vadd.f32 %v1393, %v6802
        %v6804 = vpop.f32.mrb[0].mxu0
        %v6805 = vpop.f32.mrb[0].mxu0
        %v6806 = vadd.f32 %v1393, %v6805
        %v6807 = vpop.f32.mrb[0].mxu0
        %6808 = vmatprep.mubr.bf16.mxu0 0
        %6809 = vmatmul.mubr.bf16.gmra.mrb[0].mxu0 %v4446
        %v6810 = vpop.f32.mrb[0].mxu0
        %v6811 = vadd.f32 %v1393, %v6810
        %v6812 = vpop.f32.mrb[0].mxu0
        %v6813 = vpop.f32.mrb[0].mxu0
        %v6814 = vadd.f32 %v1393, %v6813
        %v6815 = vpop.f32.mrb[0].mxu0
        %6816 = vmatprep.mubr.bf16.mxu0 0
        %6817 = vmatmul.mubr.bf16.gmra.mrb[0].mxu0 %v4449
        %v6818 = vpop.f32.mrb[0].mxu0
        %v6819 = vadd.f32 %v1393, %v6818
        %v6820 = vpop.f32.mrb[0].mxu0
        %v6821 = vpop.f32.mrb[0].mxu0
        %v6822 = vadd.f32 %v1393, %v6821
        %v6823 = vpop.f32.mrb[0].mxu0
        %6824 = vmatprep.mubr.bf16.mxu0 0
        %6825 = vmatmul.mubr.bf16.gmra.mrb[0].mxu0 %v4452
        %v6826 = vpop.f32.mrb[0].mxu0
        %v6827 = vadd.f32 %v1393, %v6826
        %v6828 = vpop.f32.mrb[0].mxu0
        %v6829 = vpop.f32.mrb[0].mxu0
        %v6830 = vadd.f32 %v1393, %v6829
        %v6831 = vpop.f32.mrb[0].mxu0
        %6832 = vmatprep.mubr.bf16.mxu0 0
        %6833 = vmatmul.mubr.bf16.gmra.mrb[0].mxu0 %v4455
        %v6834 = vpop.f32.mrb[0].mxu0
        %v6835 = vadd.f32 %v1393, %v6834
        %v6836 = vpop.f32.mrb[0].mxu0
        %v6837 = vpop.f32.mrb[0].mxu0
        %v6838 = vadd.f32 %v1393, %v6837
        %v6839 = vpop.f32.mrb[0].mxu0
        %6840 = vmatprep.mubr.bf16.mxu0 0
        %6841 = vmatmul.mubr.bf16.gmra.mrb[0].mxu0 %v4458
        %v6842 = vpop.f32.mrb[0].mxu0
        %v6843 = vadd.f32 %v1393, %v6842
        %v6844 = vpop.f32.mrb[0].mxu0
        %v6845 = vpop.f32.mrb[0].mxu0
        %v6846 = vadd.f32 %v1393, %v6845
        %v6847 = vpop.f32.mrb[0].mxu0
        %6848 = vmatprep.mubr.bf16.mxu0 0
        %6849 = vmatmul.mubr.bf16.gmra.mrb[0].mxu0 %v4461
        %v6850 = vpop.f32.mrb[0].mxu0
        %v6851 = vadd.f32 %v1393, %v6850
        %v6852 = vpop.f32.mrb[0].mxu0
        %v6853 = vpop.f32.mrb[0].mxu0
        %v6854 = vadd.f32 %v1393, %v6853
        %v6855 = vpop.f32.mrb[0].mxu0
        %6856 = vmatprep.mubr.bf16.mxu0 0
        %6857 = vmatmul.mubr.bf16.gmra.mrb[0].mxu0 %v4464
        %v6858 = vpop.f32.mrb[0].mxu0
        %v6859 = vadd.f32 %v1393, %v6858
        %v6860 = vpop.f32.mrb[0].mxu0
        %v6861 = vpop.f32.mrb[0].mxu0
        %v6862 = vadd.f32 %v1393, %v6861
        %v6863 = vpop.f32.mrb[0].mxu0
        %6864 = vmatprep.mubr.bf16.mxu0 0
        %6865 = vmatmul.mubr.bf16.gmra.mrb[0].mxu0 %v4467
        %v6866 = vpop.f32.mrb[0].mxu0
        %v6867 = vadd.f32 %v1393, %v6866
        %v6868 = vpop.f32.mrb[0].mxu0
        %v6869 = vpop.f32.mrb[0].mxu0
        %v6870 = vadd.f32 %v1393, %v6869
        %v6871 = vpop.f32.mrb[0].mxu0
        %6872 = vmatprep.mubr.bf16.mxu0 0
        %6873 = vmatmul.mubr.bf16.gmra.mrb[0].mxu0 %v4470
        %v6874 = vpop.f32.mrb[0].mxu0
        %v6875 = vadd.f32 %v1393, %v6874
        %v6876 = vpop.f32.mrb[0].mxu0
        %v6877 = vpop.f32.mrb[0].mxu0
        %v6878 = vadd.f32 %v1393, %v6877
        %v6879 = vpop.f32.mrb[0].mxu0
        %6880 = vmatprep.mubr.bf16.mxu0 0
        %6881 = vmatmul.mubr.bf16.gmra.mrb[0].mxu0 %v4473
        %v6882 = vpop.f32.mrb[0].mxu0
        %v6883 = vadd.f32 %v1393, %v6882
        %v6884 = vpop.f32.mrb[0].mxu0
        %v6885 = vpop.f32.mrb[0].mxu0
        %v6886 = vadd.f32 %v1393, %v6885
        %v6887 = vpop.f32.mrb[0].mxu0
        %6888 = vmatprep.mubr.bf16.mxu0 0
        %6889 = vmatmul.mubr.bf16.gmra.mrb[0].mxu0 %v4476
        %v6890 = vpop.f32.mrb[0].mxu0
        %v6891 = vadd.f32 %v1393, %v6890
        %v6892 = vpop.f32.mrb[0].mxu0
        %v6893 = vpop.f32.mrb[0].mxu0
        %v6894 = vadd.f32 %v1393, %v6893
        %v6895 = vpop.f32.mrb[0].mxu0
        %6896 = vmatprep.mubr.bf16.mxu0 0
        %6897 = vmatmul.mubr.bf16.gmra.mrb[0].mxu0 %v4479
        %v6898 = vpop.f32.mrb[0].mxu0
        %v6899 = vadd.f32 %v1393, %v6898
        %v6900 = vpop.f32.mrb[0].mxu0
        %v6901 = vpop.f32.mrb[0].mxu0
        %v6902 = vadd.f32 %v1393, %v6901
        %v6903 = vpop.f32.mrb[0].mxu0
        %6904 = vmatprep.mubr.bf16.mxu0 0
        %6905 = vmatmul.mubr.bf16.gmra.mrb[0].mxu0 %v4482
        %v6906 = vpop.f32.mrb[0].mxu0
        %v6907 = vadd.f32 %v1393, %v6906
        %v6908 = vpop.f32.mrb[0].mxu0
        %v6909 = vpop.f32.mrb[0].mxu0
        %v6910 = vadd.f32 %v1393, %v6909
        %v6911 = vpop.f32.mrb[0].mxu0
        %6912 = vmatprep.mubr.bf16.mxu0 0
        %6913 = vmatmul.mubr.bf16.gmra.mrb[0].mxu0 %v4485
        %v6914 = vpop.f32.mrb[0].mxu0
        %v6915 = vadd.f32 %v1393, %v6914
        %v6916 = vpop.f32.mrb[0].mxu0
        %v6917 = vpop.f32.mrb[0].mxu0
        %v6918 = vadd.f32 %v1393, %v6917
        %v6919 = vpop.f32.mrb[0].mxu0
        %6920 = vmatprep.mubr.bf16.mxu0 0
        %6921 = vmatmul.mubr.bf16.gmra.mrb[0].mxu0 %v4488
        %v6922 = vpop.f32.mrb[0].mxu0
        %v6923 = vadd.f32 %v1393, %v6922
        %v6924 = vpop.f32.mrb[0].mxu0
        %v6925 = vpop.f32.mrb[0].mxu0
        %v6926 = vadd.f32 %v1393, %v6925
        %v6927 = vpop.f32.mrb[0].mxu0
        %6928 = vmatprep.mubr.bf16.mxu0 0
        %6929 = vmatmul.mubr.bf16.gmra.mrb[0].mxu0 %v4491
        %v6930 = vpop.f32.mrb[0].mxu0
        %v6931 = vadd.f32 %v1393, %v6930
        %v6932 = vpop.f32.mrb[0].mxu0
        %v6933 = vpop.f32.mrb[0].mxu0
        %v6934 = vadd.f32 %v1393, %v6933
        %v6935 = vpop.f32.mrb[0].mxu0
        %6936 = vmatprep.mubr.bf16.mxu0 0
        %6937 = vmatmul.mubr.bf16.gmra.mrb[0].mxu0 %v4494
        %v6938 = vpop.f32.mrb[0].mxu0
        %v6939 = vadd.f32 %v1393, %v6938
        %v6940 = vpop.f32.mrb[0].mxu0
        %v6941 = vpop.f32.mrb[0].mxu0
        %v6942 = vadd.f32 %v1393, %v6941
        %v6943 = vpop.f32.mrb[0].mxu0
        %6944 = vmatprep.mubr.bf16.mxu0 0
        %6945 = vmatmul.mubr.bf16.gmra.mrb[0].mxu0 %v4497
        %v6946 = vpop.f32.mrb[0].mxu0
        %v6947 = vadd.f32 %v1393, %v6946
        %v6948 = vpop.f32.mrb[0].mxu0
        %v6949 = vpop.f32.mrb[0].mxu0
        %v6950 = vadd.f32 %v1393, %v6949
        %v6951 = vpop.f32.mrb[0].mxu0
        %6952 = vmatprep.mubr.bf16.mxu0 0
        %6953 = vmatmul.mubr.bf16.gmra.mrb[0].mxu0 %v4500
        %v6954 = vpop.f32.mrb[0].mxu0
        %v6955 = vadd.f32 %v1393, %v6954
        %v6956 = vpop.f32.mrb[0].mxu0
        %v6957 = vpop.f32.mrb[0].mxu0
        %v6958 = vadd.f32 %v1393, %v6957
        %v6959 = vpop.f32.mrb[0].mxu0
        %6960 = vmatprep.mubr.bf16.mxu0 0
        %6961 = vmatmul.mubr.bf16.gmra.mrb[0].mxu0 %v4503
        %v6962 = vpop.f32.mrb[0].mxu0
        %v6963 = vadd.f32 %v1393, %v6962
        %v6964 = vpop.f32.mrb[0].mxu0
        %v6965 = vpop.f32.mrb[0].mxu0
        %v6966 = vadd.f32 %v1393, %v6965
        %v6967 = vpop.f32.mrb[0].mxu0
        %6968 = vmatprep.mubr.bf16.mxu0 0
        %6969 = vmatmul.mubr.bf16.gmra.mrb[0].mxu0 %v4506
        %v6970 = vpop.f32.mrb[0].mxu0
        %v6971 = vadd.f32 %v1393, %v6970
        %v6972 = vpop.f32.mrb[0].mxu0
        %v6973 = vpop.f32.mrb[0].mxu0
        %v6974 = vadd.f32 %v1393, %v6973
        %v6975 = vpop.f32.mrb[0].mxu0
        %6976 = vmatprep.mubr.bf16.mxu0 0
        %6977 = vmatmul.mubr.bf16.gmra.mrb[0].mxu0 %v4509
        %v6978 = vpop.f32.mrb[0].mxu0
        %v6979 = vadd.f32 %v1393, %v6978
        %v6980 = vpop.f32.mrb[0].mxu0
        %v6981 = vpop.f32.mrb[0].mxu0
        %v6982 = vadd.f32 %v1393, %v6981
        %v6983 = vpop.f32.mrb[0].mxu0
        %6984 = vmatprep.mubr.bf16.mxu0 0
        %6985 = vmatmul.mubr.bf16.gmra.mrb[0].mxu0 %v4512
        %v6986 = vpop.f32.mrb[0].mxu0
        %v6987 = vadd.f32 %v1393, %v6986
        %v6988 = vpop.f32.mrb[0].mxu0
        %v6989 = vpop.f32.mrb[0].mxu0
        %v6990 = vadd.f32 %v1393, %v6989
        %v6991 = vpop.f32.mrb[0].mxu0
        %6992 = vmatprep.mubr.bf16.mxu0 0
        %6993 = vmatmul.mubr.bf16.gmra.mrb[0].mxu0 %v4515
        %v6994 = vpop.f32.mrb[0].mxu0
        %v6995 = vadd.f32 %v1393, %v6994
        %v6996 = vpop.f32.mrb[0].mxu0
        %v6997 = vpop.f32.mrb[0].mxu0
        %v6998 = vadd.f32 %v1393, %v6997
        %v6999 = vpop.f32.mrb[0].mxu0
        %7000 = vmatprep.mubr.bf16.mxu0 0
        %7001 = vmatmul.mubr.bf16.gmra.mrb[0].mxu0 %v4518
        %v7002 = vpop.f32.mrb[0].mxu0
        %v7003 = vadd.f32 %v1393, %v7002
        %v7004 = vpop.f32.mrb[0].mxu0
        %v7005 = vpop.f32.mrb[0].mxu0
        %v7006 = vadd.f32 %v1393, %v7005
        %v7007 = vpop.f32.mrb[0].mxu0
        %7008 = vmatprep.mubr.bf16.mxu0 0
        %7009 = vmatmul.mubr.bf16.gmra.mrb[0].mxu0 %v4521
        %v7010 = vpop.f32.mrb[0].mxu0
        %v7011 = vadd.f32 %v1393, %v7010
        %v7012 = vpop.f32.mrb[0].mxu0
        %v7013 = vpop.f32.mrb[0].mxu0
        %v7014 = vadd.f32 %v1393, %v7013
        %v7015 = vpop.f32.mrb[0].mxu0
        %7016 = vmatprep.mubr.bf16.mxu0 0
        %7017 = vmatmul.mubr.bf16.gmra.mrb[0].mxu0 %v4524
        %v7018 = vpop.f32.mrb[0].mxu0
        %v7019 = vadd.f32 %v1393, %v7018
        %v7020 = vpop.f32.mrb[0].mxu0
        %v7021 = vpop.f32.mrb[0].mxu0
        %v7022 = vadd.f32 %v1393, %v7021
        %v7023 = vpop.f32.mrb[0].mxu0
        %7024 = vmatprep.mubr.bf16.mxu0 0
        %7025 = vmatmul.mubr.bf16.gmra.mrb[0].mxu0 %v4527
        %v7026 = vpop.f32.mrb[0].mxu0
        %v7027 = vadd.f32 %v1393, %v7026
        %v7028 = vpop.f32.mrb[0].mxu0
        %v7029 = vpop.f32.mrb[0].mxu0
        %v7030 = vadd.f32 %v1393, %v7029
        %v7031 = vpop.f32.mrb[0].mxu0
        %7032 = vmatprep.mubr.bf16.mxu0 0
        %7033 = vmatmul.mubr.bf16.gmra.mrb[0].mxu0 %v4530
        %v7034 = vpop.f32.mrb[0].mxu0
        %v7035 = vadd.f32 %v1393, %v7034
        %v7036 = vpop.f32.mrb[0].mxu0
        %v7037 = vpop.f32.mrb[0].mxu0
        %v7038 = vadd.f32 %v1393, %v7037
        %v7039 = vpop.f32.mrb[0].mxu0
        %7040 = vmatprep.mubr.bf16.mxu0 0
        %7041 = vmatmul.mubr.bf16.gmra.mrb[0].mxu0 %v4533
        %v7042 = vpop.f32.mrb[0].mxu0
        %v7043 = vadd.f32 %v1393, %v7042
        %v7044 = vpop.f32.mrb[0].mxu0
        %v7045 = vpop.f32.mrb[0].mxu0
        %v7046 = vadd.f32 %v1393, %v7045
        %v7047 = vpop.f32.mrb[0].mxu0
        %7048 = vmatprep.mubr.bf16.mxu0 0
        %7049 = vmatmul.mubr.bf16.gmra.mrb[0].mxu0 %v4536
        %v7050 = vpop.f32.mrb[0].mxu0
        %v7051 = vadd.f32 %v1393, %v7050
        %v7052 = vpop.f32.mrb[0].mxu0
        %v7053 = vpop.f32.mrb[0].mxu0
        %v7054 = vadd.f32 %v1393, %v7053
        %v7055 = vpop.f32.mrb[0].mxu0
        %7056 = vmatprep.mubr.bf16.mxu0 0
        %7057 = vmatmul.mubr.bf16.gmra.mrb[0].mxu0 %v4539
        %v7058 = vpop.f32.mrb[0].mxu0
        %v7059 = vadd.f32 %v1393, %v7058
        %v7060 = vpop.f32.mrb[0].mxu0
        %v7061 = vpop.f32.mrb[0].mxu0
        %v7062 = vadd.f32 %v1393, %v7061
        %v7063 = vpop.f32.mrb[0].mxu0
        %7064 = vmatprep.mubr.bf16.mxu0 0
        %7065 = vmatmul.mubr.bf16.gmra.mrb[0].mxu0 %v4542
        %v7066 = vpop.f32.mrb[0].mxu0
        %v7067 = vadd.f32 %v1393, %v7066
        %v7068 = vpop.f32.mrb[0].mxu0
        %v7069 = vpop.f32.mrb[0].mxu0
        %v7070 = vadd.f32 %v1393, %v7069
        %v7071 = vpop.f32.mrb[0].mxu0
        %7072 = vmatprep.mubr.bf16.mxu0 0
        %7073 = vmatmul.mubr.bf16.gmra.mrb[0].mxu0 %v4545
        %v7074 = vpop.f32.mrb[0].mxu0
        %v7075 = vadd.f32 %v1393, %v7074
        %v7076 = vpop.f32.mrb[0].mxu0
        %v7077 = vpop.f32.mrb[0].mxu0
        %v7078 = vadd.f32 %v1393, %v7077
        %v7079 = vpop.f32.mrb[0].mxu0
        %7080 = vmatprep.mubr.bf16.mxu0 0
        %7081 = vmatmul.mubr.bf16.gmra.mrb[0].mxu0 %v4548
        %v7082 = vpop.f32.mrb[0].mxu0
        %v7083 = vadd.f32 %v1393, %v7082
        %v7084 = vpop.f32.mrb[0].mxu0
        %v7085 = vpop.f32.mrb[0].mxu0
        %v7086 = vadd.f32 %v1393, %v7085
        %v7087 = vpop.f32.mrb[0].mxu0
        %7088 = vmatprep.mubr.bf16.mxu0 0
        %7089 = vmatmul.mubr.bf16.gmra.mrb[0].mxu0 %v4551
        %v7090 = vpop.f32.mrb[0].mxu0
        %v7091 = vadd.f32 %v1393, %v7090
        %v7092 = vpop.f32.mrb[0].mxu0
        %v7093 = vpop.f32.mrb[0].mxu0
        %v7094 = vadd.f32 %v1393, %v7093
        %v7095 = vpop.f32.mrb[0].mxu0
        %7096 = vmatprep.mubr.bf16.mxu0 0
        %7097 = vmatmul.mubr.bf16.gmra.mrb[0].mxu0 %v4554
        %v7098 = vpop.f32.mrb[0].mxu0
        %v7099 = vadd.f32 %v1393, %v7098
        %v7100 = vpop.f32.mrb[0].mxu0
        %v7101 = vpop.f32.mrb[0].mxu0
        %v7102 = vadd.f32 %v1393, %v7101
        %v7103 = vpop.f32.mrb[0].mxu0
        %7104 = vmatprep.mubr.bf16.mxu0 0
        %7105 = vmatmul.mubr.bf16.gmra.mrb[0].mxu0 %v4557
        %v7106 = vpop.f32.mrb[0].mxu0
        %v7107 = vadd.f32 %v1393, %v7106
        %v7108 = vpop.f32.mrb[0].mxu0
        %v7109 = vpop.f32.mrb[0].mxu0
        %v7110 = vadd.f32 %v1393, %v7109
        %v7111 = vpop.f32.mrb[0].mxu0
        %7112 = vmatprep.mubr.bf16.mxu0 0
        %7113 = vmatmul.mubr.bf16.gmra.mrb[0].mxu0 %v4560
        %v7114 = vpop.f32.mrb[0].mxu0
        %v7115 = vadd.f32 %v1393, %v7114
        %v7116 = vpop.f32.mrb[0].mxu0
        %v7117 = vpop.f32.mrb[0].mxu0
        %v7118 = vadd.f32 %v1393, %v7117
        %v7119 = vpop.f32.mrb[0].mxu0
        %7120 = vmatprep.mubr.bf16.mxu0 0
        %7121 = vmatmul.mubr.bf16.gmra.mrb[0].mxu0 %v4563
        %v7122 = vpop.f32.mrb[0].mxu0
        %v7123 = vadd.f32 %v1393, %v7122
        %v7124 = vpop.f32.mrb[0].mxu0
        %v7125 = vpop.f32.mrb[0].mxu0
        %v7126 = vadd.f32 %v1393, %v7125
        %v7127 = vpop.f32.mrb[0].mxu0
        %7128 = vmatprep.mubr.bf16.mxu0 0
        %7129 = vmatmul.mubr.bf16.gmra.mrb[0].mxu0 %v4566
        %v7130 = vpop.f32.mrb[0].mxu0
        %v7131 = vadd.f32 %v1393, %v7130
        %v7132 = vpop.f32.mrb[0].mxu0
        %v7133 = vpop.f32.mrb[0].mxu0
        %v7134 = vadd.f32 %v1393, %v7133
        %v7135 = vpop.f32.mrb[0].mxu0
        %7136 = vmatprep.mubr.bf16.mxu0 0
        %7137 = vmatmul.mubr.bf16.gmra.mrb[0].mxu0 %v4569
        %v7138 = vpop.f32.mrb[0].mxu0
        %v7139 = vadd.f32 %v1393, %v7138
        %v7140 = vpop.f32.mrb[0].mxu0
        %v7141 = vpop.f32.mrb[0].mxu0
        %v7142 = vadd.f32 %v1393, %v7141
        %v7143 = vpop.f32.mrb[0].mxu0
        %7144 = vmatprep.mubr.bf16.mxu0 0
        %7145 = vmatmul.mubr.bf16.gmra.mrb[0].mxu0 %v4572
        %v7146 = vpop.f32.mrb[0].mxu0
        %v7147 = vadd.f32 %v1393, %v7146
        %v7148 = vpop.f32.mrb[0].mxu0
        %v7149 = vpop.f32.mrb[0].mxu0
        %v7150 = vadd.f32 %v1393, %v7149
        %v7151 = vpop.f32.mrb[0].mxu0
        %7152 = vmatprep.mubr.bf16.mxu0 0
        %7153 = vmatmul.mubr.bf16.gmra.mrb[0].mxu0 %v4575
        %v7154 = vpop.f32.mrb[0].mxu0
        %v7155 = vadd.f32 %v1393, %v7154
        %v7156 = vpop.f32.mrb[0].mxu0
        %v7157 = vpop.f32.mrb[0].mxu0
        %v7158 = vadd.f32 %v1393, %v7157
        %v7159 = vpop.f32.mrb[0].mxu0
        %7160 = vmatprep.mubr.bf16.mxu0 0
        %7161 = vmatmul.mubr.bf16.gmra.mrb[0].mxu0 %v4578
        %v7162 = vpop.f32.mrb[0].mxu0
        %v7163 = vadd.f32 %v1393, %v7162
        %v7164 = vpop.f32.mrb[0].mxu0
        %v7165 = vpop.f32.mrb[0].mxu0
        %v7166 = vadd.f32 %v1393, %v7165
        %v7167 = vpop.f32.mrb[0].mxu0
        %7168 = vmatprep.mubr.bf16.mxu0 0
        %7169 = vmatmul.mubr.bf16.gmra.mrb[0].mxu0 %v4581
        %v7170 = vpop.f32.mrb[0].mxu0
        %v7171 = vadd.f32 %v1393, %v7170
        %v7172 = vpop.f32.mrb[0].mxu0
        %v7173 = vpop.f32.mrb[0].mxu0
        %v7174 = vadd.f32 %v1393, %v7173
        %v7175 = vpop.f32.mrb[0].mxu0
        %7176 = vmatprep.mubr.bf16.mxu0 0
        %7177 = vmatmul.mubr.bf16.gmra.mrb[0].mxu0 %v4584
        %v7178 = vpop.f32.mrb[0].mxu0
        %v7179 = vadd.f32 %v1393, %v7178
        %v7180 = vpop.f32.mrb[0].mxu0
        %v7181 = vpop.f32.mrb[0].mxu0
        %v7182 = vadd.f32 %v1393, %v7181
        %v7183 = vpop.f32.mrb[0].mxu0
        %7184 = vmatprep.mubr.bf16.mxu0 0
        %7185 = vmatmul.mubr.bf16.gmra.mrb[0].mxu0 %v4587
        %v7186 = vpop.f32.mrb[0].mxu0
        %v7187 = vadd.f32 %v1393, %v7186
        %v7188 = vpop.f32.mrb[0].mxu0
        %v7189 = vpop.f32.mrb[0].mxu0
        %v7190 = vadd.f32 %v1393, %v7189
        %v7191 = vpop.f32.mrb[0].mxu0
        %7192 = vmatprep.mubr.bf16.mxu0 0
        %7193 = vmatmul.mubr.bf16.gmra.mrb[0].mxu0 %v4590
        %v7194 = vpop.f32.mrb[0].mxu0
        %v7195 = vadd.f32 %v1393, %v7194
        %v7196 = vpop.f32.mrb[0].mxu0
        %v7197 = vpop.f32.mrb[0].mxu0
        %v7198 = vadd.f32 %v1393, %v7197
        %v7199 = vpop.f32.mrb[0].mxu0
        %7200 = vmatprep.mubr.bf16.mxu0 0
        %7201 = vmatmul.mubr.bf16.gmra.mrb[0].mxu0 %v4593
        %v7202 = vpop.f32.mrb[0].mxu0
        %v7203 = vadd.f32 %v1393, %v7202
        %v7204 = vpop.f32.mrb[0].mxu0
        %v7205 = vpop.f32.mrb[0].mxu0
        %v7206 = vadd.f32 %v1393, %v7205
        %v7207 = vpop.f32.mrb[0].mxu0
        %7208 = vmatprep.mubr.bf16.mxu0 0
        %7209 = vmatmul.mubr.bf16.gmra.mrb[0].mxu0 %v4596
        %v7210 = vpop.f32.mrb[0].mxu0
        %v7211 = vadd.f32 %v1393, %v7210
        %v7212 = vpop.f32.mrb[0].mxu0
        %v7213 = vpop.f32.mrb[0].mxu0
        %v7214 = vadd.f32 %v1393, %v7213
        %v7215 = vpop.f32.mrb[0].mxu0
        %7216 = vmatprep.mubr.bf16.mxu0 0
        %7217 = vmatmul.mubr.bf16.gmra.mrb[0].mxu0 %v4599
        %v7218 = vpop.f32.mrb[0].mxu0
        %v7219 = vadd.f32 %v1393, %v7218
        %v7220 = vpop.f32.mrb[0].mxu0
        %v7221 = vpop.f32.mrb[0].mxu0
        %v7222 = vadd.f32 %v1393, %v7221
        %v7223 = vpop.f32.mrb[0].mxu0
        %7224 = vmatprep.mubr.bf16.mxu0 0
        %7225 = vmatmul.mubr.bf16.gmra.mrb[0].mxu0 %v4602
        %v7226 = vpop.f32.mrb[0].mxu0
        %v7227 = vadd.f32 %v1393, %v7226
        %v7228 = vpop.f32.mrb[0].mxu0
        %v7229 = vpop.f32.mrb[0].mxu0
        %v7230 = vadd.f32 %v1393, %v7229
        %v7231 = vpop.f32.mrb[0].mxu0
        %7232 = vmatprep.mubr.bf16.mxu0 0
        %7233 = vmatmul.mubr.bf16.gmra.mrb[0].mxu0 %v4605
        %v7234 = vpop.f32.mrb[0].mxu0
        %v7235 = vadd.f32 %v1393, %v7234
        %v7236 = vpop.f32.mrb[0].mxu0
        %v7237 = vpop.f32.mrb[0].mxu0
        %v7238 = vadd.f32 %v1393, %v7237
        %v7239 = vpop.f32.mrb[0].mxu0
        %7240 = vmatprep.mubr.bf16.mxu0 0
        %7241 = vmatmul.mubr.bf16.gmra.mrb[0].mxu0 %v4608
        %v7242 = vpop.f32.mrb[0].mxu0
        %v7243 = vadd.f32 %v1393, %v7242
        %v7244 = vpop.f32.mrb[0].mxu0
        %v7245 = vpop.f32.mrb[0].mxu0
        %v7246 = vadd.f32 %v1393, %v7245
        %v7247 = vpop.f32.mrb[0].mxu0
        %7248 = vmatprep.mubr.bf16.mxu0 0
        %7249 = vmatmul.mubr.bf16.gmra.mrb[0].mxu0 %v4611
        %v7250 = vpop.f32.mrb[0].mxu0
        %v7251 = vadd.f32 %v1393, %v7250
        %v7252 = vpop.f32.mrb[0].mxu0
        %v7253 = vpop.f32.mrb[0].mxu0
        %v7254 = vadd.f32 %v1393, %v7253
        %v7255 = vpop.f32.mrb[0].mxu0
        %7256 = vmatprep.mubr.bf16.mxu0 0
        %7257 = vmatmul.mubr.bf16.gmra.mrb[0].mxu0 %v4614
        %v7258 = vpop.f32.mrb[0].mxu0
        %v7259 = vadd.f32 %v1393, %v7258
        %v7260 = vpop.f32.mrb[0].mxu0
        %v7261 = vpop.f32.mrb[0].mxu0
        %v7262 = vadd.f32 %v1393, %v7261
        %v7263 = vpop.f32.mrb[0].mxu0
        %7264 = vmatprep.mubr.bf16.mxu0 0
        %7265 = vmatmul.mubr.bf16.gmra.mrb[0].mxu0 %v4617
        %v7266 = vpop.f32.mrb[0].mxu0
        %v7267 = vadd.f32 %v1393, %v7266
        %v7268 = vpop.f32.mrb[0].mxu0
        %v7269 = vpop.f32.mrb[0].mxu0
        %v7270 = vadd.f32 %v1393, %v7269
        %v7271 = vpop.f32.mrb[0].mxu0
        %7272 = vmatprep.mubr.bf16.mxu0 0
        %7273 = vmatmul.mubr.bf16.gmra.mrb[0].mxu0 %v4620
        %v7274 = vpop.f32.mrb[0].mxu0
        %v7275 = vadd.f32 %v1393, %v7274
        %v7276 = vpop.f32.mrb[0].mxu0
        %v7277 = vpop.f32.mrb[0].mxu0
        %v7278 = vadd.f32 %v1393, %v7277
        %v7279 = vpop.f32.mrb[0].mxu0
        %7280 = vmatprep.mubr.bf16.mxu0 0
        %7281 = vmatmul.mubr.bf16.gmra.mrb[0].mxu0 %v4623
        %v7282 = vpop.f32.mrb[0].mxu0
        %v7283 = vadd.f32 %v1393, %v7282
        %v7284 = vpop.f32.mrb[0].mxu0
        %v7285 = vpop.f32.mrb[0].mxu0
        %v7286 = vadd.f32 %v1393, %v7285
        %v7287 = vpop.f32.mrb[0].mxu0
        %7288 = vmatprep.mubr.bf16.mxu0 0
        %7289 = vmatmul.mubr.bf16.gmra.mrb[0].mxu0 %v4626
        %v7290 = vpop.f32.mrb[0].mxu0
        %v7291 = vadd.f32 %v1393, %v7290
        %v7292 = vpop.f32.mrb[0].mxu0
        %v7293 = vpop.f32.mrb[0].mxu0
        %v7294 = vadd.f32 %v1393, %v7293
        %v7295 = vpop.f32.mrb[0].mxu0
        %7296 = vmatprep.mubr.bf16.mxu0 0
        %7297 = vmatmul.mubr.bf16.gmra.mrb[0].mxu0 %v4629
        %v7298 = vpop.f32.mrb[0].mxu0
        %v7299 = vadd.f32 %v1393, %v7298
        %v7300 = vpop.f32.mrb[0].mxu0
        %v7301 = vpop.f32.mrb[0].mxu0
        %v7302 = vadd.f32 %v1393, %v7301
        %v7303 = vpop.f32.mrb[0].mxu0
        %7304 = vmatprep.mubr.bf16.mxu0 0
        %7305 = vmatmul.mubr.bf16.gmra.mrb[0].mxu0 %v4632
        %v7306 = vpop.f32.mrb[0].mxu0
        %v7307 = vadd.f32 %v1393, %v7306
        %v7308 = vpop.f32.mrb[0].mxu0
        %v7309 = vpop.f32.mrb[0].mxu0
        %v7310 = vadd.f32 %v1393, %v7309
        %v7311 = vpop.f32.mrb[0].mxu0
        %7312 = vmatprep.mubr.bf16.mxu0 0
        %7313 = vmatmul.mubr.bf16.gmra.mrb[0].mxu0 %v4635
        %v7314 = vpop.f32.mrb[0].mxu0
        %v7315 = vadd.f32 %v1393, %v7314
        %v7316 = vpop.f32.mrb[0].mxu0
        %v7317 = vpop.f32.mrb[0].mxu0
        %v7318 = vadd.f32 %v1393, %v7317
        %v7319 = vpop.f32.mrb[0].mxu0
        %7320 = vmatprep.mubr.bf16.mxu0 0
        %7321 = vmatmul.mubr.bf16.gmra.mrb[0].mxu0 %v4638
        %v7322 = vpop.f32.mrb[0].mxu0
        %v7323 = vadd.f32 %v1393, %v7322
        %v7324 = vpop.f32.mrb[0].mxu0
        %v7325 = vpop.f32.mrb[0].mxu0
        %v7326 = vadd.f32 %v1393, %v7325
        %v7327 = vpop.f32.mrb[0].mxu0
        %7328 = vmatprep.mubr.bf16.mxu0 0
        %7329 = vmatmul.mubr.bf16.gmra.mrb[0].mxu0 %v4641
        %v7330 = vpop.f32.mrb[0].mxu0
        %v7331 = vadd.f32 %v1393, %v7330
        %v7332 = vpop.f32.mrb[0].mxu0
        %v7333 = vpop.f32.mrb[0].mxu0
        %v7334 = vadd.f32 %v1393, %v7333
        %v7335 = vpop.f32.mrb[0].mxu0
        %7336 = vmatprep.mubr.bf16.mxu0 0
        %7337 = vmatmul.mubr.bf16.gmra.mrb[0].mxu0 %v4644
        %v7338 = vpop.f32.mrb[0].mxu0
        %v7339 = vadd.f32 %v1393, %v7338
        %v7340 = vpop.f32.mrb[0].mxu0
        %v7341 = vpop.f32.mrb[0].mxu0
        %v7342 = vadd.f32 %v1393, %v7341
        %v7343 = vpop.f32.mrb[0].mxu0
        %7344 = vmatprep.mubr.bf16.mxu0 0
        %7345 = vmatmul.mubr.bf16.gmra.mrb[0].mxu0 %v4647
        %v7346 = vpop.f32.mrb[0].mxu0
        %v7347 = vadd.f32 %v1393, %v7346
        %v7348 = vpop.f32.mrb[0].mxu0
        %v7349 = vpop.f32.mrb[0].mxu0
        %v7350 = vadd.f32 %v1393, %v7349
        %v7351 = vpop.f32.mrb[0].mxu0
        %7352 = vmatprep.mubr.bf16.mxu0 0
        %7353 = vmatmul.mubr.bf16.gmra.mrb[0].mxu0 %v4650
        %v7354 = vpop.f32.mrb[0].mxu0
        %v7355 = vadd.f32 %v1393, %v7354
        %v7356 = vpop.f32.mrb[0].mxu0
        %v7357 = vpop.f32.mrb[0].mxu0
        %v7358 = vadd.f32 %v1393, %v7357
        %v7359 = vpop.f32.mrb[0].mxu0
        %7360 = vmatprep.mubr.bf16.mxu0 0
        %7361 = vmatmul.mubr.bf16.gmra.mrb[0].mxu0 %v4653
        %v7362 = vpop.f32.mrb[0].mxu0
        %v7363 = vadd.f32 %v1393, %v7362
        %v7364 = vpop.f32.mrb[0].mxu0
        %v7365 = vpop.f32.mrb[0].mxu0
        %v7366 = vadd.f32 %v1393, %v7365
        %v7367 = vpop.f32.mrb[0].mxu0
        %7368 = vmatprep.mubr.bf16.mxu0 0
        %7369 = vmatmul.mubr.bf16.gmra.mrb[0].mxu0 %v4656
        %v7370 = vpop.f32.mrb[0].mxu0
        %v7371 = vadd.f32 %v1393, %v7370
        %v7372 = vpop.f32.mrb[0].mxu0
        %v7373 = vpop.f32.mrb[0].mxu0
        %v7374 = vadd.f32 %v1393, %v7373
        %v7375 = vpop.f32.mrb[0].mxu0
        %7376 = vmatprep.mubr.bf16.mxu0 0
        %7377 = vmatmul.mubr.bf16.gmra.mrb[0].mxu0 %v4659
        %v7378 = vpop.f32.mrb[0].mxu0
        %v7379 = vadd.f32 %v1393, %v7378
        %v7380 = vpop.f32.mrb[0].mxu0
        %v7381 = vpop.f32.mrb[0].mxu0
        %v7382 = vadd.f32 %v1393, %v7381
        %v7383 = vpop.f32.mrb[0].mxu0
        %7384 = vmatprep.mubr.bf16.mxu0 0
        %7385 = vmatmul.mubr.bf16.gmra.mrb[0].mxu0 %v4662
        %v7386 = vpop.f32.mrb[0].mxu0
        %v7387 = vadd.f32 %v1393, %v7386
        %v7388 = vpop.f32.mrb[0].mxu0
        %v7389 = vpop.f32.mrb[0].mxu0
        %v7390 = vadd.f32 %v1393, %v7389
        %v7391 = vpop.f32.mrb[0].mxu0
        %7392 = vmatprep.mubr.bf16.mxu0 0
        %7393 = vmatmul.mubr.bf16.gmra.mrb[0].mxu0 %v4665
        %v7394 = vpop.f32.mrb[0].mxu0
        %v7395 = vadd.f32 %v1393, %v7394
        %v7396 = vpop.f32.mrb[0].mxu0
        %v7397 = vpop.f32.mrb[0].mxu0
        %v7398 = vadd.f32 %v1393, %v7397
        %v7399 = vpop.f32.mrb[0].mxu0
        %7400 = vmatprep.mubr.bf16.mxu0 0
        %7401 = vmatmul.mubr.bf16.gmra.mrb[0].mxu0 %v4668
        %v7402 = vpop.f32.mrb[0].mxu0
        %v7403 = vadd.f32 %v1393, %v7402
        %v7404 = vpop.f32.mrb[0].mxu0
        %v7405 = vpop.f32.mrb[0].mxu0
        %v7406 = vadd.f32 %v1393, %v7405
        %v7407 = vpop.f32.mrb[0].mxu0
        %7408 = vmatprep.mubr.bf16.mxu0 0
        %7409 = vmatmul.mubr.bf16.gmra.mrb[0].mxu0 %v4671
        %v7410 = vpop.f32.mrb[0].mxu0
        %v7411 = vadd.f32 %v1393, %v7410
        %v7412 = vpop.f32.mrb[0].mxu0
        %v7413 = vpop.f32.mrb[0].mxu0
        %v7414 = vadd.f32 %v1393, %v7413
        %v7415 = vpop.f32.mrb[0].mxu0
        %7416 = vmatprep.mubr.bf16.mxu0 0
        %7417 = vmatmul.mubr.bf16.gmra.mrb[0].mxu0 %v4674
        %v7418 = vpop.f32.mrb[0].mxu0
        %v7419 = vadd.f32 %v1393, %v7418
        %v7420 = vpop.f32.mrb[0].mxu0
        %v7421 = vpop.f32.mrb[0].mxu0
        %v7422 = vadd.f32 %v1393, %v7421
        %v7423 = vpop.f32.mrb[0].mxu0
        %7424 = vmatprep.mubr.bf16.mxu0 0
        %7425 = vmatmul.mubr.bf16.gmra.mrb[0].mxu0 %v4677
        %v7426 = vpop.f32.mrb[0].mxu0
        %v7427 = vadd.f32 %v1393, %v7426
        %v7428 = vpop.f32.mrb[0].mxu0
        %v7429 = vpop.f32.mrb[0].mxu0
        %v7430 = vadd.f32 %v1393, %v7429
        %v7431 = vpop.f32.mrb[0].mxu0
        %7432 = vmatprep.mubr.bf16.mxu0 0
        %7433 = vmatmul.mubr.bf16.gmra.mrb[0].mxu0 %v4680
        %v7434 = vpop.f32.mrb[0].mxu0
        %v7435 = vadd.f32 %v1393, %v7434
        %v7436 = vpop.f32.mrb[0].mxu0
        %v7437 = vpop.f32.mrb[0].mxu0
        %v7438 = vadd.f32 %v1393, %v7437
        %v7439 = vpop.f32.mrb[0].mxu0
        %7440 = vmatprep.mubr.bf16.mxu0 0
        %7441 = vmatmul.mubr.bf16.gmra.mrb[0].mxu0 %v4683
        %v7442 = vpop.f32.mrb[0].mxu0
        %v7443 = vadd.f32 %v1393, %v7442
        %v7444 = vpop.f32.mrb[0].mxu0
        %v7445 = vpop.f32.mrb[0].mxu0
        %v7446 = vadd.f32 %v1393, %v7445
        %v7447 = vpop.f32.mrb[0].mxu0
        %7448 = vmatprep.mubr.bf16.mxu0 0
        %7449 = vmatmul.mubr.bf16.gmra.mrb[0].mxu0 %v4686
        %v7450 = vpop.f32.mrb[0].mxu0
        %v7451 = vadd.f32 %v1393, %v7450
        %v7452 = vpop.f32.mrb[0].mxu0
        %v7453 = vpop.f32.mrb[0].mxu0
        %v7454 = vadd.f32 %v1393, %v7453
        %v7455 = vpop.f32.mrb[0].mxu0
        %7456 = vmatprep.mubr.bf16.mxu0 0
        %7457 = vmatmul.mubr.bf16.gmra.mrb[0].mxu0 %v4689
        %v7458 = vpop.f32.mrb[0].mxu0
        %v7459 = vadd.f32 %v1393, %v7458
        %v7460 = vpop.f32.mrb[0].mxu0
        %v7461 = vpop.f32.mrb[0].mxu0
        %v7462 = vadd.f32 %v1393, %v7461
        %v7463 = vpop.f32.mrb[0].mxu0
        %7464 = vmatprep.mubr.bf16.mxu0 0
        %7465 = vmatmul.mubr.bf16.gmra.mrb[0].mxu0 %v4692
        %v7466 = vpop.f32.mrb[0].mxu0
        %v7467 = vadd.f32 %v1393, %v7466
        %v7468 = vpop.f32.mrb[0].mxu0
        %v7469 = vpop.f32.mrb[0].mxu0
        %v7470 = vadd.f32 %v1393, %v7469
        %v7471 = vpop.f32.mrb[0].mxu0
        %7472 = vmatprep.mubr.bf16.mxu0 0
        %7473 = vmatmul.mubr.bf16.gmra.mrb[0].mxu0 %v4695
        %v7474 = vpop.f32.mrb[0].mxu0
        %v7475 = vadd.f32 %v1393, %v7474
        %v7476 = vpop.f32.mrb[0].mxu0
        %v7477 = vpop.f32.mrb[0].mxu0
        %v7478 = vadd.f32 %v1393, %v7477
        %v7479 = vpop.f32.mrb[0].mxu0
        %7480 = vmatprep.mubr.bf16.mxu0 0
        %7481 = vmatmul.mubr.bf16.gmra.mrb[0].mxu0 %v4698
        %v7482 = vpop.f32.mrb[0].mxu0
        %v7483 = vadd.f32 %v1393, %v7482
        %v7484 = vpop.f32.mrb[0].mxu0
        %v7485 = vpop.f32.mrb[0].mxu0
        %v7486 = vadd.f32 %v1393, %v7485
        %v7487 = vpop.f32.mrb[0].mxu0
        %7488 = vmatprep.mubr.bf16.mxu0 0
        %7489 = vmatmul.mubr.bf16.gmra.mrb[0].mxu0 %v4701
        %v7490 = vpop.f32.mrb[0].mxu0
        %v7491 = vadd.f32 %v1393, %v7490
        %v7492 = vpop.f32.mrb[0].mxu0
        %v7493 = vpop.f32.mrb[0].mxu0
        %v7494 = vadd.f32 %v1393, %v7493
        %v7495 = vpop.f32.mrb[0].mxu0
        %7496 = vmatprep.mubr.bf16.mxu0 0
        %7497 = vmatmul.mubr.bf16.gmra.mrb[0].mxu0 %v4704
        %v7498 = vpop.f32.mrb[0].mxu0
        %v7499 = vadd.f32 %v1393, %v7498
        %v7500 = vpop.f32.mrb[0].mxu0
        %v7501 = vpop.f32.mrb[0].mxu0
        %v7502 = vadd.f32 %v1393, %v7501
        %v7503 = vpop.f32.mrb[0].mxu0
        %7504 = vmatprep.mubr.bf16.mxu0 0
        %7505 = vmatmul.mubr.bf16.gmra.mrb[0].mxu0 %v4707
        %v7506 = vpop.f32.mrb[0].mxu0
        %v7507 = vadd.f32 %v1393, %v7506
        %v7508 = vpop.f32.mrb[0].mxu0
        %v7509 = vpop.f32.mrb[0].mxu0
        %v7510 = vadd.f32 %v1393, %v7509
        %v7511 = vpop.f32.mrb[0].mxu0
        %7512 = vmatprep.mubr.bf16.mxu0 0
        %7513 = vmatmul.mubr.bf16.gmra.mrb[0].mxu0 %v4710
        %v7514 = vpop.f32.mrb[0].mxu0
        %v7515 = vadd.f32 %v1393, %v7514
        %v7516 = vpop.f32.mrb[0].mxu0
        %v7517 = vpop.f32.mrb[0].mxu0
        %v7518 = vadd.f32 %v1393, %v7517
        %v7519 = vpop.f32.mrb[0].mxu0
        %7520 = vmatprep.mubr.bf16.mxu0 0
        %7521 = vmatmul.mubr.bf16.gmra.mrb[0].mxu0 %v4713
        %v7522 = vpop.f32.mrb[0].mxu0
        %v7523 = vadd.f32 %v1393, %v7522
        %v7524 = vpop.f32.mrb[0].mxu0
        %v7525 = vpop.f32.mrb[0].mxu0
        %v7526 = vadd.f32 %v1393, %v7525
        %v7527 = vpop.f32.mrb[0].mxu0
        %7528 = vmatprep.mubr.bf16.mxu0 0
        %7529 = vmatmul.mubr.bf16.gmra.mrb[0].mxu0 %v4716
        %v7530 = vpop.f32.mrb[0].mxu0
        %v7531 = vadd.f32 %v1393, %v7530
        %v7532 = vpop.f32.mrb[0].mxu0
        %v7533 = vpop.f32.mrb[0].mxu0
        %v7534 = vadd.f32 %v1393, %v7533
        %v7535 = vpop.f32.mrb[0].mxu0
        %7536 = vmatprep.mubr.bf16.mxu0 0
        %7537 = vmatmul.mubr.bf16.gmra.mrb[0].mxu0 %v4719
        %v7538 = vpop.f32.mrb[0].mxu0
        %v7539 = vadd.f32 %v1393, %v7538
        %v7540 = vpop.f32.mrb[0].mxu0
        %v7541 = vpop.f32.mrb[0].mxu0
        %v7542 = vadd.f32 %v1393, %v7541
        %v7543 = vpop.f32.mrb[0].mxu0
        %7544 = vmatprep.mubr.bf16.mxu0 0
        %7545 = vmatmul.mubr.bf16.gmra.mrb[0].mxu0 %v4722
        %v7546 = vpop.f32.mrb[0].mxu0
        %v7547 = vadd.f32 %v1393, %v7546
        %v7548 = vpop.f32.mrb[0].mxu0
        %v7549 = vpop.f32.mrb[0].mxu0
        %v7550 = vadd.f32 %v1393, %v7549
        %v7551 = vpop.f32.mrb[0].mxu0
        %7552 = vmatprep.mubr.bf16.mxu0 0
        %7553 = vmatmul.mubr.bf16.gmra.mrb[0].mxu0 %v4725
        %v7554 = vpop.f32.mrb[0].mxu0
        %v7555 = vadd.f32 %v1393, %v7554
        %v7556 = vpop.f32.mrb[0].mxu0
        %v7557 = vpop.f32.mrb[0].mxu0
        %v7558 = vadd.f32 %v1393, %v7557
        %v7559 = vpop.f32.mrb[0].mxu0
        %7560 = vmatprep.mubr.bf16.mxu0 0
        %7561 = vmatmul.mubr.bf16.gmra.mrb[0].mxu0 %v4728
        %v7562 = vpop.f32.mrb[0].mxu0
        %v7563 = vadd.f32 %v1393, %v7562
        %v7564 = vpop.f32.mrb[0].mxu0
        %v7565 = vpop.f32.mrb[0].mxu0
        %v7566 = vadd.f32 %v1393, %v7565
        %v7567 = vpop.f32.mrb[0].mxu0
        %7568 = vmatprep.mubr.bf16.mxu0 0
        %7569 = vmatmul.mubr.bf16.gmra.mrb[0].mxu0 %v4731
        %v7570 = vpop.f32.mrb[0].mxu0
        %v7571 = vadd.f32 %v1393, %v7570
        %v7572 = vpop.f32.mrb[0].mxu0
        %v7573 = vpop.f32.mrb[0].mxu0
        %v7574 = vadd.f32 %v1393, %v7573
        %v7575 = vpop.f32.mrb[0].mxu0
        %7576 = vmatprep.mubr.bf16.mxu0 0
        %7577 = vmatmul.mubr.bf16.gmra.mrb[0].mxu0 %v4734
        %v7578 = vpop.f32.mrb[0].mxu0
        %v7579 = vadd.f32 %v1393, %v7578
        %v7580 = vpop.f32.mrb[0].mxu0
        %v7581 = vpop.f32.mrb[0].mxu0
        %v7582 = vadd.f32 %v1393, %v7581
        %v7583 = vpop.f32.mrb[0].mxu0
        %7584 = vmatprep.mubr.bf16.mxu0 0
        %7585 = vmatmul.mubr.bf16.gmra.mrb[0].mxu0 %v4737
        %v7586 = vpop.f32.mrb[0].mxu0
        %v7587 = vadd.f32 %v1393, %v7586
        %v7588 = vpop.f32.mrb[0].mxu0
        %v7589 = vpop.f32.mrb[0].mxu0
        %v7590 = vadd.f32 %v1393, %v7589
        %v7591 = vpop.f32.mrb[0].mxu0
        %7592 = vmatprep.mubr.bf16.mxu0 0
        %7593 = vmatmul.mubr.bf16.gmra.mrb[0].mxu0 %v4740
        %v7594 = vpop.f32.mrb[0].mxu0
        %v7595 = vadd.f32 %v1393, %v7594
        %v7596 = vpop.f32.mrb[0].mxu0
        %v7597 = vpop.f32.mrb[0].mxu0
        %v7598 = vadd.f32 %v1393, %v7597
        %v7599 = vpop.f32.mrb[0].mxu0
        %7600 = vmatprep.mubr.bf16.mxu0 0
        %7601 = vmatmul.mubr.bf16.gmra.mrb[0].mxu0 %v4743
        %v7602 = vpop.f32.mrb[0].mxu0
        %v7603 = vadd.f32 %v1393, %v7602
        %v7604 = vpop.f32.mrb[0].mxu0
        %v7605 = vpop.f32.mrb[0].mxu0
        %v7606 = vadd.f32 %v1393, %v7605
        %v7607 = vpop.f32.mrb[0].mxu0
        %7608 = vmatprep.mubr.bf16.mxu0 0
        %7609 = vmatmul.mubr.bf16.gmra.mrb[0].mxu0 %v4746
        %v7610 = vpop.f32.mrb[0].mxu0
        %v7611 = vadd.f32 %v1393, %v7610
        %v7612 = vpop.f32.mrb[0].mxu0
        %v7613 = vpop.f32.mrb[0].mxu0
        %v7614 = vadd.f32 %v1393, %v7613
        %v7615 = vpop.f32.mrb[0].mxu0
        %7616 = vmatprep.mubr.bf16.mxu0 0
        %7617 = vmatmul.mubr.bf16.gmra.mrb[0].mxu0 %v4749
        %v7618 = vpop.f32.mrb[0].mxu0
        %v7619 = vadd.f32 %v1393, %v7618
        %v7620 = vpop.f32.mrb[0].mxu0
        %v7621 = vpop.f32.mrb[0].mxu0
        %v7622 = vadd.f32 %v1393, %v7621
        %v7623 = vpop.f32.mrb[0].mxu0
        %7624 = vmatprep.mubr.bf16.mxu0 0
        %7625 = vmatmul.mubr.bf16.gmra.mrb[0].mxu0 %v4752
        %v7626 = vpop.f32.mrb[0].mxu0
        %v7627 = vadd.f32 %v1393, %v7626
        %v7628 = vpop.f32.mrb[0].mxu0
        %v7629 = vpop.f32.mrb[0].mxu0
        %v7630 = vadd.f32 %v1393, %v7629
        %v7631 = vpop.f32.mrb[0].mxu0
        %7632 = vmatprep.mubr.bf16.mxu0 0
        %7633 = vmatmul.mubr.bf16.gmra.mrb[0].mxu0 %v4755
        %v7634 = vpop.f32.mrb[0].mxu0
        %v7635 = vadd.f32 %v1393, %v7634
        %v7636 = vpop.f32.mrb[0].mxu0
        %v7637 = vpop.f32.mrb[0].mxu0
        %v7638 = vadd.f32 %v1393, %v7637
        %v7639 = vpop.f32.mrb[0].mxu0
        %7640 = vmatprep.mubr.bf16.mxu0 0
        %7641 = vmatmul.mubr.bf16.gmra.mrb[0].mxu0 %v4758
        %v7642 = vpop.f32.mrb[0].mxu0
        %v7643 = vadd.f32 %v1393, %v7642
        %v7644 = vpop.f32.mrb[0].mxu0
        %v7645 = vpop.f32.mrb[0].mxu0
        %v7646 = vadd.f32 %v1393, %v7645
        %v7647 = vpop.f32.mrb[0].mxu0
        %7648 = vmatprep.mubr.bf16.mxu0 0
        %7649 = vmatmul.mubr.bf16.gmra.mrb[0].mxu0 %v4761
        %v7650 = vpop.f32.mrb[0].mxu0
        %v7651 = vadd.f32 %v1393, %v7650
        %v7652 = vpop.f32.mrb[0].mxu0
        %v7653 = vpop.f32.mrb[0].mxu0
        %v7654 = vadd.f32 %v1393, %v7653
        %v7655 = vpop.f32.mrb[0].mxu0
        %7656 = vmatprep.mubr.bf16.mxu0 0
        %7657 = vmatmul.mubr.bf16.gmra.mrb[0].mxu0 %v4764
        %v7658 = vpop.f32.mrb[0].mxu0
        %v7659 = vadd.f32 %v1393, %v7658
        %v7660 = vpop.f32.mrb[0].mxu0
        %v7661 = vpop.f32.mrb[0].mxu0
        %v7662 = vadd.f32 %v1393, %v7661
        %v7663 = vpop.f32.mrb[0].mxu0
        %7664 = vmatprep.mubr.bf16.mxu0 0
        %7665 = vmatmul.mubr.bf16.gmra.mrb[0].mxu0 %v4767
        %v7666 = vpop.f32.mrb[0].mxu0
        %v7667 = vadd.f32 %v1393, %v7666
        %v7668 = vpop.f32.mrb[0].mxu0
        %v7669 = vpop.f32.mrb[0].mxu0
        %v7670 = vadd.f32 %v1393, %v7669
        %v7671 = vpop.f32.mrb[0].mxu0
        %7672 = vmatprep.mubr.bf16.mxu0 0
        %7673 = vmatmul.mubr.bf16.gmra.mrb[0].mxu0 %v4770
        %v7674 = vpop.f32.mrb[0].mxu0
        %v7675 = vadd.f32 %v1393, %v7674
        %v7676 = vpop.f32.mrb[0].mxu0
        %v7677 = vpop.f32.mrb[0].mxu0
        %v7678 = vadd.f32 %v1393, %v7677
        %v7679 = vpop.f32.mrb[0].mxu0
        %7680 = vmatprep.mubr.bf16.mxu0 0
        %7681 = vmatmul.mubr.bf16.gmra.mrb[0].mxu0 %v4773
        %v7682 = vpop.f32.mrb[0].mxu0
        %v7683 = vadd.f32 %v1393, %v7682
        %v7684 = vpop.f32.mrb[0].mxu0
        %v7685 = vpop.f32.mrb[0].mxu0
        %v7686 = vadd.f32 %v1393, %v7685
        %v7687 = vpop.f32.mrb[0].mxu0
        %7688 = vmatprep.mubr.bf16.mxu0 0
        %7689 = vmatmul.mubr.bf16.gmra.mrb[0].mxu0 %v4776
        %v7690 = vpop.f32.mrb[0].mxu0
        %v7691 = vadd.f32 %v1393, %v7690
        %v7692 = vpop.f32.mrb[0].mxu0
        %v7693 = vpop.f32.mrb[0].mxu0
        %v7694 = vadd.f32 %v1393, %v7693
        %v7695 = vpop.f32.mrb[0].mxu0
        %7696 = vmatprep.mubr.bf16.mxu0 0
        %7697 = vmatmul.mubr.bf16.gmra.mrb[0].mxu0 %v4779
        %v7698 = vpop.f32.mrb[0].mxu0
        %v7699 = vadd.f32 %v1393, %v7698
        %v7700 = vpop.f32.mrb[0].mxu0
        %v7701 = vpop.f32.mrb[0].mxu0
        %v7702 = vadd.f32 %v1393, %v7701
        %v7703 = vpop.f32.mrb[0].mxu0
        %7704 = vmatprep.mubr.bf16.mxu0 0
        %7705 = vmatmul.mubr.bf16.gmra.mrb[0].mxu0 %v4782
        %v7706 = vpop.f32.mrb[0].mxu0
        %v7707 = vadd.f32 %v1393, %v7706
        %v7708 = vpop.f32.mrb[0].mxu0
        %v7709 = vpop.f32.mrb[0].mxu0
        %v7710 = vadd.f32 %v1393, %v7709
        %v7711 = vpop.f32.mrb[0].mxu0
        %7712 = vmatprep.mubr.bf16.mxu0 0
        %7713 = vmatmul.mubr.bf16.gmra.mrb[0].mxu0 %v4785
        %v7714 = vpop.f32.mrb[0].mxu0
        %v7715 = vadd.f32 %v1393, %v7714
        %v7716 = vpop.f32.mrb[0].mxu0
        %v7717 = vpop.f32.mrb[0].mxu0
        %v7718 = vadd.f32 %v1393, %v7717
        %v7719 = vpop.f32.mrb[0].mxu0
        %7720 = vmatprep.mubr.bf16.mxu0 0
        %7721 = vmatmul.mubr.bf16.gmra.mrb[0].mxu0 %v4788
        %v7722 = vpop.f32.mrb[0].mxu0
        %v7723 = vadd.f32 %v1393, %v7722
        %v7724 = vpop.f32.mrb[0].mxu0
        %v7725 = vpop.f32.mrb[0].mxu0
        %v7726 = vadd.f32 %v1393, %v7725
        %v7727 = vpop.f32.mrb[0].mxu0
        %7728 = vmatprep.mubr.bf16.mxu0 0
        %7729 = vmatmul.mubr.bf16.gmra.mrb[0].mxu0 %v4791
        %v7730 = vpop.f32.mrb[0].mxu0
        %v7731 = vadd.f32 %v1393, %v7730
        %v7732 = vpop.f32.mrb[0].mxu0
        %v7733 = vpop.f32.mrb[0].mxu0
        %v7734 = vadd.f32 %v1393, %v7733
        %v7735 = vpop.f32.mrb[0].mxu0
        %7736 = vmatprep.mubr.bf16.mxu0 0
        %7737 = vmatmul.mubr.bf16.gmra.mrb[0].mxu0 %v4794
        %v7738 = vpop.f32.mrb[0].mxu0
        %v7739 = vadd.f32 %v1393, %v7738
        %v7740 = vpop.f32.mrb[0].mxu0
        %v7741 = vpop.f32.mrb[0].mxu0
        %v7742 = vadd.f32 %v1393, %v7741
        %v7743 = vpop.f32.mrb[0].mxu0
        %7744 = vmatprep.mubr.bf16.mxu0 0
        %7745 = vmatmul.mubr.bf16.gmra.mrb[0].mxu0 %v4797
        %v7746 = vpop.f32.mrb[0].mxu0
        %v7747 = vadd.f32 %v1393, %v7746
        %v7748 = vpop.f32.mrb[0].mxu0
        %v7749 = vpop.f32.mrb[0].mxu0
        %v7750 = vadd.f32 %v1393, %v7749
        %v7751 = vpop.f32.mrb[0].mxu0
        %7752 = vmatprep.mubr.bf16.mxu0 0
        %7753 = vmatmul.mubr.bf16.gmra.mrb[0].mxu0 %v4800
        %v7754 = vpop.f32.mrb[0].mxu0
        %v7755 = vadd.f32 %v1393, %v7754
        %v7756 = vpop.f32.mrb[0].mxu0
        %v7757 = vpop.f32.mrb[0].mxu0
        %v7758 = vadd.f32 %v1393, %v7757
        %v7759 = vpop.f32.mrb[0].mxu0
        %7760 = vmatprep.mubr.bf16.mxu0 0
        %7761 = vmatmul.mubr.bf16.gmra.mrb[0].mxu0 %v4803
        %v7762 = vpop.f32.mrb[0].mxu0
        %v7763 = vadd.f32 %v1393, %v7762
        %v7764 = vpop.f32.mrb[0].mxu0
        %v7765 = vpop.f32.mrb[0].mxu0
        %v7766 = vadd.f32 %v1393, %v7765
        %v7767 = vpop.f32.mrb[0].mxu0
        %7768 = vmatprep.mubr.bf16.mxu0 0
        %7769 = vmatmul.mubr.bf16.gmra.mrb[0].mxu0 %v4806
        %v7770 = vpop.f32.mrb[0].mxu0
        %v7771 = vadd.f32 %v1393, %v7770
        %v7772 = vpop.f32.mrb[0].mxu0
        %v7773 = vpop.f32.mrb[0].mxu0
        %v7774 = vadd.f32 %v1393, %v7773
        %v7775 = vpop.f32.mrb[0].mxu0
        %7776 = vmatprep.mubr.bf16.mxu0 0
        %7777 = vmatmul.mubr.bf16.gmra.mrb[0].mxu0 %v4809
        %v7778 = vpop.f32.mrb[0].mxu0
        %v7779 = vadd.f32 %v1393, %v7778
        %v7780 = vpop.f32.mrb[0].mxu0
        %v7781 = vpop.f32.mrb[0].mxu0
        %v7782 = vadd.f32 %v1393, %v7781
        %v7783 = vpop.f32.mrb[0].mxu0
        %7784 = vmatprep.mubr.bf16.mxu0 0
        %7785 = vmatmul.mubr.bf16.gmra.mrb[0].mxu0 %v4812
        %v7786 = vpop.f32.mrb[0].mxu0
        %v7787 = vadd.f32 %v1393, %v7786
        %v7788 = vpop.f32.mrb[0].mxu0
        %v7789 = vpop.f32.mrb[0].mxu0
        %v7790 = vadd.f32 %v1393, %v7789
        %v7791 = vpop.f32.mrb[0].mxu0
        %7792 = vmatprep.mubr.bf16.mxu0 0
        %7793 = vmatmul.mubr.bf16.gmra.mrb[0].mxu0 %v4815
        %v7794 = vpop.f32.mrb[0].mxu0
        %v7795 = vadd.f32 %v1393, %v7794
        %v7796 = vpop.f32.mrb[0].mxu0
        %v7797 = vpop.f32.mrb[0].mxu0
        %v7798 = vadd.f32 %v1393, %v7797
        %v7799 = vpop.f32.mrb[0].mxu0
        %7800 = vmatprep.mubr.bf16.mxu0 0
        %7801 = vmatmul.mubr.bf16.gmra.mrb[0].mxu0 %v4818
        %v7802 = vpop.f32.mrb[0].mxu0
        %v7803 = vadd.f32 %v1393, %v7802
        %v7804 = vpop.f32.mrb[0].mxu0
        %v7805 = vpop.f32.mrb[0].mxu0
        %v7806 = vadd.f32 %v1393, %v7805
        %v7807 = vpop.f32.mrb[0].mxu0
        %7808 = vmatprep.mubr.bf16.mxu0 0
        %7809 = vmatmul.mubr.bf16.gmra.mrb[0].mxu0 %v4821
        %v7810 = vpop.f32.mrb[0].mxu0
        %v7811 = vadd.f32 %v1393, %v7810
        %v7812 = vpop.f32.mrb[0].mxu0
        %v7813 = vpop.f32.mrb[0].mxu0
        %v7814 = vadd.f32 %v1393, %v7813
        %v7815 = vpop.f32.mrb[0].mxu0
        %7816 = vmatprep.mubr.bf16.mxu0 0
        %7817 = vmatmul.mubr.bf16.gmra.mrb[0].mxu0 %v4824
        %v7818 = vpop.f32.mrb[0].mxu0
        %v7819 = vadd.f32 %v1393, %v7818
        %v7820 = vpop.f32.mrb[0].mxu0
        %v7821 = vpop.f32.mrb[0].mxu0
        %v7822 = vadd.f32 %v1393, %v7821
        %v7823 = vpop.f32.mrb[0].mxu0
        %7824 = vmatprep.mubr.bf16.mxu0 0
        %7825 = vmatmul.mubr.bf16.gmra.mrb[0].mxu0 %v4827
        %v7826 = vpop.f32.mrb[0].mxu0
        %v7827 = vadd.f32 %v1393, %v7826
        %v7828 = vpop.f32.mrb[0].mxu0
        %v7829 = vpop.f32.mrb[0].mxu0
        %v7830 = vadd.f32 %v1393, %v7829
        %v7831 = vpop.f32.mrb[0].mxu0
        %7832 = vmatprep.mubr.bf16.mxu0 0
        %7833 = vmatmul.mubr.bf16.gmra.mrb[0].mxu0 %v4830
        %v7834 = vpop.f32.mrb[0].mxu0
        %v7835 = vadd.f32 %v1393, %v7834
        %v7836 = vpop.f32.mrb[0].mxu0
        %v7837 = vpop.f32.mrb[0].mxu0
        %v7838 = vadd.f32 %v1393, %v7837
        %v7839 = vpop.f32.mrb[0].mxu0
        %7840 = vmatprep.mubr.bf16.mxu0 0
        %7841 = vmatmul.mubr.bf16.gmra.mrb[0].mxu0 %v4833
        %v7842 = vpop.f32.mrb[0].mxu0
        %v7843 = vadd.f32 %v1393, %v7842
        %v7844 = vpop.f32.mrb[0].mxu0
        %v7845 = vpop.f32.mrb[0].mxu0
        %v7846 = vadd.f32 %v1393, %v7845
        %v7847 = vpop.f32.mrb[0].mxu0
        %7848 = vmatprep.mubr.bf16.mxu0 0
        %7849 = vmatmul.mubr.bf16.gmra.mrb[0].mxu0 %v4836
        %v7850 = vpop.f32.mrb[0].mxu0
        %v7851 = vadd.f32 %v1393, %v7850
        %v7852 = vpop.f32.mrb[0].mxu0
        %v7853 = vpop.f32.mrb[0].mxu0
        %v7854 = vadd.f32 %v1393, %v7853
        %v7855 = vpop.f32.mrb[0].mxu0
        %7856 = vmatprep.mubr.bf16.mxu0 0
        %7857 = vmatmul.mubr.bf16.gmra.mrb[0].mxu0 %v4839
        %v7858 = vpop.f32.mrb[0].mxu0
        %v7859 = vadd.f32 %v1393, %v7858
        %v7860 = vpop.f32.mrb[0].mxu0
        %v7861 = vpop.f32.mrb[0].mxu0
        %v7862 = vadd.f32 %v1393, %v7861
        %v7863 = vpop.f32.mrb[0].mxu0
        %7864 = vmatprep.mubr.bf16.mxu0 0
        %7865 = vmatmul.mubr.bf16.gmra.mrb[0].mxu0 %v4842
        %v7866 = vpop.f32.mrb[0].mxu0
        %v7867 = vadd.f32 %v1393, %v7866
        %v7868 = vpop.f32.mrb[0].mxu0
        %v7869 = vpop.f32.mrb[0].mxu0
        %v7870 = vadd.f32 %v1393, %v7869
        %v7871 = vpop.f32.mrb[0].mxu0
        %7872 = vmatprep.mubr.bf16.mxu0 0
        %7873 = vmatmul.mubr.bf16.gmra.mrb[0].mxu0 %v4845
        %v7874 = vpop.f32.mrb[0].mxu0
        %v7875 = vadd.f32 %v1393, %v7874
        %v7876 = vpop.f32.mrb[0].mxu0
        %v7877 = vpop.f32.mrb[0].mxu0
        %v7878 = vadd.f32 %v1393, %v7877
        %v7879 = vpop.f32.mrb[0].mxu0
        %7880 = vmatprep.mubr.bf16.mxu0 0
        %7881 = vmatmul.mubr.bf16.gmra.mrb[0].mxu0 %v4848
        %v7882 = vpop.f32.mrb[0].mxu0
        %v7883 = vadd.f32 %v1393, %v7882
        %v7884 = vpop.f32.mrb[0].mxu0
        %v7885 = vpop.f32.mrb[0].mxu0
        %v7886 = vadd.f32 %v1393, %v7885
        %v7887 = vpop.f32.mrb[0].mxu0
        %7888 = vmatprep.mubr.bf16.mxu0 0
        %7889 = vmatmul.mubr.bf16.gmra.mrb[0].mxu0 %v4851
        %v7890 = vpop.f32.mrb[0].mxu0
        %v7891 = vadd.f32 %v1393, %v7890
        %v7892 = vpop.f32.mrb[0].mxu0
        %v7893 = vpop.f32.mrb[0].mxu0
        %v7894 = vadd.f32 %v1393, %v7893
        %v7895 = vpop.f32.mrb[0].mxu0
        %7896 = vmatprep.mubr.bf16.mxu0 0
        %7897 = vmatmul.mubr.bf16.gmra.mrb[0].mxu0 %v4854
        %v7898 = vpop.f32.mrb[0].mxu0
        %v7899 = vadd.f32 %v1393, %v7898
        %v7900 = vpop.f32.mrb[0].mxu0
        %v7901 = vpop.f32.mrb[0].mxu0
        %v7902 = vadd.f32 %v1393, %v7901
        %v7903 = vpop.f32.mrb[0].mxu0
        %7904 = vmatprep.mubr.bf16.mxu0 0
        %7905 = vmatmul.mubr.bf16.gmra.mrb[0].mxu0 %v4857
        %v7906 = vpop.f32.mrb[0].mxu0
        %v7907 = vadd.f32 %v1393, %v7906
        %v7908 = vpop.f32.mrb[0].mxu0
        %v7909 = vpop.f32.mrb[0].mxu0
        %v7910 = vadd.f32 %v1393, %v7909
        %v7911 = vpop.f32.mrb[0].mxu0
        %7912 = vmatprep.mubr.bf16.mxu0 0
        %7913 = vmatmul.mubr.bf16.gmra.mrb[0].mxu0 %v4860
        %v7914 = vpop.f32.mrb[0].mxu0
        %v7915 = vadd.f32 %v1393, %v7914
        %v7916 = vpop.f32.mrb[0].mxu0
        %v7917 = vpop.f32.mrb[0].mxu0
        %v7918 = vadd.f32 %v1393, %v7917
        %v7919 = vpop.f32.mrb[0].mxu0
        %7920 = vmatprep.mubr.bf16.mxu0 0
        %7921 = vmatmul.mubr.bf16.gmra.mrb[0].mxu0 %v4863
        %v7922 = vpop.f32.mrb[0].mxu0
        %v7923 = vadd.f32 %v1393, %v7922
        %v7924 = vpop.f32.mrb[0].mxu0
        %v7925 = vpop.f32.mrb[0].mxu0
        %v7926 = vadd.f32 %v1393, %v7925
        %v7927 = vpop.f32.mrb[0].mxu0
        %7928 = vmatprep.mubr.bf16.mxu0 0
        %7929 = vmatmul.mubr.bf16.gmra.mrb[0].mxu0 %v4866
        %v7930 = vpop.f32.mrb[0].mxu0
        %v7931 = vadd.f32 %v1393, %v7930
        %v7932 = vpop.f32.mrb[0].mxu0
        %v7933 = vpop.f32.mrb[0].mxu0
        %v7934 = vadd.f32 %v1393, %v7933
        %v7935 = vpop.f32.mrb[0].mxu0
        %7936 = vmatprep.mubr.bf16.mxu0 0
        %7937 = vmatmul.mubr.bf16.gmra.mrb[0].mxu0 %v4869
        %v7938 = vpop.f32.mrb[0].mxu0
        %v7939 = vadd.f32 %v1393, %v7938
        %v7940 = vpop.f32.mrb[0].mxu0
        %v7941 = vpop.f32.mrb[0].mxu0
        %v7942 = vadd.f32 %v1393, %v7941
        %v7943 = vpop.f32.mrb[0].mxu0
        %7944 = vmatprep.mubr.bf16.mxu0 0
        %7945 = vmatmul.mubr.bf16.gmra.mrb[0].mxu0 %v4872
        %v7946 = vpop.f32.mrb[0].mxu0
        %v7947 = vadd.f32 %v1393, %v7946
        %v7948 = vpop.f32.mrb[0].mxu0
        %v7949 = vpop.f32.mrb[0].mxu0
        %v7950 = vadd.f32 %v1393, %v7949
        %v7951 = vpop.f32.mrb[0].mxu0
        %7952 = vmatprep.mubr.bf16.mxu0 0
        %7953 = vmatmul.mubr.bf16.gmra.mrb[0].mxu0 %v4875
        %v7954 = vpop.f32.mrb[0].mxu0
        %v7955 = vadd.f32 %v1393, %v7954
        %v7956 = vpop.f32.mrb[0].mxu0
        %v7957 = vpop.f32.mrb[0].mxu0
        %v7958 = vadd.f32 %v1393, %v7957
        %v7959 = vpop.f32.mrb[0].mxu0
        %7960 = vmatprep.mubr.bf16.mxu0 0
        %7961 = vmatmul.mubr.bf16.gmra.mrb[0].mxu0 %v4878
        %v7962 = vpop.f32.mrb[0].mxu0
        %v7963 = vadd.f32 %v1393, %v7962
        %v7964 = vpop.f32.mrb[0].mxu0
        %v7965 = vpop.f32.mrb[0].mxu0
        %v7966 = vadd.f32 %v1393, %v7965
        %v7967 = vpop.f32.mrb[0].mxu0
        %7968 = vmatprep.mubr.bf16.mxu0 0
        %7969 = vmatmul.mubr.bf16.gmra.mrb[0].mxu0 %v4881
        %v7970 = vpop.f32.mrb[0].mxu0
        %v7971 = vadd.f32 %v1393, %v7970
        %v7972 = vpop.f32.mrb[0].mxu0
        %v7973 = vpop.f32.mrb[0].mxu0
        %v7974 = vadd.f32 %v1393, %v7973
        %v7975 = vpop.f32.mrb[0].mxu0
        %7976 = vmatprep.mubr.bf16.mxu0 0
        %7977 = vmatmul.mubr.bf16.gmra.mrb[0].mxu0 %v4884
        %v7978 = vpop.f32.mrb[0].mxu0
        %v7979 = vadd.f32 %v1393, %v7978
        %v7980 = vpop.f32.mrb[0].mxu0
        %v7981 = vpop.f32.mrb[0].mxu0
        %v7982 = vadd.f32 %v1393, %v7981
        %v7983 = vpop.f32.mrb[0].mxu0
        %7984 = vmatprep.mubr.bf16.mxu0 0
        %7985 = vmatmul.mubr.bf16.gmra.mrb[0].mxu0 %v4887
        %v7986 = vpop.f32.mrb[0].mxu0
        %v7987 = vadd.f32 %v1393, %v7986
        %v7988 = vpop.f32.mrb[0].mxu0
        %v7989 = vpop.f32.mrb[0].mxu0
        %v7990 = vadd.f32 %v1393, %v7989
        %v7991 = vpop.f32.mrb[0].mxu0
        %7992 = vmatprep.mubr.bf16.mxu0 0
        %7993 = vmatmul.mubr.bf16.gmra.mrb[0].mxu0 %v4890
        %v7994 = vpop.f32.mrb[0].mxu0
        %v7995 = vadd.f32 %v1393, %v7994
        %v7996 = vpop.f32.mrb[0].mxu0
        %v7997 = vpop.f32.mrb[0].mxu0
        %v7998 = vadd.f32 %v1393, %v7997
        %v7999 = vpop.f32.mrb[0].mxu0
        %8000 = vmatprep.mubr.bf16.mxu0 0
        %8001 = vmatmul.mubr.bf16.gmra.mrb[0].mxu0 %v4893
        %v8002 = vpop.f32.mrb[0].mxu0
        %v8003 = vadd.f32 %v1393, %v8002
        %v8004 = vpop.f32.mrb[0].mxu0
        %v8005 = vpop.f32.mrb[0].mxu0
        %v8006 = vadd.f32 %v1393, %v8005
        %v8007 = vpop.f32.mrb[0].mxu0
        %8008 = vmatprep.mubr.bf16.mxu0 0
        %8009 = vmatmul.mubr.bf16.gmra.mrb[0].mxu0 %v4896
        %v8010 = vpop.f32.mrb[0].mxu0
        %v8011 = vadd.f32 %v1393, %v8010
        %v8012 = vpop.f32.mrb[0].mxu0
        %v8013 = vpop.f32.mrb[0].mxu0
        %v8014 = vadd.f32 %v1393, %v8013
        %v8015 = vpop.f32.mrb[0].mxu0
        %8016 = vmatprep.mubr.bf16.mxu0 0
        %8017 = vmatmul.mubr.bf16.gmra.mrb[0].mxu0 %v4899
        %v8018 = vpop.f32.mrb[0].mxu0
        %v8019 = vadd.f32 %v1393, %v8018
        %v8020 = vpop.f32.mrb[0].mxu0
        %v8021 = vpop.f32.mrb[0].mxu0
        %v8022 = vadd.f32 %v1393, %v8021
        %v8023 = vpop.f32.mrb[0].mxu0
        %8024 = vmatprep.mubr.bf16.mxu0 0
        %8025 = vmatmul.mubr.bf16.gmra.mrb[0].mxu0 %v4902
        %v8026 = vpop.f32.mrb[0].mxu0
        %v8027 = vadd.f32 %v1393, %v8026
        %v8028 = vpop.f32.mrb[0].mxu0
        %v8029 = vpop.f32.mrb[0].mxu0
        %v8030 = vadd.f32 %v1393, %v8029
        %v8031 = vpop.f32.mrb[0].mxu0
        %8032 = vmatprep.mubr.bf16.mxu0 0
        %8033 = vmatmul.mubr.bf16.gmra.mrb[0].mxu0 %v4905
        %v8034 = vpop.f32.mrb[0].mxu0
        %v8035 = vadd.f32 %v1393, %v8034
        %v8036 = vpop.f32.mrb[0].mxu0
        %v8037 = vpop.f32.mrb[0].mxu0
        %v8038 = vadd.f32 %v1393, %v8037
        %v8039 = vpop.f32.mrb[0].mxu0
        %8040 = vmatprep.mubr.bf16.mxu0 0
        %8041 = vmatmul.mubr.bf16.gmra.mrb[0].mxu0 %v4908
        %v8042 = vpop.f32.mrb[0].mxu0
        %v8043 = vadd.f32 %v1393, %v8042
        %v8044 = vpop.f32.mrb[0].mxu0
        %v8045 = vpop.f32.mrb[0].mxu0
        %v8046 = vadd.f32 %v1393, %v8045
        %v8047 = vpop.f32.mrb[0].mxu0
        %8048 = vmatprep.mubr.bf16.mxu0 0
        %8049 = vmatmul.mubr.bf16.gmra.mrb[0].mxu0 %v4911
        %v8050 = vpop.f32.mrb[0].mxu0
        %v8051 = vadd.f32 %v1393, %v8050
        %v8052 = vpop.f32.mrb[0].mxu0
        %v8053 = vpop.f32.mrb[0].mxu0
        %v8054 = vadd.f32 %v1393, %v8053
        %v8055 = vpop.f32.mrb[0].mxu0
        %8056 = vmatprep.mubr.bf16.mxu0 0
        %8057 = vmatmul.mubr.bf16.gmra.mrb[0].mxu0 %v4914
        %v8058 = vpop.f32.mrb[0].mxu0
        %v8059 = vadd.f32 %v1393, %v8058
        %v8060 = vpop.f32.mrb[0].mxu0
        %v8061 = vpop.f32.mrb[0].mxu0
        %v8062 = vadd.f32 %v1393, %v8061
        %v8063 = vpop.f32.mrb[0].mxu0
        %8064 = vmatprep.mubr.bf16.mxu0 0
        %8065 = vmatmul.mubr.bf16.gmra.mrb[0].mxu0 %v4917
        %v8066 = vpop.f32.mrb[0].mxu0
        %v8067 = vadd.f32 %v1393, %v8066
        %v8068 = vpop.f32.mrb[0].mxu0
        %v8069 = vpop.f32.mrb[0].mxu0
        %v8070 = vadd.f32 %v1393, %v8069
        %v8071 = vpop.f32.mrb[0].mxu0
        %8072 = vmatprep.mubr.bf16.mxu0 0
        %8073 = vmatmul.mubr.bf16.gmra.mrb[0].mxu0 %v4920
        %v8074 = vpop.f32.mrb[0].mxu0
        %v8075 = vadd.f32 %v1393, %v8074
        %v8076 = vpop.f32.mrb[0].mxu0
        %v8077 = vpop.f32.mrb[0].mxu0
        %v8078 = vadd.f32 %v1393, %v8077
        %v8079 = vpop.f32.mrb[0].mxu0
        %8080 = vmatprep.mubr.bf16.mxu0 0
        %8081 = vmatmul.mubr.bf16.gmra.mrb[0].mxu0 %v4923
        %v8082 = vpop.f32.mrb[0].mxu0
        %v8083 = vadd.f32 %v1393, %v8082
        %v8084 = vpop.f32.mrb[0].mxu0
        %v8085 = vpop.f32.mrb[0].mxu0
        %v8086 = vadd.f32 %v1393, %v8085
        %v8087 = vpop.f32.mrb[0].mxu0
        %8088 = vmatprep.mubr.bf16.mxu0 0
        %8089 = vmatmul.mubr.bf16.gmra.mrb[0].mxu0 %v4926
        %v8090 = vpop.f32.mrb[0].mxu0
        %v8091 = vadd.f32 %v1393, %v8090
        %v8092 = vpop.f32.mrb[0].mxu0
        %v8093 = vpop.f32.mrb[0].mxu0
        %v8094 = vadd.f32 %v1393, %v8093
        %v8095 = vpop.f32.mrb[0].mxu0
        %8096 = vmatprep.mubr.bf16.mxu0 0
        %8097 = vmatmul.mubr.bf16.gmra.mrb[0].mxu0 %v4929
        %v8098 = vpop.f32.mrb[0].mxu0
        %v8099 = vadd.f32 %v1393, %v8098
        %v8100 = vpop.f32.mrb[0].mxu0
        %v8101 = vpop.f32.mrb[0].mxu0
        %v8102 = vadd.f32 %v1393, %v8101
        %v8103 = vpop.f32.mrb[0].mxu0
        %8104 = vmatprep.mubr.bf16.mxu0 0
        %8105 = vmatmul.mubr.bf16.gmra.mrb[0].mxu0 %v4932
        %v8106 = vpop.f32.mrb[0].mxu0
        %v8107 = vadd.f32 %v1393, %v8106
        %v8108 = vpop.f32.mrb[0].mxu0
        %v8109 = vpop.f32.mrb[0].mxu0
        %v8110 = vadd.f32 %v1393, %v8109
        %v8111 = vpop.f32.mrb[0].mxu0
        %8112 = vmatprep.mubr.bf16.mxu0 0
        %8113 = vmatmul.mubr.bf16.gmra.mrb[0].mxu0 %v4935
        %v8114 = vpop.f32.mrb[0].mxu0
        %v8115 = vadd.f32 %v1393, %v8114
        %v8116 = vpop.f32.mrb[0].mxu0
        %v8117 = vpop.f32.mrb[0].mxu0
        %v8118 = vadd.f32 %v1393, %v8117
        %v8119 = vpop.f32.mrb[0].mxu0
        %8120 = vmatprep.mubr.bf16.mxu0 0
        %8121 = vmatmul.mubr.bf16.gmra.mrb[0].mxu0 %v4938
        %v8122 = vpop.f32.mrb[0].mxu0
        %v8123 = vadd.f32 %v1393, %v8122
        %v8124 = vpop.f32.mrb[0].mxu0
        %v8125 = vpop.f32.mrb[0].mxu0
        %v8126 = vadd.f32 %v1393, %v8125
        %v8127 = vpop.f32.mrb[0].mxu0
        %8128 = vmatprep.mubr.bf16.mxu0 0
        %8129 = vmatmul.mubr.bf16.gmra.mrb[0].mxu0 %v4941
        %v8130 = vpop.f32.mrb[0].mxu0
        %v8131 = vadd.f32 %v1393, %v8130
        %v8132 = vpop.f32.mrb[0].mxu0
        %v8133 = vpop.f32.mrb[0].mxu0
        %v8134 = vadd.f32 %v1393, %v8133
        %v8135 = vpop.f32.mrb[0].mxu0
        %8136 = vmatprep.mubr.bf16.mxu0 0
        %8137 = vmatmul.mubr.bf16.gmra.mrb[0].mxu0 %v4944
        %v8138 = vpop.f32.mrb[0].mxu0
        %v8139 = vadd.f32 %v1393, %v8138
        %v8140 = vpop.f32.mrb[0].mxu0
        %v8141 = vpop.f32.mrb[0].mxu0
        %v8142 = vadd.f32 %v1393, %v8141
        %v8143 = vpop.f32.mrb[0].mxu0
        %8144 = vmatprep.mubr.bf16.mxu0 0
        %8145 = vmatmul.mubr.bf16.gmra.mrb[0].mxu0 %v4947
        %v8146 = vpop.f32.mrb[0].mxu0
        %v8147 = vadd.f32 %v1393, %v8146
        %v8148 = vpop.f32.mrb[0].mxu0
        %v8149 = vpop.f32.mrb[0].mxu0
        %v8150 = vadd.f32 %v1393, %v8149
        %v8151 = vpop.f32.mrb[0].mxu0
        %8152 = vmatprep.mubr.bf16.mxu0 0
        %8153 = vmatmul.mubr.bf16.gmra.mrb[0].mxu0 %v4950
        %v8154 = vpop.f32.mrb[0].mxu0
        %v8155 = vadd.f32 %v1393, %v8154
        %v8156 = vpop.f32.mrb[0].mxu0
        %v8157 = vpop.f32.mrb[0].mxu0
        %v8158 = vadd.f32 %v1393, %v8157
        %v8159 = vpop.f32.mrb[0].mxu0
        %8160 = vmatprep.mubr.bf16.mxu0 0
        %8161 = vmatmul.mubr.bf16.gmra.mrb[0].mxu0 %v4953
        %v8162 = vpop.f32.mrb[0].mxu0
        %v8163 = vadd.f32 %v1393, %v8162
        %v8164 = vpop.f32.mrb[0].mxu0
        %v8165 = vpop.f32.mrb[0].mxu0
        %v8166 = vadd.f32 %v1393, %v8165
        %v8167 = vpop.f32.mrb[0].mxu0
        %8168 = vmatprep.mubr.bf16.mxu0 0
        %8169 = vmatmul.mubr.bf16.gmra.mrb[0].mxu0 %v4956
        %v8170 = vpop.f32.mrb[0].mxu0
        %v8171 = vadd.f32 %v1393, %v8170
        %v8172 = vpop.f32.mrb[0].mxu0
        %v8173 = vpop.f32.mrb[0].mxu0
        %v8174 = vadd.f32 %v1393, %v8173
        %v8175 = vpop.f32.mrb[0].mxu0
        %8176 = vmatprep.mubr.bf16.mxu0 0
        %8177 = vmatmul.mubr.bf16.gmra.mrb[0].mxu0 %v4959
        %v8178 = vpop.f32.mrb[0].mxu0
        %v8179 = vadd.f32 %v1393, %v8178
        %v8180 = vpop.f32.mrb[0].mxu0
        %v8181 = vpop.f32.mrb[0].mxu0
        %v8182 = vadd.f32 %v1393, %v8181
        %v8183 = vpop.f32.mrb[0].mxu0
        %8184 = vmatprep.mubr.bf16.mxu0 0
        %8185 = vmatmul.mubr.bf16.gmra.mrb[0].mxu0 %v4962
        %v8186 = vpop.f32.mrb[0].mxu0
        %v8187 = vadd.f32 %v1393, %v8186
        %v8188 = vpop.f32.mrb[0].mxu0
        %v8189 = vpop.f32.mrb[0].mxu0
        %v8190 = vadd.f32 %v1393, %v8189
        %v8191 = vpop.f32.mrb[0].mxu0
        %8192 = vmatprep.mubr.bf16.mxu0 0
        %8193 = vmatmul.mubr.bf16.gmra.mrb[0].mxu0 %v4965
        %v8194 = vpop.f32.mrb[0].mxu0
        %v8195 = vadd.f32 %v1393, %v8194
        %v8196 = vpop.f32.mrb[0].mxu0
        %v8197 = vpop.f32.mrb[0].mxu0
        %v8198 = vadd.f32 %v1393, %v8197
        %v8199 = vpop.f32.mrb[0].mxu0
        %8200 = vmatprep.mubr.bf16.mxu0 0
        %8201 = vmatmul.mubr.bf16.gmra.mrb[0].mxu0 %v4968
        %v8202 = vpop.f32.mrb[0].mxu0
        %v8203 = vadd.f32 %v1393, %v8202
        %v8204 = vpop.f32.mrb[0].mxu0
        %v8205 = vpop.f32.mrb[0].mxu0
        %v8206 = vadd.f32 %v1393, %v8205
        %v8207 = vpop.f32.mrb[0].mxu0
        %8208 = vmatprep.mubr.bf16.mxu0 0
        %8209 = vmatmul.mubr.bf16.gmra.mrb[0].mxu0 %v4971
        %v8210 = vpop.f32.mrb[0].mxu0
        %v8211 = vadd.f32 %v1393, %v8210
        %v8212 = vpop.f32.mrb[0].mxu0
        %v8213 = vpop.f32.mrb[0].mxu0
        %v8214 = vadd.f32 %v1393, %v8213
        %v8215 = vpop.f32.mrb[0].mxu0
        %8216 = vmatprep.mubr.bf16.mxu0 0
        %8217 = vmatmul.mubr.bf16.gmra.mrb[0].mxu0 %v4974
        %v8218 = vpop.f32.mrb[0].mxu0
        %v8219 = vadd.f32 %v1393, %v8218
        %v8220 = vpop.f32.mrb[0].mxu0
        %v8221 = vpop.f32.mrb[0].mxu0
        %v8222 = vadd.f32 %v1393, %v8221
        %v8223 = vpop.f32.mrb[0].mxu0
        %8224 = vmatprep.mubr.bf16.mxu0 0
        %8225 = vmatmul.mubr.bf16.gmra.mrb[0].mxu0 %v4977
        %v8226 = vpop.f32.mrb[0].mxu0
        %v8227 = vadd.f32 %v1393, %v8226
        %v8228 = vpop.f32.mrb[0].mxu0
        %v8229 = vpop.f32.mrb[0].mxu0
        %v8230 = vadd.f32 %v1393, %v8229
        %v8231 = vpop.f32.mrb[0].mxu0
        %8232 = vmatprep.mubr.bf16.mxu0 0
        %8233 = vmatmul.mubr.bf16.gmra.mrb[0].mxu0 %v4980
        %v8234 = vpop.f32.mrb[0].mxu0
        %v8235 = vadd.f32 %v1393, %v8234
        %v8236 = vpop.f32.mrb[0].mxu0
        %v8237 = vpop.f32.mrb[0].mxu0
        %v8238 = vadd.f32 %v1393, %v8237
        %v8239 = vpop.f32.mrb[0].mxu0
        %8240 = vmatprep.mubr.bf16.mxu0 0
        %8241 = vmatmul.mubr.bf16.gmra.mrb[0].mxu0 %v4983
        %v8242 = vpop.f32.mrb[0].mxu0
        %v8243 = vadd.f32 %v1393, %v8242
        %v8244 = vpop.f32.mrb[0].mxu0
        %v8245 = vpop.f32.mrb[0].mxu0
        %v8246 = vadd.f32 %v1393, %v8245
        %v8247 = vpop.f32.mrb[0].mxu0
        %8248 = vmatprep.mubr.bf16.mxu0 0
        %8249 = vmatmul.mubr.bf16.gmra.mrb[0].mxu0 %v4986
        %v8250 = vpop.f32.mrb[0].mxu0
        %v8251 = vadd.f32 %v1393, %v8250
        %v8252 = vpop.f32.mrb[0].mxu0
        %v8253 = vpop.f32.mrb[0].mxu0
        %v8254 = vadd.f32 %v1393, %v8253
        %v8255 = vpop.f32.mrb[0].mxu0
        %8256 = vmatprep.mubr.bf16.mxu0 0
        %8257 = vmatmul.mubr.bf16.gmra.mrb[0].mxu0 %v4989
        %v8258 = vpop.f32.mrb[0].mxu0
        %v8259 = vadd.f32 %v1393, %v8258
        %v8260 = vpop.f32.mrb[0].mxu0
        %v8261 = vpop.f32.mrb[0].mxu0
        %v8262 = vadd.f32 %v1393, %v8261
        %v8263 = vpop.f32.mrb[0].mxu0
        %8264 = vmatprep.mubr.bf16.mxu0 0
        %8265 = vmatmul.mubr.bf16.gmra.mrb[0].mxu0 %v4992
        %v8266 = vpop.f32.mrb[0].mxu0
        %v8267 = vadd.f32 %v1393, %v8266
        %v8268 = vpop.f32.mrb[0].mxu0
        %v8269 = vpop.f32.mrb[0].mxu0
        %v8270 = vadd.f32 %v1393, %v8269
        %v8271 = vpop.f32.mrb[0].mxu0
        %8272 = vmatprep.mubr.bf16.mxu0 0
        %8273 = vmatmul.mubr.bf16.gmra.mrb[0].mxu0 %v4995
        %v8274 = vpop.f32.mrb[0].mxu0
        %v8275 = vadd.f32 %v1393, %v8274
        %v8276 = vpop.f32.mrb[0].mxu0
        %v8277 = vpop.f32.mrb[0].mxu0
        %v8278 = vadd.f32 %v1393, %v8277
        %v8279 = vpop.f32.mrb[0].mxu0
        %8280 = vmatprep.mubr.bf16.mxu0 0
        %8281 = vmatmul.mubr.bf16.gmra.mrb[0].mxu0 %v4998
        %v8282 = vpop.f32.mrb[0].mxu0
        %v8283 = vadd.f32 %v1393, %v8282
        %v8284 = vpop.f32.mrb[0].mxu0
        %v8285 = vpop.f32.mrb[0].mxu0
        %v8286 = vadd.f32 %v1393, %v8285
        %v8287 = vpop.f32.mrb[0].mxu0
        %8288 = vmatprep.mubr.bf16.mxu0 0
        %8289 = vmatmul.mubr.bf16.gmra.mrb[0].mxu0 %v5001
        %v8290 = vpop.f32.mrb[0].mxu0
        %v8291 = vadd.f32 %v1393, %v8290
        %v8292 = vpop.f32.mrb[0].mxu0
        %v8293 = vpop.f32.mrb[0].mxu0
        %v8294 = vadd.f32 %v1393, %v8293
        %v8295 = vpop.f32.mrb[0].mxu0
        %8296 = vmatprep.mubr.bf16.mxu0 0
        %8297 = vmatmul.mubr.bf16.gmra.mrb[0].mxu0 %v5004
        %v8298 = vpop.f32.mrb[0].mxu0
        %v8299 = vadd.f32 %v1393, %v8298
        %v8300 = vpop.f32.mrb[0].mxu0
        %v8301 = vpop.f32.mrb[0].mxu0
        %v8302 = vadd.f32 %v1393, %v8301
        %v8303 = vpop.f32.mrb[0].mxu0
        %8304 = vmatprep.mubr.bf16.mxu0 0
        %8305 = vmatmul.mubr.bf16.gmra.mrb[0].mxu0 %v5007
        %v8306 = vpop.f32.mrb[0].mxu0
        %v8307 = vadd.f32 %v1393, %v8306
        %v8308 = vpop.f32.mrb[0].mxu0
        %v8309 = vpop.f32.mrb[0].mxu0
        %v8310 = vadd.f32 %v1393, %v8309
        %v8311 = vpop.f32.mrb[0].mxu0
        %8312 = vmatprep.mubr.bf16.mxu0 0
        %8313 = vmatmul.mubr.bf16.gmra.mrb[0].mxu0 %v5010
        %v8314 = vpop.f32.mrb[0].mxu0
        %v8315 = vadd.f32 %v1393, %v8314
        %v8316 = vpop.f32.mrb[0].mxu0
        %v8317 = vpop.f32.mrb[0].mxu0
        %v8318 = vadd.f32 %v1393, %v8317
        %v8319 = vpop.f32.mrb[0].mxu0
        %8320 = vmatprep.mubr.bf16.mxu0 0
        %8321 = vmatmul.mubr.bf16.gmra.mrb[0].mxu0 %v5013
        %v8322 = vpop.f32.mrb[0].mxu0
        %v8323 = vadd.f32 %v1393, %v8322
        %v8324 = vpop.f32.mrb[0].mxu0
        %v8325 = vpop.f32.mrb[0].mxu0
        %v8326 = vadd.f32 %v1393, %v8325
        %v8327 = vpop.f32.mrb[0].mxu0
        %8328 = vmatprep.mubr.bf16.mxu0 0
        %8329 = vmatmul.mubr.bf16.gmra.mrb[0].mxu0 %v5016
        %v8330 = vpop.f32.mrb[0].mxu0
        %v8331 = vadd.f32 %v1393, %v8330
        %v8332 = vpop.f32.mrb[0].mxu0
        %v8333 = vpop.f32.mrb[0].mxu0
        %v8334 = vadd.f32 %v1393, %v8333
        %v8335 = vpop.f32.mrb[0].mxu0
        %8336 = vmatprep.mubr.bf16.mxu0 0
        %8337 = vmatmul.mubr.bf16.gmra.mrb[0].mxu0 %v5019
        %v8338 = vpop.f32.mrb[0].mxu0
        %v8339 = vadd.f32 %v1393, %v8338
        %v8340 = vpop.f32.mrb[0].mxu0
        %v8341 = vpop.f32.mrb[0].mxu0
        %v8342 = vadd.f32 %v1393, %v8341
        %v8343 = vpop.f32.mrb[0].mxu0
        %8344 = vmatprep.mubr.bf16.mxu0 0
        %8345 = vmatmul.mubr.bf16.gmra.mrb[0].mxu0 %v5022
        %v8346 = vpop.f32.mrb[0].mxu0
        %v8347 = vadd.f32 %v1393, %v8346
        %v8348 = vpop.f32.mrb[0].mxu0
        %v8349 = vpop.f32.mrb[0].mxu0
        %v8350 = vadd.f32 %v1393, %v8349
        %v8351 = vpop.f32.mrb[0].mxu0
        %8352 = vmatprep.mubr.bf16.mxu0 0
        %8353 = vmatmul.mubr.bf16.gmra.mrb[0].mxu0 %v5025
        %v8354 = vpop.f32.mrb[0].mxu0
        %v8355 = vadd.f32 %v1393, %v8354
        %v8356 = vpop.f32.mrb[0].mxu0
        %v8357 = vpop.f32.mrb[0].mxu0
        %v8358 = vadd.f32 %v1393, %v8357
        %v8359 = vpop.f32.mrb[0].mxu0
        %8360 = vmatprep.mubr.bf16.mxu0 0
        %8361 = vmatmul.mubr.bf16.gmra.mrb[0].mxu0 %v5028
        %v8362 = vpop.f32.mrb[0].mxu0
        %v8363 = vadd.f32 %v1393, %v8362
        %v8364 = vpop.f32.mrb[0].mxu0
        %v8365 = vpop.f32.mrb[0].mxu0
        %v8366 = vadd.f32 %v1393, %v8365
        %v8367 = vpop.f32.mrb[0].mxu0
        %8368 = vmatprep.mubr.bf16.mxu0 0
        %8369 = vmatmul.mubr.bf16.gmra.mrb[0].mxu0 %v5031
        %v8370 = vpop.f32.mrb[0].mxu0
        %v8371 = vadd.f32 %v1393, %v8370
        %v8372 = vpop.f32.mrb[0].mxu0
        %v8373 = vpop.f32.mrb[0].mxu0
        %v8374 = vadd.f32 %v1393, %v8373
        %v8375 = vpop.f32.mrb[0].mxu0
        %8376 = vmatprep.mubr.bf16.mxu0 0
        %8377 = vmatmul.mubr.bf16.gmra.mrb[0].mxu0 %v5034
        %v8378 = vpop.f32.mrb[0].mxu0
        %v8379 = vadd.f32 %v1393, %v8378
        %v8380 = vpop.f32.mrb[0].mxu0
        %v8381 = vpop.f32.mrb[0].mxu0
        %v8382 = vadd.f32 %v1393, %v8381
        %v8383 = vpop.f32.mrb[0].mxu0
        %8384 = vmatprep.mubr.bf16.mxu0 0
        %8385 = vmatmul.mubr.bf16.gmra.mrb[0].mxu0 %v5037
        %v8386 = vpop.f32.mrb[0].mxu0
        %v8387 = vadd.f32 %v1393, %v8386
        %v8388 = vpop.f32.mrb[0].mxu0
        %v8389 = vpop.f32.mrb[0].mxu0
        %v8390 = vadd.f32 %v1393, %v8389
        %v8391 = vpop.f32.mrb[0].mxu0
        %8392 = vmatprep.mubr.bf16.mxu0 0
        %8393 = vmatmul.mubr.bf16.gmra.mrb[0].mxu0 %v5040
        %v8394 = vpop.f32.mrb[0].mxu0
        %v8395 = vadd.f32 %v1393, %v8394
        %v8396 = vpop.f32.mrb[0].mxu0
        %v8397 = vpop.f32.mrb[0].mxu0
        %v8398 = vadd.f32 %v1393, %v8397
        %v8399 = vpop.f32.mrb[0].mxu0
        %8400 = vmatprep.mubr.bf16.mxu0 0
        %8401 = vmatmul.mubr.bf16.gmra.mrb[0].mxu0 %v5043
        %v8402 = vpop.f32.mrb[0].mxu0
        %v8403 = vadd.f32 %v1393, %v8402
        %v8404 = vpop.f32.mrb[0].mxu0
        %v8405 = vpop.f32.mrb[0].mxu0
        %v8406 = vadd.f32 %v1393, %v8405
        %v8407 = vpop.f32.mrb[0].mxu0
        %8408 = vmatprep.mubr.bf16.mxu0 0
        %8409 = vmatmul.mubr.bf16.gmra.mrb[0].mxu0 %v5046
        %v8410 = vpop.f32.mrb[0].mxu0
        %v8411 = vadd.f32 %v1393, %v8410
        %v8412 = vpop.f32.mrb[0].mxu0
        %v8413 = vpop.f32.mrb[0].mxu0
        %v8414 = vadd.f32 %v1393, %v8413
        %v8415 = vpop.f32.mrb[0].mxu0
        %8416 = vmatprep.mubr.bf16.mxu0 0
        %8417 = vmatmul.mubr.bf16.gmra.mrb[0].mxu0 %v5049
        %v8418 = vpop.f32.mrb[0].mxu0
        %v8419 = vadd.f32 %v1393, %v8418
        %v8420 = vpop.f32.mrb[0].mxu0
        %v8421 = vpop.f32.mrb[0].mxu0
        %v8422 = vadd.f32 %v1393, %v8421
        %v8423 = vpop.f32.mrb[0].mxu0
        %8424 = vmatprep.mubr.bf16.mxu0 0
        %8425 = vmatmul.mubr.bf16.gmra.mrb[0].mxu0 %v5052
        %v8426 = vpop.f32.mrb[0].mxu0
        %v8427 = vadd.f32 %v1393, %v8426
        %v8428 = vpop.f32.mrb[0].mxu0
        %v8429 = vpop.f32.mrb[0].mxu0
        %v8430 = vadd.f32 %v1393, %v8429
        %v8431 = vpop.f32.mrb[0].mxu0
        %8432 = vmatprep.mubr.bf16.mxu0 0
        %8433 = vmatmul.mubr.bf16.gmra.mrb[0].mxu0 %v5055
        %v8434 = vpop.f32.mrb[0].mxu0
        %v8435 = vadd.f32 %v1393, %v8434
        %v8436 = vpop.f32.mrb[0].mxu0
        %v8437 = vpop.f32.mrb[0].mxu0
        %v8438 = vadd.f32 %v1393, %v8437
        %v8439 = vpop.f32.mrb[0].mxu0
        %8440 = vmatprep.mubr.bf16.mxu0 0
        %8441 = vmatmul.mubr.bf16.gmra.mrb[0].mxu0 %v5058
        %v8442 = vpop.f32.mrb[0].mxu0
        %v8443 = vadd.f32 %v1393, %v8442
        %v8444 = vpop.f32.mrb[0].mxu0
        %v8445 = vpop.f32.mrb[0].mxu0
        %v8446 = vadd.f32 %v1393, %v8445
        %v8447 = vpop.f32.mrb[0].mxu0
        %8448 = vmatprep.mubr.bf16.mxu0 0
        %8449 = vmatmul.mubr.bf16.gmra.mrb[0].mxu0 %v5061
        %v8450 = vpop.f32.mrb[0].mxu0
        %v8451 = vadd.f32 %v1393, %v8450
        %v8452 = vpop.f32.mrb[0].mxu0
        %v8453 = vpop.f32.mrb[0].mxu0
        %v8454 = vadd.f32 %v1393, %v8453
        %v8455 = vpop.f32.mrb[0].mxu0
        %8456 = vmatprep.mubr.bf16.mxu0 0
        %8457 = vmatmul.mubr.bf16.gmra.mrb[0].mxu0 %v5064
        %v8458 = vpop.f32.mrb[0].mxu0
        %v8459 = vadd.f32 %v1393, %v8458
        %v8460 = vpop.f32.mrb[0].mxu0
        %v8461 = vpop.f32.mrb[0].mxu0
        %v8462 = vadd.f32 %v1393, %v8461
        %v8463 = vpop.f32.mrb[0].mxu0
        %8464 = vmatprep.mubr.bf16.mxu0 0
        %8465 = vmatmul.mubr.bf16.gmra.mrb[0].mxu0 %v5067
        %v8466 = vpop.f32.mrb[0].mxu0
        %v8467 = vadd.f32 %v1393, %v8466
        %v8468 = vpop.f32.mrb[0].mxu0
        %v8469 = vpop.f32.mrb[0].mxu0
        %v8470 = vadd.f32 %v1393, %v8469
        %v8471 = vpop.f32.mrb[0].mxu0
        %8472 = vmatprep.mubr.bf16.mxu0 0
        %8473 = vmatmul.mubr.bf16.gmra.mrb[0].mxu0 %v5070
        %v8474 = vpop.f32.mrb[0].mxu0
        %v8475 = vadd.f32 %v1393, %v8474
        %v8476 = vpop.f32.mrb[0].mxu0
        %v8477 = vpop.f32.mrb[0].mxu0
        %v8478 = vadd.f32 %v1393, %v8477
        %v8479 = vpop.f32.mrb[0].mxu0
        %8480 = vmatprep.mubr.bf16.mxu0 0
        %8481 = vmatmul.mubr.bf16.gmra.mrb[0].mxu0 %v5073
        %v8482 = vpop.f32.mrb[0].mxu0
        %v8483 = vadd.f32 %v1393, %v8482
        %v8484 = vpop.f32.mrb[0].mxu0
        %v8485 = vpop.f32.mrb[0].mxu0
        %v8486 = vadd.f32 %v1393, %v8485
        %v8487 = vpop.f32.mrb[0].mxu0
        %8488 = vmatprep.mubr.bf16.mxu0 0
        %8489 = vmatmul.mubr.bf16.gmra.mrb[0].mxu0 %v5076
        %v8490 = vpop.f32.mrb[0].mxu0
        %v8491 = vadd.f32 %v1393, %v8490
        %v8492 = vpop.f32.mrb[0].mxu0
        %v8493 = vpop.f32.mrb[0].mxu0
        %v8494 = vadd.f32 %v1393, %v8493
        %v8495 = vpop.f32.mrb[0].mxu0
        %8496 = vmatprep.mubr.bf16.mxu0 0
        %8497 = vmatmul.mubr.bf16.gmra.mrb[0].mxu0 %v5079
        %v8498 = vpop.f32.mrb[0].mxu0
        %v8499 = vadd.f32 %v1393, %v8498
        %v8500 = vpop.f32.mrb[0].mxu0
        %v8501 = vpop.f32.mrb[0].mxu0
        %v8502 = vadd.f32 %v1393, %v8501
        %v8503 = vpop.f32.mrb[0].mxu0
        %8504 = vmatprep.mubr.bf16.mxu0 0
        %8505 = vmatmul.mubr.bf16.gmra.mrb[0].mxu0 %v5082
        %v8506 = vpop.f32.mrb[0].mxu0
        %v8507 = vadd.f32 %v1393, %v8506
        %v8508 = vpop.f32.mrb[0].mxu0
        %v8509 = vpop.f32.mrb[0].mxu0
        %v8510 = vadd.f32 %v1393, %v8509
        %v8511 = vpop.f32.mrb[0].mxu0
        %8512 = vmatprep.mubr.bf16.mxu0 0
        %8513 = vmatmul.mubr.bf16.gmra.mrb[0].mxu0 %v5085
        %v8514 = vpop.f32.mrb[0].mxu0
        %v8515 = vadd.f32 %v1393, %v8514
        %v8516 = vpop.f32.mrb[0].mxu0
        %v8517 = vpop.f32.mrb[0].mxu0
        %v8518 = vadd.f32 %v1393, %v8517
        %v8519 = vpop.f32.mrb[0].mxu0
        %8520 = vmatprep.mubr.bf16.mxu0 0
        %8521 = vmatmul.mubr.bf16.gmra.mrb[0].mxu0 %v5088
        %v8522 = vpop.f32.mrb[0].mxu0
        %v8523 = vadd.f32 %v1393, %v8522
        %v8524 = vpop.f32.mrb[0].mxu0
        %v8525 = vpop.f32.mrb[0].mxu0
        %v8526 = vadd.f32 %v1393, %v8525
        %v8527 = vpop.f32.mrb[0].mxu0
        %8528 = vmatprep.mubr.bf16.mxu0 0
        %8529 = vmatmul.mubr.bf16.gmra.mrb[0].mxu0 %v5091
        %v8530 = vpop.f32.mrb[0].mxu0
        %v8531 = vadd.f32 %v1393, %v8530
        %v8532 = vpop.f32.mrb[0].mxu0
        %v8533 = vpop.f32.mrb[0].mxu0
        %v8534 = vadd.f32 %v1393, %v8533
        %v8535 = vpop.f32.mrb[0].mxu0
        %8536 = vmatprep.mubr.bf16.mxu0 0
        %8537 = vmatmul.mubr.bf16.gmra.mrb[0].mxu0 %v5094
        %v8538 = vpop.f32.mrb[0].mxu0
        %v8539 = vadd.f32 %v1393, %v8538
        %v8540 = vpop.f32.mrb[0].mxu0
        %v8541 = vpop.f32.mrb[0].mxu0
        %v8542 = vadd.f32 %v1393, %v8541
        %v8543 = vpop.f32.mrb[0].mxu0
        %8544 = vmatprep.mubr.bf16.mxu0 0
        %8545 = vmatmul.mubr.bf16.gmra.mrb[0].mxu0 %v5097
        %v8546 = vpop.f32.mrb[0].mxu0
        %v8547 = vadd.f32 %v1393, %v8546
        %v8548 = vpop.f32.mrb[0].mxu0
        %v8549 = vpop.f32.mrb[0].mxu0
        %v8550 = vadd.f32 %v1393, %v8549
        %v8551 = vpop.f32.mrb[0].mxu0
        %8552 = vmatprep.mubr.bf16.mxu0 0
        %8553 = vmatmul.mubr.bf16.gmra.mrb[0].mxu0 %v5100
        %v8554 = vpop.f32.mrb[0].mxu0
        %v8555 = vadd.f32 %v1393, %v8554
        %v8556 = vpop.f32.mrb[0].mxu0
        %v8557 = vpop.f32.mrb[0].mxu0
        %v8558 = vadd.f32 %v1393, %v8557
        %v8559 = vpop.f32.mrb[0].mxu0
        %8560 = vmatprep.mubr.bf16.mxu0 0
        %8561 = vmatmul.mubr.bf16.gmra.mrb[0].mxu0 %v5103
        %v8562 = vpop.f32.mrb[0].mxu0
        %v8563 = vadd.f32 %v1393, %v8562
        %v8564 = vpop.f32.mrb[0].mxu0
        %v8565 = vpop.f32.mrb[0].mxu0
        %v8566 = vadd.f32 %v1393, %v8565
        %v8567 = vpop.f32.mrb[0].mxu0
        %8568 = vmatprep.mubr.bf16.mxu0 0
        %8569 = vmatmul.mubr.bf16.gmra.mrb[0].mxu0 %v5106
        %v8570 = vpop.f32.mrb[0].mxu0
        %v8571 = vadd.f32 %v1393, %v8570
        %v8572 = vpop.f32.mrb[0].mxu0
        %v8573 = vpop.f32.mrb[0].mxu0
        %v8574 = vadd.f32 %v1393, %v8573
        %v8575 = vpop.f32.mrb[0].mxu0
        %8576 = vmatprep.mubr.bf16.mxu0 0
        %8577 = vmatmul.mubr.bf16.gmra.mrb[0].mxu0 %v5109
        %v8578 = vpop.f32.mrb[0].mxu0
        %v8579 = vadd.f32 %v1393, %v8578
        %v8580 = vpop.f32.mrb[0].mxu0
        %v8581 = vpop.f32.mrb[0].mxu0
        %v8582 = vadd.f32 %v1393, %v8581
        %v8583 = vpop.f32.mrb[0].mxu0
        %8584 = vmatprep.mubr.bf16.mxu0 0
        %8585 = vmatmul.mubr.bf16.gmra.mrb[0].mxu0 %v5112
        %v8586 = vpop.f32.mrb[0].mxu0
        %v8587 = vadd.f32 %v1393, %v8586
        %v8588 = vpop.f32.mrb[0].mxu0
        %v8589 = vpop.f32.mrb[0].mxu0
        %v8590 = vadd.f32 %v1393, %v8589
        %v8591 = vpop.f32.mrb[0].mxu0
        %8592 = vmatprep.mubr.bf16.mxu0 0
        %8593 = vmatmul.mubr.bf16.gmra.mrb[0].mxu0 %v5115
        %v8594 = vpop.f32.mrb[0].mxu0
        %v8595 = vadd.f32 %v1393, %v8594
        %v8596 = vpop.f32.mrb[0].mxu0
        %v8597 = vpop.f32.mrb[0].mxu0
        %v8598 = vadd.f32 %v1393, %v8597
        %v8599 = vpop.f32.mrb[0].mxu0
        %8600 = vmatprep.mubr.bf16.mxu0 0
        %8601 = vmatmul.mubr.bf16.gmra.mrb[0].mxu0 %v5118
        %v8602 = vpop.f32.mrb[0].mxu0
        %v8603 = vadd.f32 %v1393, %v8602
        %v8604 = vpop.f32.mrb[0].mxu0
        %v8605 = vpop.f32.mrb[0].mxu0
        %v8606 = vadd.f32 %v1393, %v8605
        %v8607 = vpop.f32.mrb[0].mxu0
        %8608 = vmatprep.mubr.bf16.mxu0 0
        %8609 = vmatmul.mubr.bf16.gmra.mrb[0].mxu0 %v5121
        %v8610 = vpop.f32.mrb[0].mxu0
        %v8611 = vadd.f32 %v1393, %v8610
        %v8612 = vpop.f32.mrb[0].mxu0
        %v8613 = vpop.f32.mrb[0].mxu0
        %v8614 = vadd.f32 %v1393, %v8613
        %v8615 = vpop.f32.mrb[0].mxu0
        %8616 = vmatprep.mubr.bf16.mxu0 0
        %8617 = vmatmul.mubr.bf16.gmra.mrb[0].mxu0 %v5124
        %v8618 = vpop.f32.mrb[0].mxu0
        %v8619 = vadd.f32 %v1393, %v8618
        %v8620 = vpop.f32.mrb[0].mxu0
        %v8621 = vpop.f32.mrb[0].mxu0
        %v8622 = vadd.f32 %v1393, %v8621
        %v8623 = vpop.f32.mrb[0].mxu0
        %8624 = vmatprep.mubr.bf16.mxu0 0
        %8625 = vmatmul.mubr.bf16.gmra.mrb[0].mxu0 %v5127
        %v8626 = vpop.f32.mrb[0].mxu0
        %v8627 = vadd.f32 %v1393, %v8626
        %v8628 = vpop.f32.mrb[0].mxu0
        %v8629 = vpop.f32.mrb[0].mxu0
        %v8630 = vadd.f32 %v1393, %v8629
        %v8631 = vpop.f32.mrb[0].mxu0
        %8632 = vmatprep.mubr.bf16.mxu0 0
        %8633 = vmatmul.mubr.bf16.gmra.mrb[0].mxu0 %v5130
        %v8634 = vpop.f32.mrb[0].mxu0
        %v8635 = vadd.f32 %v1393, %v8634
        %v8636 = vpop.f32.mrb[0].mxu0
        %v8637 = vpop.f32.mrb[0].mxu0
        %v8638 = vadd.f32 %v1393, %v8637
        %v8639 = vpop.f32.mrb[0].mxu0
        %8640 = vmatprep.mubr.bf16.mxu0 0
        %8641 = vmatmul.mubr.bf16.gmra.mrb[0].mxu0 %v5133
        %v8642 = vpop.f32.mrb[0].mxu0
        %v8643 = vadd.f32 %v1393, %v8642
        %v8644 = vpop.f32.mrb[0].mxu0
        %v8645 = vpop.f32.mrb[0].mxu0
        %v8646 = vadd.f32 %v1393, %v8645
        %v8647 = vpop.f32.mrb[0].mxu0
        %8648 = vmatprep.mubr.bf16.mxu0 0
        %8649 = vmatmul.mubr.bf16.gmra.mrb[0].mxu0 %v5136
        %v8650 = vpop.f32.mrb[0].mxu0
        %v8651 = vadd.f32 %v1393, %v8650
        %v8652 = vpop.f32.mrb[0].mxu0
        %v8653 = vpop.f32.mrb[0].mxu0
        %v8654 = vadd.f32 %v1393, %v8653
        %v8655 = vpop.f32.mrb[0].mxu0
        %8656 = vmatprep.mubr.bf16.mxu0 0
        %8657 = vmatmul.mubr.bf16.gmra.mrb[0].mxu0 %v5139
        %v8658 = vpop.f32.mrb[0].mxu0
        %v8659 = vadd.f32 %v1393, %v8658
        %v8660 = vpop.f32.mrb[0].mxu0
        %v8661 = vpop.f32.mrb[0].mxu0
        %v8662 = vadd.f32 %v1393, %v8661
        %v8663 = vpop.f32.mrb[0].mxu0
        %8664 = vmatprep.mubr.bf16.mxu0 0
        %8665 = vmatmul.mubr.bf16.gmra.mrb[0].mxu0 %v5142
        %v8666 = vpop.f32.mrb[0].mxu0
        %v8667 = vadd.f32 %v1393, %v8666
        %v8668 = vpop.f32.mrb[0].mxu0
        %v8669 = vpop.f32.mrb[0].mxu0
        %v8670 = vadd.f32 %v1393, %v8669
        %v8671 = vpop.f32.mrb[0].mxu0
        %8672 = vmatprep.mubr.bf16.mxu0 0
        %8673 = vmatmul.mubr.bf16.gmra.mrb[0].mxu0 %v5145
        %v8674 = vpop.f32.mrb[0].mxu0
        %v8675 = vadd.f32 %v1393, %v8674
        %v8676 = vpop.f32.mrb[0].mxu0
        %v8677 = vpop.f32.mrb[0].mxu0
        %v8678 = vadd.f32 %v1393, %v8677
        %v8679 = vpop.f32.mrb[0].mxu0
        %8680 = vmatprep.mubr.bf16.mxu0 0
        %8681 = vmatmul.mubr.bf16.gmra.mrb[0].mxu0 %v5148
        %v8682 = vpop.f32.mrb[0].mxu0
        %v8683 = vadd.f32 %v1393, %v8682
        %v8684 = vpop.f32.mrb[0].mxu0
        %v8685 = vpop.f32.mrb[0].mxu0
        %v8686 = vadd.f32 %v1393, %v8685
        %v8687 = vpop.f32.mrb[0].mxu0
        %8688 = vmatprep.mubr.bf16.mxu0 0
        %8689 = vmatmul.mubr.bf16.gmra.mrb[0].mxu0 %v5151
        %v8690 = vpop.f32.mrb[0].mxu0
        %v8691 = vadd.f32 %v1393, %v8690
        %v8692 = vpop.f32.mrb[0].mxu0
        %v8693 = vpop.f32.mrb[0].mxu0
        %v8694 = vadd.f32 %v1393, %v8693
        %v8695 = vpop.f32.mrb[0].mxu0
        %8696 = vmatprep.mubr.bf16.mxu0 0
        %8697 = vmatmul.mubr.bf16.gmra.mrb[0].mxu0 %v5154
        %v8698 = vpop.f32.mrb[0].mxu0
        %v8699 = vadd.f32 %v1393, %v8698
        %v8700 = vpop.f32.mrb[0].mxu0
        %v8701 = vpop.f32.mrb[0].mxu0
        %v8702 = vadd.f32 %v1393, %v8701
        %v8703 = vpop.f32.mrb[0].mxu0
        %8704 = vmatprep.mubr.bf16.mxu0 0
        %8705 = vmatmul.mubr.bf16.gmra.mrb[0].mxu0 %v5157
        %v8706 = vpop.f32.mrb[0].mxu0
        %v8707 = vadd.f32 %v1393, %v8706
        %v8708 = vpop.f32.mrb[0].mxu0
        %v8709 = vpop.f32.mrb[0].mxu0
        %v8710 = vadd.f32 %v1393, %v8709
        %v8711 = vpop.f32.mrb[0].mxu0
        %8712 = vmatprep.mubr.bf16.mxu0 0
        %8713 = vmatmul.mubr.bf16.gmra.mrb[0].mxu0 %v5160
        %v8714 = vpop.f32.mrb[0].mxu0
        %v8715 = vadd.f32 %v1393, %v8714
        %v8716 = vpop.f32.mrb[0].mxu0
        %v8717 = vpop.f32.mrb[0].mxu0
        %v8718 = vadd.f32 %v1393, %v8717
        %v8719 = vpop.f32.mrb[0].mxu0
        %8720 = vmatprep.mubr.bf16.mxu0 0
        %8721 = vmatmul.mubr.bf16.gmra.mrb[0].mxu0 %v5163
        %v8722 = vpop.f32.mrb[0].mxu0
        %v8723 = vadd.f32 %v1393, %v8722
        %v8724 = vpop.f32.mrb[0].mxu0
        %v8725 = vpop.f32.mrb[0].mxu0
        %v8726 = vadd.f32 %v1393, %v8725
        %v8727 = vpop.f32.mrb[0].mxu0
        %8728 = vmatprep.mubr.bf16.mxu0 0
        %8729 = vmatmul.mubr.bf16.gmra.mrb[0].mxu0 %v5166
        %v8730 = vpop.f32.mrb[0].mxu0
        %v8731 = vadd.f32 %v1393, %v8730
        %v8732 = vpop.f32.mrb[0].mxu0
        %v8733 = vpop.f32.mrb[0].mxu0
        %v8734 = vadd.f32 %v1393, %v8733
        %v8735 = vpop.f32.mrb[0].mxu0
        %8736 = vmatprep.mubr.bf16.mxu0 0
        %8737 = vmatmul.mubr.bf16.gmra.mrb[0].mxu0 %v5169
        %v8738 = vpop.f32.mrb[0].mxu0
        %v8739 = vadd.f32 %v1393, %v8738
        %v8740 = vpop.f32.mrb[0].mxu0
        %v8741 = vpop.f32.mrb[0].mxu0
        %v8742 = vadd.f32 %v1393, %v8741
        %v8743 = vpop.f32.mrb[0].mxu0
        %8744 = vmatprep.mubr.bf16.mxu0 0
        %8745 = vmatmul.mubr.bf16.gmra.mrb[0].mxu0 %v5172
        %v8746 = vpop.f32.mrb[0].mxu0
        %v8747 = vadd.f32 %v1393, %v8746
        %v8748 = vpop.f32.mrb[0].mxu0
        %v8749 = vpop.f32.mrb[0].mxu0
        %v8750 = vadd.f32 %v1393, %v8749
        %v8751 = vpop.f32.mrb[0].mxu0
        %8752 = vmatprep.mubr.bf16.mxu0 0
        %8753 = vmatmul.mubr.bf16.gmra.mrb[0].mxu0 %v5175
        %v8754 = vpop.f32.mrb[0].mxu0
        %v8755 = vadd.f32 %v1393, %v8754
        %v8756 = vpop.f32.mrb[0].mxu0
        %v8757 = vpop.f32.mrb[0].mxu0
        %v8758 = vadd.f32 %v1393, %v8757
        %v8759 = vpop.f32.mrb[0].mxu0
        %8760 = vmatprep.mubr.bf16.mxu0 0
        %8761 = vmatmul.mubr.bf16.gmra.mrb[0].mxu0 %v5178
        %v8762 = vpop.f32.mrb[0].mxu0
        %v8763 = vadd.f32 %v1393, %v8762
        %v8764 = vpop.f32.mrb[0].mxu0
        %v8765 = vpop.f32.mrb[0].mxu0
        %v8766 = vadd.f32 %v1393, %v8765
        %v8767 = vpop.f32.mrb[0].mxu0
        %8768 = vmatprep.mubr.bf16.mxu0 0
        %8769 = vmatmul.mubr.bf16.gmra.mrb[0].mxu0 %v5181
        %v8770 = vpop.f32.mrb[0].mxu0
        %v8771 = vadd.f32 %v1393, %v8770
        %v8772 = vpop.f32.mrb[0].mxu0
        %v8773 = vpop.f32.mrb[0].mxu0
        %v8774 = vadd.f32 %v1393, %v8773
        %v8775 = vpop.f32.mrb[0].mxu0
        %8776 = vmatprep.mubr.bf16.mxu0 0
        %8777 = vmatmul.mubr.bf16.gmra.mrb[0].mxu0 %v5184
        %v8778 = vpop.f32.mrb[0].mxu0
        %v8779 = vadd.f32 %v1393, %v8778
        %v8780 = vpop.f32.mrb[0].mxu0
        %v8781 = vpop.f32.mrb[0].mxu0
        %v8782 = vadd.f32 %v1393, %v8781
        %v8783 = vpop.f32.mrb[0].mxu0
        %8784 = vmatprep.mubr.bf16.mxu0 0
        %8785 = vmatmul.mubr.bf16.gmra.mrb[0].mxu0 %v5187
        %v8786 = vpop.f32.mrb[0].mxu0
        %v8787 = vadd.f32 %v1393, %v8786
        %v8788 = vpop.f32.mrb[0].mxu0
        %v8789 = vpop.f32.mrb[0].mxu0
        %v8790 = vadd.f32 %v1393, %v8789
        %v8791 = vpop.f32.mrb[0].mxu0
        %8792 = vmatprep.mubr.bf16.mxu0 0
        %8793 = vmatmul.mubr.bf16.gmra.mrb[0].mxu0 %v5190
        %v8794 = vpop.f32.mrb[0].mxu0
        %v8795 = vadd.f32 %v1393, %v8794
        %v8796 = vpop.f32.mrb[0].mxu0
        %v8797 = vpop.f32.mrb[0].mxu0
        %v8798 = vadd.f32 %v1393, %v8797
        %v8799 = vpop.f32.mrb[0].mxu0
        %8800 = vmatprep.mubr.bf16.mxu0 0
        %8801 = vmatmul.mubr.bf16.gmra.mrb[0].mxu0 %v5193
        %v8802 = vpop.f32.mrb[0].mxu0
        %v8803 = vadd.f32 %v1393, %v8802
        %v8804 = vpop.f32.mrb[0].mxu0
        %v8805 = vpop.f32.mrb[0].mxu0
        %v8806 = vadd.f32 %v1393, %v8805
        %v8807 = vpop.f32.mrb[0].mxu0
        %8808 = vmatprep.mubr.bf16.mxu0 0
        %8809 = vmatmul.mubr.bf16.gmra.mrb[0].mxu0 %v5196
        %v8810 = vpop.f32.mrb[0].mxu0
        %v8811 = vadd.f32 %v1393, %v8810
        %v8812 = vpop.f32.mrb[0].mxu0
        %v8813 = vpop.f32.mrb[0].mxu0
        %v8814 = vadd.f32 %v1393, %v8813
        %v8815 = vpop.f32.mrb[0].mxu0
        %8816 = vmatprep.mubr.bf16.mxu0 0
        %8817 = vmatmul.mubr.bf16.gmra.mrb[0].mxu0 %v5199
        %v8818 = vpop.f32.mrb[0].mxu0
        %v8819 = vadd.f32 %v1393, %v8818
        %v8820 = vpop.f32.mrb[0].mxu0
        %v8821 = vpop.f32.mrb[0].mxu0
        %v8822 = vadd.f32 %v1393, %v8821
        %v8823 = vpop.f32.mrb[0].mxu0
        %8824 = vmatprep.mubr.bf16.mxu0 0
        %8825 = vmatmul.mubr.bf16.gmra.mrb[0].mxu0 %v5202
        %v8826 = vpop.f32.mrb[0].mxu0
        %v8827 = vadd.f32 %v1393, %v8826
        %v8828 = vpop.f32.mrb[0].mxu0
        %v8829 = vpop.f32.mrb[0].mxu0
        %v8830 = vadd.f32 %v1393, %v8829
        %v8831 = vpop.f32.mrb[0].mxu0
        %8832 = vmatprep.mubr.bf16.mxu0 0
        %8833 = vmatmul.mubr.bf16.gmra.mrb[0].mxu0 %v5205
        %v8834 = vpop.f32.mrb[0].mxu0
        %v8835 = vadd.f32 %v1393, %v8834
        %v8836 = vpop.f32.mrb[0].mxu0
        %v8837 = vpop.f32.mrb[0].mxu0
        %v8838 = vadd.f32 %v1393, %v8837
        %v8839 = vpop.f32.mrb[0].mxu0
        %8840 = vmatprep.mubr.bf16.mxu0 0
        %8841 = vmatmul.mubr.bf16.gmra.mrb[0].mxu0 %v5208
        %v8842 = vpop.f32.mrb[0].mxu0
        %v8843 = vadd.f32 %v1393, %v8842
        %v8844 = vpop.f32.mrb[0].mxu0
        %v8845 = vpop.f32.mrb[0].mxu0
        %v8846 = vadd.f32 %v1393, %v8845
        %v8847 = vpop.f32.mrb[0].mxu0
        %8848 = vmatprep.mubr.bf16.mxu0 0
        %8849 = vmatmul.mubr.bf16.gmra.mrb[0].mxu0 %v5211
        %v8850 = vpop.f32.mrb[0].mxu0
        %v8851 = vadd.f32 %v1393, %v8850
        %v8852 = vpop.f32.mrb[0].mxu0
        %v8853 = vpop.f32.mrb[0].mxu0
        %v8854 = vadd.f32 %v1393, %v8853
        %v8855 = vpop.f32.mrb[0].mxu0
        %8856 = vmatprep.mubr.bf16.mxu0 0
        %8857 = vmatmul.mubr.bf16.gmra.mrb[0].mxu0 %v5214
        %v8858 = vpop.f32.mrb[0].mxu0
        %v8859 = vadd.f32 %v1393, %v8858
        %v8860 = vpop.f32.mrb[0].mxu0
        %v8861 = vpop.f32.mrb[0].mxu0
        %v8862 = vadd.f32 %v1393, %v8861
        %v8863 = vpop.f32.mrb[0].mxu0
        %8864 = vmatprep.mubr.bf16.mxu0 0
        %8865 = vmatmul.mubr.bf16.gmra.mrb[0].mxu0 %v5217
        %v8866 = vpop.f32.mrb[0].mxu0
        %v8867 = vadd.f32 %v1393, %v8866
        %v8868 = vpop.f32.mrb[0].mxu0
        %v8869 = vpop.f32.mrb[0].mxu0
        %v8870 = vadd.f32 %v1393, %v8869
        %v8871 = vpop.f32.mrb[0].mxu0
        %8872 = vmatprep.mubr.bf16.mxu0 0
        %8873 = vmatmul.mubr.bf16.gmra.mrb[0].mxu0 %v5220
        %v8874 = vpop.f32.mrb[0].mxu0
        %v8875 = vadd.f32 %v1393, %v8874
        %v8876 = vpop.f32.mrb[0].mxu0
        %v8877 = vpop.f32.mrb[0].mxu0
        %v8878 = vadd.f32 %v1393, %v8877
        %v8879 = vpop.f32.mrb[0].mxu0
        %8880 = vmatprep.mubr.bf16.mxu0 0
        %8881 = vmatmul.mubr.bf16.gmra.mrb[0].mxu0 %v5223
        %v8882 = vpop.f32.mrb[0].mxu0
        %v8883 = vadd.f32 %v1393, %v8882
        %v8884 = vpop.f32.mrb[0].mxu0
        %v8885 = vpop.f32.mrb[0].mxu0
        %v8886 = vadd.f32 %v1393, %v8885
        %v8887 = vpop.f32.mrb[0].mxu0
        %8888 = vmatprep.mubr.bf16.mxu0 0
        %8889 = vmatmul.mubr.bf16.gmra.mrb[0].mxu0 %v5226
        %v8890 = vpop.f32.mrb[0].mxu0
        %v8891 = vadd.f32 %v1393, %v8890
        %v8892 = vpop.f32.mrb[0].mxu0
        %v8893 = vpop.f32.mrb[0].mxu0
        %v8894 = vadd.f32 %v1393, %v8893
        %v8895 = vpop.f32.mrb[0].mxu0
        %8896 = vmatprep.mubr.bf16.mxu0 0
        %8897 = vmatmul.mubr.bf16.gmra.mrb[0].mxu0 %v5229
        %v8898 = vpop.f32.mrb[0].mxu0
        %v8899 = vadd.f32 %v1393, %v8898
        %v8900 = vpop.f32.mrb[0].mxu0
        %v8901 = vpop.f32.mrb[0].mxu0
        %v8902 = vadd.f32 %v1393, %v8901
        %v8903 = vpop.f32.mrb[0].mxu0
        %8904 = vmatprep.mubr.bf16.mxu0 0
        %8905 = vmatmul.mubr.bf16.gmra.mrb[0].mxu0 %v5232
        %v8906 = vpop.f32.mrb[0].mxu0
        %v8907 = vadd.f32 %v1393, %v8906
        %v8908 = vpop.f32.mrb[0].mxu0
        %v8909 = vpop.f32.mrb[0].mxu0
        %v8910 = vadd.f32 %v1393, %v8909
        %v8911 = vpop.f32.mrb[0].mxu0
        %8912 = vmatprep.mubr.bf16.mxu0 0
        %8913 = vmatmul.mubr.bf16.gmra.mrb[0].mxu0 %v5235
        %v8914 = vpop.f32.mrb[0].mxu0
        %v8915 = vadd.f32 %v1393, %v8914
        %v8916 = vpop.f32.mrb[0].mxu0
        %v8917 = vpop.f32.mrb[0].mxu0
        %v8918 = vadd.f32 %v1393, %v8917
        %v8919 = vpop.f32.mrb[0].mxu0
        %8920 = vmatprep.mubr.bf16.mxu0 0
        %8921 = vmatmul.mubr.bf16.gmra.mrb[0].mxu0 %v5238
        %v8922 = vpop.f32.mrb[0].mxu0
        %v8923 = vadd.f32 %v1393, %v8922
        %v8924 = vpop.f32.mrb[0].mxu0
        %v8925 = vpop.f32.mrb[0].mxu0
        %v8926 = vadd.f32 %v1393, %v8925
        %v8927 = vpop.f32.mrb[0].mxu0
        %8928 = vmatprep.mubr.bf16.mxu0 0
        %8929 = vmatmul.mubr.bf16.gmra.mrb[0].mxu0 %v5241
        %v8930 = vpop.f32.mrb[0].mxu0
        %v8931 = vadd.f32 %v1393, %v8930
        %v8932 = vpop.f32.mrb[0].mxu0
        %v8933 = vpop.f32.mrb[0].mxu0
        %v8934 = vadd.f32 %v1393, %v8933
        %v8935 = vpop.f32.mrb[0].mxu0
        %8936 = vmatprep.mubr.bf16.mxu0 0
        %8937 = vmatmul.mubr.bf16.gmra.mrb[0].mxu0 %v5244
        %v8938 = vpop.f32.mrb[0].mxu0
        %v8939 = vadd.f32 %v1393, %v8938
        %v8940 = vpop.f32.mrb[0].mxu0
        %v8941 = vpop.f32.mrb[0].mxu0
        %v8942 = vadd.f32 %v1393, %v8941
        %v8943 = vpop.f32.mrb[0].mxu0
        %8944 = vmatprep.mubr.bf16.mxu0 0
        %8945 = vmatmul.mubr.bf16.gmra.mrb[0].mxu0 %v5247
        %v8946 = vpop.f32.mrb[0].mxu0
        %v8947 = vadd.f32 %v1393, %v8946
        %v8948 = vpop.f32.mrb[0].mxu0
        %v8949 = vpop.f32.mrb[0].mxu0
        %v8950 = vadd.f32 %v1393, %v8949
        %v8951 = vpop.f32.mrb[0].mxu0
        %8952 = vmatprep.mubr.bf16.mxu0 0
        %8953 = vmatmul.mubr.bf16.gmra.mrb[0].mxu0 %v5250
        %v8954 = vpop.f32.mrb[0].mxu0
        %v8955 = vadd.f32 %v1393, %v8954
        %v8956 = vpop.f32.mrb[0].mxu0
        %v8957 = vpop.f32.mrb[0].mxu0
        %v8958 = vadd.f32 %v1393, %v8957
        %v8959 = vpop.f32.mrb[0].mxu0
        %8960 = vmatprep.mubr.bf16.mxu0 0
        %8961 = vmatmul.mubr.bf16.gmra.mrb[0].mxu0 %v5253
        %v8962 = vpop.f32.mrb[0].mxu0
        %v8963 = vadd.f32 %v1393, %v8962
        %v8964 = vpop.f32.mrb[0].mxu0
        %v8965 = vpop.f32.mrb[0].mxu0
        %v8966 = vadd.f32 %v1393, %v8965
        %v8967 = vpop.f32.mrb[0].mxu0
        %8968 = vmatprep.mubr.bf16.mxu0 0
        %8969 = vmatmul.mubr.bf16.gmra.mrb[0].mxu0 %v5256
        %v8970 = vpop.f32.mrb[0].mxu0
        %v8971 = vadd.f32 %v1393, %v8970
        %v8972 = vpop.f32.mrb[0].mxu0
        %v8973 = vpop.f32.mrb[0].mxu0
        %v8974 = vadd.f32 %v1393, %v8973
        %v8975 = vpop.f32.mrb[0].mxu0
        %8976 = vmatprep.mubr.bf16.mxu0 0
        %8977 = vmatmul.mubr.bf16.gmra.mrb[0].mxu0 %v5259
        %v8978 = vpop.f32.mrb[0].mxu0
        %v8979 = vadd.f32 %v1393, %v8978
        %v8980 = vpop.f32.mrb[0].mxu0
        %v8981 = vpop.f32.mrb[0].mxu0
        %v8982 = vadd.f32 %v1393, %v8981
        %v8983 = vpop.f32.mrb[0].mxu0
        %8984 = vmatprep.mubr.bf16.mxu0 0
        %8985 = vmatmul.mubr.bf16.gmra.mrb[0].mxu0 %v5262
        %v8986 = vpop.f32.mrb[0].mxu0
        %v8987 = vadd.f32 %v1393, %v8986
        %v8988 = vpop.f32.mrb[0].mxu0
        %v8989 = vpop.f32.mrb[0].mxu0
        %v8990 = vadd.f32 %v1393, %v8989
        %v8991 = vpop.f32.mrb[0].mxu0
        %8992 = vmatprep.mubr.bf16.mxu0 0
        %8993 = vmatmul.mubr.bf16.gmra.mrb[0].mxu0 %v5265
        %v8994 = vpop.f32.mrb[0].mxu0
        %v8995 = vadd.f32 %v1393, %v8994
        %v8996 = vpop.f32.mrb[0].mxu0
        %v8997 = vpop.f32.mrb[0].mxu0
        %v8998 = vadd.f32 %v1393, %v8997
        %v8999 = vpop.f32.mrb[0].mxu0
        %9000 = vmatprep.mubr.bf16.mxu0 0
        %9001 = vmatmul.mubr.bf16.gmra.mrb[0].mxu0 %v5268
        %v9002 = vpop.f32.mrb[0].mxu0
        %v9003 = vadd.f32 %v1393, %v9002
        %v9004 = vpop.f32.mrb[0].mxu0
        %v9005 = vpop.f32.mrb[0].mxu0
        %v9006 = vadd.f32 %v1393, %v9005
        %v9007 = vpop.f32.mrb[0].mxu0
        %9008 = vmatprep.mubr.bf16.mxu0 0
        %9009 = vmatmul.mubr.bf16.gmra.mrb[0].mxu0 %v5271
        %v9010 = vpop.f32.mrb[0].mxu0
        %v9011 = vadd.f32 %v1393, %v9010
        %v9012 = vpop.f32.mrb[0].mxu0
        %v9013 = vpop.f32.mrb[0].mxu0
        %v9014 = vadd.f32 %v1393, %v9013
        %v9015 = vpop.f32.mrb[0].mxu0
        %9016 = vmatprep.mubr.bf16.mxu0 0
        %9017 = vmatmul.mubr.bf16.gmra.mrb[0].mxu0 %v5274
        %v9018 = vpop.f32.mrb[0].mxu0
        %v9019 = vadd.f32 %v1393, %v9018
        %v9020 = vpop.f32.mrb[0].mxu0
        %v9021 = vpop.f32.mrb[0].mxu0
        %v9022 = vadd.f32 %v1393, %v9021
        %v9023 = vpop.f32.mrb[0].mxu0
        %9024 = vmatprep.mubr.bf16.mxu0 0
        %9025 = vmatmul.mubr.bf16.gmra.mrb[0].mxu0 %v5277
        %v9026 = vpop.f32.mrb[0].mxu0
        %v9027 = vadd.f32 %v1393, %v9026
        %v9028 = vpop.f32.mrb[0].mxu0
        %v9029 = vpop.f32.mrb[0].mxu0
        %v9030 = vadd.f32 %v1393, %v9029
        %v9031 = vpop.f32.mrb[0].mxu0
        %9032 = vmatprep.mubr.bf16.mxu0 0
        %9033 = vmatmul.mubr.bf16.gmra.mrb[0].mxu0 %v5280
        %v9034 = vpop.f32.mrb[0].mxu0
        %v9035 = vadd.f32 %v1393, %v9034
        %v9036 = vpop.f32.mrb[0].mxu0
        %v9037 = vpop.f32.mrb[0].mxu0
        %v9038 = vadd.f32 %v1393, %v9037
        %v9039 = vpop.f32.mrb[0].mxu0
        %9040 = vmatprep.mubr.bf16.mxu0 0
        %9041 = vmatmul.mubr.bf16.gmra.mrb[0].mxu0 %v5283
        %v9042 = vpop.f32.mrb[0].mxu0
        %v9043 = vadd.f32 %v1393, %v9042
        %v9044 = vpop.f32.mrb[0].mxu0
        %v9045 = vpop.f32.mrb[0].mxu0
        %v9046 = vadd.f32 %v1393, %v9045
        %v9047 = vpop.f32.mrb[0].mxu0
        %9048 = vmatprep.mubr.bf16.mxu0 0
        %9049 = vmatmul.mubr.bf16.gmra.mrb[0].mxu0 %v5286
        %v9050 = vpop.f32.mrb[0].mxu0
        %v9051 = vadd.f32 %v1393, %v9050
        %v9052 = vpop.f32.mrb[0].mxu0
        %v9053 = vpop.f32.mrb[0].mxu0
        %v9054 = vadd.f32 %v1393, %v9053
        %v9055 = vpop.f32.mrb[0].mxu0
        %9056 = vmatprep.mubr.bf16.mxu0 0
        %9057 = vmatmul.mubr.bf16.gmra.mrb[0].mxu0 %v5289
        %v9058 = vpop.f32.mrb[0].mxu0
        %v9059 = vadd.f32 %v1393, %v9058
        %v9060 = vpop.f32.mrb[0].mxu0
        %v9061 = vpop.f32.mrb[0].mxu0
        %v9062 = vadd.f32 %v1393, %v9061
        %v9063 = vpop.f32.mrb[0].mxu0
        %9064 = vmatprep.mubr.bf16.mxu0 0
        %9065 = vmatmul.mubr.bf16.gmra.mrb[0].mxu0 %v5292
        %v9066 = vpop.f32.mrb[0].mxu0
        %v9067 = vadd.f32 %v1393, %v9066
        %v9068 = vpop.f32.mrb[0].mxu0
        %v9069 = vpop.f32.mrb[0].mxu0
        %v9070 = vadd.f32 %v1393, %v9069
        %v9071 = vpop.f32.mrb[0].mxu0
        %9072 = vmatprep.mubr.bf16.mxu0 0
        %9073 = vmatmul.mubr.bf16.gmra.mrb[0].mxu0 %v5295
        %v9074 = vpop.f32.mrb[0].mxu0
        %v9075 = vadd.f32 %v1393, %v9074
        %v9076 = vpop.f32.mrb[0].mxu0
        %v9077 = vpop.f32.mrb[0].mxu0
        %v9078 = vadd.f32 %v1393, %v9077
        %v9079 = vpop.f32.mrb[0].mxu0
        %9080 = vmatprep.mubr.bf16.mxu0 0
        %9081 = vmatmul.mubr.bf16.gmra.mrb[0].mxu0 %v5298
        %v9082 = vpop.f32.mrb[0].mxu0
        %v9083 = vadd.f32 %v1393, %v9082
        %v9084 = vpop.f32.mrb[0].mxu0
        %v9085 = vpop.f32.mrb[0].mxu0
        %v9086 = vadd.f32 %v1393, %v9085
        %v9087 = vpop.f32.mrb[0].mxu0
        %9088 = vmatprep.mubr.bf16.mxu0 0
        %9089 = vmatmul.mubr.bf16.gmra.mrb[0].mxu0 %v5301
        %v9090 = vpop.f32.mrb[0].mxu0
        %v9091 = vadd.f32 %v1393, %v9090
        %v9092 = vpop.f32.mrb[0].mxu0
        %v9093 = vpop.f32.mrb[0].mxu0
        %v9094 = vadd.f32 %v1393, %v9093
        %v9095 = vpop.f32.mrb[0].mxu0
        %9096 = vmatprep.mubr.bf16.mxu0 0
        %9097 = vmatmul.mubr.bf16.gmra.mrb[0].mxu0 %v5304
        %v9098 = vpop.f32.mrb[0].mxu0
        %v9099 = vadd.f32 %v1393, %v9098
        %v9100 = vpop.f32.mrb[0].mxu0
        %v9101 = vpop.f32.mrb[0].mxu0
        %v9102 = vadd.f32 %v1393, %v9101
        %v9103 = vpop.f32.mrb[0].mxu0
        %9104 = vmatprep.mubr.bf16.mxu0 0
        %9105 = vmatmul.mubr.bf16.gmra.mrb[0].mxu0 %v5307
        %v9106 = vpop.f32.mrb[0].mxu0
        %v9107 = vadd.f32 %v1393, %v9106
        %v9108 = vpop.f32.mrb[0].mxu0
        %v9109 = vpop.f32.mrb[0].mxu0
        %v9110 = vadd.f32 %v1393, %v9109
        %v9111 = vpop.f32.mrb[0].mxu0
        %9112 = vmatprep.mubr.bf16.mxu0 0
        %9113 = vmatmul.mubr.bf16.gmra.mrb[0].mxu0 %v5310
        %v9114 = vpop.f32.mrb[0].mxu0
        %v9115 = vadd.f32 %v1393, %v9114
        %v9116 = vpop.f32.mrb[0].mxu0
        %v9117 = vpop.f32.mrb[0].mxu0
        %v9118 = vadd.f32 %v1393, %v9117
        %v9119 = vpop.f32.mrb[0].mxu0
        %9120 = vmatprep.mubr.bf16.mxu0 0
        %9121 = vmatmul.mubr.bf16.gmra.mrb[0].mxu0 %v5313
        %v9122 = vpop.f32.mrb[0].mxu0
        %v9123 = vadd.f32 %v1393, %v9122
        %v9124 = vpop.f32.mrb[0].mxu0
        %v9125 = vpop.f32.mrb[0].mxu0
        %v9126 = vadd.f32 %v1393, %v9125
        %v9127 = vpop.f32.mrb[0].mxu0
        %9128 = vmatprep.mubr.bf16.mxu0 0
        %9129 = vmatmul.mubr.bf16.gmra.mrb[0].mxu0 %v5316
        %v9130 = vpop.f32.mrb[0].mxu0
        %v9131 = vadd.f32 %v1393, %v9130
        %v9132 = vpop.f32.mrb[0].mxu0
        %v9133 = vpop.f32.mrb[0].mxu0
        %v9134 = vadd.f32 %v1393, %v9133
        %v9135 = vpop.f32.mrb[0].mxu0
        %9136 = vmatprep.mubr.bf16.mxu0 0
        %9137 = vmatmul.mubr.bf16.gmra.mrb[0].mxu0 %v5319
        %v9138 = vpop.f32.mrb[0].mxu0
        %v9139 = vadd.f32 %v1393, %v9138
        %v9140 = vpop.f32.mrb[0].mxu0
        %v9141 = vpop.f32.mrb[0].mxu0
        %v9142 = vadd.f32 %v1393, %v9141
        %v9143 = vpop.f32.mrb[0].mxu0
        %9144 = vmatprep.mubr.bf16.mxu0 0
        %9145 = vmatmul.mubr.bf16.gmra.mrb[0].mxu0 %v5322
        %v9146 = vpop.f32.mrb[0].mxu0
        %v9147 = vadd.f32 %v1393, %v9146
        %v9148 = vpop.f32.mrb[0].mxu0
        %v9149 = vpop.f32.mrb[0].mxu0
        %v9150 = vadd.f32 %v1393, %v9149
        %v9151 = vpop.f32.mrb[0].mxu0
        %9152 = vmatprep.mubr.bf16.mxu0 0
        %9153 = vmatmul.mubr.bf16.gmra.mrb[0].mxu0 %v5325
        %v9154 = vpop.f32.mrb[0].mxu0
        %v9155 = vadd.f32 %v1393, %v9154
        %v9156 = vpop.f32.mrb[0].mxu0
        %v9157 = vpop.f32.mrb[0].mxu0
        %v9158 = vadd.f32 %v1393, %v9157
        %v9159 = vpop.f32.mrb[0].mxu0
        %9160 = vmatprep.mubr.bf16.mxu0 0
        %9161 = vmatmul.mubr.bf16.gmra.mrb[0].mxu0 %v5328
        %v9162 = vpop.f32.mrb[0].mxu0
        %v9163 = vadd.f32 %v1393, %v9162
        %v9164 = vpop.f32.mrb[0].mxu0
        %v9165 = vpop.f32.mrb[0].mxu0
        %v9166 = vadd.f32 %v1393, %v9165
        %v9167 = vpop.f32.mrb[0].mxu0
        %9168 = vmatprep.mubr.bf16.mxu0 0
        %9169 = vmatmul.mubr.bf16.gmra.mrb[0].mxu0 %v5331
        %v9170 = vpop.f32.mrb[0].mxu0
        %v9171 = vadd.f32 %v1393, %v9170
        %v9172 = vpop.f32.mrb[0].mxu0
        %v9173 = vpop.f32.mrb[0].mxu0
        %v9174 = vadd.f32 %v1393, %v9173
        %v9175 = vpop.f32.mrb[0].mxu0
        %9176 = vmatprep.mubr.bf16.mxu0 0
        %9177 = vmatmul.mubr.bf16.gmra.mrb[0].mxu0 %v5334
        %v9178 = vpop.f32.mrb[0].mxu0
        %v9179 = vadd.f32 %v1393, %v9178
        %v9180 = vpop.f32.mrb[0].mxu0
        %v9181 = vpop.f32.mrb[0].mxu0
        %v9182 = vadd.f32 %v1393, %v9181
        %v9183 = vpop.f32.mrb[0].mxu0
        %9184 = vmatprep.mubr.bf16.mxu0 0
        %9185 = vmatmul.mubr.bf16.gmra.mrb[0].mxu0 %v5337
        %v9186 = vpop.f32.mrb[0].mxu0
        %v9187 = vadd.f32 %v1393, %v9186
        %v9188 = vpop.f32.mrb[0].mxu0
        %v9189 = vpop.f32.mrb[0].mxu0
        %v9190 = vadd.f32 %v1393, %v9189
        %v9191 = vpop.f32.mrb[0].mxu0
        %9192 = vmatprep.mubr.bf16.mxu0 0
        %9193 = vmatmul.mubr.bf16.gmra.mrb[0].mxu0 %v5340
        %v9194 = vpop.f32.mrb[0].mxu0
        %v9195 = vadd.f32 %v1393, %v9194
        %v9196 = vpop.f32.mrb[0].mxu0
        %v9197 = vpop.f32.mrb[0].mxu0
        %v9198 = vadd.f32 %v1393, %v9197
        %v9199 = vpop.f32.mrb[0].mxu0
        %9200 = vmatprep.mubr.bf16.mxu0 0
        %9201 = vmatmul.mubr.bf16.gmra.mrb[0].mxu0 %v5343
        %v9202 = vpop.f32.mrb[0].mxu0
        %v9203 = vadd.f32 %v1393, %v9202
        %v9204 = vpop.f32.mrb[0].mxu0
        %v9205 = vpop.f32.mrb[0].mxu0
        %v9206 = vadd.f32 %v1393, %v9205
        %v9207 = vpop.f32.mrb[0].mxu0
        %9208 = vmatprep.mubr.bf16.mxu0 0
        %9209 = vmatmul.mubr.bf16.gmra.mrb[0].mxu0 %v5346
        %v9210 = vpop.f32.mrb[0].mxu0
        %v9211 = vadd.f32 %v1393, %v9210
        %v9212 = vpop.f32.mrb[0].mxu0
        %v9213 = vpop.f32.mrb[0].mxu0
        %v9214 = vadd.f32 %v1393, %v9213
        %v9215 = vpop.f32.mrb[0].mxu0
        %9216 = vmatprep.mubr.bf16.mxu0 0
        %9217 = vmatmul.mubr.bf16.gmra.mrb[0].mxu0 %v5349
        %v9218 = vpop.f32.mrb[0].mxu0
        %v9219 = vadd.f32 %v1393, %v9218
        %v9220 = vpop.f32.mrb[0].mxu0
        %v9221 = vpop.f32.mrb[0].mxu0
        %v9222 = vadd.f32 %v1393, %v9221
        %v9223 = vpop.f32.mrb[0].mxu0
        %9224 = vmatprep.mubr.bf16.mxu0 0
        %9225 = vmatmul.mubr.bf16.gmra.mrb[0].mxu0 %v5352
        %v9226 = vpop.f32.mrb[0].mxu0
        %v9227 = vadd.f32 %v1393, %v9226
        %v9228 = vpop.f32.mrb[0].mxu0
        %v9229 = vpop.f32.mrb[0].mxu0
        %v9230 = vadd.f32 %v1393, %v9229
        %v9231 = vpop.f32.mrb[0].mxu0
        %9232 = vmatprep.mubr.bf16.mxu0 0
        %9233 = vmatmul.mubr.bf16.gmra.mrb[0].mxu0 %v5355
        %v9234 = vpop.f32.mrb[0].mxu0
        %v9235 = vadd.f32 %v1393, %v9234
        %v9236 = vpop.f32.mrb[0].mxu0
        %v9237 = vpop.f32.mrb[0].mxu0
        %v9238 = vadd.f32 %v1393, %v9237
        %v9239 = vpop.f32.mrb[0].mxu0
        %9240 = vmatprep.mubr.bf16.mxu0 0
        %9241 = vmatmul.mubr.bf16.gmra.mrb[0].mxu0 %v5358
        %v9242 = vpop.f32.mrb[0].mxu0
        %v9243 = vadd.f32 %v1393, %v9242
        %v9244 = vpop.f32.mrb[0].mxu0
        %v9245 = vpop.f32.mrb[0].mxu0
        %v9246 = vadd.f32 %v1393, %v9245
        %v9247 = vpop.f32.mrb[0].mxu0
        %9248 = vmatprep.mubr.bf16.mxu0 0
        %9249 = vmatmul.mubr.bf16.gmra.mrb[0].mxu0 %v5361
        %v9250 = vpop.f32.mrb[0].mxu0
        %v9251 = vadd.f32 %v1393, %v9250
        %v9252 = vpop.f32.mrb[0].mxu0
        %v9253 = vpop.f32.mrb[0].mxu0
        %v9254 = vadd.f32 %v1393, %v9253
        %v9255 = vpop.f32.mrb[0].mxu0
        %9256 = vmatprep.mubr.bf16.mxu0 0
        %9257 = vmatmul.mubr.bf16.gmra.mrb[0].mxu0 %v5364
        %v9258 = vpop.f32.mrb[0].mxu0
        %v9259 = vadd.f32 %v1393, %v9258
        %v9260 = vpop.f32.mrb[0].mxu0
        %v9261 = vpop.f32.mrb[0].mxu0
        %v9262 = vadd.f32 %v1393, %v9261
        %v9263 = vpop.f32.mrb[0].mxu0
        %9264 = vmatprep.mubr.bf16.mxu0 0
        %9265 = vmatmul.mubr.bf16.gmra.mrb[0].mxu0 %v5367
        %v9266 = vpop.f32.mrb[0].mxu0
        %v9267 = vadd.f32 %v1393, %v9266
        %v9268 = vpop.f32.mrb[0].mxu0
        %v9269 = vpop.f32.mrb[0].mxu0
        %v9270 = vadd.f32 %v1393, %v9269
        %v9271 = vpop.f32.mrb[0].mxu0
        %9272 = vmatprep.mubr.bf16.mxu0 0
        %9273 = vmatmul.mubr.bf16.gmra.mrb[0].mxu0 %v5370
        %v9274 = vpop.f32.mrb[0].mxu0
        %v9275 = vadd.f32 %v1393, %v9274
        %v9276 = vpop.f32.mrb[0].mxu0
        %v9277 = vpop.f32.mrb[0].mxu0
        %v9278 = vadd.f32 %v1393, %v9277
        %v9279 = vpop.f32.mrb[0].mxu0
        %9280 = vmatprep.mubr.bf16.mxu0 0
        %9281 = vmatmul.mubr.bf16.gmra.mrb[0].mxu0 %v5373
        %v9282 = vpop.f32.mrb[0].mxu0
        %v9283 = vadd.f32 %v1393, %v9282
        %v9284 = vpop.f32.mrb[0].mxu0
        %v9285 = vpop.f32.mrb[0].mxu0
        %v9286 = vadd.f32 %v1393, %v9285
        %v9287 = vpop.f32.mrb[0].mxu0
        %9288 = vmatprep.mubr.bf16.mxu0 0
        %9289 = vmatmul.mubr.bf16.gmra.mrb[0].mxu0 %v5376
        %v9290 = vpop.f32.mrb[0].mxu0
        %v9291 = vadd.f32 %v1393, %v9290
        %v9292 = vpop.f32.mrb[0].mxu0
        %v9293 = vpop.f32.mrb[0].mxu0
        %v9294 = vadd.f32 %v1393, %v9293
        %v9295 = vpop.f32.mrb[0].mxu0
        %9296 = vmatprep.mubr.bf16.mxu0 0
        %9297 = vmatmul.mubr.bf16.gmra.mrb[0].mxu0 %v5379
        %v9298 = vpop.f32.mrb[0].mxu0
        %v9299 = vadd.f32 %v1393, %v9298
        %v9300 = vpop.f32.mrb[0].mxu0
        %v9301 = vpop.f32.mrb[0].mxu0
        %v9302 = vadd.f32 %v1393, %v9301
        %v9303 = vpop.f32.mrb[0].mxu0
        %9304 = vmatprep.mubr.bf16.mxu0 0
        %9305 = vmatmul.mubr.bf16.gmra.mrb[0].mxu0 %v5382
        %v9306 = vpop.f32.mrb[0].mxu0
        %v9307 = vadd.f32 %v1393, %v9306
        %v9308 = vpop.f32.mrb[0].mxu0
        %v9309 = vpop.f32.mrb[0].mxu0
        %v9310 = vadd.f32 %v1393, %v9309
        %v9311 = vpop.f32.mrb[0].mxu0
        %9312 = vmatprep.mubr.bf16.mxu0 0
        %9313 = vmatmul.mubr.bf16.gmra.mrb[0].mxu0 %v5385
        %v9314 = vpop.f32.mrb[0].mxu0
        %v9315 = vadd.f32 %v1393, %v9314
        %v9316 = vpop.f32.mrb[0].mxu0
        %v9317 = vpop.f32.mrb[0].mxu0
        %v9318 = vadd.f32 %v1393, %v9317
        %v9319 = vpop.f32.mrb[0].mxu0
        %9320 = vmatprep.mubr.bf16.mxu0 0
        %9321 = vmatmul.mubr.bf16.gmra.mrb[0].mxu0 %v5388
        %v9322 = vpop.f32.mrb[0].mxu0
        %v9323 = vadd.f32 %v1393, %v9322
        %v9324 = vpop.f32.mrb[0].mxu0
        %v9325 = vpop.f32.mrb[0].mxu0
        %v9326 = vadd.f32 %v1393, %v9325
        %v9327 = vpop.f32.mrb[0].mxu0
        %9328 = vmatprep.mubr.bf16.mxu0 0
        %9329 = vmatmul.mubr.bf16.gmra.mrb[0].mxu0 %v5391
        %v9330 = vpop.f32.mrb[0].mxu0
        %v9331 = vadd.f32 %v1393, %v9330
        %v9332 = vpop.f32.mrb[0].mxu0
        %v9333 = vpop.f32.mrb[0].mxu0
        %v9334 = vadd.f32 %v1393, %v9333
        %v9335 = vpop.f32.mrb[0].mxu0
        %9336 = vmatprep.mubr.bf16.mxu0 0
        %9337 = vmatmul.mubr.bf16.gmra.mrb[0].mxu0 %v5394
        %v9338 = vpop.f32.mrb[0].mxu0
        %v9339 = vadd.f32 %v1393, %v9338
        %v9340 = vpop.f32.mrb[0].mxu0
        %v9341 = vpop.f32.mrb[0].mxu0
        %v9342 = vadd.f32 %v1393, %v9341
        %v9343 = vpop.f32.mrb[0].mxu0
        %9344 = vmatprep.mubr.bf16.mxu0 0
        %9345 = vmatmul.mubr.bf16.gmra.mrb[0].mxu0 %v5397
        %v9346 = vpop.f32.mrb[0].mxu0
        %v9347 = vadd.f32 %v1393, %v9346
        %v9348 = vpop.f32.mrb[0].mxu0
        %v9349 = vpop.f32.mrb[0].mxu0
        %v9350 = vadd.f32 %v1393, %v9349
        %v9351 = vpop.f32.mrb[0].mxu0
        %9352 = vmatprep.mubr.bf16.mxu0 0
        %9353 = vmatmul.mubr.bf16.gmra.mrb[0].mxu0 %v5400
        %v9354 = vpop.f32.mrb[0].mxu0
        %v9355 = vadd.f32 %v1393, %v9354
        %v9356 = vpop.f32.mrb[0].mxu0
        %v9357 = vpop.f32.mrb[0].mxu0
        %v9358 = vadd.f32 %v1393, %v9357
        %v9359 = vpop.f32.mrb[0].mxu0
        %9360 = vmatprep.mubr.bf16.mxu0 0
        %9361 = vmatmul.mubr.bf16.gmra.mrb[0].mxu0 %v5403
        %v9362 = vpop.f32.mrb[0].mxu0
        %v9363 = vadd.f32 %v1393, %v9362
        %v9364 = vpop.f32.mrb[0].mxu0
        %v9365 = vpop.f32.mrb[0].mxu0
        %v9366 = vadd.f32 %v1393, %v9365
        %v9367 = vpop.f32.mrb[0].mxu0
        %9368 = vmatprep.mubr.bf16.mxu0 0
        %9369 = vmatmul.mubr.bf16.gmra.mrb[0].mxu0 %v5406
        %v9370 = vpop.f32.mrb[0].mxu0
        %v9371 = vadd.f32 %v1393, %v9370
        %v9372 = vpop.f32.mrb[0].mxu0
        %v9373 = vpop.f32.mrb[0].mxu0
        %v9374 = vadd.f32 %v1393, %v9373
        %v9375 = vpop.f32.mrb[0].mxu0
        %9376 = vmatprep.mubr.bf16.mxu0 0
        %9377 = vmatmul.mubr.bf16.gmra.mrb[0].mxu0 %v5409
        %v9378 = vpop.f32.mrb[0].mxu0
        %v9379 = vadd.f32 %v1393, %v9378
        %v9380 = vpop.f32.mrb[0].mxu0
        %v9381 = vpop.f32.mrb[0].mxu0
        %v9382 = vadd.f32 %v1393, %v9381
        %v9383 = vpop.f32.mrb[0].mxu0
        %9384 = vmatprep.mubr.bf16.mxu0 0
        %9385 = vmatmul.mubr.bf16.gmra.mrb[0].mxu0 %v5412
        %v9386 = vpop.f32.mrb[0].mxu0
        %v9387 = vadd.f32 %v1393, %v9386
        %v9388 = vpop.f32.mrb[0].mxu0
        %v9389 = vpop.f32.mrb[0].mxu0
        %v9390 = vadd.f32 %v1393, %v9389
        %v9391 = vpop.f32.mrb[0].mxu0
        %9392 = vmatprep.mubr.bf16.mxu0 0
        %9393 = vmatmul.mubr.bf16.gmra.mrb[0].mxu0 %v5415
        %v9394 = vpop.f32.mrb[0].mxu0
        %v9395 = vadd.f32 %v1393, %v9394
        %v9396 = vpop.f32.mrb[0].mxu0
        %v9397 = vpop.f32.mrb[0].mxu0
        %v9398 = vadd.f32 %v1393, %v9397
        %v9399 = vpop.f32.mrb[0].mxu0
        %9400 = vmatprep.mubr.bf16.mxu0 0
        %9401 = vmatmul.mubr.bf16.gmra.mrb[0].mxu0 %v5418
        %v9402 = vpop.f32.mrb[0].mxu0
        %v9403 = vadd.f32 %v1393, %v9402
        %v9404 = vpop.f32.mrb[0].mxu0
        %v9405 = vpop.f32.mrb[0].mxu0
        %v9406 = vadd.f32 %v1393, %v9405
        %v9407 = vpop.f32.mrb[0].mxu0
        %9408 = vmatprep.mubr.bf16.mxu0 0
        %9409 = vmatmul.mubr.bf16.gmra.mrb[0].mxu0 %v5421
        %v9410 = vpop.f32.mrb[0].mxu0
        %v9411 = vadd.f32 %v1393, %v9410
        %v9412 = vpop.f32.mrb[0].mxu0
        %v9413 = vpop.f32.mrb[0].mxu0
        %v9414 = vadd.f32 %v1393, %v9413
        %v9415 = vpop.f32.mrb[0].mxu0
        %9416 = vmatprep.mubr.bf16.mxu0 0
        %9417 = vmatmul.mubr.bf16.gmra.mrb[0].mxu0 %v5424
        %v9418 = vpop.f32.mrb[0].mxu0
        %v9419 = vadd.f32 %v1393, %v9418
        %v9420 = vpop.f32.mrb[0].mxu0
        %v9421 = vpop.f32.mrb[0].mxu0
        %v9422 = vadd.f32 %v1393, %v9421
        %v9423 = vpop.f32.mrb[0].mxu0
        %9424 = vmatprep.mubr.bf16.mxu0 0
        %9425 = vmatmul.mubr.bf16.gmra.mrb[0].mxu0 %v5427
        %v9426 = vpop.f32.mrb[0].mxu0
        %v9427 = vadd.f32 %v1393, %v9426
        %v9428 = vpop.f32.mrb[0].mxu0
        %v9429 = vpop.f32.mrb[0].mxu0
        %v9430 = vadd.f32 %v1393, %v9429
        %v9431 = vpop.f32.mrb[0].mxu0
        %9432 = vmatprep.mubr.bf16.mxu0 0
        %9433 = vmatmul.mubr.bf16.gmra.mrb[0].mxu0 %v5430
        %v9434 = vpop.f32.mrb[0].mxu0
        %v9435 = vadd.f32 %v1393, %v9434
        %v9436 = vpop.f32.mrb[0].mxu0
        %v9437 = vpop.f32.mrb[0].mxu0
        %v9438 = vadd.f32 %v1393, %v9437
        %v9439 = vpop.f32.mrb[0].mxu0
        %9440 = vmatprep.mubr.bf16.mxu0 0
        %9441 = vmatmul.mubr.bf16.gmra.mrb[0].mxu0 %v5433
        %v9442 = vpop.f32.mrb[0].mxu0
        %v9443 = vadd.f32 %v1393, %v9442
        %v9444 = vpop.f32.mrb[0].mxu0
        %v9445 = vpop.f32.mrb[0].mxu0
        %v9446 = vadd.f32 %v1393, %v9445
        %v9447 = vpop.f32.mrb[0].mxu0
        %9448 = vmatprep.mubr.bf16.mxu0 0
        %9449 = vmatmul.mubr.bf16.gmra.mrb[0].mxu0 %v5436
        %v9450 = vpop.f32.mrb[0].mxu0
        %v9451 = vadd.f32 %v1393, %v9450
        %v9452 = vpop.f32.mrb[0].mxu0
        %v9453 = vpop.f32.mrb[0].mxu0
        %v9454 = vadd.f32 %v1393, %v9453
        %v9455 = vpop.f32.mrb[0].mxu0
        %9456 = vmatprep.mubr.bf16.mxu0 0
        %9457 = vmatmul.mubr.bf16.gmra.mrb[0].mxu0 %v5439
        %v9458 = vpop.f32.mrb[0].mxu0
        %v9459 = vadd.f32 %v1393, %v9458
        %v9460 = vpop.f32.mrb[0].mxu0
        %v9461 = vpop.f32.mrb[0].mxu0
        %v9462 = vadd.f32 %v1393, %v9461
        %v9463 = vpop.f32.mrb[0].mxu0
        %9464 = vmatprep.mubr.bf16.mxu0 0
        %9465 = vmatmul.mubr.bf16.gmra.mrb[0].mxu0 %v5442
        %v9466 = vpop.f32.mrb[0].mxu0
        %v9467 = vadd.f32 %v1393, %v9466
        %v9468 = vpop.f32.mrb[0].mxu0
        %v9469 = vpop.f32.mrb[0].mxu0
        %v9470 = vadd.f32 %v1393, %v9469
        %v9471 = vpop.f32.mrb[0].mxu0
        %9472 = vmatprep.mubr.bf16.mxu0 0
        %9473 = vmatmul.mubr.bf16.gmra.mrb[0].mxu0 %v5445
        %v9474 = vpop.f32.mrb[0].mxu0
        %v9475 = vadd.f32 %v1393, %v9474
        %v9476 = vpop.f32.mrb[0].mxu0
        %v9477 = vpop.f32.mrb[0].mxu0
        %v9478 = vadd.f32 %v1393, %v9477
        %v9479 = vpop.f32.mrb[0].mxu0
        %9480 = vmatprep.mubr.bf16.mxu0 0
        %9481 = vmatmul.mubr.bf16.gmra.mrb[0].mxu0 %v5448
        %v9482 = vpop.f32.mrb[0].mxu0
        %v9483 = vadd.f32 %v1393, %v9482
        %v9484 = vpop.f32.mrb[0].mxu0
        %v9485 = vpop.f32.mrb[0].mxu0
        %v9486 = vadd.f32 %v1393, %v9485
        %v9487 = vpop.f32.mrb[0].mxu0
        %9488 = vmatprep.mubr.bf16.mxu0 0
        %9489 = vmatmul.mubr.bf16.gmra.mrb[0].mxu0 %v5451
        %v9490 = vpop.f32.mrb[0].mxu0
        %v9491 = vadd.f32 %v1393, %v9490
        %v9492 = vpop.f32.mrb[0].mxu0
        %v9493 = vpop.f32.mrb[0].mxu0
        %v9494 = vadd.f32 %v1393, %v9493
        %v9495 = vpop.f32.mrb[0].mxu0
        %9496 = vmatprep.mubr.bf16.mxu0 0
        %9497 = vmatmul.mubr.bf16.gmra.mrb[0].mxu0 %v5454
        %v9498 = vpop.f32.mrb[0].mxu0
        %v9499 = vadd.f32 %v1393, %v9498
        %v9500 = vpop.f32.mrb[0].mxu0
        %v9501 = vpop.f32.mrb[0].mxu0
        %v9502 = vadd.f32 %v1393, %v9501
        %v9503 = vpop.f32.mrb[0].mxu0
        %9504 = vmatprep.mubr.bf16.mxu0 0
        %9505 = vmatmul.mubr.bf16.gmra.mrb[0].mxu0 %v5457
        %v9506 = vpop.f32.mrb[0].mxu0
        %v9507 = vadd.f32 %v1393, %v9506
        %v9508 = vpop.f32.mrb[0].mxu0
        %v9509 = vpop.f32.mrb[0].mxu0
        %v9510 = vadd.f32 %v1393, %v9509
        %v9511 = vpop.f32.mrb[0].mxu0
        %9512 = vmatprep.mubr.bf16.mxu0 0
        %9513 = vmatmul.mubr.bf16.gmra.mrb[0].mxu0 %v5460
        %v9514 = vpop.f32.mrb[0].mxu0
        %v9515 = vadd.f32 %v1393, %v9514
        %v9516 = vpop.f32.mrb[0].mxu0
        %v9517 = vpop.f32.mrb[0].mxu0
        %v9518 = vadd.f32 %v1393, %v9517
        %v9519 = vpop.f32.mrb[0].mxu0
        %9520 = vmatprep.mubr.bf16.mxu0 0
        %9521 = vmatmul.mubr.bf16.gmra.mrb[0].mxu0 %v5463
        %v9522 = vpop.f32.mrb[0].mxu0
        %v9523 = vadd.f32 %v1393, %v9522
        %v9524 = vpop.f32.mrb[0].mxu0
        %v9525 = vpop.f32.mrb[0].mxu0
        %v9526 = vadd.f32 %v1393, %v9525
        %v9527 = vpop.f32.mrb[0].mxu0
        %9528 = vmatprep.mubr.bf16.mxu0 0
        %9529 = vmatmul.mubr.bf16.gmra.mrb[0].mxu0 %v5466
        %v9530 = vpop.f32.mrb[0].mxu0
        %v9531 = vadd.f32 %v1393, %v9530
        %v9532 = vpop.f32.mrb[0].mxu0
        %v9533 = vpop.f32.mrb[0].mxu0
        %v9534 = vadd.f32 %v1393, %v9533
        %v9535 = vpop.f32.mrb[0].mxu0
        %9536 = vmatprep.mubr.bf16.mxu0 0
        %9537 = vmatmul.mubr.bf16.gmra.mrb[0].mxu0 %v5469
        %v9538 = vpop.f32.mrb[0].mxu0
        %v9539 = vadd.f32 %v1393, %v9538
        %v9540 = vpop.f32.mrb[0].mxu0
        %v9541 = vpop.f32.mrb[0].mxu0
        %v9542 = vadd.f32 %v1393, %v9541
        %v9543 = vpop.f32.mrb[0].mxu0
        %9544 = vmatprep.mubr.bf16.mxu0 0
        %9545 = vmatmul.mubr.bf16.gmra.mrb[0].mxu0 %v5472
        %v9546 = vpop.f32.mrb[0].mxu0
        %v9547 = vadd.f32 %v1393, %v9546
        %v9548 = vpop.f32.mrb[0].mxu0
        %v9549 = vpop.f32.mrb[0].mxu0
        %v9550 = vadd.f32 %v1393, %v9549
        %v9551 = vpop.f32.mrb[0].mxu0
        %9552 = vmatprep.mubr.bf16.mxu0 0
        %9553 = vmatmul.mubr.bf16.gmra.mrb[0].mxu0 %v5475
        %v9554 = vpop.f32.mrb[0].mxu0
        %v9555 = vadd.f32 %v1393, %v9554
        %v9556 = vpop.f32.mrb[0].mxu0
        %v9557 = vpop.f32.mrb[0].mxu0
        %v9558 = vadd.f32 %v1393, %v9557
        %v9559 = vpop.f32.mrb[0].mxu0
        %9560 = vmatprep.mubr.bf16.mxu0 0
        %9561 = vmatmul.mubr.bf16.gmra.mrb[0].mxu0 %v5478
        %v9562 = vpop.f32.mrb[0].mxu0
        %v9563 = vadd.f32 %v1393, %v9562
        %v9564 = vpop.f32.mrb[0].mxu0
        %v9565 = vpop.f32.mrb[0].mxu0
        %v9566 = vadd.f32 %v1393, %v9565
        %v9567 = vpop.f32.mrb[0].mxu0
        %9568 = vmatprep.mubr.bf16.mxu0 0
        %9569 = vmatmul.mubr.bf16.gmra.mrb[0].mxu0 %v5481
        %v9570 = vpop.f32.mrb[0].mxu0
        %v9571 = vadd.f32 %v1393, %v9570
        %v9572 = vpop.f32.mrb[0].mxu0
        %v9573 = vpop.f32.mrb[0].mxu0
        %v9574 = vadd.f32 %v1393, %v9573
        %v9575 = vpop.f32.mrb[0].mxu0
        %9576 = vmatprep.mubr.bf16.mxu0 0
        %9577 = vmatmul.mubr.bf16.gmra.mrb[0].mxu0 %v5484
        %v9578 = vpop.f32.mrb[0].mxu0
        %v9579 = vadd.f32 %v1393, %v9578
        %v9580 = vpop.f32.mrb[0].mxu0
        %v9581 = vpop.f32.mrb[0].mxu0
        %v9582 = vadd.f32 %v1393, %v9581
        %v9583 = vpop.f32.mrb[0].mxu0
        %9584 = vmatprep.mubr.bf16.mxu0 0
        %9585 = vmatmul.mubr.bf16.gmra.mrb[0].mxu0 %v5487
        %v9586 = vpop.f32.mrb[0].mxu0
        %v9587 = vadd.f32 %v1393, %v9586
        %v9588 = vpop.f32.mrb[0].mxu0
        %v9589 = vpop.f32.mrb[0].mxu0
        %v9590 = vadd.f32 %v1393, %v9589
        %v9591 = vpop.f32.mrb[0].mxu0
        %9592 = vmatprep.mubr.bf16.mxu0 0
        %9593 = vmatmul.mubr.bf16.gmra.mrb[0].mxu0 %v5490
        %v9594 = vpop.f32.mrb[0].mxu0
        %v9595 = vadd.f32 %v1393, %v9594
        %v9596 = vpop.f32.mrb[0].mxu0
        %v9597 = vpop.f32.mrb[0].mxu0
        %v9598 = vadd.f32 %v1393, %v9597
        %v9599 = vpop.f32.mrb[0].mxu0
        %9600 = vmatprep.mubr.bf16.mxu0 0
        %9601 = vmatmul.mubr.bf16.gmra.mrb[0].mxu0 %v5493
        %v9602 = vpop.f32.mrb[0].mxu0
        %v9603 = vadd.f32 %v1393, %v9602
        %v9604 = vpop.f32.mrb[0].mxu0
        %v9605 = vpop.f32.mrb[0].mxu0
        %v9606 = vadd.f32 %v1393, %v9605
        %v9607 = vpop.f32.mrb[0].mxu0
        %9608 = vmatprep.mubr.bf16.mxu0 0
        %9609 = vmatmul.mubr.bf16.gmra.mrb[0].mxu0 %v5496
        %v9610 = vpop.f32.mrb[0].mxu0
        %v9611 = vadd.f32 %v1393, %v9610
        %v9612 = vpop.f32.mrb[0].mxu0
        %v9613 = vpop.f32.mrb[0].mxu0
        %v9614 = vadd.f32 %v1393, %v9613
        %v9615 = vpop.f32.mrb[0].mxu0
        %9616 = vmatprep.mubr.bf16.mxu0 0
        %9617 = vmatmul.mubr.bf16.gmra.mrb[0].mxu0 %v5499
        %v9618 = vpop.f32.mrb[0].mxu0
        %v9619 = vadd.f32 %v1393, %v9618
        %v9620 = vpop.f32.mrb[0].mxu0
        %v9621 = vpop.f32.mrb[0].mxu0
        %v9622 = vadd.f32 %v1393, %v9621
        %v9623 = vpop.f32.mrb[0].mxu0
        %9624 = vmatprep.mubr.bf16.mxu0 0
        %9625 = vmatmul.mubr.bf16.gmra.mrb[0].mxu0 %v5502
        %v9626 = vpop.f32.mrb[0].mxu0
        %v9627 = vadd.f32 %v1393, %v9626
        %v9628 = vpop.f32.mrb[0].mxu0
        %v9629 = vpop.f32.mrb[0].mxu0
        %v9630 = vadd.f32 %v1393, %v9629
        %v9631 = vpop.f32.mrb[0].mxu0
        %9632 = vdwg.mxu0
        %v9633 = vmax.f32 %v5539, 0.0
        %v9634 = vmax.f32 %v5542, 0.0
        %v9635 = vmax.f32 %v5547, 0.0
        %v9636 = vmax.f32 %v5550, 0.0
        %v9637 = vmax.f32 %v5555, 0.0
        %v9638 = vmax.f32 %v5558, 0.0
        %v9639 = vmax.f32 %v5563, 0.0
        %v9640 = vmax.f32 %v5566, 0.0
        %v9641 = vmax.f32 %v5571, 0.0
        %v9642 = vmax.f32 %v5574, 0.0
        %v9643 = vmax.f32 %v5579, 0.0
        %v9644 = vmax.f32 %v5582, 0.0
        %v9645 = vmax.f32 %v5587, 0.0
        %v9646 = vmax.f32 %v5590, 0.0
        %v9647 = vmax.f32 %v5595, 0.0
        %v9648 = vmax.f32 %v5598, 0.0
        %v9649 = vmax.f32 %v5603, 0.0
        %v9650 = vmax.f32 %v5606, 0.0
        %v9651 = vmax.f32 %v5611, 0.0
        %v9652 = vmax.f32 %v5614, 0.0
        %v9653 = vmax.f32 %v5619, 0.0
        %v9654 = vmax.f32 %v5622, 0.0
        %v9655 = vmax.f32 %v5627, 0.0
        %v9656 = vmax.f32 %v5630, 0.0
        %v9657 = vmax.f32 %v5635, 0.0
        %v9658 = vmax.f32 %v5638, 0.0
        %v9659 = vmax.f32 %v5643, 0.0
        %v9660 = vmax.f32 %v5646, 0.0
        %v9661 = vmax.f32 %v5651, 0.0
        %v9662 = vmax.f32 %v5654, 0.0
        %v9663 = vmax.f32 %v5659, 0.0
        %v9664 = vmax.f32 %v5662, 0.0
        %v9665 = vmax.f32 %v5667, 0.0
        %v9666 = vmax.f32 %v5670, 0.0
        %v9667 = vmax.f32 %v5675, 0.0
        %v9668 = vmax.f32 %v5678, 0.0
        %v9669 = vmax.f32 %v5683, 0.0
        %v9670 = vmax.f32 %v5686, 0.0
        %v9671 = vmax.f32 %v5691, 0.0
        %v9672 = vmax.f32 %v5694, 0.0
        %v9673 = vmax.f32 %v5699, 0.0
        %v9674 = vmax.f32 %v5702, 0.0
        %v9675 = vmax.f32 %v5707, 0.0
        %v9676 = vmax.f32 %v5710, 0.0
        %v9677 = vmax.f32 %v5715, 0.0
        %v9678 = vmax.f32 %v5718, 0.0
        %v9679 = vmax.f32 %v5723, 0.0
        %v9680 = vmax.f32 %v5726, 0.0
        %v9681 = vmax.f32 %v5731, 0.0
        %v9682 = vmax.f32 %v5734, 0.0
        %v9683 = vmax.f32 %v5739, 0.0
        %v9684 = vmax.f32 %v5742, 0.0
        %v9685 = vmax.f32 %v5747, 0.0
        %v9686 = vmax.f32 %v5750, 0.0
        %v9687 = vmax.f32 %v5755, 0.0
        %v9688 = vmax.f32 %v5758, 0.0
        %v9689 = vmax.f32 %v5763, 0.0
        %v9690 = vmax.f32 %v5766, 0.0
        %v9691 = vmax.f32 %v5771, 0.0
        %v9692 = vmax.f32 %v5774, 0.0
        %v9693 = vmax.f32 %v5779, 0.0
        %v9694 = vmax.f32 %v5782, 0.0
        %v9695 = vmax.f32 %v5787, 0.0
        %v9696 = vmax.f32 %v5790, 0.0
        %v9697 = vmax.f32 %v5795, 0.0
        %v9698 = vmax.f32 %v5798, 0.0
        %v9699 = vmax.f32 %v5803, 0.0
        %v9700 = vmax.f32 %v5806, 0.0
        %v9701 = vmax.f32 %v5811, 0.0
        %v9702 = vmax.f32 %v5814, 0.0
        %v9703 = vmax.f32 %v5819, 0.0
        %v9704 = vmax.f32 %v5822, 0.0
        %v9705 = vmax.f32 %v5827, 0.0
        %v9706 = vmax.f32 %v5830, 0.0
        %v9707 = vmax.f32 %v5835, 0.0
        %v9708 = vmax.f32 %v5838, 0.0
        %v9709 = vmax.f32 %v5843, 0.0
        %v9710 = vmax.f32 %v5846, 0.0
        %v9711 = vmax.f32 %v5851, 0.0
        %v9712 = vmax.f32 %v5854, 0.0
        %v9713 = vmax.f32 %v5859, 0.0
        %v9714 = vmax.f32 %v5862, 0.0
        %v9715 = vmax.f32 %v5867, 0.0
        %v9716 = vmax.f32 %v5870, 0.0
        %v9717 = vmax.f32 %v5875, 0.0
        %v9718 = vmax.f32 %v5878, 0.0
        %v9719 = vmax.f32 %v5883, 0.0
        %v9720 = vmax.f32 %v5886, 0.0
        %v9721 = vmax.f32 %v5891, 0.0
        %v9722 = vmax.f32 %v5894, 0.0
        %v9723 = vmax.f32 %v5899, 0.0
        %v9724 = vmax.f32 %v5902, 0.0
        %v9725 = vmax.f32 %v5907, 0.0
        %v9726 = vmax.f32 %v5910, 0.0
        %v9727 = vmax.f32 %v5915, 0.0
        %v9728 = vmax.f32 %v5918, 0.0
        %v9729 = vmax.f32 %v5923, 0.0
        %v9730 = vmax.f32 %v5926, 0.0
        %v9731 = vmax.f32 %v5931, 0.0
        %v9732 = vmax.f32 %v5934, 0.0
        %v9733 = vmax.f32 %v5939, 0.0
        %v9734 = vmax.f32 %v5942, 0.0
        %v9735 = vmax.f32 %v5947, 0.0
        %v9736 = vmax.f32 %v5950, 0.0
        %v9737 = vmax.f32 %v5955, 0.0
        %v9738 = vmax.f32 %v5958, 0.0
        %v9739 = vmax.f32 %v5963, 0.0
        %v9740 = vmax.f32 %v5966, 0.0
        %v9741 = vmax.f32 %v5971, 0.0
        %v9742 = vmax.f32 %v5974, 0.0
        %v9743 = vmax.f32 %v5979, 0.0
        %v9744 = vmax.f32 %v5982, 0.0
        %v9745 = vmax.f32 %v5987, 0.0
        %v9746 = vmax.f32 %v5990, 0.0
        %v9747 = vmax.f32 %v5995, 0.0
        %v9748 = vmax.f32 %v5998, 0.0
        %v9749 = vmax.f32 %v6003, 0.0
        %v9750 = vmax.f32 %v6006, 0.0
        %v9751 = vmax.f32 %v6011, 0.0
        %v9752 = vmax.f32 %v6014, 0.0
        %v9753 = vmax.f32 %v6019, 0.0
        %v9754 = vmax.f32 %v6022, 0.0
        %v9755 = vmax.f32 %v6027, 0.0
        %v9756 = vmax.f32 %v6030, 0.0
        %v9757 = vmax.f32 %v6035, 0.0
        %v9758 = vmax.f32 %v6038, 0.0
        %v9759 = vmax.f32 %v6043, 0.0
        %v9760 = vmax.f32 %v6046, 0.0
        %v9761 = vmax.f32 %v6051, 0.0
        %v9762 = vmax.f32 %v6054, 0.0
        %v9763 = vmax.f32 %v6059, 0.0
        %v9764 = vmax.f32 %v6062, 0.0
        %v9765 = vmax.f32 %v6067, 0.0
        %v9766 = vmax.f32 %v6070, 0.0
        %v9767 = vmax.f32 %v6075, 0.0
        %v9768 = vmax.f32 %v6078, 0.0
        %v9769 = vmax.f32 %v6083, 0.0
        %v9770 = vmax.f32 %v6086, 0.0
        %v9771 = vmax.f32 %v6091, 0.0
        %v9772 = vmax.f32 %v6094, 0.0
        %v9773 = vmax.f32 %v6099, 0.0
        %v9774 = vmax.f32 %v6102, 0.0
        %v9775 = vmax.f32 %v6107, 0.0
        %v9776 = vmax.f32 %v6110, 0.0
        %v9777 = vmax.f32 %v6115, 0.0
        %v9778 = vmax.f32 %v6118, 0.0
        %v9779 = vmax.f32 %v6123, 0.0
        %v9780 = vmax.f32 %v6126, 0.0
        %v9781 = vmax.f32 %v6131, 0.0
        %v9782 = vmax.f32 %v6134, 0.0
        %v9783 = vmax.f32 %v6139, 0.0
        %v9784 = vmax.f32 %v6142, 0.0
        %v9785 = vmax.f32 %v6147, 0.0
        %v9786 = vmax.f32 %v6150, 0.0
        %v9787 = vmax.f32 %v6155, 0.0
        %v9788 = vmax.f32 %v6158, 0.0
        %v9789 = vmax.f32 %v6163, 0.0
        %v9790 = vmax.f32 %v6166, 0.0
        %v9791 = vmax.f32 %v6171, 0.0
        %v9792 = vmax.f32 %v6174, 0.0
        %v9793 = vmax.f32 %v6179, 0.0
        %v9794 = vmax.f32 %v6182, 0.0
        %v9795 = vmax.f32 %v6187, 0.0
        %v9796 = vmax.f32 %v6190, 0.0
        %v9797 = vmax.f32 %v6195, 0.0
        %v9798 = vmax.f32 %v6198, 0.0
        %v9799 = vmax.f32 %v6203, 0.0
        %v9800 = vmax.f32 %v6206, 0.0
        %v9801 = vmax.f32 %v6211, 0.0
        %v9802 = vmax.f32 %v6214, 0.0
        %v9803 = vmax.f32 %v6219, 0.0
        %v9804 = vmax.f32 %v6222, 0.0
        %v9805 = vmax.f32 %v6227, 0.0
        %v9806 = vmax.f32 %v6230, 0.0
        %v9807 = vmax.f32 %v6235, 0.0
        %v9808 = vmax.f32 %v6238, 0.0
        %v9809 = vmax.f32 %v6243, 0.0
        %v9810 = vmax.f32 %v6246, 0.0
        %v9811 = vmax.f32 %v6251, 0.0
        %v9812 = vmax.f32 %v6254, 0.0
        %v9813 = vmax.f32 %v6259, 0.0
        %v9814 = vmax.f32 %v6262, 0.0
        %v9815 = vmax.f32 %v6267, 0.0
        %v9816 = vmax.f32 %v6270, 0.0
        %v9817 = vmax.f32 %v6275, 0.0
        %v9818 = vmax.f32 %v6278, 0.0
        %v9819 = vmax.f32 %v6283, 0.0
        %v9820 = vmax.f32 %v6286, 0.0
        %v9821 = vmax.f32 %v6291, 0.0
        %v9822 = vmax.f32 %v6294, 0.0
        %v9823 = vmax.f32 %v6299, 0.0
        %v9824 = vmax.f32 %v6302, 0.0
        %v9825 = vmax.f32 %v6307, 0.0
        %v9826 = vmax.f32 %v6310, 0.0
        %v9827 = vmax.f32 %v6315, 0.0
        %v9828 = vmax.f32 %v6318, 0.0
        %v9829 = vmax.f32 %v6323, 0.0
        %v9830 = vmax.f32 %v6326, 0.0
        %v9831 = vmax.f32 %v6331, 0.0
        %v9832 = vmax.f32 %v6334, 0.0
        %v9833 = vmax.f32 %v6339, 0.0
        %v9834 = vmax.f32 %v6342, 0.0
        %v9835 = vmax.f32 %v6347, 0.0
        %v9836 = vmax.f32 %v6350, 0.0
        %v9837 = vmax.f32 %v6355, 0.0
        %v9838 = vmax.f32 %v6358, 0.0
        %v9839 = vmax.f32 %v6363, 0.0
        %v9840 = vmax.f32 %v6366, 0.0
        %v9841 = vmax.f32 %v6371, 0.0
        %v9842 = vmax.f32 %v6374, 0.0
        %v9843 = vmax.f32 %v6379, 0.0
        %v9844 = vmax.f32 %v6382, 0.0
        %v9845 = vmax.f32 %v6387, 0.0
        %v9846 = vmax.f32 %v6390, 0.0
        %v9847 = vmax.f32 %v6395, 0.0
        %v9848 = vmax.f32 %v6398, 0.0
        %v9849 = vmax.f32 %v6403, 0.0
        %v9850 = vmax.f32 %v6406, 0.0
        %v9851 = vmax.f32 %v6411, 0.0
        %v9852 = vmax.f32 %v6414, 0.0
        %v9853 = vmax.f32 %v6419, 0.0
        %v9854 = vmax.f32 %v6422, 0.0
        %v9855 = vmax.f32 %v6427, 0.0
        %v9856 = vmax.f32 %v6430, 0.0
        %v9857 = vmax.f32 %v6435, 0.0
        %v9858 = vmax.f32 %v6438, 0.0
        %v9859 = vmax.f32 %v6443, 0.0
        %v9860 = vmax.f32 %v6446, 0.0
        %v9861 = vmax.f32 %v6451, 0.0
        %v9862 = vmax.f32 %v6454, 0.0
        %v9863 = vmax.f32 %v6459, 0.0
        %v9864 = vmax.f32 %v6462, 0.0
        %v9865 = vmax.f32 %v6467, 0.0
        %v9866 = vmax.f32 %v6470, 0.0
        %v9867 = vmax.f32 %v6475, 0.0
        %v9868 = vmax.f32 %v6478, 0.0
        %v9869 = vmax.f32 %v6483, 0.0
        %v9870 = vmax.f32 %v6486, 0.0
        %v9871 = vmax.f32 %v6491, 0.0
        %v9872 = vmax.f32 %v6494, 0.0
        %v9873 = vmax.f32 %v6499, 0.0
        %v9874 = vmax.f32 %v6502, 0.0
        %v9875 = vmax.f32 %v6507, 0.0
        %v9876 = vmax.f32 %v6510, 0.0
        %v9877 = vmax.f32 %v6515, 0.0
        %v9878 = vmax.f32 %v6518, 0.0
        %v9879 = vmax.f32 %v6523, 0.0
        %v9880 = vmax.f32 %v6526, 0.0
        %v9881 = vmax.f32 %v6531, 0.0
        %v9882 = vmax.f32 %v6534, 0.0
        %v9883 = vmax.f32 %v6539, 0.0
        %v9884 = vmax.f32 %v6542, 0.0
        %v9885 = vmax.f32 %v6547, 0.0
        %v9886 = vmax.f32 %v6550, 0.0
        %v9887 = vmax.f32 %v6555, 0.0
        %v9888 = vmax.f32 %v6558, 0.0
        %v9889 = vmax.f32 %v6563, 0.0
        %v9890 = vmax.f32 %v6566, 0.0
        %v9891 = vmax.f32 %v6571, 0.0
        %v9892 = vmax.f32 %v6574, 0.0
        %v9893 = vmax.f32 %v6579, 0.0
        %v9894 = vmax.f32 %v6582, 0.0
        %v9895 = vmax.f32 %v6587, 0.0
        %v9896 = vmax.f32 %v6590, 0.0
        %v9897 = vmax.f32 %v6595, 0.0
        %v9898 = vmax.f32 %v6598, 0.0
        %v9899 = vmax.f32 %v6603, 0.0
        %v9900 = vmax.f32 %v6606, 0.0
        %v9901 = vmax.f32 %v6611, 0.0
        %v9902 = vmax.f32 %v6614, 0.0
        %v9903 = vmax.f32 %v6619, 0.0
        %v9904 = vmax.f32 %v6622, 0.0
        %v9905 = vmax.f32 %v6627, 0.0
        %v9906 = vmax.f32 %v6630, 0.0
        %v9907 = vmax.f32 %v6635, 0.0
        %v9908 = vmax.f32 %v6638, 0.0
        %v9909 = vmax.f32 %v6643, 0.0
        %v9910 = vmax.f32 %v6646, 0.0
        %v9911 = vmax.f32 %v6651, 0.0
        %v9912 = vmax.f32 %v6654, 0.0
        %v9913 = vmax.f32 %v6659, 0.0
        %v9914 = vmax.f32 %v6662, 0.0
        %v9915 = vmax.f32 %v6667, 0.0
        %v9916 = vmax.f32 %v6670, 0.0
        %v9917 = vmax.f32 %v6675, 0.0
        %v9918 = vmax.f32 %v6678, 0.0
        %v9919 = vmax.f32 %v6683, 0.0
        %v9920 = vmax.f32 %v6686, 0.0
        %v9921 = vmax.f32 %v6691, 0.0
        %v9922 = vmax.f32 %v6694, 0.0
        %v9923 = vmax.f32 %v6699, 0.0
        %v9924 = vmax.f32 %v6702, 0.0
        %v9925 = vmax.f32 %v6707, 0.0
        %v9926 = vmax.f32 %v6710, 0.0
        %v9927 = vmax.f32 %v6715, 0.0
        %v9928 = vmax.f32 %v6718, 0.0
        %v9929 = vmax.f32 %v6723, 0.0
        %v9930 = vmax.f32 %v6726, 0.0
        %v9931 = vmax.f32 %v6731, 0.0
        %v9932 = vmax.f32 %v6734, 0.0
        %v9933 = vmax.f32 %v6739, 0.0
        %v9934 = vmax.f32 %v6742, 0.0
        %v9935 = vmax.f32 %v6747, 0.0
        %v9936 = vmax.f32 %v6750, 0.0
        %v9937 = vmax.f32 %v6755, 0.0
        %v9938 = vmax.f32 %v6758, 0.0
        %v9939 = vmax.f32 %v6763, 0.0
        %v9940 = vmax.f32 %v6766, 0.0
        %v9941 = vmax.f32 %v6771, 0.0
        %v9942 = vmax.f32 %v6774, 0.0
        %v9943 = vmax.f32 %v6779, 0.0
        %v9944 = vmax.f32 %v6782, 0.0
        %v9945 = vmax.f32 %v6787, 0.0
        %v9946 = vmax.f32 %v6790, 0.0
        %v9947 = vmax.f32 %v6795, 0.0
        %v9948 = vmax.f32 %v6798, 0.0
        %v9949 = vmax.f32 %v6803, 0.0
        %v9950 = vmax.f32 %v6806, 0.0
        %v9951 = vmax.f32 %v6811, 0.0
        %v9952 = vmax.f32 %v6814, 0.0
        %v9953 = vmax.f32 %v6819, 0.0
        %v9954 = vmax.f32 %v6822, 0.0
        %v9955 = vmax.f32 %v6827, 0.0
        %v9956 = vmax.f32 %v6830, 0.0
        %v9957 = vmax.f32 %v6835, 0.0
        %v9958 = vmax.f32 %v6838, 0.0
        %v9959 = vmax.f32 %v6843, 0.0
        %v9960 = vmax.f32 %v6846, 0.0
        %v9961 = vmax.f32 %v6851, 0.0
        %v9962 = vmax.f32 %v6854, 0.0
        %v9963 = vmax.f32 %v6859, 0.0
        %v9964 = vmax.f32 %v6862, 0.0
        %v9965 = vmax.f32 %v6867, 0.0
        %v9966 = vmax.f32 %v6870, 0.0
        %v9967 = vmax.f32 %v6875, 0.0
        %v9968 = vmax.f32 %v6878, 0.0
        %v9969 = vmax.f32 %v6883, 0.0
        %v9970 = vmax.f32 %v6886, 0.0
        %v9971 = vmax.f32 %v6891, 0.0
        %v9972 = vmax.f32 %v6894, 0.0
        %v9973 = vmax.f32 %v6899, 0.0
        %v9974 = vmax.f32 %v6902, 0.0
        %v9975 = vmax.f32 %v6907, 0.0
        %v9976 = vmax.f32 %v6910, 0.0
        %v9977 = vmax.f32 %v6915, 0.0
        %v9978 = vmax.f32 %v6918, 0.0
        %v9979 = vmax.f32 %v6923, 0.0
        %v9980 = vmax.f32 %v6926, 0.0
        %v9981 = vmax.f32 %v6931, 0.0
        %v9982 = vmax.f32 %v6934, 0.0
        %v9983 = vmax.f32 %v6939, 0.0
        %v9984 = vmax.f32 %v6942, 0.0
        %v9985 = vmax.f32 %v6947, 0.0
        %v9986 = vmax.f32 %v6950, 0.0
        %v9987 = vmax.f32 %v6955, 0.0
        %v9988 = vmax.f32 %v6958, 0.0
        %v9989 = vmax.f32 %v6963, 0.0
        %v9990 = vmax.f32 %v6966, 0.0
        %v9991 = vmax.f32 %v6971, 0.0
        %v9992 = vmax.f32 %v6974, 0.0
        %v9993 = vmax.f32 %v6979, 0.0
        %v9994 = vmax.f32 %v6982, 0.0
        %v9995 = vmax.f32 %v6987, 0.0
        %v9996 = vmax.f32 %v6990, 0.0
        %v9997 = vmax.f32 %v6995, 0.0
        %v9998 = vmax.f32 %v6998, 0.0
        %v9999 = vmax.f32 %v7003, 0.0
        %v10000 = vmax.f32 %v7006, 0.0
        %v10001 = vmax.f32 %v7011, 0.0
        %v10002 = vmax.f32 %v7014, 0.0
        %v10003 = vmax.f32 %v7019, 0.0
        %v10004 = vmax.f32 %v7022, 0.0
        %v10005 = vmax.f32 %v7027, 0.0
        %v10006 = vmax.f32 %v7030, 0.0
        %v10007 = vmax.f32 %v7035, 0.0
        %v10008 = vmax.f32 %v7038, 0.0
        %v10009 = vmax.f32 %v7043, 0.0
        %v10010 = vmax.f32 %v7046, 0.0
        %v10011 = vmax.f32 %v7051, 0.0
        %v10012 = vmax.f32 %v7054, 0.0
        %v10013 = vmax.f32 %v7059, 0.0
        %v10014 = vmax.f32 %v7062, 0.0
        %v10015 = vmax.f32 %v7067, 0.0
        %v10016 = vmax.f32 %v7070, 0.0
        %v10017 = vmax.f32 %v7075, 0.0
        %v10018 = vmax.f32 %v7078, 0.0
        %v10019 = vmax.f32 %v7083, 0.0
        %v10020 = vmax.f32 %v7086, 0.0
        %v10021 = vmax.f32 %v7091, 0.0
        %v10022 = vmax.f32 %v7094, 0.0
        %v10023 = vmax.f32 %v7099, 0.0
        %v10024 = vmax.f32 %v7102, 0.0
        %v10025 = vmax.f32 %v7107, 0.0
        %v10026 = vmax.f32 %v7110, 0.0
        %v10027 = vmax.f32 %v7115, 0.0
        %v10028 = vmax.f32 %v7118, 0.0
        %v10029 = vmax.f32 %v7123, 0.0
        %v10030 = vmax.f32 %v7126, 0.0
        %v10031 = vmax.f32 %v7131, 0.0
        %v10032 = vmax.f32 %v7134, 0.0
        %v10033 = vmax.f32 %v7139, 0.0
        %v10034 = vmax.f32 %v7142, 0.0
        %v10035 = vmax.f32 %v7147, 0.0
        %v10036 = vmax.f32 %v7150, 0.0
        %v10037 = vmax.f32 %v7155, 0.0
        %v10038 = vmax.f32 %v7158, 0.0
        %v10039 = vmax.f32 %v7163, 0.0
        %v10040 = vmax.f32 %v7166, 0.0
        %v10041 = vmax.f32 %v7171, 0.0
        %v10042 = vmax.f32 %v7174, 0.0
        %v10043 = vmax.f32 %v7179, 0.0
        %v10044 = vmax.f32 %v7182, 0.0
        %v10045 = vmax.f32 %v7187, 0.0
        %v10046 = vmax.f32 %v7190, 0.0
        %v10047 = vmax.f32 %v7195, 0.0
        %v10048 = vmax.f32 %v7198, 0.0
        %v10049 = vmax.f32 %v7203, 0.0
        %v10050 = vmax.f32 %v7206, 0.0
        %v10051 = vmax.f32 %v7211, 0.0
        %v10052 = vmax.f32 %v7214, 0.0
        %v10053 = vmax.f32 %v7219, 0.0
        %v10054 = vmax.f32 %v7222, 0.0
        %v10055 = vmax.f32 %v7227, 0.0
        %v10056 = vmax.f32 %v7230, 0.0
        %v10057 = vmax.f32 %v7235, 0.0
        %v10058 = vmax.f32 %v7238, 0.0
        %v10059 = vmax.f32 %v7243, 0.0
        %v10060 = vmax.f32 %v7246, 0.0
        %v10061 = vmax.f32 %v7251, 0.0
        %v10062 = vmax.f32 %v7254, 0.0
        %v10063 = vmax.f32 %v7259, 0.0
        %v10064 = vmax.f32 %v7262, 0.0
        %v10065 = vmax.f32 %v7267, 0.0
        %v10066 = vmax.f32 %v7270, 0.0
        %v10067 = vmax.f32 %v7275, 0.0
        %v10068 = vmax.f32 %v7278, 0.0
        %v10069 = vmax.f32 %v7283, 0.0
        %v10070 = vmax.f32 %v7286, 0.0
        %v10071 = vmax.f32 %v7291, 0.0
        %v10072 = vmax.f32 %v7294, 0.0
        %v10073 = vmax.f32 %v7299, 0.0
        %v10074 = vmax.f32 %v7302, 0.0
        %v10075 = vmax.f32 %v7307, 0.0
        %v10076 = vmax.f32 %v7310, 0.0
        %v10077 = vmax.f32 %v7315, 0.0
        %v10078 = vmax.f32 %v7318, 0.0
        %v10079 = vmax.f32 %v7323, 0.0
        %v10080 = vmax.f32 %v7326, 0.0
        %v10081 = vmax.f32 %v7331, 0.0
        %v10082 = vmax.f32 %v7334, 0.0
        %v10083 = vmax.f32 %v7339, 0.0
        %v10084 = vmax.f32 %v7342, 0.0
        %v10085 = vmax.f32 %v7347, 0.0
        %v10086 = vmax.f32 %v7350, 0.0
        %v10087 = vmax.f32 %v7355, 0.0
        %v10088 = vmax.f32 %v7358, 0.0
        %v10089 = vmax.f32 %v7363, 0.0
        %v10090 = vmax.f32 %v7366, 0.0
        %v10091 = vmax.f32 %v7371, 0.0
        %v10092 = vmax.f32 %v7374, 0.0
        %v10093 = vmax.f32 %v7379, 0.0
        %v10094 = vmax.f32 %v7382, 0.0
        %v10095 = vmax.f32 %v7387, 0.0
        %v10096 = vmax.f32 %v7390, 0.0
        %v10097 = vmax.f32 %v7395, 0.0
        %v10098 = vmax.f32 %v7398, 0.0
        %v10099 = vmax.f32 %v7403, 0.0
        %v10100 = vmax.f32 %v7406, 0.0
        %v10101 = vmax.f32 %v7411, 0.0
        %v10102 = vmax.f32 %v7414, 0.0
        %v10103 = vmax.f32 %v7419, 0.0
        %v10104 = vmax.f32 %v7422, 0.0
        %v10105 = vmax.f32 %v7427, 0.0
        %v10106 = vmax.f32 %v7430, 0.0
        %v10107 = vmax.f32 %v7435, 0.0
        %v10108 = vmax.f32 %v7438, 0.0
        %v10109 = vmax.f32 %v7443, 0.0
        %v10110 = vmax.f32 %v7446, 0.0
        %v10111 = vmax.f32 %v7451, 0.0
        %v10112 = vmax.f32 %v7454, 0.0
        %v10113 = vmax.f32 %v7459, 0.0
        %v10114 = vmax.f32 %v7462, 0.0
        %v10115 = vmax.f32 %v7467, 0.0
        %v10116 = vmax.f32 %v7470, 0.0
        %v10117 = vmax.f32 %v7475, 0.0
        %v10118 = vmax.f32 %v7478, 0.0
        %v10119 = vmax.f32 %v7483, 0.0
        %v10120 = vmax.f32 %v7486, 0.0
        %v10121 = vmax.f32 %v7491, 0.0
        %v10122 = vmax.f32 %v7494, 0.0
        %v10123 = vmax.f32 %v7499, 0.0
        %v10124 = vmax.f32 %v7502, 0.0
        %v10125 = vmax.f32 %v7507, 0.0
        %v10126 = vmax.f32 %v7510, 0.0
        %v10127 = vmax.f32 %v7515, 0.0
        %v10128 = vmax.f32 %v7518, 0.0
        %v10129 = vmax.f32 %v7523, 0.0
        %v10130 = vmax.f32 %v7526, 0.0
        %v10131 = vmax.f32 %v7531, 0.0
        %v10132 = vmax.f32 %v7534, 0.0
        %v10133 = vmax.f32 %v7539, 0.0
        %v10134 = vmax.f32 %v7542, 0.0
        %v10135 = vmax.f32 %v7547, 0.0
        %v10136 = vmax.f32 %v7550, 0.0
        %v10137 = vmax.f32 %v7555, 0.0
        %v10138 = vmax.f32 %v7558, 0.0
        %v10139 = vmax.f32 %v7563, 0.0
        %v10140 = vmax.f32 %v7566, 0.0
        %v10141 = vmax.f32 %v7571, 0.0
        %v10142 = vmax.f32 %v7574, 0.0
        %v10143 = vmax.f32 %v7579, 0.0
        %v10144 = vmax.f32 %v7582, 0.0
        %v10145 = vmax.f32 %v7587, 0.0
        %v10146 = vmax.f32 %v7590, 0.0
        %v10147 = vmax.f32 %v7595, 0.0
        %v10148 = vmax.f32 %v7598, 0.0
        %v10149 = vmax.f32 %v7603, 0.0
        %v10150 = vmax.f32 %v7606, 0.0
        %v10151 = vmax.f32 %v7611, 0.0
        %v10152 = vmax.f32 %v7614, 0.0
        %v10153 = vmax.f32 %v7619, 0.0
        %v10154 = vmax.f32 %v7622, 0.0
        %v10155 = vmax.f32 %v7627, 0.0
        %v10156 = vmax.f32 %v7630, 0.0
        %v10157 = vmax.f32 %v7635, 0.0
        %v10158 = vmax.f32 %v7638, 0.0
        %v10159 = vmax.f32 %v7643, 0.0
        %v10160 = vmax.f32 %v7646, 0.0
        %v10161 = vmax.f32 %v7651, 0.0
        %v10162 = vmax.f32 %v7654, 0.0
        %v10163 = vmax.f32 %v7659, 0.0
        %v10164 = vmax.f32 %v7662, 0.0
        %v10165 = vmax.f32 %v7667, 0.0
        %v10166 = vmax.f32 %v7670, 0.0
        %v10167 = vmax.f32 %v7675, 0.0
        %v10168 = vmax.f32 %v7678, 0.0
        %v10169 = vmax.f32 %v7683, 0.0
        %v10170 = vmax.f32 %v7686, 0.0
        %v10171 = vmax.f32 %v7691, 0.0
        %v10172 = vmax.f32 %v7694, 0.0
        %v10173 = vmax.f32 %v7699, 0.0
        %v10174 = vmax.f32 %v7702, 0.0
        %v10175 = vmax.f32 %v7707, 0.0
        %v10176 = vmax.f32 %v7710, 0.0
        %v10177 = vmax.f32 %v7715, 0.0
        %v10178 = vmax.f32 %v7718, 0.0
        %v10179 = vmax.f32 %v7723, 0.0
        %v10180 = vmax.f32 %v7726, 0.0
        %v10181 = vmax.f32 %v7731, 0.0
        %v10182 = vmax.f32 %v7734, 0.0
        %v10183 = vmax.f32 %v7739, 0.0
        %v10184 = vmax.f32 %v7742, 0.0
        %v10185 = vmax.f32 %v7747, 0.0
        %v10186 = vmax.f32 %v7750, 0.0
        %v10187 = vmax.f32 %v7755, 0.0
        %v10188 = vmax.f32 %v7758, 0.0
        %v10189 = vmax.f32 %v7763, 0.0
        %v10190 = vmax.f32 %v7766, 0.0
        %v10191 = vmax.f32 %v7771, 0.0
        %v10192 = vmax.f32 %v7774, 0.0
        %v10193 = vmax.f32 %v7779, 0.0
        %v10194 = vmax.f32 %v7782, 0.0
        %v10195 = vmax.f32 %v7787, 0.0
        %v10196 = vmax.f32 %v7790, 0.0
        %v10197 = vmax.f32 %v7795, 0.0
        %v10198 = vmax.f32 %v7798, 0.0
        %v10199 = vmax.f32 %v7803, 0.0
        %v10200 = vmax.f32 %v7806, 0.0
        %v10201 = vmax.f32 %v7811, 0.0
        %v10202 = vmax.f32 %v7814, 0.0
        %v10203 = vmax.f32 %v7819, 0.0
        %v10204 = vmax.f32 %v7822, 0.0
        %v10205 = vmax.f32 %v7827, 0.0
        %v10206 = vmax.f32 %v7830, 0.0
        %v10207 = vmax.f32 %v7835, 0.0
        %v10208 = vmax.f32 %v7838, 0.0
        %v10209 = vmax.f32 %v7843, 0.0
        %v10210 = vmax.f32 %v7846, 0.0
        %v10211 = vmax.f32 %v7851, 0.0
        %v10212 = vmax.f32 %v7854, 0.0
        %v10213 = vmax.f32 %v7859, 0.0
        %v10214 = vmax.f32 %v7862, 0.0
        %v10215 = vmax.f32 %v7867, 0.0
        %v10216 = vmax.f32 %v7870, 0.0
        %v10217 = vmax.f32 %v7875, 0.0
        %v10218 = vmax.f32 %v7878, 0.0
        %v10219 = vmax.f32 %v7883, 0.0
        %v10220 = vmax.f32 %v7886, 0.0
        %v10221 = vmax.f32 %v7891, 0.0
        %v10222 = vmax.f32 %v7894, 0.0
        %v10223 = vmax.f32 %v7899, 0.0
        %v10224 = vmax.f32 %v7902, 0.0
        %v10225 = vmax.f32 %v7907, 0.0
        %v10226 = vmax.f32 %v7910, 0.0
        %v10227 = vmax.f32 %v7915, 0.0
        %v10228 = vmax.f32 %v7918, 0.0
        %v10229 = vmax.f32 %v7923, 0.0
        %v10230 = vmax.f32 %v7926, 0.0
        %v10231 = vmax.f32 %v7931, 0.0
        %v10232 = vmax.f32 %v7934, 0.0
        %v10233 = vmax.f32 %v7939, 0.0
        %v10234 = vmax.f32 %v7942, 0.0
        %v10235 = vmax.f32 %v7947, 0.0
        %v10236 = vmax.f32 %v7950, 0.0
        %v10237 = vmax.f32 %v7955, 0.0
        %v10238 = vmax.f32 %v7958, 0.0
        %v10239 = vmax.f32 %v7963, 0.0
        %v10240 = vmax.f32 %v7966, 0.0
        %v10241 = vmax.f32 %v7971, 0.0
        %v10242 = vmax.f32 %v7974, 0.0
        %v10243 = vmax.f32 %v7979, 0.0
        %v10244 = vmax.f32 %v7982, 0.0
        %v10245 = vmax.f32 %v7987, 0.0
        %v10246 = vmax.f32 %v7990, 0.0
        %v10247 = vmax.f32 %v7995, 0.0
        %v10248 = vmax.f32 %v7998, 0.0
        %v10249 = vmax.f32 %v8003, 0.0
        %v10250 = vmax.f32 %v8006, 0.0
        %v10251 = vmax.f32 %v8011, 0.0
        %v10252 = vmax.f32 %v8014, 0.0
        %v10253 = vmax.f32 %v8019, 0.0
        %v10254 = vmax.f32 %v8022, 0.0
        %v10255 = vmax.f32 %v8027, 0.0
        %v10256 = vmax.f32 %v8030, 0.0
        %v10257 = vmax.f32 %v8035, 0.0
        %v10258 = vmax.f32 %v8038, 0.0
        %v10259 = vmax.f32 %v8043, 0.0
        %v10260 = vmax.f32 %v8046, 0.0
        %v10261 = vmax.f32 %v8051, 0.0
        %v10262 = vmax.f32 %v8054, 0.0
        %v10263 = vmax.f32 %v8059, 0.0
        %v10264 = vmax.f32 %v8062, 0.0
        %v10265 = vmax.f32 %v8067, 0.0
        %v10266 = vmax.f32 %v8070, 0.0
        %v10267 = vmax.f32 %v8075, 0.0
        %v10268 = vmax.f32 %v8078, 0.0
        %v10269 = vmax.f32 %v8083, 0.0
        %v10270 = vmax.f32 %v8086, 0.0
        %v10271 = vmax.f32 %v8091, 0.0
        %v10272 = vmax.f32 %v8094, 0.0
        %v10273 = vmax.f32 %v8099, 0.0
        %v10274 = vmax.f32 %v8102, 0.0
        %v10275 = vmax.f32 %v8107, 0.0
        %v10276 = vmax.f32 %v8110, 0.0
        %v10277 = vmax.f32 %v8115, 0.0
        %v10278 = vmax.f32 %v8118, 0.0
        %v10279 = vmax.f32 %v8123, 0.0
        %v10280 = vmax.f32 %v8126, 0.0
        %v10281 = vmax.f32 %v8131, 0.0
        %v10282 = vmax.f32 %v8134, 0.0
        %v10283 = vmax.f32 %v8139, 0.0
        %v10284 = vmax.f32 %v8142, 0.0
        %v10285 = vmax.f32 %v8147, 0.0
        %v10286 = vmax.f32 %v8150, 0.0
        %v10287 = vmax.f32 %v8155, 0.0
        %v10288 = vmax.f32 %v8158, 0.0
        %v10289 = vmax.f32 %v8163, 0.0
        %v10290 = vmax.f32 %v8166, 0.0
        %v10291 = vmax.f32 %v8171, 0.0
        %v10292 = vmax.f32 %v8174, 0.0
        %v10293 = vmax.f32 %v8179, 0.0
        %v10294 = vmax.f32 %v8182, 0.0
        %v10295 = vmax.f32 %v8187, 0.0
        %v10296 = vmax.f32 %v8190, 0.0
        %v10297 = vmax.f32 %v8195, 0.0
        %v10298 = vmax.f32 %v8198, 0.0
        %v10299 = vmax.f32 %v8203, 0.0
        %v10300 = vmax.f32 %v8206, 0.0
        %v10301 = vmax.f32 %v8211, 0.0
        %v10302 = vmax.f32 %v8214, 0.0
        %v10303 = vmax.f32 %v8219, 0.0
        %v10304 = vmax.f32 %v8222, 0.0
        %v10305 = vmax.f32 %v8227, 0.0
        %v10306 = vmax.f32 %v8230, 0.0
        %v10307 = vmax.f32 %v8235, 0.0
        %v10308 = vmax.f32 %v8238, 0.0
        %v10309 = vmax.f32 %v8243, 0.0
        %v10310 = vmax.f32 %v8246, 0.0
        %v10311 = vmax.f32 %v8251, 0.0
        %v10312 = vmax.f32 %v8254, 0.0
        %v10313 = vmax.f32 %v8259, 0.0
        %v10314 = vmax.f32 %v8262, 0.0
        %v10315 = vmax.f32 %v8267, 0.0
        %v10316 = vmax.f32 %v8270, 0.0
        %v10317 = vmax.f32 %v8275, 0.0
        %v10318 = vmax.f32 %v8278, 0.0
        %v10319 = vmax.f32 %v8283, 0.0
        %v10320 = vmax.f32 %v8286, 0.0
        %v10321 = vmax.f32 %v8291, 0.0
        %v10322 = vmax.f32 %v8294, 0.0
        %v10323 = vmax.f32 %v8299, 0.0
        %v10324 = vmax.f32 %v8302, 0.0
        %v10325 = vmax.f32 %v8307, 0.0
        %v10326 = vmax.f32 %v8310, 0.0
        %v10327 = vmax.f32 %v8315, 0.0
        %v10328 = vmax.f32 %v8318, 0.0
        %v10329 = vmax.f32 %v8323, 0.0
        %v10330 = vmax.f32 %v8326, 0.0
        %v10331 = vmax.f32 %v8331, 0.0
        %v10332 = vmax.f32 %v8334, 0.0
        %v10333 = vmax.f32 %v8339, 0.0
        %v10334 = vmax.f32 %v8342, 0.0
        %v10335 = vmax.f32 %v8347, 0.0
        %v10336 = vmax.f32 %v8350, 0.0
        %v10337 = vmax.f32 %v8355, 0.0
        %v10338 = vmax.f32 %v8358, 0.0
        %v10339 = vmax.f32 %v8363, 0.0
        %v10340 = vmax.f32 %v8366, 0.0
        %v10341 = vmax.f32 %v8371, 0.0
        %v10342 = vmax.f32 %v8374, 0.0
        %v10343 = vmax.f32 %v8379, 0.0
        %v10344 = vmax.f32 %v8382, 0.0
        %v10345 = vmax.f32 %v8387, 0.0
        %v10346 = vmax.f32 %v8390, 0.0
        %v10347 = vmax.f32 %v8395, 0.0
        %v10348 = vmax.f32 %v8398, 0.0
        %v10349 = vmax.f32 %v8403, 0.0
        %v10350 = vmax.f32 %v8406, 0.0
        %v10351 = vmax.f32 %v8411, 0.0
        %v10352 = vmax.f32 %v8414, 0.0
        %v10353 = vmax.f32 %v8419, 0.0
        %v10354 = vmax.f32 %v8422, 0.0
        %v10355 = vmax.f32 %v8427, 0.0
        %v10356 = vmax.f32 %v8430, 0.0
        %v10357 = vmax.f32 %v8435, 0.0
        %v10358 = vmax.f32 %v8438, 0.0
        %v10359 = vmax.f32 %v8443, 0.0
        %v10360 = vmax.f32 %v8446, 0.0
        %v10361 = vmax.f32 %v8451, 0.0
        %v10362 = vmax.f32 %v8454, 0.0
        %v10363 = vmax.f32 %v8459, 0.0
        %v10364 = vmax.f32 %v8462, 0.0
        %v10365 = vmax.f32 %v8467, 0.0
        %v10366 = vmax.f32 %v8470, 0.0
        %v10367 = vmax.f32 %v8475, 0.0
        %v10368 = vmax.f32 %v8478, 0.0
        %v10369 = vmax.f32 %v8483, 0.0
        %v10370 = vmax.f32 %v8486, 0.0
        %v10371 = vmax.f32 %v8491, 0.0
        %v10372 = vmax.f32 %v8494, 0.0
        %v10373 = vmax.f32 %v8499, 0.0
        %v10374 = vmax.f32 %v8502, 0.0
        %v10375 = vmax.f32 %v8507, 0.0
        %v10376 = vmax.f32 %v8510, 0.0
        %v10377 = vmax.f32 %v8515, 0.0
        %v10378 = vmax.f32 %v8518, 0.0
        %v10379 = vmax.f32 %v8523, 0.0
        %v10380 = vmax.f32 %v8526, 0.0
        %v10381 = vmax.f32 %v8531, 0.0
        %v10382 = vmax.f32 %v8534, 0.0
        %v10383 = vmax.f32 %v8539, 0.0
        %v10384 = vmax.f32 %v8542, 0.0
        %v10385 = vmax.f32 %v8547, 0.0
        %v10386 = vmax.f32 %v8550, 0.0
        %v10387 = vmax.f32 %v8555, 0.0
        %v10388 = vmax.f32 %v8558, 0.0
        %v10389 = vmax.f32 %v8563, 0.0
        %v10390 = vmax.f32 %v8566, 0.0
        %v10391 = vmax.f32 %v8571, 0.0
        %v10392 = vmax.f32 %v8574, 0.0
        %v10393 = vmax.f32 %v8579, 0.0
        %v10394 = vmax.f32 %v8582, 0.0
        %v10395 = vmax.f32 %v8587, 0.0
        %v10396 = vmax.f32 %v8590, 0.0
        %v10397 = vmax.f32 %v8595, 0.0
        %v10398 = vmax.f32 %v8598, 0.0
        %v10399 = vmax.f32 %v8603, 0.0
        %v10400 = vmax.f32 %v8606, 0.0
        %v10401 = vmax.f32 %v8611, 0.0
        %v10402 = vmax.f32 %v8614, 0.0
        %v10403 = vmax.f32 %v8619, 0.0
        %v10404 = vmax.f32 %v8622, 0.0
        %v10405 = vmax.f32 %v8627, 0.0
        %v10406 = vmax.f32 %v8630, 0.0
        %v10407 = vmax.f32 %v8635, 0.0
        %v10408 = vmax.f32 %v8638, 0.0
        %v10409 = vmax.f32 %v8643, 0.0
        %v10410 = vmax.f32 %v8646, 0.0
        %v10411 = vmax.f32 %v8651, 0.0
        %v10412 = vmax.f32 %v8654, 0.0
        %v10413 = vmax.f32 %v8659, 0.0
        %v10414 = vmax.f32 %v8662, 0.0
        %v10415 = vmax.f32 %v8667, 0.0
        %v10416 = vmax.f32 %v8670, 0.0
        %v10417 = vmax.f32 %v8675, 0.0
        %v10418 = vmax.f32 %v8678, 0.0
        %v10419 = vmax.f32 %v8683, 0.0
        %v10420 = vmax.f32 %v8686, 0.0
        %v10421 = vmax.f32 %v8691, 0.0
        %v10422 = vmax.f32 %v8694, 0.0
        %v10423 = vmax.f32 %v8699, 0.0
        %v10424 = vmax.f32 %v8702, 0.0
        %v10425 = vmax.f32 %v8707, 0.0
        %v10426 = vmax.f32 %v8710, 0.0
        %v10427 = vmax.f32 %v8715, 0.0
        %v10428 = vmax.f32 %v8718, 0.0
        %v10429 = vmax.f32 %v8723, 0.0
        %v10430 = vmax.f32 %v8726, 0.0
        %v10431 = vmax.f32 %v8731, 0.0
        %v10432 = vmax.f32 %v8734, 0.0
        %v10433 = vmax.f32 %v8739, 0.0
        %v10434 = vmax.f32 %v8742, 0.0
        %v10435 = vmax.f32 %v8747, 0.0
        %v10436 = vmax.f32 %v8750, 0.0
        %v10437 = vmax.f32 %v8755, 0.0
        %v10438 = vmax.f32 %v8758, 0.0
        %v10439 = vmax.f32 %v8763, 0.0
        %v10440 = vmax.f32 %v8766, 0.0
        %v10441 = vmax.f32 %v8771, 0.0
        %v10442 = vmax.f32 %v8774, 0.0
        %v10443 = vmax.f32 %v8779, 0.0
        %v10444 = vmax.f32 %v8782, 0.0
        %v10445 = vmax.f32 %v8787, 0.0
        %v10446 = vmax.f32 %v8790, 0.0
        %v10447 = vmax.f32 %v8795, 0.0
        %v10448 = vmax.f32 %v8798, 0.0
        %v10449 = vmax.f32 %v8803, 0.0
        %v10450 = vmax.f32 %v8806, 0.0
        %v10451 = vmax.f32 %v8811, 0.0
        %v10452 = vmax.f32 %v8814, 0.0
        %v10453 = vmax.f32 %v8819, 0.0
        %v10454 = vmax.f32 %v8822, 0.0
        %v10455 = vmax.f32 %v8827, 0.0
        %v10456 = vmax.f32 %v8830, 0.0
        %v10457 = vmax.f32 %v8835, 0.0
        %v10458 = vmax.f32 %v8838, 0.0
        %v10459 = vmax.f32 %v8843, 0.0
        %v10460 = vmax.f32 %v8846, 0.0
        %v10461 = vmax.f32 %v8851, 0.0
        %v10462 = vmax.f32 %v8854, 0.0
        %v10463 = vmax.f32 %v8859, 0.0
        %v10464 = vmax.f32 %v8862, 0.0
        %v10465 = vmax.f32 %v8867, 0.0
        %v10466 = vmax.f32 %v8870, 0.0
        %v10467 = vmax.f32 %v8875, 0.0
        %v10468 = vmax.f32 %v8878, 0.0
        %v10469 = vmax.f32 %v8883, 0.0
        %v10470 = vmax.f32 %v8886, 0.0
        %v10471 = vmax.f32 %v8891, 0.0
        %v10472 = vmax.f32 %v8894, 0.0
        %v10473 = vmax.f32 %v8899, 0.0
        %v10474 = vmax.f32 %v8902, 0.0
        %v10475 = vmax.f32 %v8907, 0.0
        %v10476 = vmax.f32 %v8910, 0.0
        %v10477 = vmax.f32 %v8915, 0.0
        %v10478 = vmax.f32 %v8918, 0.0
        %v10479 = vmax.f32 %v8923, 0.0
        %v10480 = vmax.f32 %v8926, 0.0
        %v10481 = vmax.f32 %v8931, 0.0
        %v10482 = vmax.f32 %v8934, 0.0
        %v10483 = vmax.f32 %v8939, 0.0
        %v10484 = vmax.f32 %v8942, 0.0
        %v10485 = vmax.f32 %v8947, 0.0
        %v10486 = vmax.f32 %v8950, 0.0
        %v10487 = vmax.f32 %v8955, 0.0
        %v10488 = vmax.f32 %v8958, 0.0
        %v10489 = vmax.f32 %v8963, 0.0
        %v10490 = vmax.f32 %v8966, 0.0
        %v10491 = vmax.f32 %v8971, 0.0
        %v10492 = vmax.f32 %v8974, 0.0
        %v10493 = vmax.f32 %v8979, 0.0
        %v10494 = vmax.f32 %v8982, 0.0
        %v10495 = vmax.f32 %v8987, 0.0
        %v10496 = vmax.f32 %v8990, 0.0
        %v10497 = vmax.f32 %v8995, 0.0
        %v10498 = vmax.f32 %v8998, 0.0
        %v10499 = vmax.f32 %v9003, 0.0
        %v10500 = vmax.f32 %v9006, 0.0
        %v10501 = vmax.f32 %v9011, 0.0
        %v10502 = vmax.f32 %v9014, 0.0
        %v10503 = vmax.f32 %v9019, 0.0
        %v10504 = vmax.f32 %v9022, 0.0
        %v10505 = vmax.f32 %v9027, 0.0
        %v10506 = vmax.f32 %v9030, 0.0
        %v10507 = vmax.f32 %v9035, 0.0
        %v10508 = vmax.f32 %v9038, 0.0
        %v10509 = vmax.f32 %v9043, 0.0
        %v10510 = vmax.f32 %v9046, 0.0
        %v10511 = vmax.f32 %v9051, 0.0
        %v10512 = vmax.f32 %v9054, 0.0
        %v10513 = vmax.f32 %v9059, 0.0
        %v10514 = vmax.f32 %v9062, 0.0
        %v10515 = vmax.f32 %v9067, 0.0
        %v10516 = vmax.f32 %v9070, 0.0
        %v10517 = vmax.f32 %v9075, 0.0
        %v10518 = vmax.f32 %v9078, 0.0
        %v10519 = vmax.f32 %v9083, 0.0
        %v10520 = vmax.f32 %v9086, 0.0
        %v10521 = vmax.f32 %v9091, 0.0
        %v10522 = vmax.f32 %v9094, 0.0
        %v10523 = vmax.f32 %v9099, 0.0
        %v10524 = vmax.f32 %v9102, 0.0
        %v10525 = vmax.f32 %v9107, 0.0
        %v10526 = vmax.f32 %v9110, 0.0
        %v10527 = vmax.f32 %v9115, 0.0
        %v10528 = vmax.f32 %v9118, 0.0
        %v10529 = vmax.f32 %v9123, 0.0
        %v10530 = vmax.f32 %v9126, 0.0
        %v10531 = vmax.f32 %v9131, 0.0
        %v10532 = vmax.f32 %v9134, 0.0
        %v10533 = vmax.f32 %v9139, 0.0
        %v10534 = vmax.f32 %v9142, 0.0
        %v10535 = vmax.f32 %v9147, 0.0
        %v10536 = vmax.f32 %v9150, 0.0
        %v10537 = vmax.f32 %v9155, 0.0
        %v10538 = vmax.f32 %v9158, 0.0
        %v10539 = vmax.f32 %v9163, 0.0
        %v10540 = vmax.f32 %v9166, 0.0
        %v10541 = vmax.f32 %v9171, 0.0
        %v10542 = vmax.f32 %v9174, 0.0
        %v10543 = vmax.f32 %v9179, 0.0
        %v10544 = vmax.f32 %v9182, 0.0
        %v10545 = vmax.f32 %v9187, 0.0
        %v10546 = vmax.f32 %v9190, 0.0
        %v10547 = vmax.f32 %v9195, 0.0
        %v10548 = vmax.f32 %v9198, 0.0
        %v10549 = vmax.f32 %v9203, 0.0
        %v10550 = vmax.f32 %v9206, 0.0
        %v10551 = vmax.f32 %v9211, 0.0
        %v10552 = vmax.f32 %v9214, 0.0
        %v10553 = vmax.f32 %v9219, 0.0
        %v10554 = vmax.f32 %v9222, 0.0
        %v10555 = vmax.f32 %v9227, 0.0
        %v10556 = vmax.f32 %v9230, 0.0
        %v10557 = vmax.f32 %v9235, 0.0
        %v10558 = vmax.f32 %v9238, 0.0
        %v10559 = vmax.f32 %v9243, 0.0
        %v10560 = vmax.f32 %v9246, 0.0
        %v10561 = vmax.f32 %v9251, 0.0
        %v10562 = vmax.f32 %v9254, 0.0
        %v10563 = vmax.f32 %v9259, 0.0
        %v10564 = vmax.f32 %v9262, 0.0
        %v10565 = vmax.f32 %v9267, 0.0
        %v10566 = vmax.f32 %v9270, 0.0
        %v10567 = vmax.f32 %v9275, 0.0
        %v10568 = vmax.f32 %v9278, 0.0
        %v10569 = vmax.f32 %v9283, 0.0
        %v10570 = vmax.f32 %v9286, 0.0
        %v10571 = vmax.f32 %v9291, 0.0
        %v10572 = vmax.f32 %v9294, 0.0
        %v10573 = vmax.f32 %v9299, 0.0
        %v10574 = vmax.f32 %v9302, 0.0
        %v10575 = vmax.f32 %v9307, 0.0
        %v10576 = vmax.f32 %v9310, 0.0
        %v10577 = vmax.f32 %v9315, 0.0
        %v10578 = vmax.f32 %v9318, 0.0
        %v10579 = vmax.f32 %v9323, 0.0
        %v10580 = vmax.f32 %v9326, 0.0
        %v10581 = vmax.f32 %v9331, 0.0
        %v10582 = vmax.f32 %v9334, 0.0
        %v10583 = vmax.f32 %v9339, 0.0
        %v10584 = vmax.f32 %v9342, 0.0
        %v10585 = vmax.f32 %v9347, 0.0
        %v10586 = vmax.f32 %v9350, 0.0
        %v10587 = vmax.f32 %v9355, 0.0
        %v10588 = vmax.f32 %v9358, 0.0
        %v10589 = vmax.f32 %v9363, 0.0
        %v10590 = vmax.f32 %v9366, 0.0
        %v10591 = vmax.f32 %v9371, 0.0
        %v10592 = vmax.f32 %v9374, 0.0
        %v10593 = vmax.f32 %v9379, 0.0
        %v10594 = vmax.f32 %v9382, 0.0
        %v10595 = vmax.f32 %v9387, 0.0
        %v10596 = vmax.f32 %v9390, 0.0
        %v10597 = vmax.f32 %v9395, 0.0
        %v10598 = vmax.f32 %v9398, 0.0
        %v10599 = vmax.f32 %v9403, 0.0
        %v10600 = vmax.f32 %v9406, 0.0
        %v10601 = vmax.f32 %v9411, 0.0
        %v10602 = vmax.f32 %v9414, 0.0
        %v10603 = vmax.f32 %v9419, 0.0
        %v10604 = vmax.f32 %v9422, 0.0
        %v10605 = vmax.f32 %v9427, 0.0
        %v10606 = vmax.f32 %v9430, 0.0
        %v10607 = vmax.f32 %v9435, 0.0
        %v10608 = vmax.f32 %v9438, 0.0
        %v10609 = vmax.f32 %v9443, 0.0
        %v10610 = vmax.f32 %v9446, 0.0
        %v10611 = vmax.f32 %v9451, 0.0
        %v10612 = vmax.f32 %v9454, 0.0
        %v10613 = vmax.f32 %v9459, 0.0
        %v10614 = vmax.f32 %v9462, 0.0
        %v10615 = vmax.f32 %v9467, 0.0
        %v10616 = vmax.f32 %v9470, 0.0
        %v10617 = vmax.f32 %v9475, 0.0
        %v10618 = vmax.f32 %v9478, 0.0
        %v10619 = vmax.f32 %v9483, 0.0
        %v10620 = vmax.f32 %v9486, 0.0
        %v10621 = vmax.f32 %v9491, 0.0
        %v10622 = vmax.f32 %v9494, 0.0
        %v10623 = vmax.f32 %v9499, 0.0
        %v10624 = vmax.f32 %v9502, 0.0
        %v10625 = vmax.f32 %v9507, 0.0
        %v10626 = vmax.f32 %v9510, 0.0
        %v10627 = vmax.f32 %v9515, 0.0
        %v10628 = vmax.f32 %v9518, 0.0
        %v10629 = vmax.f32 %v9523, 0.0
        %v10630 = vmax.f32 %v9526, 0.0
        %v10631 = vmax.f32 %v9531, 0.0
        %v10632 = vmax.f32 %v9534, 0.0
        %v10633 = vmax.f32 %v9539, 0.0
        %v10634 = vmax.f32 %v9542, 0.0
        %v10635 = vmax.f32 %v9547, 0.0
        %v10636 = vmax.f32 %v9550, 0.0
        %v10637 = vmax.f32 %v9555, 0.0
        %v10638 = vmax.f32 %v9558, 0.0
        %v10639 = vmax.f32 %v9563, 0.0
        %v10640 = vmax.f32 %v9566, 0.0
        %v10641 = vmax.f32 %v9571, 0.0
        %v10642 = vmax.f32 %v9574, 0.0
        %v10643 = vmax.f32 %v9579, 0.0
        %v10644 = vmax.f32 %v9582, 0.0
        %v10645 = vmax.f32 %v9587, 0.0
        %v10646 = vmax.f32 %v9590, 0.0
        %v10647 = vmax.f32 %v9595, 0.0
        %v10648 = vmax.f32 %v9598, 0.0
        %v10649 = vmax.f32 %v9603, 0.0
        %v10650 = vmax.f32 %v9606, 0.0
        %v10651 = vmax.f32 %v9611, 0.0
        %v10652 = vmax.f32 %v9614, 0.0
        %v10653 = vmax.f32 %v9619, 0.0
        %v10654 = vmax.f32 %v9622, 0.0
        %v10655 = vmax.f32 %v9627, 0.0
        %v10656 = vmax.f32 %v9630, 0.0
        %v10657 = vadd.f32 %v9633, %v9634
        %v10658 = vadd.f32 %v10657, %v9635
        %v10659 = vadd.f32 %v10658, %v9636
        %v10660 = vadd.f32 %v10659, %v9637
        %v10661 = vadd.f32 %v10660, %v9638
        %v10662 = vadd.f32 %v10661, %v9639
        %v10663 = vadd.f32 %v10662, %v9640
        %v10664 = vadd.f32 %v10663, %v9641
        %v10665 = vadd.f32 %v10664, %v9642
        %v10666 = vadd.f32 %v10665, %v9643
        %v10667 = vadd.f32 %v10666, %v9644
        %v10668 = vadd.f32 %v10667, %v9645
        %v10669 = vadd.f32 %v10668, %v9646
        %v10670 = vadd.f32 %v10669, %v9647
        %v10671 = vadd.f32 %v10670, %v9648
        %v10672 = vadd.f32 %v10671, %v9649
        %v10673 = vadd.f32 %v10672, %v9650
        %v10674 = vadd.f32 %v10673, %v9651
        %v10675 = vadd.f32 %v10674, %v9652
        %v10676 = vadd.f32 %v10675, %v9653
        %v10677 = vadd.f32 %v10676, %v9654
        %v10678 = vadd.f32 %v10677, %v9655
        %v10679 = vadd.f32 %v10678, %v9656
        %v10680 = vadd.f32 %v10679, %v9657
        %v10681 = vadd.f32 %v10680, %v9658
        %v10682 = vadd.f32 %v10681, %v9659
        %v10683 = vadd.f32 %v10682, %v9660
        %v10684 = vadd.f32 %v10683, %v9661
        %v10685 = vadd.f32 %v10684, %v9662
        %v10686 = vadd.f32 %v10685, %v9663
        %v10687 = vadd.f32 %v10686, %v9664
        %v10688 = vrot.slane %v10687, 4
        %v10689 = vadd.f32 %v10687, %v10688
        %v10690 = vrot.slane %v10689, 2
        %v10691 = vadd.f32 %v10689, %v10690
        %v10692 = vrot.slane %v10691, 1
        %v10693 = vadd.f32 %v10691, %v10692
        %v10694 = vadd.f32 %v9665, %v9666
        %v10695 = vadd.f32 %v10694, %v9667
        %v10696 = vadd.f32 %v10695, %v9668
        %v10697 = vadd.f32 %v10696, %v9669
        %v10698 = vadd.f32 %v10697, %v9670
        %v10699 = vadd.f32 %v10698, %v9671
        %v10700 = vadd.f32 %v10699, %v9672
        %v10701 = vadd.f32 %v10700, %v9673
        %v10702 = vadd.f32 %v10701, %v9674
        %v10703 = vadd.f32 %v10702, %v9675
        %v10704 = vadd.f32 %v10703, %v9676
        %v10705 = vadd.f32 %v10704, %v9677
        %v10706 = vadd.f32 %v10705, %v9678
        %v10707 = vadd.f32 %v10706, %v9679
        %v10708 = vadd.f32 %v10707, %v9680
        %v10709 = vadd.f32 %v10708, %v9681
        %v10710 = vadd.f32 %v10709, %v9682
        %v10711 = vadd.f32 %v10710, %v9683
        %v10712 = vadd.f32 %v10711, %v9684
        %v10713 = vadd.f32 %v10712, %v9685
        %v10714 = vadd.f32 %v10713, %v9686
        %v10715 = vadd.f32 %v10714, %v9687
        %v10716 = vadd.f32 %v10715, %v9688
        %v10717 = vadd.f32 %v10716, %v9689
        %v10718 = vadd.f32 %v10717, %v9690
        %v10719 = vadd.f32 %v10718, %v9691
        %v10720 = vadd.f32 %v10719, %v9692
        %v10721 = vadd.f32 %v10720, %v9693
        %v10722 = vadd.f32 %v10721, %v9694
        %v10723 = vadd.f32 %v10722, %v9695
        %v10724 = vadd.f32 %v10723, %v9696
        %v10725 = vrot.slane %v10724, 4
        %v10726 = vadd.f32 %v10724, %v10725
        %v10727 = vrot.slane %v10726, 2
        %v10728 = vadd.f32 %v10726, %v10727
        %v10729 = vrot.slane %v10728, 1
        %v10730 = vadd.f32 %v10728, %v10729
        %v10731 = vadd.f32 %v9697, %v9698
        %v10732 = vadd.f32 %v10731, %v9699
        %v10733 = vadd.f32 %v10732, %v9700
        %v10734 = vadd.f32 %v10733, %v9701
        %v10735 = vadd.f32 %v10734, %v9702
        %v10736 = vadd.f32 %v10735, %v9703
        %v10737 = vadd.f32 %v10736, %v9704
        %v10738 = vadd.f32 %v10737, %v9705
        %v10739 = vadd.f32 %v10738, %v9706
        %v10740 = vadd.f32 %v10739, %v9707
        %v10741 = vadd.f32 %v10740, %v9708
        %v10742 = vadd.f32 %v10741, %v9709
        %v10743 = vadd.f32 %v10742, %v9710
        %v10744 = vadd.f32 %v10743, %v9711
        %v10745 = vadd.f32 %v10744, %v9712
        %v10746 = vadd.f32 %v10745, %v9713
        %v10747 = vadd.f32 %v10746, %v9714
        %v10748 = vadd.f32 %v10747, %v9715
        %v10749 = vadd.f32 %v10748, %v9716
        %v10750 = vadd.f32 %v10749, %v9717
        %v10751 = vadd.f32 %v10750, %v9718
        %v10752 = vadd.f32 %v10751, %v9719
        %v10753 = vadd.f32 %v10752, %v9720
        %v10754 = vadd.f32 %v10753, %v9721
        %v10755 = vadd.f32 %v10754, %v9722
        %v10756 = vadd.f32 %v10755, %v9723
        %v10757 = vadd.f32 %v10756, %v9724
        %v10758 = vadd.f32 %v10757, %v9725
        %v10759 = vadd.f32 %v10758, %v9726
        %v10760 = vadd.f32 %v10759, %v9727
        %v10761 = vadd.f32 %v10760, %v9728
        %v10762 = vrot.slane %v10761, 4
        %v10763 = vadd.f32 %v10761, %v10762
        %v10764 = vrot.slane %v10763, 2
        %v10765 = vadd.f32 %v10763, %v10764
        %v10766 = vrot.slane %v10765, 1
        %v10767 = vadd.f32 %v10765, %v10766
        %v10768 = vadd.f32 %v9729, %v9730
        %v10769 = vadd.f32 %v10768, %v9731
        %v10770 = vadd.f32 %v10769, %v9732
        %v10771 = vadd.f32 %v10770, %v9733
        %v10772 = vadd.f32 %v10771, %v9734
        %v10773 = vadd.f32 %v10772, %v9735
        %v10774 = vadd.f32 %v10773, %v9736
        %v10775 = vadd.f32 %v10774, %v9737
        %v10776 = vadd.f32 %v10775, %v9738
        %v10777 = vadd.f32 %v10776, %v9739
        %v10778 = vadd.f32 %v10777, %v9740
        %v10779 = vadd.f32 %v10778, %v9741
        %v10780 = vadd.f32 %v10779, %v9742
        %v10781 = vadd.f32 %v10780, %v9743
        %v10782 = vadd.f32 %v10781, %v9744
        %v10783 = vadd.f32 %v10782, %v9745
        %v10784 = vadd.f32 %v10783, %v9746
        %v10785 = vadd.f32 %v10784, %v9747
        %v10786 = vadd.f32 %v10785, %v9748
        %v10787 = vadd.f32 %v10786, %v9749
        %v10788 = vadd.f32 %v10787, %v9750
        %v10789 = vadd.f32 %v10788, %v9751
        %v10790 = vadd.f32 %v10789, %v9752
        %v10791 = vadd.f32 %v10790, %v9753
        %v10792 = vadd.f32 %v10791, %v9754
        %v10793 = vadd.f32 %v10792, %v9755
        %v10794 = vadd.f32 %v10793, %v9756
        %v10795 = vadd.f32 %v10794, %v9757
        %v10796 = vadd.f32 %v10795, %v9758
        %v10797 = vadd.f32 %v10796, %v9759
        %v10798 = vadd.f32 %v10797, %v9760
        %v10799 = vrot.slane %v10798, 4
        %v10800 = vadd.f32 %v10798, %v10799
        %v10801 = vrot.slane %v10800, 2
        %v10802 = vadd.f32 %v10800, %v10801
        %v10803 = vrot.slane %v10802, 1
        %v10804 = vadd.f32 %v10802, %v10803
        %v10805 = vadd.f32 %v9761, %v9762
        %v10806 = vadd.f32 %v10805, %v9763
        %v10807 = vadd.f32 %v10806, %v9764
        %v10808 = vadd.f32 %v10807, %v9765
        %v10809 = vadd.f32 %v10808, %v9766
        %v10810 = vadd.f32 %v10809, %v9767
        %v10811 = vadd.f32 %v10810, %v9768
        %v10812 = vadd.f32 %v10811, %v9769
        %v10813 = vadd.f32 %v10812, %v9770
        %v10814 = vadd.f32 %v10813, %v9771
        %v10815 = vadd.f32 %v10814, %v9772
        %v10816 = vadd.f32 %v10815, %v9773
        %v10817 = vadd.f32 %v10816, %v9774
        %v10818 = vadd.f32 %v10817, %v9775
        %v10819 = vadd.f32 %v10818, %v9776
        %v10820 = vadd.f32 %v10819, %v9777
        %v10821 = vadd.f32 %v10820, %v9778
        %v10822 = vadd.f32 %v10821, %v9779
        %v10823 = vadd.f32 %v10822, %v9780
        %v10824 = vadd.f32 %v10823, %v9781
        %v10825 = vadd.f32 %v10824, %v9782
        %v10826 = vadd.f32 %v10825, %v9783
        %v10827 = vadd.f32 %v10826, %v9784
        %v10828 = vadd.f32 %v10827, %v9785
        %v10829 = vadd.f32 %v10828, %v9786
        %v10830 = vadd.f32 %v10829, %v9787
        %v10831 = vadd.f32 %v10830, %v9788
        %v10832 = vadd.f32 %v10831, %v9789
        %v10833 = vadd.f32 %v10832, %v9790
        %v10834 = vadd.f32 %v10833, %v9791
        %v10835 = vadd.f32 %v10834, %v9792
        %v10836 = vrot.slane %v10835, 4
        %v10837 = vadd.f32 %v10835, %v10836
        %v10838 = vrot.slane %v10837, 2
        %v10839 = vadd.f32 %v10837, %v10838
        %v10840 = vrot.slane %v10839, 1
        %v10841 = vadd.f32 %v10839, %v10840
        %v10842 = vadd.f32 %v9793, %v9794
        %v10843 = vadd.f32 %v10842, %v9795
        %v10844 = vadd.f32 %v10843, %v9796
        %v10845 = vadd.f32 %v10844, %v9797
        %v10846 = vadd.f32 %v10845, %v9798
        %v10847 = vadd.f32 %v10846, %v9799
        %v10848 = vadd.f32 %v10847, %v9800
        %v10849 = vadd.f32 %v10848, %v9801
        %v10850 = vadd.f32 %v10849, %v9802
        %v10851 = vadd.f32 %v10850, %v9803
        %v10852 = vadd.f32 %v10851, %v9804
        %v10853 = vadd.f32 %v10852, %v9805
        %v10854 = vadd.f32 %v10853, %v9806
        %v10855 = vadd.f32 %v10854, %v9807
        %v10856 = vadd.f32 %v10855, %v9808
        %v10857 = vadd.f32 %v10856, %v9809
        %v10858 = vadd.f32 %v10857, %v9810
        %v10859 = vadd.f32 %v10858, %v9811
        %v10860 = vadd.f32 %v10859, %v9812
        %v10861 = vadd.f32 %v10860, %v9813
        %v10862 = vadd.f32 %v10861, %v9814
        %v10863 = vadd.f32 %v10862, %v9815
        %v10864 = vadd.f32 %v10863, %v9816
        %v10865 = vadd.f32 %v10864, %v9817
        %v10866 = vadd.f32 %v10865, %v9818
        %v10867 = vadd.f32 %v10866, %v9819
        %v10868 = vadd.f32 %v10867, %v9820
        %v10869 = vadd.f32 %v10868, %v9821
        %v10870 = vadd.f32 %v10869, %v9822
        %v10871 = vadd.f32 %v10870, %v9823
        %v10872 = vadd.f32 %v10871, %v9824
        %v10873 = vrot.slane %v10872, 4
        %v10874 = vadd.f32 %v10872, %v10873
        %v10875 = vrot.slane %v10874, 2
        %v10876 = vadd.f32 %v10874, %v10875
        %v10877 = vrot.slane %v10876, 1
        %v10878 = vadd.f32 %v10876, %v10877
        %v10879 = vadd.f32 %v9825, %v9826
        %v10880 = vadd.f32 %v10879, %v9827
        %v10881 = vadd.f32 %v10880, %v9828
        %v10882 = vadd.f32 %v10881, %v9829
        %v10883 = vadd.f32 %v10882, %v9830
        %v10884 = vadd.f32 %v10883, %v9831
        %v10885 = vadd.f32 %v10884, %v9832
        %v10886 = vadd.f32 %v10885, %v9833
        %v10887 = vadd.f32 %v10886, %v9834
        %v10888 = vadd.f32 %v10887, %v9835
        %v10889 = vadd.f32 %v10888, %v9836
        %v10890 = vadd.f32 %v10889, %v9837
        %v10891 = vadd.f32 %v10890, %v9838
        %v10892 = vadd.f32 %v10891, %v9839
        %v10893 = vadd.f32 %v10892, %v9840
        %v10894 = vadd.f32 %v10893, %v9841
        %v10895 = vadd.f32 %v10894, %v9842
        %v10896 = vadd.f32 %v10895, %v9843
        %v10897 = vadd.f32 %v10896, %v9844
        %v10898 = vadd.f32 %v10897, %v9845
        %v10899 = vadd.f32 %v10898, %v9846
        %v10900 = vadd.f32 %v10899, %v9847
        %v10901 = vadd.f32 %v10900, %v9848
        %v10902 = vadd.f32 %v10901, %v9849
        %v10903 = vadd.f32 %v10902, %v9850
        %v10904 = vadd.f32 %v10903, %v9851
        %v10905 = vadd.f32 %v10904, %v9852
        %v10906 = vadd.f32 %v10905, %v9853
        %v10907 = vadd.f32 %v10906, %v9854
        %v10908 = vadd.f32 %v10907, %v9855
        %v10909 = vadd.f32 %v10908, %v9856
        %v10910 = vrot.slane %v10909, 4
        %v10911 = vadd.f32 %v10909, %v10910
        %v10912 = vrot.slane %v10911, 2
        %v10913 = vadd.f32 %v10911, %v10912
        %v10914 = vrot.slane %v10913, 1
        %v10915 = vadd.f32 %v10913, %v10914
        %v10916 = vadd.f32 %v9857, %v9858
        %v10917 = vadd.f32 %v10916, %v9859
        %v10918 = vadd.f32 %v10917, %v9860
        %v10919 = vadd.f32 %v10918, %v9861
        %v10920 = vadd.f32 %v10919, %v9862
        %v10921 = vadd.f32 %v10920, %v9863
        %v10922 = vadd.f32 %v10921, %v9864
        %v10923 = vadd.f32 %v10922, %v9865
        %v10924 = vadd.f32 %v10923, %v9866
        %v10925 = vadd.f32 %v10924, %v9867
        %v10926 = vadd.f32 %v10925, %v9868
        %v10927 = vadd.f32 %v10926, %v9869
        %v10928 = vadd.f32 %v10927, %v9870
        %v10929 = vadd.f32 %v10928, %v9871
        %v10930 = vadd.f32 %v10929, %v9872
        %v10931 = vadd.f32 %v10930, %v9873
        %v10932 = vadd.f32 %v10931, %v9874
        %v10933 = vadd.f32 %v10932, %v9875
        %v10934 = vadd.f32 %v10933, %v9876
        %v10935 = vadd.f32 %v10934, %v9877
        %v10936 = vadd.f32 %v10935, %v9878
        %v10937 = vadd.f32 %v10936, %v9879
        %v10938 = vadd.f32 %v10937, %v9880
        %v10939 = vadd.f32 %v10938, %v9881
        %v10940 = vadd.f32 %v10939, %v9882
        %v10941 = vadd.f32 %v10940, %v9883
        %v10942 = vadd.f32 %v10941, %v9884
        %v10943 = vadd.f32 %v10942, %v9885
        %v10944 = vadd.f32 %v10943, %v9886
        %v10945 = vadd.f32 %v10944, %v9887
        %v10946 = vadd.f32 %v10945, %v9888
        %v10947 = vrot.slane %v10946, 4
        %v10948 = vadd.f32 %v10946, %v10947
        %v10949 = vrot.slane %v10948, 2
        %v10950 = vadd.f32 %v10948, %v10949
        %v10951 = vrot.slane %v10950, 1
        %v10952 = vadd.f32 %v10950, %v10951
        %v10953 = vadd.f32 %v9889, %v9890
        %v10954 = vadd.f32 %v10953, %v9891
        %v10955 = vadd.f32 %v10954, %v9892
        %v10956 = vadd.f32 %v10955, %v9893
        %v10957 = vadd.f32 %v10956, %v9894
        %v10958 = vadd.f32 %v10957, %v9895
        %v10959 = vadd.f32 %v10958, %v9896
        %v10960 = vadd.f32 %v10959, %v9897
        %v10961 = vadd.f32 %v10960, %v9898
        %v10962 = vadd.f32 %v10961, %v9899
        %v10963 = vadd.f32 %v10962, %v9900
        %v10964 = vadd.f32 %v10963, %v9901
        %v10965 = vadd.f32 %v10964, %v9902
        %v10966 = vadd.f32 %v10965, %v9903
        %v10967 = vadd.f32 %v10966, %v9904
        %v10968 = vadd.f32 %v10967, %v9905
        %v10969 = vadd.f32 %v10968, %v9906
        %v10970 = vadd.f32 %v10969, %v9907
        %v10971 = vadd.f32 %v10970, %v9908
        %v10972 = vadd.f32 %v10971, %v9909
        %v10973 = vadd.f32 %v10972, %v9910
        %v10974 = vadd.f32 %v10973, %v9911
        %v10975 = vadd.f32 %v10974, %v9912
        %v10976 = vadd.f32 %v10975, %v9913
        %v10977 = vadd.f32 %v10976, %v9914
        %v10978 = vadd.f32 %v10977, %v9915
        %v10979 = vadd.f32 %v10978, %v9916
        %v10980 = vadd.f32 %v10979, %v9917
        %v10981 = vadd.f32 %v10980, %v9918
        %v10982 = vadd.f32 %v10981, %v9919
        %v10983 = vadd.f32 %v10982, %v9920
        %v10984 = vrot.slane %v10983, 4
        %v10985 = vadd.f32 %v10983, %v10984
        %v10986 = vrot.slane %v10985, 2
        %v10987 = vadd.f32 %v10985, %v10986
        %v10988 = vrot.slane %v10987, 1
        %v10989 = vadd.f32 %v10987, %v10988
        %v10990 = vadd.f32 %v9921, %v9922
        %v10991 = vadd.f32 %v10990, %v9923
        %v10992 = vadd.f32 %v10991, %v9924
        %v10993 = vadd.f32 %v10992, %v9925
        %v10994 = vadd.f32 %v10993, %v9926
        %v10995 = vadd.f32 %v10994, %v9927
        %v10996 = vadd.f32 %v10995, %v9928
        %v10997 = vadd.f32 %v10996, %v9929
        %v10998 = vadd.f32 %v10997, %v9930
        %v10999 = vadd.f32 %v10998, %v9931
        %v11000 = vadd.f32 %v10999, %v9932
        %v11001 = vadd.f32 %v11000, %v9933
        %v11002 = vadd.f32 %v11001, %v9934
        %v11003 = vadd.f32 %v11002, %v9935
        %v11004 = vadd.f32 %v11003, %v9936
        %v11005 = vadd.f32 %v11004, %v9937
        %v11006 = vadd.f32 %v11005, %v9938
        %v11007 = vadd.f32 %v11006, %v9939
        %v11008 = vadd.f32 %v11007, %v9940
        %v11009 = vadd.f32 %v11008, %v9941
        %v11010 = vadd.f32 %v11009, %v9942
        %v11011 = vadd.f32 %v11010, %v9943
        %v11012 = vadd.f32 %v11011, %v9944
        %v11013 = vadd.f32 %v11012, %v9945
        %v11014 = vadd.f32 %v11013, %v9946
        %v11015 = vadd.f32 %v11014, %v9947
        %v11016 = vadd.f32 %v11015, %v9948
        %v11017 = vadd.f32 %v11016, %v9949
        %v11018 = vadd.f32 %v11017, %v9950
        %v11019 = vadd.f32 %v11018, %v9951
        %v11020 = vadd.f32 %v11019, %v9952
        %v11021 = vrot.slane %v11020, 4
        %v11022 = vadd.f32 %v11020, %v11021
        %v11023 = vrot.slane %v11022, 2
        %v11024 = vadd.f32 %v11022, %v11023
        %v11025 = vrot.slane %v11024, 1
        %v11026 = vadd.f32 %v11024, %v11025
        %v11027 = vadd.f32 %v9953, %v9954
        %v11028 = vadd.f32 %v11027, %v9955
        %v11029 = vadd.f32 %v11028, %v9956
        %v11030 = vadd.f32 %v11029, %v9957
        %v11031 = vadd.f32 %v11030, %v9958
        %v11032 = vadd.f32 %v11031, %v9959
        %v11033 = vadd.f32 %v11032, %v9960
        %v11034 = vadd.f32 %v11033, %v9961
        %v11035 = vadd.f32 %v11034, %v9962
        %v11036 = vadd.f32 %v11035, %v9963
        %v11037 = vadd.f32 %v11036, %v9964
        %v11038 = vadd.f32 %v11037, %v9965
        %v11039 = vadd.f32 %v11038, %v9966
        %v11040 = vadd.f32 %v11039, %v9967
        %v11041 = vadd.f32 %v11040, %v9968
        %v11042 = vadd.f32 %v11041, %v9969
        %v11043 = vadd.f32 %v11042, %v9970
        %v11044 = vadd.f32 %v11043, %v9971
        %v11045 = vadd.f32 %v11044, %v9972
        %v11046 = vadd.f32 %v11045, %v9973
        %v11047 = vadd.f32 %v11046, %v9974
        %v11048 = vadd.f32 %v11047, %v9975
        %v11049 = vadd.f32 %v11048, %v9976
        %v11050 = vadd.f32 %v11049, %v9977
        %v11051 = vadd.f32 %v11050, %v9978
        %v11052 = vadd.f32 %v11051, %v9979
        %v11053 = vadd.f32 %v11052, %v9980
        %v11054 = vadd.f32 %v11053, %v9981
        %v11055 = vadd.f32 %v11054, %v9982
        %v11056 = vadd.f32 %v11055, %v9983
        %v11057 = vadd.f32 %v11056, %v9984
        %v11058 = vrot.slane %v11057, 4
        %v11059 = vadd.f32 %v11057, %v11058
        %v11060 = vrot.slane %v11059, 2
        %v11061 = vadd.f32 %v11059, %v11060
        %v11062 = vrot.slane %v11061, 1
        %v11063 = vadd.f32 %v11061, %v11062
        %v11064 = vadd.f32 %v9985, %v9986
        %v11065 = vadd.f32 %v11064, %v9987
        %v11066 = vadd.f32 %v11065, %v9988
        %v11067 = vadd.f32 %v11066, %v9989
        %v11068 = vadd.f32 %v11067, %v9990
        %v11069 = vadd.f32 %v11068, %v9991
        %v11070 = vadd.f32 %v11069, %v9992
        %v11071 = vadd.f32 %v11070, %v9993
        %v11072 = vadd.f32 %v11071, %v9994
        %v11073 = vadd.f32 %v11072, %v9995
        %v11074 = vadd.f32 %v11073, %v9996
        %v11075 = vadd.f32 %v11074, %v9997
        %v11076 = vadd.f32 %v11075, %v9998
        %v11077 = vadd.f32 %v11076, %v9999
        %v11078 = vadd.f32 %v11077, %v10000
        %v11079 = vadd.f32 %v11078, %v10001
        %v11080 = vadd.f32 %v11079, %v10002
        %v11081 = vadd.f32 %v11080, %v10003
        %v11082 = vadd.f32 %v11081, %v10004
        %v11083 = vadd.f32 %v11082, %v10005
        %v11084 = vadd.f32 %v11083, %v10006
        %v11085 = vadd.f32 %v11084, %v10007
        %v11086 = vadd.f32 %v11085, %v10008
        %v11087 = vadd.f32 %v11086, %v10009
        %v11088 = vadd.f32 %v11087, %v10010
        %v11089 = vadd.f32 %v11088, %v10011
        %v11090 = vadd.f32 %v11089, %v10012
        %v11091 = vadd.f32 %v11090, %v10013
        %v11092 = vadd.f32 %v11091, %v10014
        %v11093 = vadd.f32 %v11092, %v10015
        %v11094 = vadd.f32 %v11093, %v10016
        %v11095 = vrot.slane %v11094, 4
        %v11096 = vadd.f32 %v11094, %v11095
        %v11097 = vrot.slane %v11096, 2
        %v11098 = vadd.f32 %v11096, %v11097
        %v11099 = vrot.slane %v11098, 1
        %v11100 = vadd.f32 %v11098, %v11099
        %v11101 = vadd.f32 %v10017, %v10018
        %v11102 = vadd.f32 %v11101, %v10019
        %v11103 = vadd.f32 %v11102, %v10020
        %v11104 = vadd.f32 %v11103, %v10021
        %v11105 = vadd.f32 %v11104, %v10022
        %v11106 = vadd.f32 %v11105, %v10023
        %v11107 = vadd.f32 %v11106, %v10024
        %v11108 = vadd.f32 %v11107, %v10025
        %v11109 = vadd.f32 %v11108, %v10026
        %v11110 = vadd.f32 %v11109, %v10027
        %v11111 = vadd.f32 %v11110, %v10028
        %v11112 = vadd.f32 %v11111, %v10029
        %v11113 = vadd.f32 %v11112, %v10030
        %v11114 = vadd.f32 %v11113, %v10031
        %v11115 = vadd.f32 %v11114, %v10032
        %v11116 = vadd.f32 %v11115, %v10033
        %v11117 = vadd.f32 %v11116, %v10034
        %v11118 = vadd.f32 %v11117, %v10035
        %v11119 = vadd.f32 %v11118, %v10036
        %v11120 = vadd.f32 %v11119, %v10037
        %v11121 = vadd.f32 %v11120, %v10038
        %v11122 = vadd.f32 %v11121, %v10039
        %v11123 = vadd.f32 %v11122, %v10040
        %v11124 = vadd.f32 %v11123, %v10041
        %v11125 = vadd.f32 %v11124, %v10042
        %v11126 = vadd.f32 %v11125, %v10043
        %v11127 = vadd.f32 %v11126, %v10044
        %v11128 = vadd.f32 %v11127, %v10045
        %v11129 = vadd.f32 %v11128, %v10046
        %v11130 = vadd.f32 %v11129, %v10047
        %v11131 = vadd.f32 %v11130, %v10048
        %v11132 = vrot.slane %v11131, 4
        %v11133 = vadd.f32 %v11131, %v11132
        %v11134 = vrot.slane %v11133, 2
        %v11135 = vadd.f32 %v11133, %v11134
        %v11136 = vrot.slane %v11135, 1
        %v11137 = vadd.f32 %v11135, %v11136
        %v11138 = vadd.f32 %v10049, %v10050
        %v11139 = vadd.f32 %v11138, %v10051
        %v11140 = vadd.f32 %v11139, %v10052
        %v11141 = vadd.f32 %v11140, %v10053
        %v11142 = vadd.f32 %v11141, %v10054
        %v11143 = vadd.f32 %v11142, %v10055
        %v11144 = vadd.f32 %v11143, %v10056
        %v11145 = vadd.f32 %v11144, %v10057
        %v11146 = vadd.f32 %v11145, %v10058
        %v11147 = vadd.f32 %v11146, %v10059
        %v11148 = vadd.f32 %v11147, %v10060
        %v11149 = vadd.f32 %v11148, %v10061
        %v11150 = vadd.f32 %v11149, %v10062
        %v11151 = vadd.f32 %v11150, %v10063
        %v11152 = vadd.f32 %v11151, %v10064
        %v11153 = vadd.f32 %v11152, %v10065
        %v11154 = vadd.f32 %v11153, %v10066
        %v11155 = vadd.f32 %v11154, %v10067
        %v11156 = vadd.f32 %v11155, %v10068
        %v11157 = vadd.f32 %v11156, %v10069
        %v11158 = vadd.f32 %v11157, %v10070
        %v11159 = vadd.f32 %v11158, %v10071
        %v11160 = vadd.f32 %v11159, %v10072
        %v11161 = vadd.f32 %v11160, %v10073
        %v11162 = vadd.f32 %v11161, %v10074
        %v11163 = vadd.f32 %v11162, %v10075
        %v11164 = vadd.f32 %v11163, %v10076
        %v11165 = vadd.f32 %v11164, %v10077
        %v11166 = vadd.f32 %v11165, %v10078
        %v11167 = vadd.f32 %v11166, %v10079
        %v11168 = vadd.f32 %v11167, %v10080
        %v11169 = vrot.slane %v11168, 4
        %v11170 = vadd.f32 %v11168, %v11169
        %v11171 = vrot.slane %v11170, 2
        %v11172 = vadd.f32 %v11170, %v11171
        %v11173 = vrot.slane %v11172, 1
        %v11174 = vadd.f32 %v11172, %v11173
        %v11175 = vadd.f32 %v10081, %v10082
        %v11176 = vadd.f32 %v11175, %v10083
        %v11177 = vadd.f32 %v11176, %v10084
        %v11178 = vadd.f32 %v11177, %v10085
        %v11179 = vadd.f32 %v11178, %v10086
        %v11180 = vadd.f32 %v11179, %v10087
        %v11181 = vadd.f32 %v11180, %v10088
        %v11182 = vadd.f32 %v11181, %v10089
        %v11183 = vadd.f32 %v11182, %v10090
        %v11184 = vadd.f32 %v11183, %v10091
        %v11185 = vadd.f32 %v11184, %v10092
        %v11186 = vadd.f32 %v11185, %v10093
        %v11187 = vadd.f32 %v11186, %v10094
        %v11188 = vadd.f32 %v11187, %v10095
        %v11189 = vadd.f32 %v11188, %v10096
        %v11190 = vadd.f32 %v11189, %v10097
        %v11191 = vadd.f32 %v11190, %v10098
        %v11192 = vadd.f32 %v11191, %v10099
        %v11193 = vadd.f32 %v11192, %v10100
        %v11194 = vadd.f32 %v11193, %v10101
        %v11195 = vadd.f32 %v11194, %v10102
        %v11196 = vadd.f32 %v11195, %v10103
        %v11197 = vadd.f32 %v11196, %v10104
        %v11198 = vadd.f32 %v11197, %v10105
        %v11199 = vadd.f32 %v11198, %v10106
        %v11200 = vadd.f32 %v11199, %v10107
        %v11201 = vadd.f32 %v11200, %v10108
        %v11202 = vadd.f32 %v11201, %v10109
        %v11203 = vadd.f32 %v11202, %v10110
        %v11204 = vadd.f32 %v11203, %v10111
        %v11205 = vadd.f32 %v11204, %v10112
        %v11206 = vrot.slane %v11205, 4
        %v11207 = vadd.f32 %v11205, %v11206
        %v11208 = vrot.slane %v11207, 2
        %v11209 = vadd.f32 %v11207, %v11208
        %v11210 = vrot.slane %v11209, 1
        %v11211 = vadd.f32 %v11209, %v11210
        %v11212 = vadd.f32 %v10113, %v10114
        %v11213 = vadd.f32 %v11212, %v10115
        %v11214 = vadd.f32 %v11213, %v10116
        %v11215 = vadd.f32 %v11214, %v10117
        %v11216 = vadd.f32 %v11215, %v10118
        %v11217 = vadd.f32 %v11216, %v10119
        %v11218 = vadd.f32 %v11217, %v10120
        %v11219 = vadd.f32 %v11218, %v10121
        %v11220 = vadd.f32 %v11219, %v10122
        %v11221 = vadd.f32 %v11220, %v10123
        %v11222 = vadd.f32 %v11221, %v10124
        %v11223 = vadd.f32 %v11222, %v10125
        %v11224 = vadd.f32 %v11223, %v10126
        %v11225 = vadd.f32 %v11224, %v10127
        %v11226 = vadd.f32 %v11225, %v10128
        %v11227 = vadd.f32 %v11226, %v10129
        %v11228 = vadd.f32 %v11227, %v10130
        %v11229 = vadd.f32 %v11228, %v10131
        %v11230 = vadd.f32 %v11229, %v10132
        %v11231 = vadd.f32 %v11230, %v10133
        %v11232 = vadd.f32 %v11231, %v10134
        %v11233 = vadd.f32 %v11232, %v10135
        %v11234 = vadd.f32 %v11233, %v10136
        %v11235 = vadd.f32 %v11234, %v10137
        %v11236 = vadd.f32 %v11235, %v10138
        %v11237 = vadd.f32 %v11236, %v10139
        %v11238 = vadd.f32 %v11237, %v10140
        %v11239 = vadd.f32 %v11238, %v10141
        %v11240 = vadd.f32 %v11239, %v10142
        %v11241 = vadd.f32 %v11240, %v10143
        %v11242 = vadd.f32 %v11241, %v10144
        %v11243 = vrot.slane %v11242, 4
        %v11244 = vadd.f32 %v11242, %v11243
        %v11245 = vrot.slane %v11244, 2
        %v11246 = vadd.f32 %v11244, %v11245
        %v11247 = vrot.slane %v11246, 1
        %v11248 = vadd.f32 %v11246, %v11247
        %v11249 = vadd.f32 %v10145, %v10146
        %v11250 = vadd.f32 %v11249, %v10147
        %v11251 = vadd.f32 %v11250, %v10148
        %v11252 = vadd.f32 %v11251, %v10149
        %v11253 = vadd.f32 %v11252, %v10150
        %v11254 = vadd.f32 %v11253, %v10151
        %v11255 = vadd.f32 %v11254, %v10152
        %v11256 = vadd.f32 %v11255, %v10153
        %v11257 = vadd.f32 %v11256, %v10154
        %v11258 = vadd.f32 %v11257, %v10155
        %v11259 = vadd.f32 %v11258, %v10156
        %v11260 = vadd.f32 %v11259, %v10157
        %v11261 = vadd.f32 %v11260, %v10158
        %v11262 = vadd.f32 %v11261, %v10159
        %v11263 = vadd.f32 %v11262, %v10160
        %v11264 = vadd.f32 %v11263, %v10161
        %v11265 = vadd.f32 %v11264, %v10162
        %v11266 = vadd.f32 %v11265, %v10163
        %v11267 = vadd.f32 %v11266, %v10164
        %v11268 = vadd.f32 %v11267, %v10165
        %v11269 = vadd.f32 %v11268, %v10166
        %v11270 = vadd.f32 %v11269, %v10167
        %v11271 = vadd.f32 %v11270, %v10168
        %v11272 = vadd.f32 %v11271, %v10169
        %v11273 = vadd.f32 %v11272, %v10170
        %v11274 = vadd.f32 %v11273, %v10171
        %v11275 = vadd.f32 %v11274, %v10172
        %v11276 = vadd.f32 %v11275, %v10173
        %v11277 = vadd.f32 %v11276, %v10174
        %v11278 = vadd.f32 %v11277, %v10175
        %v11279 = vadd.f32 %v11278, %v10176
        %v11280 = vrot.slane %v11279, 4
        %v11281 = vadd.f32 %v11279, %v11280
        %v11282 = vrot.slane %v11281, 2
        %v11283 = vadd.f32 %v11281, %v11282
        %v11284 = vrot.slane %v11283, 1
        %v11285 = vadd.f32 %v11283, %v11284
        %v11286 = vadd.f32 %v10177, %v10178
        %v11287 = vadd.f32 %v11286, %v10179
        %v11288 = vadd.f32 %v11287, %v10180
        %v11289 = vadd.f32 %v11288, %v10181
        %v11290 = vadd.f32 %v11289, %v10182
        %v11291 = vadd.f32 %v11290, %v10183
        %v11292 = vadd.f32 %v11291, %v10184
        %v11293 = vadd.f32 %v11292, %v10185
        %v11294 = vadd.f32 %v11293, %v10186
        %v11295 = vadd.f32 %v11294, %v10187
        %v11296 = vadd.f32 %v11295, %v10188
        %v11297 = vadd.f32 %v11296, %v10189
        %v11298 = vadd.f32 %v11297, %v10190
        %v11299 = vadd.f32 %v11298, %v10191
        %v11300 = vadd.f32 %v11299, %v10192
        %v11301 = vadd.f32 %v11300, %v10193
        %v11302 = vadd.f32 %v11301, %v10194
        %v11303 = vadd.f32 %v11302, %v10195
        %v11304 = vadd.f32 %v11303, %v10196
        %v11305 = vadd.f32 %v11304, %v10197
        %v11306 = vadd.f32 %v11305, %v10198
        %v11307 = vadd.f32 %v11306, %v10199
        %v11308 = vadd.f32 %v11307, %v10200
        %v11309 = vadd.f32 %v11308, %v10201
        %v11310 = vadd.f32 %v11309, %v10202
        %v11311 = vadd.f32 %v11310, %v10203
        %v11312 = vadd.f32 %v11311, %v10204
        %v11313 = vadd.f32 %v11312, %v10205
        %v11314 = vadd.f32 %v11313, %v10206
        %v11315 = vadd.f32 %v11314, %v10207
        %v11316 = vadd.f32 %v11315, %v10208
        %v11317 = vrot.slane %v11316, 4
        %v11318 = vadd.f32 %v11316, %v11317
        %v11319 = vrot.slane %v11318, 2
        %v11320 = vadd.f32 %v11318, %v11319
        %v11321 = vrot.slane %v11320, 1
        %v11322 = vadd.f32 %v11320, %v11321
        %v11323 = vadd.f32 %v10209, %v10210
        %v11324 = vadd.f32 %v11323, %v10211
        %v11325 = vadd.f32 %v11324, %v10212
        %v11326 = vadd.f32 %v11325, %v10213
        %v11327 = vadd.f32 %v11326, %v10214
        %v11328 = vadd.f32 %v11327, %v10215
        %v11329 = vadd.f32 %v11328, %v10216
        %v11330 = vadd.f32 %v11329, %v10217
        %v11331 = vadd.f32 %v11330, %v10218
        %v11332 = vadd.f32 %v11331, %v10219
        %v11333 = vadd.f32 %v11332, %v10220
        %v11334 = vadd.f32 %v11333, %v10221
        %v11335 = vadd.f32 %v11334, %v10222
        %v11336 = vadd.f32 %v11335, %v10223
        %v11337 = vadd.f32 %v11336, %v10224
        %v11338 = vadd.f32 %v11337, %v10225
        %v11339 = vadd.f32 %v11338, %v10226
        %v11340 = vadd.f32 %v11339, %v10227
        %v11341 = vadd.f32 %v11340, %v10228
        %v11342 = vadd.f32 %v11341, %v10229
        %v11343 = vadd.f32 %v11342, %v10230
        %v11344 = vadd.f32 %v11343, %v10231
        %v11345 = vadd.f32 %v11344, %v10232
        %v11346 = vadd.f32 %v11345, %v10233
        %v11347 = vadd.f32 %v11346, %v10234
        %v11348 = vadd.f32 %v11347, %v10235
        %v11349 = vadd.f32 %v11348, %v10236
        %v11350 = vadd.f32 %v11349, %v10237
        %v11351 = vadd.f32 %v11350, %v10238
        %v11352 = vadd.f32 %v11351, %v10239
        %v11353 = vadd.f32 %v11352, %v10240
        %v11354 = vrot.slane %v11353, 4
        %v11355 = vadd.f32 %v11353, %v11354
        %v11356 = vrot.slane %v11355, 2
        %v11357 = vadd.f32 %v11355, %v11356
        %v11358 = vrot.slane %v11357, 1
        %v11359 = vadd.f32 %v11357, %v11358
        %v11360 = vadd.f32 %v10241, %v10242
        %v11361 = vadd.f32 %v11360, %v10243
        %v11362 = vadd.f32 %v11361, %v10244
        %v11363 = vadd.f32 %v11362, %v10245
        %v11364 = vadd.f32 %v11363, %v10246
        %v11365 = vadd.f32 %v11364, %v10247
        %v11366 = vadd.f32 %v11365, %v10248
        %v11367 = vadd.f32 %v11366, %v10249
        %v11368 = vadd.f32 %v11367, %v10250
        %v11369 = vadd.f32 %v11368, %v10251
        %v11370 = vadd.f32 %v11369, %v10252
        %v11371 = vadd.f32 %v11370, %v10253
        %v11372 = vadd.f32 %v11371, %v10254
        %v11373 = vadd.f32 %v11372, %v10255
        %v11374 = vadd.f32 %v11373, %v10256
        %v11375 = vadd.f32 %v11374, %v10257
        %v11376 = vadd.f32 %v11375, %v10258
        %v11377 = vadd.f32 %v11376, %v10259
        %v11378 = vadd.f32 %v11377, %v10260
        %v11379 = vadd.f32 %v11378, %v10261
        %v11380 = vadd.f32 %v11379, %v10262
        %v11381 = vadd.f32 %v11380, %v10263
        %v11382 = vadd.f32 %v11381, %v10264
        %v11383 = vadd.f32 %v11382, %v10265
        %v11384 = vadd.f32 %v11383, %v10266
        %v11385 = vadd.f32 %v11384, %v10267
        %v11386 = vadd.f32 %v11385, %v10268
        %v11387 = vadd.f32 %v11386, %v10269
        %v11388 = vadd.f32 %v11387, %v10270
        %v11389 = vadd.f32 %v11388, %v10271
        %v11390 = vadd.f32 %v11389, %v10272
        %v11391 = vrot.slane %v11390, 4
        %v11392 = vadd.f32 %v11390, %v11391
        %v11393 = vrot.slane %v11392, 2
        %v11394 = vadd.f32 %v11392, %v11393
        %v11395 = vrot.slane %v11394, 1
        %v11396 = vadd.f32 %v11394, %v11395
        %v11397 = vadd.f32 %v10273, %v10274
        %v11398 = vadd.f32 %v11397, %v10275
        %v11399 = vadd.f32 %v11398, %v10276
        %v11400 = vadd.f32 %v11399, %v10277
        %v11401 = vadd.f32 %v11400, %v10278
        %v11402 = vadd.f32 %v11401, %v10279
        %v11403 = vadd.f32 %v11402, %v10280
        %v11404 = vadd.f32 %v11403, %v10281
        %v11405 = vadd.f32 %v11404, %v10282
        %v11406 = vadd.f32 %v11405, %v10283
        %v11407 = vadd.f32 %v11406, %v10284
        %v11408 = vadd.f32 %v11407, %v10285
        %v11409 = vadd.f32 %v11408, %v10286
        %v11410 = vadd.f32 %v11409, %v10287
        %v11411 = vadd.f32 %v11410, %v10288
        %v11412 = vadd.f32 %v11411, %v10289
        %v11413 = vadd.f32 %v11412, %v10290
        %v11414 = vadd.f32 %v11413, %v10291
        %v11415 = vadd.f32 %v11414, %v10292
        %v11416 = vadd.f32 %v11415, %v10293
        %v11417 = vadd.f32 %v11416, %v10294
        %v11418 = vadd.f32 %v11417, %v10295
        %v11419 = vadd.f32 %v11418, %v10296
        %v11420 = vadd.f32 %v11419, %v10297
        %v11421 = vadd.f32 %v11420, %v10298
        %v11422 = vadd.f32 %v11421, %v10299
        %v11423 = vadd.f32 %v11422, %v10300
        %v11424 = vadd.f32 %v11423, %v10301
        %v11425 = vadd.f32 %v11424, %v10302
        %v11426 = vadd.f32 %v11425, %v10303
        %v11427 = vadd.f32 %v11426, %v10304
        %v11428 = vrot.slane %v11427, 4
        %v11429 = vadd.f32 %v11427, %v11428
        %v11430 = vrot.slane %v11429, 2
        %v11431 = vadd.f32 %v11429, %v11430
        %v11432 = vrot.slane %v11431, 1
        %v11433 = vadd.f32 %v11431, %v11432
        %v11434 = vadd.f32 %v10305, %v10306
        %v11435 = vadd.f32 %v11434, %v10307
        %v11436 = vadd.f32 %v11435, %v10308
        %v11437 = vadd.f32 %v11436, %v10309
        %v11438 = vadd.f32 %v11437, %v10310
        %v11439 = vadd.f32 %v11438, %v10311
        %v11440 = vadd.f32 %v11439, %v10312
        %v11441 = vadd.f32 %v11440, %v10313
        %v11442 = vadd.f32 %v11441, %v10314
        %v11443 = vadd.f32 %v11442, %v10315
        %v11444 = vadd.f32 %v11443, %v10316
        %v11445 = vadd.f32 %v11444, %v10317
        %v11446 = vadd.f32 %v11445, %v10318
        %v11447 = vadd.f32 %v11446, %v10319
        %v11448 = vadd.f32 %v11447, %v10320
        %v11449 = vadd.f32 %v11448, %v10321
        %v11450 = vadd.f32 %v11449, %v10322
        %v11451 = vadd.f32 %v11450, %v10323
        %v11452 = vadd.f32 %v11451, %v10324
        %v11453 = vadd.f32 %v11452, %v10325
        %v11454 = vadd.f32 %v11453, %v10326
        %v11455 = vadd.f32 %v11454, %v10327
        %v11456 = vadd.f32 %v11455, %v10328
        %v11457 = vadd.f32 %v11456, %v10329
        %v11458 = vadd.f32 %v11457, %v10330
        %v11459 = vadd.f32 %v11458, %v10331
        %v11460 = vadd.f32 %v11459, %v10332
        %v11461 = vadd.f32 %v11460, %v10333
        %v11462 = vadd.f32 %v11461, %v10334
        %v11463 = vadd.f32 %v11462, %v10335
        %v11464 = vadd.f32 %v11463, %v10336
        %v11465 = vrot.slane %v11464, 4
        %v11466 = vadd.f32 %v11464, %v11465
        %v11467 = vrot.slane %v11466, 2
        %v11468 = vadd.f32 %v11466, %v11467
        %v11469 = vrot.slane %v11468, 1
        %v11470 = vadd.f32 %v11468, %v11469
        %v11471 = vadd.f32 %v10337, %v10338
        %v11472 = vadd.f32 %v11471, %v10339
        %v11473 = vadd.f32 %v11472, %v10340
        %v11474 = vadd.f32 %v11473, %v10341
        %v11475 = vadd.f32 %v11474, %v10342
        %v11476 = vadd.f32 %v11475, %v10343
        %v11477 = vadd.f32 %v11476, %v10344
        %v11478 = vadd.f32 %v11477, %v10345
        %v11479 = vadd.f32 %v11478, %v10346
        %v11480 = vadd.f32 %v11479, %v10347
        %v11481 = vadd.f32 %v11480, %v10348
        %v11482 = vadd.f32 %v11481, %v10349
        %v11483 = vadd.f32 %v11482, %v10350
        %v11484 = vadd.f32 %v11483, %v10351
        %v11485 = vadd.f32 %v11484, %v10352
        %v11486 = vadd.f32 %v11485, %v10353
        %v11487 = vadd.f32 %v11486, %v10354
        %v11488 = vadd.f32 %v11487, %v10355
        %v11489 = vadd.f32 %v11488, %v10356
        %v11490 = vadd.f32 %v11489, %v10357
        %v11491 = vadd.f32 %v11490, %v10358
        %v11492 = vadd.f32 %v11491, %v10359
        %v11493 = vadd.f32 %v11492, %v10360
        %v11494 = vadd.f32 %v11493, %v10361
        %v11495 = vadd.f32 %v11494, %v10362
        %v11496 = vadd.f32 %v11495, %v10363
        %v11497 = vadd.f32 %v11496, %v10364
        %v11498 = vadd.f32 %v11497, %v10365
        %v11499 = vadd.f32 %v11498, %v10366
        %v11500 = vadd.f32 %v11499, %v10367
        %v11501 = vadd.f32 %v11500, %v10368
        %v11502 = vrot.slane %v11501, 4
        %v11503 = vadd.f32 %v11501, %v11502
        %v11504 = vrot.slane %v11503, 2
        %v11505 = vadd.f32 %v11503, %v11504
        %v11506 = vrot.slane %v11505, 1
        %v11507 = vadd.f32 %v11505, %v11506
        %v11508 = vadd.f32 %v10369, %v10370
        %v11509 = vadd.f32 %v11508, %v10371
        %v11510 = vadd.f32 %v11509, %v10372
        %v11511 = vadd.f32 %v11510, %v10373
        %v11512 = vadd.f32 %v11511, %v10374
        %v11513 = vadd.f32 %v11512, %v10375
        %v11514 = vadd.f32 %v11513, %v10376
        %v11515 = vadd.f32 %v11514, %v10377
        %v11516 = vadd.f32 %v11515, %v10378
        %v11517 = vadd.f32 %v11516, %v10379
        %v11518 = vadd.f32 %v11517, %v10380
        %v11519 = vadd.f32 %v11518, %v10381
        %v11520 = vadd.f32 %v11519, %v10382
        %v11521 = vadd.f32 %v11520, %v10383
        %v11522 = vadd.f32 %v11521, %v10384
        %v11523 = vadd.f32 %v11522, %v10385
        %v11524 = vadd.f32 %v11523, %v10386
        %v11525 = vadd.f32 %v11524, %v10387
        %v11526 = vadd.f32 %v11525, %v10388
        %v11527 = vadd.f32 %v11526, %v10389
        %v11528 = vadd.f32 %v11527, %v10390
        %v11529 = vadd.f32 %v11528, %v10391
        %v11530 = vadd.f32 %v11529, %v10392
        %v11531 = vadd.f32 %v11530, %v10393
        %v11532 = vadd.f32 %v11531, %v10394
        %v11533 = vadd.f32 %v11532, %v10395
        %v11534 = vadd.f32 %v11533, %v10396
        %v11535 = vadd.f32 %v11534, %v10397
        %v11536 = vadd.f32 %v11535, %v10398
        %v11537 = vadd.f32 %v11536, %v10399
        %v11538 = vadd.f32 %v11537, %v10400
        %v11539 = vrot.slane %v11538, 4
        %v11540 = vadd.f32 %v11538, %v11539
        %v11541 = vrot.slane %v11540, 2
        %v11542 = vadd.f32 %v11540, %v11541
        %v11543 = vrot.slane %v11542, 1
        %v11544 = vadd.f32 %v11542, %v11543
        %v11545 = vadd.f32 %v10401, %v10402
        %v11546 = vadd.f32 %v11545, %v10403
        %v11547 = vadd.f32 %v11546, %v10404
        %v11548 = vadd.f32 %v11547, %v10405
        %v11549 = vadd.f32 %v11548, %v10406
        %v11550 = vadd.f32 %v11549, %v10407
        %v11551 = vadd.f32 %v11550, %v10408
        %v11552 = vadd.f32 %v11551, %v10409
        %v11553 = vadd.f32 %v11552, %v10410
        %v11554 = vadd.f32 %v11553, %v10411
        %v11555 = vadd.f32 %v11554, %v10412
        %v11556 = vadd.f32 %v11555, %v10413
        %v11557 = vadd.f32 %v11556, %v10414
        %v11558 = vadd.f32 %v11557, %v10415
        %v11559 = vadd.f32 %v11558, %v10416
        %v11560 = vadd.f32 %v11559, %v10417
        %v11561 = vadd.f32 %v11560, %v10418
        %v11562 = vadd.f32 %v11561, %v10419
        %v11563 = vadd.f32 %v11562, %v10420
        %v11564 = vadd.f32 %v11563, %v10421
        %v11565 = vadd.f32 %v11564, %v10422
        %v11566 = vadd.f32 %v11565, %v10423
        %v11567 = vadd.f32 %v11566, %v10424
        %v11568 = vadd.f32 %v11567, %v10425
        %v11569 = vadd.f32 %v11568, %v10426
        %v11570 = vadd.f32 %v11569, %v10427
        %v11571 = vadd.f32 %v11570, %v10428
        %v11572 = vadd.f32 %v11571, %v10429
        %v11573 = vadd.f32 %v11572, %v10430
        %v11574 = vadd.f32 %v11573, %v10431
        %v11575 = vadd.f32 %v11574, %v10432
        %v11576 = vrot.slane %v11575, 4
        %v11577 = vadd.f32 %v11575, %v11576
        %v11578 = vrot.slane %v11577, 2
        %v11579 = vadd.f32 %v11577, %v11578
        %v11580 = vrot.slane %v11579, 1
        %v11581 = vadd.f32 %v11579, %v11580
        %v11582 = vadd.f32 %v10433, %v10434
        %v11583 = vadd.f32 %v11582, %v10435
        %v11584 = vadd.f32 %v11583, %v10436
        %v11585 = vadd.f32 %v11584, %v10437
        %v11586 = vadd.f32 %v11585, %v10438
        %v11587 = vadd.f32 %v11586, %v10439
        %v11588 = vadd.f32 %v11587, %v10440
        %v11589 = vadd.f32 %v11588, %v10441
        %v11590 = vadd.f32 %v11589, %v10442
        %v11591 = vadd.f32 %v11590, %v10443
        %v11592 = vadd.f32 %v11591, %v10444
        %v11593 = vadd.f32 %v11592, %v10445
        %v11594 = vadd.f32 %v11593, %v10446
        %v11595 = vadd.f32 %v11594, %v10447
        %v11596 = vadd.f32 %v11595, %v10448
        %v11597 = vadd.f32 %v11596, %v10449
        %v11598 = vadd.f32 %v11597, %v10450
        %v11599 = vadd.f32 %v11598, %v10451
        %v11600 = vadd.f32 %v11599, %v10452
        %v11601 = vadd.f32 %v11600, %v10453
        %v11602 = vadd.f32 %v11601, %v10454
        %v11603 = vadd.f32 %v11602, %v10455
        %v11604 = vadd.f32 %v11603, %v10456
        %v11605 = vadd.f32 %v11604, %v10457
        %v11606 = vadd.f32 %v11605, %v10458
        %v11607 = vadd.f32 %v11606, %v10459
        %v11608 = vadd.f32 %v11607, %v10460
        %v11609 = vadd.f32 %v11608, %v10461
        %v11610 = vadd.f32 %v11609, %v10462
        %v11611 = vadd.f32 %v11610, %v10463
        %v11612 = vadd.f32 %v11611, %v10464
        %v11613 = vrot.slane %v11612, 4
        %v11614 = vadd.f32 %v11612, %v11613
        %v11615 = vrot.slane %v11614, 2
        %v11616 = vadd.f32 %v11614, %v11615
        %v11617 = vrot.slane %v11616, 1
        %v11618 = vadd.f32 %v11616, %v11617
        %v11619 = vadd.f32 %v10465, %v10466
        %v11620 = vadd.f32 %v11619, %v10467
        %v11621 = vadd.f32 %v11620, %v10468
        %v11622 = vadd.f32 %v11621, %v10469
        %v11623 = vadd.f32 %v11622, %v10470
        %v11624 = vadd.f32 %v11623, %v10471
        %v11625 = vadd.f32 %v11624, %v10472
        %v11626 = vadd.f32 %v11625, %v10473
        %v11627 = vadd.f32 %v11626, %v10474
        %v11628 = vadd.f32 %v11627, %v10475
        %v11629 = vadd.f32 %v11628, %v10476
        %v11630 = vadd.f32 %v11629, %v10477
        %v11631 = vadd.f32 %v11630, %v10478
        %v11632 = vadd.f32 %v11631, %v10479
        %v11633 = vadd.f32 %v11632, %v10480
        %v11634 = vadd.f32 %v11633, %v10481
        %v11635 = vadd.f32 %v11634, %v10482
        %v11636 = vadd.f32 %v11635, %v10483
        %v11637 = vadd.f32 %v11636, %v10484
        %v11638 = vadd.f32 %v11637, %v10485
        %v11639 = vadd.f32 %v11638, %v10486
        %v11640 = vadd.f32 %v11639, %v10487
        %v11641 = vadd.f32 %v11640, %v10488
        %v11642 = vadd.f32 %v11641, %v10489
        %v11643 = vadd.f32 %v11642, %v10490
        %v11644 = vadd.f32 %v11643, %v10491
        %v11645 = vadd.f32 %v11644, %v10492
        %v11646 = vadd.f32 %v11645, %v10493
        %v11647 = vadd.f32 %v11646, %v10494
        %v11648 = vadd.f32 %v11647, %v10495
        %v11649 = vadd.f32 %v11648, %v10496
        %v11650 = vrot.slane %v11649, 4
        %v11651 = vadd.f32 %v11649, %v11650
        %v11652 = vrot.slane %v11651, 2
        %v11653 = vadd.f32 %v11651, %v11652
        %v11654 = vrot.slane %v11653, 1
        %v11655 = vadd.f32 %v11653, %v11654
        %v11656 = vadd.f32 %v10497, %v10498
        %v11657 = vadd.f32 %v11656, %v10499
        %v11658 = vadd.f32 %v11657, %v10500
        %v11659 = vadd.f32 %v11658, %v10501
        %v11660 = vadd.f32 %v11659, %v10502
        %v11661 = vadd.f32 %v11660, %v10503
        %v11662 = vadd.f32 %v11661, %v10504
        %v11663 = vadd.f32 %v11662, %v10505
        %v11664 = vadd.f32 %v11663, %v10506
        %v11665 = vadd.f32 %v11664, %v10507
        %v11666 = vadd.f32 %v11665, %v10508
        %v11667 = vadd.f32 %v11666, %v10509
        %v11668 = vadd.f32 %v11667, %v10510
        %v11669 = vadd.f32 %v11668, %v10511
        %v11670 = vadd.f32 %v11669, %v10512
        %v11671 = vadd.f32 %v11670, %v10513
        %v11672 = vadd.f32 %v11671, %v10514
        %v11673 = vadd.f32 %v11672, %v10515
        %v11674 = vadd.f32 %v11673, %v10516
        %v11675 = vadd.f32 %v11674, %v10517
        %v11676 = vadd.f32 %v11675, %v10518
        %v11677 = vadd.f32 %v11676, %v10519
        %v11678 = vadd.f32 %v11677, %v10520
        %v11679 = vadd.f32 %v11678, %v10521
        %v11680 = vadd.f32 %v11679, %v10522
        %v11681 = vadd.f32 %v11680, %v10523
        %v11682 = vadd.f32 %v11681, %v10524
        %v11683 = vadd.f32 %v11682, %v10525
        %v11684 = vadd.f32 %v11683, %v10526
        %v11685 = vadd.f32 %v11684, %v10527
        %v11686 = vadd.f32 %v11685, %v10528
        %v11687 = vrot.slane %v11686, 4
        %v11688 = vadd.f32 %v11686, %v11687
        %v11689 = vrot.slane %v11688, 2
        %v11690 = vadd.f32 %v11688, %v11689
        %v11691 = vrot.slane %v11690, 1
        %v11692 = vadd.f32 %v11690, %v11691
        %v11693 = vadd.f32 %v10529, %v10530
        %v11694 = vadd.f32 %v11693, %v10531
        %v11695 = vadd.f32 %v11694, %v10532
        %v11696 = vadd.f32 %v11695, %v10533
        %v11697 = vadd.f32 %v11696, %v10534
        %v11698 = vadd.f32 %v11697, %v10535
        %v11699 = vadd.f32 %v11698, %v10536
        %v11700 = vadd.f32 %v11699, %v10537
        %v11701 = vadd.f32 %v11700, %v10538
        %v11702 = vadd.f32 %v11701, %v10539
        %v11703 = vadd.f32 %v11702, %v10540
        %v11704 = vadd.f32 %v11703, %v10541
        %v11705 = vadd.f32 %v11704, %v10542
        %v11706 = vadd.f32 %v11705, %v10543
        %v11707 = vadd.f32 %v11706, %v10544
        %v11708 = vadd.f32 %v11707, %v10545
        %v11709 = vadd.f32 %v11708, %v10546
        %v11710 = vadd.f32 %v11709, %v10547
        %v11711 = vadd.f32 %v11710, %v10548
        %v11712 = vadd.f32 %v11711, %v10549
        %v11713 = vadd.f32 %v11712, %v10550
        %v11714 = vadd.f32 %v11713, %v10551
        %v11715 = vadd.f32 %v11714, %v10552
        %v11716 = vadd.f32 %v11715, %v10553
        %v11717 = vadd.f32 %v11716, %v10554
        %v11718 = vadd.f32 %v11717, %v10555
        %v11719 = vadd.f32 %v11718, %v10556
        %v11720 = vadd.f32 %v11719, %v10557
        %v11721 = vadd.f32 %v11720, %v10558
        %v11722 = vadd.f32 %v11721, %v10559
        %v11723 = vadd.f32 %v11722, %v10560
        %v11724 = vrot.slane %v11723, 4
        %v11725 = vadd.f32 %v11723, %v11724
        %v11726 = vrot.slane %v11725, 2
        %v11727 = vadd.f32 %v11725, %v11726
        %v11728 = vrot.slane %v11727, 1
        %v11729 = vadd.f32 %v11727, %v11728
        %v11730 = vadd.f32 %v10561, %v10562
        %v11731 = vadd.f32 %v11730, %v10563
        %v11732 = vadd.f32 %v11731, %v10564
        %v11733 = vadd.f32 %v11732, %v10565
        %v11734 = vadd.f32 %v11733, %v10566
        %v11735 = vadd.f32 %v11734, %v10567
        %v11736 = vadd.f32 %v11735, %v10568
        %v11737 = vadd.f32 %v11736, %v10569
        %v11738 = vadd.f32 %v11737, %v10570
        %v11739 = vadd.f32 %v11738, %v10571
        %v11740 = vadd.f32 %v11739, %v10572
        %v11741 = vadd.f32 %v11740, %v10573
        %v11742 = vadd.f32 %v11741, %v10574
        %v11743 = vadd.f32 %v11742, %v10575
        %v11744 = vadd.f32 %v11743, %v10576
        %v11745 = vadd.f32 %v11744, %v10577
        %v11746 = vadd.f32 %v11745, %v10578
        %v11747 = vadd.f32 %v11746, %v10579
        %v11748 = vadd.f32 %v11747, %v10580
        %v11749 = vadd.f32 %v11748, %v10581
        %v11750 = vadd.f32 %v11749, %v10582
        %v11751 = vadd.f32 %v11750, %v10583
        %v11752 = vadd.f32 %v11751, %v10584
        %v11753 = vadd.f32 %v11752, %v10585
        %v11754 = vadd.f32 %v11753, %v10586
        %v11755 = vadd.f32 %v11754, %v10587
        %v11756 = vadd.f32 %v11755, %v10588
        %v11757 = vadd.f32 %v11756, %v10589
        %v11758 = vadd.f32 %v11757, %v10590
        %v11759 = vadd.f32 %v11758, %v10591
        %v11760 = vadd.f32 %v11759, %v10592
        %v11761 = vrot.slane %v11760, 4
        %v11762 = vadd.f32 %v11760, %v11761
        %v11763 = vrot.slane %v11762, 2
        %v11764 = vadd.f32 %v11762, %v11763
        %v11765 = vrot.slane %v11764, 1
        %v11766 = vadd.f32 %v11764, %v11765
        %v11767 = vadd.f32 %v10593, %v10594
        %v11768 = vadd.f32 %v11767, %v10595
        %v11769 = vadd.f32 %v11768, %v10596
        %v11770 = vadd.f32 %v11769, %v10597
        %v11771 = vadd.f32 %v11770, %v10598
        %v11772 = vadd.f32 %v11771, %v10599
        %v11773 = vadd.f32 %v11772, %v10600
        %v11774 = vadd.f32 %v11773, %v10601
        %v11775 = vadd.f32 %v11774, %v10602
        %v11776 = vadd.f32 %v11775, %v10603
        %v11777 = vadd.f32 %v11776, %v10604
        %v11778 = vadd.f32 %v11777, %v10605
        %v11779 = vadd.f32 %v11778, %v10606
        %v11780 = vadd.f32 %v11779, %v10607
        %v11781 = vadd.f32 %v11780, %v10608
        %v11782 = vadd.f32 %v11781, %v10609
        %v11783 = vadd.f32 %v11782, %v10610
        %v11784 = vadd.f32 %v11783, %v10611
        %v11785 = vadd.f32 %v11784, %v10612
        %v11786 = vadd.f32 %v11785, %v10613
        %v11787 = vadd.f32 %v11786, %v10614
        %v11788 = vadd.f32 %v11787, %v10615
        %v11789 = vadd.f32 %v11788, %v10616
        %v11790 = vadd.f32 %v11789, %v10617
        %v11791 = vadd.f32 %v11790, %v10618
        %v11792 = vadd.f32 %v11791, %v10619
        %v11793 = vadd.f32 %v11792, %v10620
        %v11794 = vadd.f32 %v11793, %v10621
        %v11795 = vadd.f32 %v11794, %v10622
        %v11796 = vadd.f32 %v11795, %v10623
        %v11797 = vadd.f32 %v11796, %v10624
        %v11798 = vrot.slane %v11797, 4
        %v11799 = vadd.f32 %v11797, %v11798
        %v11800 = vrot.slane %v11799, 2
        %v11801 = vadd.f32 %v11799, %v11800
        %v11802 = vrot.slane %v11801, 1
        %v11803 = vadd.f32 %v11801, %v11802
        %v11804 = vadd.f32 %v10625, %v10626
        %v11805 = vadd.f32 %v11804, %v10627
        %v11806 = vadd.f32 %v11805, %v10628
        %v11807 = vadd.f32 %v11806, %v10629
        %v11808 = vadd.f32 %v11807, %v10630
        %v11809 = vadd.f32 %v11808, %v10631
        %v11810 = vadd.f32 %v11809, %v10632
        %v11811 = vadd.f32 %v11810, %v10633
        %v11812 = vadd.f32 %v11811, %v10634
        %v11813 = vadd.f32 %v11812, %v10635
        %v11814 = vadd.f32 %v11813, %v10636
        %v11815 = vadd.f32 %v11814, %v10637
        %v11816 = vadd.f32 %v11815, %v10638
        %v11817 = vadd.f32 %v11816, %v10639
        %v11818 = vadd.f32 %v11817, %v10640
        %v11819 = vadd.f32 %v11818, %v10641
        %v11820 = vadd.f32 %v11819, %v10642
        %v11821 = vadd.f32 %v11820, %v10643
        %v11822 = vadd.f32 %v11821, %v10644
        %v11823 = vadd.f32 %v11822, %v10645
        %v11824 = vadd.f32 %v11823, %v10646
        %v11825 = vadd.f32 %v11824, %v10647
        %v11826 = vadd.f32 %v11825, %v10648
        %v11827 = vadd.f32 %v11826, %v10649
        %v11828 = vadd.f32 %v11827, %v10650
        %v11829 = vadd.f32 %v11828, %v10651
        %v11830 = vadd.f32 %v11829, %v10652
        %v11831 = vadd.f32 %v11830, %v10653
        %v11832 = vadd.f32 %v11831, %v10654
        %v11833 = vadd.f32 %v11832, %v10655
        %v11834 = vadd.f32 %v11833, %v10656
        %v11835 = vrot.slane %v11834, 4
        %v11836 = vadd.f32 %v11834, %v11835
        %v11837 = vrot.slane %v11836, 2
        %v11838 = vadd.f32 %v11836, %v11837
        %v11839 = vrot.slane %v11838, 1
        %v11840 = vadd.f32 %v11838, %v11839
        %v11841 = vmul.f32 %v10693, 0.00390625
        %v11842 = vmul.f32 %v10730, 0.00390625
        %v11843 = vmul.f32 %v10767, 0.00390625
        %v11844 = vmul.f32 %v10804, 0.00390625
        %v11845 = vmul.f32 %v10841, 0.00390625
        %v11846 = vmul.f32 %v10878, 0.00390625
        %v11847 = vmul.f32 %v10915, 0.00390625
        %v11848 = vmul.f32 %v10952, 0.00390625
        %v11849 = vmul.f32 %v10989, 0.00390625
        %v11850 = vmul.f32 %v11026, 0.00390625
        %v11851 = vmul.f32 %v11063, 0.00390625
        %v11852 = vmul.f32 %v11100, 0.00390625
        %v11853 = vmul.f32 %v11137, 0.00390625
        %v11854 = vmul.f32 %v11174, 0.00390625
        %v11855 = vmul.f32 %v11211, 0.00390625
        %v11856 = vmul.f32 %v11248, 0.00390625
        %v11857 = vmul.f32 %v11285, 0.00390625
        %v11858 = vmul.f32 %v11322, 0.00390625
        %v11859 = vmul.f32 %v11359, 0.00390625
        %v11860 = vmul.f32 %v11396, 0.00390625
        %v11861 = vmul.f32 %v11433, 0.00390625
        %v11862 = vmul.f32 %v11470, 0.00390625
        %v11863 = vmul.f32 %v11507, 0.00390625
        %v11864 = vmul.f32 %v11544, 0.00390625
        %v11865 = vmul.f32 %v11581, 0.00390625
        %v11866 = vmul.f32 %v11618, 0.00390625
        %v11867 = vmul.f32 %v11655, 0.00390625
        %v11868 = vmul.f32 %v11692, 0.00390625
        %v11869 = vmul.f32 %v11729, 0.00390625
        %v11870 = vmul.f32 %v11766, 0.00390625
        %v11871 = vmul.f32 %v11803, 0.00390625
        %v11872 = vmul.f32 %v11840, 0.00390625
        %v11873 = vld [vmem:[%s356] sm:$0xff]
        %v11874 = vld [vmem:[%s356 + $0x8] sm:$0xff]
        %v11875 = vld [vmem:[%s356 + $0x10] sm:$0xff]
        %v11876 = vld [vmem:[%s356 + $0x18] sm:$0xff]
        %v11877 = vld [vmem:[%s4] sm:$0xf]
        %v11878 = vld [vmem:[%s4 + $0x4] sm:$0xf]
        %v11879 = vld [vmem:[%s4 + $0x8] sm:$0xf]
        %v11880 = vld [vmem:[%s4 + $0xc] sm:$0xf]
        %v11881 = vld [vmem:[%s4 + $0x10] sm:$0xf]
        %v11882 = vld [vmem:[%s4 + $0x14] sm:$0xf]
        %v11883 = vld [vmem:[%s4 + $0x18] sm:$0xf]
        %v11884 = vld [vmem:[%s4 + $0x1c] sm:$0xf]
        %v11885 = vld [vmem:[%s4 + $0x20] sm:$0xf]
        %v11886 = vld [vmem:[%s4 + $0x24] sm:$0xf]
        %v11887 = vld [vmem:[%s4 + $0x28] sm:$0xf]
        %v11888 = vld [vmem:[%s4 + $0x2c] sm:$0xf]
        %v11889 = vld [vmem:[%s4 + $0x30] sm:$0xf]
        %v11890 = vld [vmem:[%s4 + $0x34] sm:$0xf]
        %v11891 = vld [vmem:[%s4 + $0x38] sm:$0xf]
        %v11892 = vld [vmem:[%s4 + $0x3c] sm:$0xf]
        %v11893 = vld [vmem:[%s4 + $0x40] sm:$0xf]
        %v11894 = vld [vmem:[%s4 + $0x44] sm:$0xf]
        %v11895 = vpack.c.bf16 %v11841, %v11841
        %v11896 = vpack.c.bf16 %v11842, %v11842
        %v11897 = vpack.c.bf16 %v11843, %v11843
        %v11898 = vpack.c.bf16 %v11844, %v11844
        %v11899 = vpack.c.bf16 %v11845, %v11845
        %v11900 = vpack.c.bf16 %v11846, %v11846
        %v11901 = vpack.c.bf16 %v11847, %v11847
        %v11902 = vpack.c.bf16 %v11848, %v11848
        %v11903 = vpack.c.bf16 %v11849, %v11849
        %v11904 = vpack.c.bf16 %v11850, %v11850
        %v11905 = vpack.c.bf16 %v11851, %v11851
        %v11906 = vpack.c.bf16 %v11852, %v11852
        %v11907 = vpack.c.bf16 %v11853, %v11853
        %v11908 = vpack.c.bf16 %v11854, %v11854
        %v11909 = vpack.c.bf16 %v11855, %v11855
        %v11910 = vpack.c.bf16 %v11856, %v11856
        %v11911 = vpack.c.bf16 %v11857, %v11857
        %v11912 = vpack.c.bf16 %v11858, %v11858
        %v11913 = vpack.c.bf16 %v11859, %v11859
        %v11914 = vpack.c.bf16 %v11860, %v11860
        %v11915 = vpack.c.bf16 %v11861, %v11861
        %v11916 = vpack.c.bf16 %v11862, %v11862
        %v11917 = vpack.c.bf16 %v11863, %v11863
        %v11918 = vpack.c.bf16 %v11864, %v11864
        %v11919 = vpack.c.bf16 %v11865, %v11865
        %v11920 = vpack.c.bf16 %v11866, %v11866
        %v11921 = vpack.c.bf16 %v11867, %v11867
        %v11922 = vpack.c.bf16 %v11868, %v11868
        %v11923 = vpack.c.bf16 %v11869, %v11869
        %v11924 = vpack.c.bf16 %v11870, %v11870
        %v11925 = vpack.c.bf16 %v11871, %v11871
        %v11926 = vpack.c.bf16 %v11872, %v11872
        %v11927 = vld [vmem:[%s5] sm:$0xf]
        %v11928 = vld [vmem:[%s5 + $0x4] sm:$0xf]
        %v11929 = vld [vmem:[%s5 + $0x8] sm:$0xf]
        %v11930 = vld [vmem:[%s5 + $0xc] sm:$0xf]
        %v11931 = vld [vmem:[%s5 + $0x10] sm:$0xf]
        %v11932 = vld [vmem:[%s5 + $0x14] sm:$0xf]
        %v11933 = vld [vmem:[%s5 + $0x18] sm:$0xf]
        %v11934 = vld [vmem:[%s5 + $0x1c] sm:$0xf]
        %v11935 = vld [vmem:[%s5 + $0x20] sm:$0xf]
        %v11936 = vld [vmem:[%s5 + $0x24] sm:$0xf]
        %v11937 = vld [vmem:[%s5 + $0x28] sm:$0xf]
        %v11938 = vld [vmem:[%s5 + $0x2c] sm:$0xf]
        %v11939 = vld [vmem:[%s5 + $0x30] sm:$0xf]
        %v11940 = vld [vmem:[%s5 + $0x34] sm:$0xf]
        %v11941 = vld [vmem:[%s5 + $0x38] sm:$0xf]
        %v11942 = vld [vmem:[%s5 + $0x3c] sm:$0xf]
        %v11975 = vunpack.c.l.b16 %v11895
        %v11976 = vunpack.c.l.b16 %v11896
        %v11977 = vunpack.c.l.b16 %v11897
        %v11978 = vunpack.c.l.b16 %v11898
        %v11979 = vunpack.c.l.b16 %v11899
        %v11980 = vunpack.c.l.b16 %v11900
        %v11981 = vunpack.c.l.b16 %v11901
        %v11982 = vunpack.c.l.b16 %v11902
        %v11983 = vunpack.c.l.b16 %v11903
        %v11984 = vunpack.c.l.b16 %v11904
        %v11985 = vunpack.c.l.b16 %v11905
        %v11986 = vunpack.c.l.b16 %v11906
        %v11987 = vunpack.c.l.b16 %v11907
        %v11988 = vunpack.c.l.b16 %v11908
        %v11989 = vunpack.c.l.b16 %v11909
        %v11990 = vunpack.c.l.b16 %v11910
        %v11991 = vunpack.c.l.b16 %v11911
        %v11992 = vunpack.c.l.b16 %v11912
        %v11993 = vunpack.c.l.b16 %v11913
        %v11994 = vunpack.c.l.b16 %v11914
        %v11995 = vunpack.c.l.b16 %v11915
        %v11996 = vunpack.c.l.b16 %v11916
        %v11997 = vunpack.c.l.b16 %v11917
        %v11998 = vunpack.c.l.b16 %v11918
        %v11999 = vunpack.c.l.b16 %v11919
        %v12000 = vunpack.c.l.b16 %v11920
        %v12001 = vunpack.c.l.b16 %v11921
        %v12002 = vunpack.c.l.b16 %v11922
        %v12003 = vunpack.c.l.b16 %v11923
        %v12004 = vunpack.c.l.b16 %v11924
        %v12005 = vunpack.c.l.b16 %v11925
        %v12006 = vunpack.c.l.b16 %v11926
        %vm12007 = vcmask 1041409
        %v12008 = vsel %vm12007, %v11976, %v11975
        %vm12009 = vcmask 1042434
        %v12010 = vsel %vm12009, %v11977, %v12008
        %vm12011 = vcmask 1043459
        %v12012 = vsel %vm12011, %v11978, %v12010
        %vm12013 = vcmask 1044484
        %v12014 = vsel %vm12013, %v11979, %v12012
        %vm12015 = vcmask 1045509
        %v12016 = vsel %vm12015, %v11980, %v12014
        %vm12017 = vcmask 1046534
        %v12018 = vsel %vm12017, %v11981, %v12016
        %vm12019 = vcmask 1047559
        %v12020 = vsel %vm12019, %v11982, %v12018
        %v12021 = vsel %vm12007, %v11984, %v11983
        %v12022 = vsel %vm12009, %v11985, %v12021
        %v12023 = vsel %vm12011, %v11986, %v12022
        %v12024 = vsel %vm12013, %v11987, %v12023
        %v12025 = vsel %vm12015, %v11988, %v12024
        %v12026 = vsel %vm12017, %v11989, %v12025
        %v12027 = vsel %vm12019, %v11990, %v12026
        %v12028 = vsel %vm12007, %v11992, %v11991
        %v12029 = vsel %vm12009, %v11993, %v12028
        %v12030 = vsel %vm12011, %v11994, %v12029
        %v12031 = vsel %vm12013, %v11995, %v12030
        %v12032 = vsel %vm12015, %v11996, %v12031
        %v12033 = vsel %vm12017, %v11997, %v12032
        %v12034 = vsel %vm12019, %v11998, %v12033
        %v12035 = vsel %vm12007, %v12000, %v11999
        %v12036 = vsel %vm12009, %v12001, %v12035
        %v12037 = vsel %vm12011, %v12002, %v12036
        %v12038 = vsel %vm12013, %v12003, %v12037
        %v12039 = vsel %vm12015, %v12004, %v12038
        %v12040 = vsel %vm12017, %v12005, %v12039
        %v12041 = vsel %vm12019, %v12006, %v12040
        %v12042 = vpack.c.b16 %v12027, %v12020
        %v12043 = vpack.c.b16 %v12041, %v12034
        %v12062 = vunpack.c.l.b16 %v11927
        %v12063 = vunpack.c.l.b16 %v11928
        %v12064 = vunpack.c.l.b16 %v11929
        %v12065 = vunpack.c.l.b16 %v11930
        %v12066 = vunpack.c.l.b16 %v11931
        %v12067 = vunpack.c.l.b16 %v11932
        %v12068 = vunpack.c.l.b16 %v11933
        %v12069 = vunpack.c.l.b16 %v11934
        %v12070 = vunpack.c.l.b16 %v11935
        %v12071 = vunpack.c.l.b16 %v11936
        %v12072 = vunpack.c.l.b16 %v11937
        %v12073 = vunpack.c.l.b16 %v11938
        %v12074 = vunpack.c.l.b16 %v11939
        %v12075 = vunpack.c.l.b16 %v11940
        %v12076 = vunpack.c.l.b16 %v11941
        %v12077 = vunpack.c.l.b16 %v11942
        %v12078 = vpack.c.b16 %v12063, %v12062
        %v12079 = vpack.c.b16 %v12065, %v12064
        %v12080 = vpack.c.b16 %v12067, %v12066
        %v12081 = vpack.c.b16 %v12069, %v12068
        %v12082 = vpack.c.b16 %v12071, %v12070
        %v12083 = vpack.c.b16 %v12073, %v12072
        %v12084 = vpack.c.b16 %v12075, %v12074
        %v12085 = vpack.c.b16 %v12077, %v12076
        %12094 = vmatprep.subr.bf16.mxu0 0
        %12095 = vmatpush1.bf16.msra.mxu0 %v12078
        %12096 = vmatprep.subr.bf16.mxu0 0
        %12097 = vmatpush1.bf16.msra.mxu0 %v12079
        %12098 = vmatprep.subr.bf16.mxu0 0
        %12099 = vmatpush1.bf16.msra.mxu0 %v12080
        %12100 = vmatprep.subr.bf16.mxu0 0
        %12101 = vmatpush1.bf16.msra.mxu0 %v12081
        %12102 = vmatprep.subr.bf16.mxu0 0
        %12103 = vmatpush1.bf16.msra.mxu0 %v12082
        %12104 = vmatprep.subr.bf16.mxu0 0
        %12105 = vmatpush1.bf16.msra.mxu0 %v12083
        %12106 = vmatprep.subr.bf16.mxu0 0
        %12107 = vmatpush1.bf16.msra.mxu0 %v12084
        %12108 = vmatprep.subr.bf16.mxu0 0
        %12109 = vmatpush1.bf16.msra.mxu0 %v12085
        %12110 = vmatprep.subr.bf16.mxu0 0
        %12111 = vmatpush1.bf16.msra.mxu0 0
        %12112 = vmatprep.subr.bf16.mxu0 0
        %12113 = vmatpush1.bf16.msra.mxu0 0
        %12114 = vmatprep.subr.bf16.mxu0 0
        %12115 = vmatpush1.bf16.msra.mxu0 0
        %12116 = vmatprep.subr.bf16.mxu0 0
        %12117 = vmatpush1.bf16.msra.mxu0 0
        %12118 = vmatprep.subr.bf16.mxu0 0
        %12119 = vmatpush1.bf16.msra.mxu0 0
        %12120 = vmatprep.subr.bf16.mxu0 0
        %12121 = vmatpush1.bf16.msra.mxu0 0
        %12122 = vmatprep.subr.bf16.mxu0 0
        %12123 = vmatpush1.bf16.msra.mxu0 0
        %12124 = vmatprep.subr.bf16.mxu0 0
        %12125 = vmatpush1.bf16.msra.mxu0 0
        %12126 = vmatprep.mubr.bf16.mxu0 0
        %12127 = vmatmul.mubr.bf16.gmra.mrb[0].mxu0 %v12042
        %v12128 = vpop.f32.mrb[0].mxu0
        %v12129 = vadd.f32 0.0, %v12128
        %v12130 = vpop.f32.mrb[0].mxu0
        %v12131 = vpop.f32.mrb[0].mxu0
        %v12132 = vadd.f32 0.0, %v12131
        %v12133 = vpop.f32.mrb[0].mxu0
        %12134 = vmatprep.mubr.bf16.mxu0 0
        %12135 = vmatmul.mubr.bf16.gmra.mrb[0].mxu0 %v12043
        %v12136 = vpop.f32.mrb[0].mxu0
        %v12137 = vadd.f32 0.0, %v12136
        %v12138 = vpop.f32.mrb[0].mxu0
        %v12139 = vpop.f32.mrb[0].mxu0
        %v12140 = vadd.f32 0.0, %v12139
        %v12141 = vpop.f32.mrb[0].mxu0
        %12142 = vdwg.mxu0
        %v12147 = vunpack.c.l.b16 %v11873
        %v12148 = vunpack.c.h.b16 %v11873
        %v12149 = vunpack.c.l.b16 %v11874
        %v12150 = vunpack.c.h.b16 %v11874
        %v12151 = vunpack.c.l.b16 %v11875
        %v12152 = vunpack.c.h.b16 %v11875
        %v12153 = vunpack.c.l.b16 %v11876
        %v12154 = vunpack.c.h.b16 %v11876
        %v12155 = vpack.c.b16 %v12149, %v12147
        %v12156 = vpack.c.b16 %v12150, %v12148
        %v12157 = vpack.c.b16 %v12153, %v12151
        %v12158 = vpack.c.b16 %v12154, %v12152
        %v12179 = vunpack.c.l.b16 %v11877
        %v12180 = vunpack.c.l.b16 %v11878
        %v12181 = vunpack.c.l.b16 %v11879
        %v12182 = vunpack.c.l.b16 %v11880
        %v12183 = vunpack.c.l.b16 %v11881
        %v12184 = vunpack.c.l.b16 %v11882
        %v12185 = vunpack.c.l.b16 %v11883
        %v12186 = vunpack.c.l.b16 %v11884
        %v12187 = vunpack.c.l.b16 %v11885
        %v12188 = vunpack.c.l.b16 %v11886
        %v12189 = vunpack.c.l.b16 %v11887
        %v12190 = vunpack.c.l.b16 %v11888
        %v12191 = vunpack.c.l.b16 %v11889
        %v12192 = vunpack.c.l.b16 %v11890
        %v12193 = vunpack.c.l.b16 %v11891
        %v12194 = vunpack.c.l.b16 %v11892
        %v12195 = vunpack.c.l.b16 %v11893
        %v12196 = vunpack.c.l.b16 %v11894
        %v12197 = vpack.c.b16 %v12180, %v12179
        %v12198 = vpack.c.b16 %v12182, %v12181
        %v12199 = vpack.c.b16 %v12184, %v12183
        %v12200 = vpack.c.b16 %v12186, %v12185
        %v12201 = vpack.c.b16 %v12188, %v12187
        %v12202 = vpack.c.b16 %v12190, %v12189
        %v12203 = vpack.c.b16 %v12192, %v12191
        %v12204 = vpack.c.b16 %v12194, %v12193
        %v12205 = vpack.c.b16 %v12196, %v12195
        %vm12215 = vcmask 130048
        %v12217 = vsel %vm12215, %v12156, 0
        %v12220 = vsel %vm12215, %v12158, 0
        %12222 = vmatprep.subr.bf16.mxu0 0
        %12223 = vmatpush1.bf16.msra.mxu0 %v12197
        %12224 = vmatprep.subr.bf16.mxu0 0
        %12225 = vmatpush1.bf16.msra.mxu0 %v12198
        %12226 = vmatprep.subr.bf16.mxu0 0
        %12227 = vmatpush1.bf16.msra.mxu0 %v12199
        %12228 = vmatprep.subr.bf16.mxu0 0
        %12229 = vmatpush1.bf16.msra.mxu0 %v12200
        %12230 = vmatprep.subr.bf16.mxu0 0
        %12231 = vmatpush1.bf16.msra.mxu0 %v12201
        %12232 = vmatprep.subr.bf16.mxu0 0
        %12233 = vmatpush1.bf16.msra.mxu0 %v12202
        %12234 = vmatprep.subr.bf16.mxu0 0
        %12235 = vmatpush1.bf16.msra.mxu0 %v12203
        %12236 = vmatprep.subr.bf16.mxu0 0
        %12237 = vmatpush1.bf16.msra.mxu0 %v12204
        %12238 = vmatprep.subr.bf16.mxu0 0
        %12239 = vmatpush1.bf16.msra.mxu0 %v12205
        %12240 = vmatprep.subr.bf16.mxu0 0
        %12241 = vmatpush1.bf16.msra.mxu0 0
        %12242 = vmatprep.subr.bf16.mxu0 0
        %12243 = vmatpush1.bf16.msra.mxu0 0
        %12244 = vmatprep.subr.bf16.mxu0 0
        %12245 = vmatpush1.bf16.msra.mxu0 0
        %12246 = vmatprep.subr.bf16.mxu0 0
        %12247 = vmatpush1.bf16.msra.mxu0 0
        %12248 = vmatprep.subr.bf16.mxu0 0
        %12249 = vmatpush1.bf16.msra.mxu0 0
        %12250 = vmatprep.subr.bf16.mxu0 0
        %12251 = vmatpush1.bf16.msra.mxu0 0
        %12252 = vmatprep.subr.bf16.mxu0 0
        %12253 = vmatpush1.bf16.msra.mxu0 0
        %12254 = vmatprep.mubr.bf16.mxu0 %v12217
        %12255 = vmatmul.mubr.bf16.gmra.mrb[0].mxu0 %v12155
        %v12256 = vpop.f32.mrb[0].mxu0
        %v12257 = vadd.f32 %v12129, %v12256
        %v12258 = vpop.f32.mrb[0].mxu0
        %v12259 = vpop.f32.mrb[0].mxu0
        %v12260 = vadd.f32 %v12132, %v12259
        %v12261 = vpop.f32.mrb[0].mxu0
        %12262 = vmatprep.mubr.bf16.mxu0 %v12220
        %12263 = vmatmul.mubr.bf16.gmra.mrb[0].mxu0 %v12157
        %v12264 = vpop.f32.mrb[0].mxu0
        %v12265 = vadd.f32 %v12137, %v12264
        %v12266 = vpop.f32.mrb[0].mxu0
        %v12267 = vpop.f32.mrb[0].mxu0
        %v12268 = vadd.f32 %v12140, %v12267
        %v12269 = vpop.f32.mrb[0].mxu0
        %12270 = vdwg.mxu0
        %v12271 = vld [vmem:[%s6] sm:$0x1]
        %v12273 = vlaneseq
        %v12274 = vshrl.u32 %v12273, 7
        %v12275 = vsub.s32 0, %v12274
        %v12276 = vrot.slane %v12271, %v12275
        %v12278 = vadd.f32 %v12257, %v12276
        %v12279 = vadd.f32 %v12260, %v12276
        %v12280 = vadd.f32 %v12265, %v12276
        %v12281 = vadd.f32 %v12268, %v12276
        %v12282 = vmax.f32 %v12278, 0.0
        %v12283 = vmax.f32 %v12279, 0.0
        %v12284 = vmax.f32 %v12280, 0.0
        %v12285 = vmax.f32 %v12281, 0.0
        %v12286 = vpack.c.bf16 %v12283, %v12282
        %v12287 = vpack.c.bf16 %v12285, %v12284
        %v12288 = vld [vmem:[%s7] sm:$0xf]
        %v12289 = vld [vmem:[%s7 + $0x4] sm:$0xf]
        %v12290 = vld [vmem:[%s7 + $0x8] sm:$0xf]
        %v12291 = vld [vmem:[%s7 + $0xc] sm:$0xf]
        %v12292 = vld [vmem:[%s7 + $0x10] sm:$0xf]
        %v12293 = vld [vmem:[%s7 + $0x14] sm:$0xf]
        %v12294 = vld [vmem:[%s7 + $0x18] sm:$0xf]
        %v12295 = vld [vmem:[%s7 + $0x1c] sm:$0xf]
        %v12296 = vld [vmem:[%s7 + $0x20] sm:$0xf]
        %v12297 = vld [vmem:[%s7 + $0x24] sm:$0xf]
        %v12298 = vld [vmem:[%s7 + $0x28] sm:$0xf]
        %v12299 = vld [vmem:[%s7 + $0x2c] sm:$0xf]
        %v12300 = vld [vmem:[%s7 + $0x30] sm:$0xf]
        %v12301 = vld [vmem:[%s7 + $0x34] sm:$0xf]
        %v12302 = vld [vmem:[%s7 + $0x38] sm:$0xf]
        %v12303 = vld [vmem:[%s7 + $0x3c] sm:$0xf]
        %v12304 = vld [vmem:[%s8] sm:$0x1]
        %v12306 = vlaneseq
        %v12307 = vshrl.u32 %v12306, 7
        %v12308 = vsub.s32 0, %v12307
        %v12309 = vrot.slane %v12304, %v12308
        %v12327 = vunpack.c.l.b16 %v12288
        %v12328 = vunpack.c.l.b16 %v12289
        %v12329 = vunpack.c.l.b16 %v12290
        %v12330 = vunpack.c.l.b16 %v12291
        %v12331 = vunpack.c.l.b16 %v12292
        %v12332 = vunpack.c.l.b16 %v12293
        %v12333 = vunpack.c.l.b16 %v12294
        %v12334 = vunpack.c.l.b16 %v12295
        %v12335 = vunpack.c.l.b16 %v12296
        %v12336 = vunpack.c.l.b16 %v12297
        %v12337 = vunpack.c.l.b16 %v12298
        %v12338 = vunpack.c.l.b16 %v12299
        %v12339 = vunpack.c.l.b16 %v12300
        %v12340 = vunpack.c.l.b16 %v12301
        %v12341 = vunpack.c.l.b16 %v12302
        %v12342 = vunpack.c.l.b16 %v12303
        %v12343 = vpack.c.b16 %v12328, %v12327
        %v12344 = vpack.c.b16 %v12330, %v12329
        %v12345 = vpack.c.b16 %v12332, %v12331
        %v12346 = vpack.c.b16 %v12334, %v12333
        %v12347 = vpack.c.b16 %v12336, %v12335
        %v12348 = vpack.c.b16 %v12338, %v12337
        %v12349 = vpack.c.b16 %v12340, %v12339
        %v12350 = vpack.c.b16 %v12342, %v12341
        %12359 = vmatprep.subr.bf16.mxu0 0
        %12360 = vmatpush1.bf16.msra.mxu0 %v12343
        %12361 = vmatprep.subr.bf16.mxu0 0
        %12362 = vmatpush1.bf16.msra.mxu0 %v12344
        %12363 = vmatprep.subr.bf16.mxu0 0
        %12364 = vmatpush1.bf16.msra.mxu0 %v12345
        %12365 = vmatprep.subr.bf16.mxu0 0
        %12366 = vmatpush1.bf16.msra.mxu0 %v12346
        %12367 = vmatprep.subr.bf16.mxu0 0
        %12368 = vmatpush1.bf16.msra.mxu0 %v12347
        %12369 = vmatprep.subr.bf16.mxu0 0
        %12370 = vmatpush1.bf16.msra.mxu0 %v12348
        %12371 = vmatprep.subr.bf16.mxu0 0
        %12372 = vmatpush1.bf16.msra.mxu0 %v12349
        %12373 = vmatprep.subr.bf16.mxu0 0
        %12374 = vmatpush1.bf16.msra.mxu0 %v12350
        %12375 = vmatprep.subr.bf16.mxu0 0
        %12376 = vmatpush1.bf16.msra.mxu0 0
        %12377 = vmatprep.subr.bf16.mxu0 0
        %12378 = vmatpush1.bf16.msra.mxu0 0
        %12379 = vmatprep.subr.bf16.mxu0 0
        %12380 = vmatpush1.bf16.msra.mxu0 0
        %12381 = vmatprep.subr.bf16.mxu0 0
        %12382 = vmatpush1.bf16.msra.mxu0 0
        %12383 = vmatprep.subr.bf16.mxu0 0
        %12384 = vmatpush1.bf16.msra.mxu0 0
        %12385 = vmatprep.subr.bf16.mxu0 0
        %12386 = vmatpush1.bf16.msra.mxu0 0
        %12387 = vmatprep.subr.bf16.mxu0 0
        %12388 = vmatpush1.bf16.msra.mxu0 0
        %12389 = vmatprep.subr.bf16.mxu0 0
        %12390 = vmatpush1.bf16.msra.mxu0 0
        %12391 = vmatprep.mubr.bf16.mxu0 0
        %12392 = vmatmul.mubr.bf16.gmra.mrb[0].mxu0 %v12286
        %v12393 = vpop.f32.mrb[0].mxu0
        %v12394 = vadd.f32 %v12309, %v12393
        %v12395 = vpop.f32.mrb[0].mxu0
        %v12396 = vpop.f32.mrb[0].mxu0
        %v12397 = vadd.f32 %v12309, %v12396
        %v12398 = vpop.f32.mrb[0].mxu0
        %12399 = vmatprep.mubr.bf16.mxu0 0
        %12400 = vmatmul.mubr.bf16.gmra.mrb[0].mxu0 %v12287
        %v12401 = vpop.f32.mrb[0].mxu0
        %v12402 = vadd.f32 %v12309, %v12401
        %v12403 = vpop.f32.mrb[0].mxu0
        %v12404 = vpop.f32.mrb[0].mxu0
        %v12405 = vadd.f32 %v12309, %v12404
        %v12406 = vpop.f32.mrb[0].mxu0
        %12407 = vdwg.mxu0
        %v12408 = vmax.f32 %v12394, 0.0
        %v12409 = vmax.f32 %v12397, 0.0
        %v12410 = vmax.f32 %v12402, 0.0
        %v12411 = vmax.f32 %v12405, 0.0
        %v12412 = vpack.c.bf16 %v12409, %v12408
        %v12413 = vpack.c.bf16 %v12411, %v12410
        %s12414 = scalar_lea.vmem %s7, 64
        %v12415 = vld [vmem:[%s12414] sm:$0xf]
        %v12416 = vld [vmem:[%s12414 + $0x4] sm:$0xf]
        %v12417 = vld [vmem:[%s12414 + $0x8] sm:$0xf]
        %v12418 = vld [vmem:[%s12414 + $0xc] sm:$0xf]
        %v12419 = vld [vmem:[%s12414 + $0x10] sm:$0xf]
        %v12420 = vld [vmem:[%s12414 + $0x14] sm:$0xf]
        %v12421 = vld [vmem:[%s12414 + $0x18] sm:$0xf]
        %v12422 = vld [vmem:[%s12414 + $0x1c] sm:$0xf]
        %v12423 = vld [vmem:[%s12414 + $0x20] sm:$0xf]
        %v12424 = vld [vmem:[%s12414 + $0x24] sm:$0xf]
        %v12425 = vld [vmem:[%s12414 + $0x28] sm:$0xf]
        %v12426 = vld [vmem:[%s12414 + $0x2c] sm:$0xf]
        %v12427 = vld [vmem:[%s12414 + $0x30] sm:$0xf]
        %v12428 = vld [vmem:[%s12414 + $0x34] sm:$0xf]
        %v12429 = vld [vmem:[%s12414 + $0x38] sm:$0xf]
        %v12430 = vld [vmem:[%s12414 + $0x3c] sm:$0xf]
        %s12431 = scalar_lea.vmem %s8, 1
        %v12432 = vld [vmem:[%s12431] sm:$0x1]
        %v12434 = vlaneseq
        %v12435 = vshrl.u32 %v12434, 7
        %v12436 = vsub.s32 0, %v12435
        %v12437 = vrot.slane %v12432, %v12436
        %v12455 = vunpack.c.l.b16 %v12415
        %v12456 = vunpack.c.l.b16 %v12416
        %v12457 = vunpack.c.l.b16 %v12417
        %v12458 = vunpack.c.l.b16 %v12418
        %v12459 = vunpack.c.l.b16 %v12419
        %v12460 = vunpack.c.l.b16 %v12420
        %v12461 = vunpack.c.l.b16 %v12421
        %v12462 = vunpack.c.l.b16 %v12422
        %v12463 = vunpack.c.l.b16 %v12423
        %v12464 = vunpack.c.l.b16 %v12424
        %v12465 = vunpack.c.l.b16 %v12425
        %v12466 = vunpack.c.l.b16 %v12426
        %v12467 = vunpack.c.l.b16 %v12427
        %v12468 = vunpack.c.l.b16 %v12428
        %v12469 = vunpack.c.l.b16 %v12429
        %v12470 = vunpack.c.l.b16 %v12430
        %v12471 = vpack.c.b16 %v12456, %v12455
        %v12472 = vpack.c.b16 %v12458, %v12457
        %v12473 = vpack.c.b16 %v12460, %v12459
        %v12474 = vpack.c.b16 %v12462, %v12461
        %v12475 = vpack.c.b16 %v12464, %v12463
        %v12476 = vpack.c.b16 %v12466, %v12465
        %v12477 = vpack.c.b16 %v12468, %v12467
        %v12478 = vpack.c.b16 %v12470, %v12469
        %12487 = vmatprep.subr.bf16.mxu0 0
        %12488 = vmatpush1.bf16.msra.mxu0 %v12471
        %12489 = vmatprep.subr.bf16.mxu0 0
        %12490 = vmatpush1.bf16.msra.mxu0 %v12472
        %12491 = vmatprep.subr.bf16.mxu0 0
        %12492 = vmatpush1.bf16.msra.mxu0 %v12473
        %12493 = vmatprep.subr.bf16.mxu0 0
        %12494 = vmatpush1.bf16.msra.mxu0 %v12474
        %12495 = vmatprep.subr.bf16.mxu0 0
        %12496 = vmatpush1.bf16.msra.mxu0 %v12475
        %12497 = vmatprep.subr.bf16.mxu0 0
        %12498 = vmatpush1.bf16.msra.mxu0 %v12476
        %12499 = vmatprep.subr.bf16.mxu0 0
        %12500 = vmatpush1.bf16.msra.mxu0 %v12477
        %12501 = vmatprep.subr.bf16.mxu0 0
        %12502 = vmatpush1.bf16.msra.mxu0 %v12478
        %12503 = vmatprep.subr.bf16.mxu0 0
        %12504 = vmatpush1.bf16.msra.mxu0 0
        %12505 = vmatprep.subr.bf16.mxu0 0
        %12506 = vmatpush1.bf16.msra.mxu0 0
        %12507 = vmatprep.subr.bf16.mxu0 0
        %12508 = vmatpush1.bf16.msra.mxu0 0
        %12509 = vmatprep.subr.bf16.mxu0 0
        %12510 = vmatpush1.bf16.msra.mxu0 0
        %12511 = vmatprep.subr.bf16.mxu0 0
        %12512 = vmatpush1.bf16.msra.mxu0 0
        %12513 = vmatprep.subr.bf16.mxu0 0
        %12514 = vmatpush1.bf16.msra.mxu0 0
        %12515 = vmatprep.subr.bf16.mxu0 0
        %12516 = vmatpush1.bf16.msra.mxu0 0
        %12517 = vmatprep.subr.bf16.mxu0 0
        %12518 = vmatpush1.bf16.msra.mxu0 0
        %12519 = vmatprep.mubr.bf16.mxu0 0
        %12520 = vmatmul.mubr.bf16.gmra.mrb[0].mxu0 %v12412
        %v12521 = vpop.f32.mrb[0].mxu0
        %v12522 = vadd.f32 %v12437, %v12521
        %v12523 = vpop.f32.mrb[0].mxu0
        %v12524 = vpop.f32.mrb[0].mxu0
        %v12525 = vadd.f32 %v12437, %v12524
        %v12526 = vpop.f32.mrb[0].mxu0
        %12527 = vmatprep.mubr.bf16.mxu0 0
        %12528 = vmatmul.mubr.bf16.gmra.mrb[0].mxu0 %v12413
        %v12529 = vpop.f32.mrb[0].mxu0
        %v12530 = vadd.f32 %v12437, %v12529
        %v12531 = vpop.f32.mrb[0].mxu0
        %v12532 = vpop.f32.mrb[0].mxu0
        %v12533 = vadd.f32 %v12437, %v12532
        %v12534 = vpop.f32.mrb[0].mxu0
        %12535 = vdwg.mxu0
        %v12536 = vmax.f32 %v12522, 0.0
        %v12537 = vmax.f32 %v12525, 0.0
        %v12538 = vmax.f32 %v12530, 0.0
        %v12539 = vmax.f32 %v12533, 0.0
        %v12540 = vpack.c.bf16 %v12537, %v12536
        %v12541 = vpack.c.bf16 %v12539, %v12538
        %s12542 = scalar_lea.vmem %s7, 128
        %v12543 = vld [vmem:[%s12542] sm:$0xf]
        %v12544 = vld [vmem:[%s12542 + $0x4] sm:$0xf]
        %v12545 = vld [vmem:[%s12542 + $0x8] sm:$0xf]
        %v12546 = vld [vmem:[%s12542 + $0xc] sm:$0xf]
        %v12547 = vld [vmem:[%s12542 + $0x10] sm:$0xf]
        %v12548 = vld [vmem:[%s12542 + $0x14] sm:$0xf]
        %v12549 = vld [vmem:[%s12542 + $0x18] sm:$0xf]
        %v12550 = vld [vmem:[%s12542 + $0x1c] sm:$0xf]
        %v12551 = vld [vmem:[%s12542 + $0x20] sm:$0xf]
        %v12552 = vld [vmem:[%s12542 + $0x24] sm:$0xf]
        %v12553 = vld [vmem:[%s12542 + $0x28] sm:$0xf]
        %v12554 = vld [vmem:[%s12542 + $0x2c] sm:$0xf]
        %v12555 = vld [vmem:[%s12542 + $0x30] sm:$0xf]
        %v12556 = vld [vmem:[%s12542 + $0x34] sm:$0xf]
        %v12557 = vld [vmem:[%s12542 + $0x38] sm:$0xf]
        %v12558 = vld [vmem:[%s12542 + $0x3c] sm:$0xf]
        %s12559 = scalar_lea.vmem %s8, 2
        %v12560 = vld [vmem:[%s12559] sm:$0x1]
        %v12562 = vlaneseq
        %v12563 = vshrl.u32 %v12562, 7
        %v12564 = vsub.s32 0, %v12563
        %v12565 = vrot.slane %v12560, %v12564
        %v12583 = vunpack.c.l.b16 %v12543
        %v12584 = vunpack.c.l.b16 %v12544
        %v12585 = vunpack.c.l.b16 %v12545
        %v12586 = vunpack.c.l.b16 %v12546
        %v12587 = vunpack.c.l.b16 %v12547
        %v12588 = vunpack.c.l.b16 %v12548
        %v12589 = vunpack.c.l.b16 %v12549
        %v12590 = vunpack.c.l.b16 %v12550
        %v12591 = vunpack.c.l.b16 %v12551
        %v12592 = vunpack.c.l.b16 %v12552
        %v12593 = vunpack.c.l.b16 %v12553
        %v12594 = vunpack.c.l.b16 %v12554
        %v12595 = vunpack.c.l.b16 %v12555
        %v12596 = vunpack.c.l.b16 %v12556
        %v12597 = vunpack.c.l.b16 %v12557
        %v12598 = vunpack.c.l.b16 %v12558
        %v12599 = vpack.c.b16 %v12584, %v12583
        %v12600 = vpack.c.b16 %v12586, %v12585
        %v12601 = vpack.c.b16 %v12588, %v12587
        %v12602 = vpack.c.b16 %v12590, %v12589
        %v12603 = vpack.c.b16 %v12592, %v12591
        %v12604 = vpack.c.b16 %v12594, %v12593
        %v12605 = vpack.c.b16 %v12596, %v12595
        %v12606 = vpack.c.b16 %v12598, %v12597
        %12615 = vmatprep.subr.bf16.mxu0 0
        %12616 = vmatpush1.bf16.msra.mxu0 %v12599
        %12617 = vmatprep.subr.bf16.mxu0 0
        %12618 = vmatpush1.bf16.msra.mxu0 %v12600
        %12619 = vmatprep.subr.bf16.mxu0 0
        %12620 = vmatpush1.bf16.msra.mxu0 %v12601
        %12621 = vmatprep.subr.bf16.mxu0 0
        %12622 = vmatpush1.bf16.msra.mxu0 %v12602
        %12623 = vmatprep.subr.bf16.mxu0 0
        %12624 = vmatpush1.bf16.msra.mxu0 %v12603
        %12625 = vmatprep.subr.bf16.mxu0 0
        %12626 = vmatpush1.bf16.msra.mxu0 %v12604
        %12627 = vmatprep.subr.bf16.mxu0 0
        %12628 = vmatpush1.bf16.msra.mxu0 %v12605
        %12629 = vmatprep.subr.bf16.mxu0 0
        %12630 = vmatpush1.bf16.msra.mxu0 %v12606
        %12631 = vmatprep.subr.bf16.mxu0 0
        %12632 = vmatpush1.bf16.msra.mxu0 0
        %12633 = vmatprep.subr.bf16.mxu0 0
        %12634 = vmatpush1.bf16.msra.mxu0 0
        %12635 = vmatprep.subr.bf16.mxu0 0
        %12636 = vmatpush1.bf16.msra.mxu0 0
        %12637 = vmatprep.subr.bf16.mxu0 0
        %12638 = vmatpush1.bf16.msra.mxu0 0
        %12639 = vmatprep.subr.bf16.mxu0 0
        %12640 = vmatpush1.bf16.msra.mxu0 0
        %12641 = vmatprep.subr.bf16.mxu0 0
        %12642 = vmatpush1.bf16.msra.mxu0 0
        %12643 = vmatprep.subr.bf16.mxu0 0
        %12644 = vmatpush1.bf16.msra.mxu0 0
        %12645 = vmatprep.subr.bf16.mxu0 0
        %12646 = vmatpush1.bf16.msra.mxu0 0
        %12647 = vmatprep.mubr.bf16.mxu0 0
        %12648 = vmatmul.mubr.bf16.gmra.mrb[0].mxu0 %v12540
        %v12649 = vpop.f32.mrb[0].mxu0
        %v12650 = vadd.f32 %v12565, %v12649
        %v12651 = vpop.f32.mrb[0].mxu0
        %v12652 = vpop.f32.mrb[0].mxu0
        %v12653 = vadd.f32 %v12565, %v12652
        %v12654 = vpop.f32.mrb[0].mxu0
        %12655 = vmatprep.mubr.bf16.mxu0 0
        %12656 = vmatmul.mubr.bf16.gmra.mrb[0].mxu0 %v12541
        %v12657 = vpop.f32.mrb[0].mxu0
        %v12658 = vadd.f32 %v12565, %v12657
        %v12659 = vpop.f32.mrb[0].mxu0
        %v12660 = vpop.f32.mrb[0].mxu0
        %v12661 = vadd.f32 %v12565, %v12660
        %v12662 = vpop.f32.mrb[0].mxu0
        %12663 = vdwg.mxu0
        %v12664 = vmax.f32 %v12650, 0.0
        %v12665 = vmax.f32 %v12653, 0.0
        %v12666 = vmax.f32 %v12658, 0.0
        %v12667 = vmax.f32 %v12661, 0.0
        %v12668 = vpack.c.bf16 %v12665, %v12664
        %v12669 = vpack.c.bf16 %v12667, %v12666
        %s12670 = scalar_lea.vmem %s7, 192
        %v12671 = vld [vmem:[%s12670] sm:$0xf]
        %v12672 = vld [vmem:[%s12670 + $0x4] sm:$0xf]
        %v12673 = vld [vmem:[%s12670 + $0x8] sm:$0xf]
        %v12674 = vld [vmem:[%s12670 + $0xc] sm:$0xf]
        %v12675 = vld [vmem:[%s12670 + $0x10] sm:$0xf]
        %v12676 = vld [vmem:[%s12670 + $0x14] sm:$0xf]
        %v12677 = vld [vmem:[%s12670 + $0x18] sm:$0xf]
        %v12678 = vld [vmem:[%s12670 + $0x1c] sm:$0xf]
        %v12679 = vld [vmem:[%s12670 + $0x20] sm:$0xf]
        %v12680 = vld [vmem:[%s12670 + $0x24] sm:$0xf]
        %v12681 = vld [vmem:[%s12670 + $0x28] sm:$0xf]
        %v12682 = vld [vmem:[%s12670 + $0x2c] sm:$0xf]
        %v12683 = vld [vmem:[%s12670 + $0x30] sm:$0xf]
        %v12684 = vld [vmem:[%s12670 + $0x34] sm:$0xf]
        %v12685 = vld [vmem:[%s12670 + $0x38] sm:$0xf]
        %v12686 = vld [vmem:[%s12670 + $0x3c] sm:$0xf]
        %s12687 = scalar_lea.vmem %s8, 3
        %v12688 = vld [vmem:[%s12687] sm:$0x1]
        %v12690 = vlaneseq
        %v12691 = vshrl.u32 %v12690, 7
        %v12692 = vsub.s32 0, %v12691
        %v12693 = vrot.slane %v12688, %v12692
        %v12711 = vunpack.c.l.b16 %v12671
        %v12712 = vunpack.c.l.b16 %v12672
        %v12713 = vunpack.c.l.b16 %v12673
        %v12714 = vunpack.c.l.b16 %v12674
        %v12715 = vunpack.c.l.b16 %v12675
        %v12716 = vunpack.c.l.b16 %v12676
        %v12717 = vunpack.c.l.b16 %v12677
        %v12718 = vunpack.c.l.b16 %v12678
        %v12719 = vunpack.c.l.b16 %v12679
        %v12720 = vunpack.c.l.b16 %v12680
        %v12721 = vunpack.c.l.b16 %v12681
        %v12722 = vunpack.c.l.b16 %v12682
        %v12723 = vunpack.c.l.b16 %v12683
        %v12724 = vunpack.c.l.b16 %v12684
        %v12725 = vunpack.c.l.b16 %v12685
        %v12726 = vunpack.c.l.b16 %v12686
        %v12727 = vpack.c.b16 %v12712, %v12711
        %v12728 = vpack.c.b16 %v12714, %v12713
        %v12729 = vpack.c.b16 %v12716, %v12715
        %v12730 = vpack.c.b16 %v12718, %v12717
        %v12731 = vpack.c.b16 %v12720, %v12719
        %v12732 = vpack.c.b16 %v12722, %v12721
        %v12733 = vpack.c.b16 %v12724, %v12723
        %v12734 = vpack.c.b16 %v12726, %v12725
        %12743 = vmatprep.subr.bf16.mxu0 0
        %12744 = vmatpush1.bf16.msra.mxu0 %v12727
        %12745 = vmatprep.subr.bf16.mxu0 0
        %12746 = vmatpush1.bf16.msra.mxu0 %v12728
        %12747 = vmatprep.subr.bf16.mxu0 0
        %12748 = vmatpush1.bf16.msra.mxu0 %v12729
        %12749 = vmatprep.subr.bf16.mxu0 0
        %12750 = vmatpush1.bf16.msra.mxu0 %v12730
        %12751 = vmatprep.subr.bf16.mxu0 0
        %12752 = vmatpush1.bf16.msra.mxu0 %v12731
        %12753 = vmatprep.subr.bf16.mxu0 0
        %12754 = vmatpush1.bf16.msra.mxu0 %v12732
        %12755 = vmatprep.subr.bf16.mxu0 0
        %12756 = vmatpush1.bf16.msra.mxu0 %v12733
        %12757 = vmatprep.subr.bf16.mxu0 0
        %12758 = vmatpush1.bf16.msra.mxu0 %v12734
        %12759 = vmatprep.subr.bf16.mxu0 0
        %12760 = vmatpush1.bf16.msra.mxu0 0
        %12761 = vmatprep.subr.bf16.mxu0 0
        %12762 = vmatpush1.bf16.msra.mxu0 0
        %12763 = vmatprep.subr.bf16.mxu0 0
        %12764 = vmatpush1.bf16.msra.mxu0 0
        %12765 = vmatprep.subr.bf16.mxu0 0
        %12766 = vmatpush1.bf16.msra.mxu0 0
        %12767 = vmatprep.subr.bf16.mxu0 0
        %12768 = vmatpush1.bf16.msra.mxu0 0
        %12769 = vmatprep.subr.bf16.mxu0 0
        %12770 = vmatpush1.bf16.msra.mxu0 0
        %12771 = vmatprep.subr.bf16.mxu0 0
        %12772 = vmatpush1.bf16.msra.mxu0 0
        %12773 = vmatprep.subr.bf16.mxu0 0
        %12774 = vmatpush1.bf16.msra.mxu0 0
        %12775 = vmatprep.mubr.bf16.mxu0 0
        %12776 = vmatmul.mubr.bf16.gmra.mrb[0].mxu0 %v12668
        %v12777 = vpop.f32.mrb[0].mxu0
        %v12778 = vadd.f32 %v12693, %v12777
        %v12779 = vpop.f32.mrb[0].mxu0
        %v12780 = vpop.f32.mrb[0].mxu0
        %v12781 = vadd.f32 %v12693, %v12780
        %v12782 = vpop.f32.mrb[0].mxu0
        %12783 = vmatprep.mubr.bf16.mxu0 0
        %12784 = vmatmul.mubr.bf16.gmra.mrb[0].mxu0 %v12669
        %v12785 = vpop.f32.mrb[0].mxu0
        %v12786 = vadd.f32 %v12693, %v12785
        %v12787 = vpop.f32.mrb[0].mxu0
        %v12788 = vpop.f32.mrb[0].mxu0
        %v12789 = vadd.f32 %v12693, %v12788
        %v12790 = vpop.f32.mrb[0].mxu0
        %12791 = vdwg.mxu0
        %12792 = vst [vmem:[%s344] sm:$0xff] %v12778
        %12793 = vst [vmem:[%s344 + $0x8] sm:$0xff] %v12781
        %12794 = vst [vmem:[%s344 + $0x10] sm:$0xff] %v12786
        %12795 = vst [vmem:[%s344 + $0x18] sm:$0xff] %v12789
        %s12796 = sand.u32 %s230, 1
        %s12797 = scalar_lea.sflag [#allocation3], %s12796
        %s12798 = sand.u32 %s230, 1
        %s12799 = smul.addr %s12798, 32
        %s12800 = scalar_lea.vmem [#allocation2], %s12799
        // Predicated region
        $region57: #{tpu_custom_call.1} parent=55 // pred_check
          %p12801 = pneg %p240
        $region58: #{tpu_custom_call.1} parent=55 // pred_check_branch
          %12803 = sbr.rel (%p12801) target = $region60
        $region59: #{tpu_custom_call.1} parent=55 // pred_region
          %s12804 = smul.u32 4, %s23
          %s12806 = ssub.s32 512, 512
          %12807 = vsyncadd %s12797, %s12806
          %s12808 = smul.addr %s12804, 128
          %s12809 = scalar_lea.hbm %s9, %s12808
          %s12810 = sshll.u32 %s12800, 4
          %s12811 = int_to_ptr.vmem [resolvable:$true] %s12810
          %12816 = dma.vmem_to_hbm [thread:$0]  %s12811, 512, %s12809, %s12797, 128, 128, 8
        $region60: #{tpu_custom_call.1} parent=55 // pred_fallthru
          _
      $region56: #{tpu_custom_call.1} parent=5 // pred_fallthru
        _
      %p12817 = scmp.le.s32.totalorder 2, %s18
      // Predicated region
      $region61: #{tpu_custom_call.1} parent=5 // pred_check
        %p12818 = pneg %p12817
      $region62: #{tpu_custom_call.1} parent=5 // pred_check_branch
        %12820 = sbr.rel (%p12818) target = $region64
      $region63: #{tpu_custom_call.1} parent=5 // pred_region
        %s12821 = ssub.s32 %s18, 2
        // Predicated region
        $region65: #{tpu_custom_call.1} parent=63 // pred_check
          %p12822 = pneg %p246
        $region66: #{tpu_custom_call.1} parent=63 // pred_check_branch
          %12824 = sbr.rel (%p12822) target = $region68
        $region67: #{tpu_custom_call.1} parent=63 // pred_region
          %s12825 = sand.u32 %s231, 1
          %s12826 = scalar_lea.sflag [#allocation3], %s12825
          %s12827 = sand.u32 %s231, 1
          %s12828 = smul.addr %s12827, 32
          %s12829 = scalar_lea.vmem [#allocation2], %s12828
          %12830 = dma.done %s12826, 512
        $region68: #{tpu_custom_call.1} parent=63 // pred_fallthru
          _
      $region64: #{tpu_custom_call.1} parent=5 // pred_fallthru
        _
    $region6: #{tpu_custom_call.1} parent=1 // loop_footer
      %s22 = sadd.s32 1, %s18
    $region7: #{tpu_custom_call.1} parent=1 // loop_footer_branch
      %17 = sbr.rel target = $region3
    $region8: #{tpu_custom_call.1} parent=1 // loop_exit
      _
    %12831 = vsyncpa [#allocation3], 1
    %s12832 = scalar_lea.sflag [#allocation3], 1
    %12833 = vsyncpa %s12832, 1

</llo_original>
